<compile_context>
chip_gen: v7x
topology: tpu7x:2x2x1
jax: 0.10.0
libtpu: 0.0.40
codegen_flags: <defaults>
</compile_context>

<pallas_src>
import functools

import jax
import jax.numpy as jnp
from jax import lax
from jax.experimental import pallas as pl
from jax.experimental.pallas import tpu as pltpu

EPS = 1e-5                      # nn.BatchNorm2d default eps
VMEM_LIMIT = 32 * 1024 * 1024   # explicit scoped-VMEM budget (safe on v5e/v6e/v7x)


def _round_up(x, m):
    return (x + m - 1) // m * m


# --------------------------------------------------------------------------- #
# Kernels
# --------------------------------------------------------------------------- #
def conv_stats_kernel(p_ref, w_ref, conv_ref, stats_ref):
    """One row tile of the convolution + single-pass BN statistics.

    p_ref:     (TR, Kp)    bf16 im2col patches (K = KH*KW*Cin, zero-padded)
    w_ref:     (Kp, Cp)    bf16 packed conv weight (same block every step -> resident)
    conv_ref:  (TR, Cp)    f32 conv output tile
    stats_ref: (1, 2, Cp)  f32 per-tile [sum, sum-of-squares] over the tile's rows
    """
    acc = jnp.dot(p_ref[...], w_ref[...], preferred_element_type=jnp.float32)
    conv_ref[...] = acc
    s = jnp.sum(acc, axis=0, keepdims=True)           # (1, Cp)
    sq = jnp.sum(acc * acc, axis=0, keepdims=True)    # (1, Cp)
    stats_ref[...] = jnp.concatenate([s, sq], axis=0)[None]


def scale_shift_relu_kernel(x_ref, scale_ref, shift_ref, o_ref):
    """BatchNorm (pre-folded per-channel scale/shift) + ReLU: one FMA + max."""
    o_ref[...] = jnp.maximum(x_ref[...] * scale_ref[...] + shift_ref[...], 0.0)


def linear_kernel(x_ref, w_ref, b_ref, o_ref, *, relu):
    """y = x @ w + b (bf16 operands, f32 accumulation), optional ReLU."""
    y = jnp.dot(x_ref[...], w_ref[...], preferred_element_type=jnp.float32)
    y = y + b_ref[...]
    if relu:
        y = jnp.maximum(y, 0.0)
    o_ref[...] = y


# --------------------------------------------------------------------------- #
# Layer wrappers
# --------------------------------------------------------------------------- #
def conv_block(x_nhwc, w_oihw, gamma, beta, *, row_tile=512):
    """ConvBlock forward: Conv2d(bias=False, stride=1, padding=0) + BN(train) + ReLU.

    x_nhwc: (N, H, W, Cin) f32.  Returns (N, Ho, Wo, Cout) f32.
    """
    N, H, W, Cin = x_nhwc.shape
    Cout, _, KH, KW = w_oihw.shape
    Ho, Wo = H - KH + 1, W - KW + 1
    rows = N * Ho * Wo
    K = KH * KW * Cin
    Kp = _round_up(K, 128)        # lane-aligned contraction dim
    Cp = _round_up(Cout, 128)     # lane-dense output channels -> unmasked stores

    # --- im2col in the wrapper: one wide contraction instead of KH*KW taps ------
    xq = x_nhwc.astype(jnp.bfloat16)                  # bf16 matmul operands
    if KH == 1 and KW == 1:
        patches = xq.reshape(rows, K)                 # pure reshape for 1x1 convs
    else:
        patches = jnp.concatenate(
            [xq[:, kh:kh + Ho, kw:kw + Wo, :] for kh in range(KH) for kw in range(KW)],
            axis=-1).reshape(rows, K)

    TR = min(row_tile, _round_up(rows, 8))            # rows per grid step
    rows_p = _round_up(rows, TR)
    n_tiles = rows_p // TR
    patches = jnp.pad(patches, ((0, rows_p - rows), (0, Kp - K)))

    # Conv weight packed to (K, Cout) with the same (kh, kw, cin) ordering as patches.
    w = jnp.transpose(w_oihw, (2, 3, 1, 0)).reshape(K, Cout)
    w = jnp.pad(w, ((0, Kp - K), (0, Cp - Cout))).astype(jnp.bfloat16)

    conv, stats = pl.pallas_call(
        conv_stats_kernel,
        out_shape=(jax.ShapeDtypeStruct((rows_p, Cp), jnp.float32),
                   jax.ShapeDtypeStruct((n_tiles, 2, Cp), jnp.float32)),
        grid_spec=pltpu.PrefetchScalarGridSpec(
            num_scalar_prefetch=0, grid=(n_tiles,),
            in_specs=[pl.BlockSpec((TR, Kp), lambda i: (i, 0)),
                      pl.BlockSpec((Kp, Cp), lambda i: (0, 0))],
            out_specs=[pl.BlockSpec((TR, Cp), lambda i: (i, 0)),
                       pl.BlockSpec((1, 2, Cp), lambda i: (i, 0, 0))]),
        compiler_params=pltpu.CompilerParams(
            dimension_semantics=("parallel",), vmem_limit_bytes=VMEM_LIMIT),
    )(patches, w)

    # --- BN finalize (tiny per-channel glue): fold gamma/beta into scale/shift ---
    # Zero-padded rows/channels contribute 0 to both sums, so dividing by the true
    # row count gives exact batch statistics (biased variance, training-mode BN).
    sums = jnp.sum(stats, axis=0)                     # (2, Cp), f32
    mean = sums[0] / rows
    var = jnp.maximum(sums[1] / rows - mean * mean, 0.0)
    gamma_p = jnp.pad(gamma.astype(jnp.float32), (0, Cp - Cout))
    beta_p = jnp.pad(beta.astype(jnp.float32), (0, Cp - Cout))
    scale = (gamma_p * lax.rsqrt(var + EPS)).reshape(1, Cp)
    shift = (beta_p - mean * scale[0]).reshape(1, Cp)

    y = pl.pallas_call(
        scale_shift_relu_kernel,
        out_shape=jax.ShapeDtypeStruct((rows_p, Cp), jnp.float32),
        grid_spec=pltpu.PrefetchScalarGridSpec(
            num_scalar_prefetch=0, grid=(n_tiles,),
            in_specs=[pl.BlockSpec((TR, Cp), lambda i: (i, 0)),
                      pl.BlockSpec((1, Cp), lambda i: (0, 0)),
                      pl.BlockSpec((1, Cp), lambda i: (0, 0))],
            out_specs=pl.BlockSpec((TR, Cp), lambda i: (i, 0))),
        compiler_params=pltpu.CompilerParams(
            dimension_semantics=("parallel",), vmem_limit_bytes=VMEM_LIMIT),
    )(conv, scale, shift)

    return y[:rows, :Cout].reshape(N, Ho, Wo, Cout)


def linear(x, w_out_in, b, *, relu):
    """nn.Linear (+ optional ReLU) as a single-block Pallas matmul (tiny shapes)."""
    N, K = x.shape
    M = w_out_in.shape[0]
    xq = x.astype(jnp.bfloat16)
    wq = jnp.transpose(w_out_in).astype(jnp.bfloat16)   # (K, M)
    b2 = b.reshape(1, M).astype(jnp.float32)
    return pl.pallas_call(
        functools.partial(linear_kernel, relu=relu),
        out_shape=jax.ShapeDtypeStruct((N, M), jnp.float32),
        in_specs=[pl.BlockSpec(memory_space=pltpu.MemorySpace.VMEM)] * 3,
        out_specs=pl.BlockSpec(memory_space=pltpu.MemorySpace.VMEM),
        compiler_params=pltpu.CompilerParams(vmem_limit_bytes=VMEM_LIMIT),
    )(xq, wq, b2)


def maxpool2x2(x_nhwc):
    # nn.MaxPool2d(2): pure strided data movement + max; left to XLA as layout glue.
    N, H, W, C = x_nhwc.shape
    Ho, Wo = H // 2, W // 2
    x = x_nhwc[:, :2 * Ho, :2 * Wo, :]
    return jnp.max(x.reshape(N, Ho, 2, Wo, 2, C), axis=(2, 4))


def feat_encoder_forward(x_nchw, params):
    """FeatEncoder.forward. x_nchw: (N, 1, H, W).
    BatchNorm uses batch statistics (fresh module in train mode)."""
    # TODO(synk): nn.Dropout(0.2) train-mode stochastic masking is not reproduced
    # (cannot match torch RNG); dropout is applied as identity.
    x = jnp.transpose(x_nchw, (0, 2, 3, 1)).astype(jnp.float32)   # NHWC (Cin=1: free)
    x = conv_block(x, *params["cb1"])
    x = conv_block(x, *params["cb2"])
    x = maxpool2x2(x)
    x = conv_block(x, *params["cb3"])
    x = conv_block(x, *params["cb4"])
    x = maxpool2x2(x)
    x = conv_block(x, *params["cb5"])
    x = maxpool2x2(x)
    x = conv_block(x, *params["cb6"])
    x = maxpool2x2(x)
    N = x.shape[0]
    # nn.Flatten flattens NCHW as (C, H, W)-major: tiny (N, 2, 2, 512) transpose.
    x = jnp.transpose(x, (0, 3, 1, 2)).reshape(N, -1)
    x = linear(x, params["fc1_w"], params["fc1_b"], relu=True)
    x = linear(x, params["fc2_w"], params["fc2_b"], relu=False)
    return x


# --------------------------------------------------------------------------- #
# Pure-JAX reference (mirrors PyTorch forward; same bf16 rounding of matmul
# operands as the kernels so the comparison isolates the Pallas implementation).
# --------------------------------------------------------------------------- #
def _bf16(x):
    return x.astype(jnp.bfloat16).astype(jnp.float32)


def conv_block_ref(x_nchw, w, gamma, beta):
    conv = lax.conv_general_dilated(
        _bf16(x_nchw), _bf16(w), window_strides=(1, 1), padding="VALID",
        dimension_numbers=("NCHW", "OIHW", "NCHW"))
    mean = conv.mean(axis=(0, 2, 3), keepdims=True)
    var = ((conv - mean) ** 2).mean(axis=(0, 2, 3), keepdims=True)
    y = (conv - mean) * lax.rsqrt(var + EPS)
    y = y * gamma.reshape(1, -1, 1, 1) + beta.reshape(1, -1, 1, 1)
    return jnp.maximum(y, 0.0)


def maxpool2x2_ref(x_nchw):
    N, C, H, W = x_nchw.shape
    Ho, Wo = H // 2, W // 2
    x = x_nchw[:, :, :2 * Ho, :2 * Wo]
    return jnp.max(x.reshape(N, C, Ho, 2, Wo, 2), axis=(3, 5))


def feat_encoder_reference(x_nchw, params):
    x = x_nchw.astype(jnp.float32)
    x = conv_block_ref(x, *params["cb1"])
    x = conv_block_ref(x, *params["cb2"])
    x = maxpool2x2_ref(x)
    x = conv_block_ref(x, *params["cb3"])
    x = conv_block_ref(x, *params["cb4"])
    x = maxpool2x2_ref(x)
    x = conv_block_ref(x, *params["cb5"])
    x = maxpool2x2_ref(x)
    x = conv_block_ref(x, *params["cb6"])
    x = maxpool2x2_ref(x)
    x = x.reshape(x.shape[0], -1)
    x = jnp.maximum(_bf16(x) @ _bf16(params["fc1_w"]).T + params["fc1_b"], 0.0)
    x = _bf16(x) @ _bf16(params["fc2_w"]).T + params["fc2_b"]
    return x


if __name__ == "__main__":
    # FeatEncoder's Flatten -> Linear(2048, 512) implies a 48x48 single-channel input:
    # 48 -conv3-> 46 -pool-> 23 -conv3-> 21 -pool-> 10 -pool-> 5 -pool-> 2; 512*2*2=2048.
    N, H, W = 2, 48, 48
    LATENT = 32

    key = jax.random.PRNGKey(0)
    keys = jax.random.split(key, 12)

    def conv_params(k, cin, cout, ksz):
        kw_, kg, kb = jax.random.split(k, 3)
        w = jax.random.normal(kw_, (cout, cin, ksz, ksz), jnp.float32) / (cin * ksz * ksz) ** 0.5
        gamma = 1.0 + 0.1 * jax.random.normal(kg, (cout,), jnp.float32)
        beta = 0.1 * jax.random.normal(kb, (cout,), jnp.float32)
        return (w, gamma, beta)

    params = {
        "cb1": conv_params(keys[0], 1, 64, 3),
        "cb2": conv_params(keys[1], 64, 64, 1),
        "cb3": conv_params(keys[2], 64, 128, 3),
        "cb4": conv_params(keys[3], 128, 128, 1),
        "cb5": conv_params(keys[4], 128, 256, 1),
        "cb6": conv_params(keys[5], 256, 512, 1),
        "fc1_w": jax.random.normal(keys[6], (512, 2048), jnp.float32) / 2048.0 ** 0.5,
        "fc1_b": 0.1 * jax.random.normal(keys[7], (512,), jnp.float32),
        "fc2_w": jax.random.normal(keys[8], (LATENT, 512), jnp.float32) / 512.0 ** 0.5,
        "fc2_b": 0.1 * jax.random.normal(keys[9], (LATENT,), jnp.float32),
    }
    x = jax.random.normal(keys[10], (N, 1, H, W), jnp.float32)

    out = jax.jit(feat_encoder_forward)(x, params)
    out = jax.block_until_ready(out)

    ref = feat_encoder_reference(x, params)
    assert out.shape == (N, LATENT), out.shape
    max_err = float(jnp.max(jnp.abs(out - ref)))
    assert jnp.allclose(out, ref, atol=2e-2, rtol=2e-2), max_err

    print("KERNEL_OK")
</pallas_src>

<mosaic_0001>
module attributes {stable_mosaic.version = 11 : i64} {
  func.func @conv_stats_kernel(%arg0: i32, %arg1: memref<512x128xbf16, #tpu.memory_space<vmem>>, %arg2: memref<128x128xbf16, #tpu.memory_space<vmem>>, %arg3: memref<512x128xf32, #tpu.memory_space<vmem>>, %arg4: memref<1x2x128xf32, #tpu.memory_space<vmem>>) attributes {dimension_semantics = [#tpu.dimension_semantics<parallel>], iteration_bounds = array<i64: 9>, scalar_prefetch = 0 : i64, scratch_operands = 0 : i64, tpu.core_type = #tpu.core_type<tc>, window_params = [{transform_indices = @transform_0, window_bounds = array<i64: 512, 128>}, {pipeline_mode = #tpu.pipeline_mode<synchronous>, transform_indices = @transform_1, window_bounds = array<i64: 128, 128>}, {transform_indices = @transform_2, window_bounds = array<i64: 512, 128>}, {transform_indices = @transform_3, window_bounds = array<i64: 1, 2, 128>}]} {
    %c0 = arith.constant 0 : index
    %c0_0 = arith.constant 0 : index
    %0 = vector.load %arg1[%c0, %c0_0] : memref<512x128xbf16, #tpu.memory_space<vmem>>, vector<512x128xbf16>
    %c0_1 = arith.constant 0 : index
    %c0_2 = arith.constant 0 : index
    %1 = vector.load %arg2[%c0_1, %c0_2] : memref<128x128xbf16, #tpu.memory_space<vmem>>, vector<128x128xbf16>
    %cst = arith.constant dense<0.000000e+00> : vector<512x128xf32>
    %2 = tpu.matmul %0, %1, %cst {dimension_numbers = #tpu.dot_dimension_numbers<[1], [0], [0], [1], [0, 0, 1, 1], [], []>} : vector<512x128xbf16>, vector<128x128xbf16>, vector<512x128xf32> -> vector<512x128xf32>
    %c0_3 = arith.constant 0 : index
    %c0_4 = arith.constant 0 : index
    %3 = vector.load %arg3[%c0_3, %c0_4] : memref<512x128xf32, #tpu.memory_space<vmem>>, vector<512x128xf32>
    tpu.vector_store %arg3[%c0_3, %c0_4], %2 {strides = array<i32>} : memref<512x128xf32, #tpu.memory_space<vmem>>, vector<512x128xf32>,
    %cst_5 = arith.constant dense<0.000000e+00> : vector<128xf32>
    %4 = vector.multi_reduction <add>, %2, %cst_5 [0] : vector<512x128xf32> to vector<128xf32>
    %5 = vector.shape_cast %4 : vector<128xf32> to vector<1x128xf32>
    %6 = arith.mulf %2, %2 : vector<512x128xf32>
    %cst_6 = arith.constant dense<0.000000e+00> : vector<128xf32>
    %7 = vector.multi_reduction <add>, %6, %cst_6 [0] : vector<512x128xf32> to vector<128xf32>
    %8 = vector.shape_cast %7 : vector<128xf32> to vector<1x128xf32>
    %9 = tpu.concatenate %5, %8 in 0 : vector<1x128xf32>, vector<1x128xf32> -> vector<2x128xf32>
    %10 = vector.shape_cast %9 : vector<2x128xf32> to vector<1x2x128xf32>
    %c0_7 = arith.constant 0 : index
    %c0_8 = arith.constant 0 : index
    %c0_9 = arith.constant 0 : index
    %11 = vector.load %arg4[%c0_7, %c0_8, %c0_9] : memref<1x2x128xf32, #tpu.memory_space<vmem>>, vector<1x2x128xf32>
    tpu.vector_store %arg4[%c0_7, %c0_8, %c0_9], %10 {strides = array<i32>} : memref<1x2x128xf32, #tpu.memory_space<vmem>>, vector<1x2x128xf32>,
    return
  }
  func.func @transform_0(%arg0: i32) -> (i32, i32) {
    %c0_i32 = arith.constant 0 : i32
    %c0_i32_0 = arith.constant 0 : i32
    return %arg0, %c0_i32 : i32, i32
  }
  func.func @transform_1(%arg0: i32) -> (i32, i32) {
    %c0_i32 = arith.constant 0 : i32
    %c0_i32_0 = arith.constant 0 : i32
    %c0_i32_1 = arith.constant 0 : i32
    return %c0_i32, %c0_i32_0 : i32, i32
  }
  func.func @transform_2(%arg0: i32) -> (i32, i32) {
    %c0_i32 = arith.constant 0 : i32
    %c0_i32_0 = arith.constant 0 : i32
    return %arg0, %c0_i32 : i32, i32
  }
  func.func @transform_3(%arg0: i32) -> (i32, i32, i32) {
    %c0_i32 = arith.constant 0 : i32
    %c0_i32_0 = arith.constant 0 : i32
    %c0_i32_1 = arith.constant 0 : i32
    return %arg0, %c0_i32, %c0_i32_0 : i32, i32, i32
  }
}

module attributes {stable_mosaic.version = 11 : i64} {
  func.func @scale_shift_relu_kernel(%arg0: i32, %arg1: memref<512x128xf32, #tpu.memory_space<vmem>>, %arg2: memref<1x128xf32, #tpu.memory_space<vmem>>, %arg3: memref<1x128xf32, #tpu.memory_space<vmem>>, %arg4: memref<512x128xf32, #tpu.memory_space<vmem>>) attributes {dimension_semantics = [#tpu.dimension_semantics<parallel>], iteration_bounds = array<i64: 9>, scalar_prefetch = 0 : i64, scratch_operands = 0 : i64, tpu.core_type = #tpu.core_type<tc>, window_params = [{transform_indices = @transform_0, window_bounds = array<i64: 512, 128>}, {pipeline_mode = #tpu.pipeline_mode<synchronous>, transform_indices = @transform_1, window_bounds = array<i64: 1, 128>}, {pipeline_mode = #tpu.pipeline_mode<synchronous>, transform_indices = @transform_2, window_bounds = array<i64: 1, 128>}, {transform_indices = @transform_3, window_bounds = array<i64: 512, 128>}]} {
    %c0 = arith.constant 0 : index
    %c0_0 = arith.constant 0 : index
    %0 = vector.load %arg1[%c0, %c0_0] : memref<512x128xf32, #tpu.memory_space<vmem>>, vector<512x128xf32>
    %c0_1 = arith.constant 0 : index
    %c0_2 = arith.constant 0 : index
    %1 = vector.load %arg2[%c0_1, %c0_2] : memref<1x128xf32, #tpu.memory_space<vmem>>, vector<1x128xf32>
    %2 = vector.broadcast %1 : vector<1x128xf32> to vector<512x128xf32>
    %3 = arith.mulf %0, %2 : vector<512x128xf32>
    %c0_3 = arith.constant 0 : index
    %c0_4 = arith.constant 0 : index
    %4 = vector.load %arg3[%c0_3, %c0_4] : memref<1x128xf32, #tpu.memory_space<vmem>>, vector<1x128xf32>
    %5 = vector.broadcast %4 : vector<1x128xf32> to vector<512x128xf32>
    %6 = arith.addf %3, %5 : vector<512x128xf32>
    %cst = arith.constant 0.000000e+00 : f32
    %7 = vector.broadcast %cst : f32 to vector<512x128xf32>
    %8 = arith.maximumf %6, %7 : vector<512x128xf32>
    %c0_5 = arith.constant 0 : index
    %c0_6 = arith.constant 0 : index
    %9 = vector.load %arg4[%c0_5, %c0_6] : memref<512x128xf32, #tpu.memory_space<vmem>>, vector<512x128xf32>
    tpu.vector_store %arg4[%c0_5, %c0_6], %8 {strides = array<i32>} : memref<512x128xf32, #tpu.memory_space<vmem>>, vector<512x128xf32>,
    return
  }
  func.func @transform_0(%arg0: i32) -> (i32, i32) {
    %c0_i32 = arith.constant 0 : i32
    %c0_i32_0 = arith.constant 0 : i32
    return %arg0, %c0_i32 : i32, i32
  }
  func.func @transform_1(%arg0: i32) -> (i32, i32) {
    %c0_i32 = arith.constant 0 : i32
    %c0_i32_0 = arith.constant 0 : i32
    %c0_i32_1 = arith.constant 0 : i32
    return %c0_i32, %c0_i32_0 : i32, i32
  }
  func.func @transform_2(%arg0: i32) -> (i32, i32) {
    %c0_i32 = arith.constant 0 : i32
    %c0_i32_0 = arith.constant 0 : i32
    %c0_i32_1 = arith.constant 0 : i32
    return %c0_i32, %c0_i32_0 : i32, i32
  }
  func.func @transform_3(%arg0: i32) -> (i32, i32) {
    %c0_i32 = arith.constant 0 : i32
    %c0_i32_0 = arith.constant 0 : i32
    return %arg0, %c0_i32 : i32, i32
  }
}

module attributes {stable_mosaic.version = 11 : i64} {
  func.func @conv_stats_kernel(%arg0: i32, %arg1: memref<512x640xbf16, #tpu.memory_space<vmem>>, %arg2: memref<640x128xbf16, #tpu.memory_space<vmem>>, %arg3: memref<512x128xf32, #tpu.memory_space<vmem>>, %arg4: memref<1x2x128xf32, #tpu.memory_space<vmem>>) attributes {dimension_semantics = [#tpu.dimension_semantics<parallel>], iteration_bounds = array<i64: 2>, scalar_prefetch = 0 : i64, scratch_operands = 0 : i64, tpu.core_type = #tpu.core_type<tc>, window_params = [{transform_indices = @transform_0, window_bounds = array<i64: 512, 640>}, {pipeline_mode = #tpu.pipeline_mode<synchronous>, transform_indices = @transform_1, window_bounds = array<i64: 640, 128>}, {transform_indices = @transform_2, window_bounds = array<i64: 512, 128>}, {transform_indices = @transform_3, window_bounds = array<i64: 1, 2, 128>}]} {
    %c0 = arith.constant 0 : index
    %c0_0 = arith.constant 0 : index
    %0 = vector.load %arg1[%c0, %c0_0] : memref<512x640xbf16, #tpu.memory_space<vmem>>, vector<512x640xbf16>
    %c0_1 = arith.constant 0 : index
    %c0_2 = arith.constant 0 : index
    %1 = vector.load %arg2[%c0_1, %c0_2] : memref<640x128xbf16, #tpu.memory_space<vmem>>, vector<640x128xbf16>
    %cst = arith.constant dense<0.000000e+00> : vector<512x128xf32>
    %2 = tpu.matmul %0, %1, %cst {dimension_numbers = #tpu.dot_dimension_numbers<[1], [0], [0], [1], [0, 0, 1, 1], [], []>} : vector<512x640xbf16>, vector<640x128xbf16>, vector<512x128xf32> -> vector<512x128xf32>
    %c0_3 = arith.constant 0 : index
    %c0_4 = arith.constant 0 : index
    %3 = vector.load %arg3[%c0_3, %c0_4] : memref<512x128xf32, #tpu.memory_space<vmem>>, vector<512x128xf32>
    tpu.vector_store %arg3[%c0_3, %c0_4], %2 {strides = array<i32>} : memref<512x128xf32, #tpu.memory_space<vmem>>, vector<512x128xf32>,
    %cst_5 = arith.constant dense<0.000000e+00> : vector<128xf32>
    %4 = vector.multi_reduction <add>, %2, %cst_5 [0] : vector<512x128xf32> to vector<128xf32>
    %5 = vector.shape_cast %4 : vector<128xf32> to vector<1x128xf32>
    %6 = arith.mulf %2, %2 : vector<512x128xf32>
    %cst_6 = arith.constant dense<0.000000e+00> : vector<128xf32>
    %7 = vector.multi_reduction <add>, %6, %cst_6 [0] : vector<512x128xf32> to vector<128xf32>
    %8 = vector.shape_cast %7 : vector<128xf32> to vector<1x128xf32>
    %9 = tpu.concatenate %5, %8 in 0 : vector<1x128xf32>, vector<1x128xf32> -> vector<2x128xf32>
    %10 = vector.shape_cast %9 : vector<2x128xf32> to vector<1x2x128xf32>
    %c0_7 = arith.constant 0 : index
    %c0_8 = arith.constant 0 : index
    %c0_9 = arith.constant 0 : index
    %11 = vector.load %arg4[%c0_7, %c0_8, %c0_9] : memref<1x2x128xf32, #tpu.memory_space<vmem>>, vector<1x2x128xf32>
    tpu.vector_store %arg4[%c0_7, %c0_8, %c0_9], %10 {strides = array<i32>} : memref<1x2x128xf32, #tpu.memory_space<vmem>>, vector<1x2x128xf32>,
    return
  }
  func.func @transform_0(%arg0: i32) -> (i32, i32) {
    %c0_i32 = arith.constant 0 : i32
    %c0_i32_0 = arith.constant 0 : i32
    return %arg0, %c0_i32 : i32, i32
  }
  func.func @transform_1(%arg0: i32) -> (i32, i32) {
    %c0_i32 = arith.constant 0 : i32
    %c0_i32_0 = arith.constant 0 : i32
    %c0_i32_1 = arith.constant 0 : i32
    return %c0_i32, %c0_i32_0 : i32, i32
  }
  func.func @transform_2(%arg0: i32) -> (i32, i32) {
    %c0_i32 = arith.constant 0 : i32
    %c0_i32_0 = arith.constant 0 : i32
    return %arg0, %c0_i32 : i32, i32
  }
  func.func @transform_3(%arg0: i32) -> (i32, i32, i32) {
    %c0_i32 = arith.constant 0 : i32
    %c0_i32_0 = arith.constant 0 : i32
    %c0_i32_1 = arith.constant 0 : i32
    return %arg0, %c0_i32, %c0_i32_0 : i32, i32, i32
  }
}

module attributes {stable_mosaic.version = 11 : i64} {
  func.func @scale_shift_relu_kernel(%arg0: i32, %arg1: memref<512x128xf32, #tpu.memory_space<vmem>>, %arg2: memref<1x128xf32, #tpu.memory_space<vmem>>, %arg3: memref<1x128xf32, #tpu.memory_space<vmem>>, %arg4: memref<512x128xf32, #tpu.memory_space<vmem>>) attributes {dimension_semantics = [#tpu.dimension_semantics<parallel>], iteration_bounds = array<i64: 2>, scalar_prefetch = 0 : i64, scratch_operands = 0 : i64, tpu.core_type = #tpu.core_type<tc>, window_params = [{transform_indices = @transform_0, window_bounds = array<i64: 512, 128>}, {pipeline_mode = #tpu.pipeline_mode<synchronous>, transform_indices = @transform_1, window_bounds = array<i64: 1, 128>}, {pipeline_mode = #tpu.pipeline_mode<synchronous>, transform_indices = @transform_2, window_bounds = array<i64: 1, 128>}, {transform_indices = @transform_3, window_bounds = array<i64: 512, 128>}]} {
    %c0 = arith.constant 0 : index
    %c0_0 = arith.constant 0 : index
    %0 = vector.load %arg1[%c0, %c0_0] : memref<512x128xf32, #tpu.memory_space<vmem>>, vector<512x128xf32>
    %c0_1 = arith.constant 0 : index
    %c0_2 = arith.constant 0 : index
    %1 = vector.load %arg2[%c0_1, %c0_2] : memref<1x128xf32, #tpu.memory_space<vmem>>, vector<1x128xf32>
    %2 = vector.broadcast %1 : vector<1x128xf32> to vector<512x128xf32>
    %3 = arith.mulf %0, %2 : vector<512x128xf32>
    %c0_3 = arith.constant 0 : index
    %c0_4 = arith.constant 0 : index
    %4 = vector.load %arg3[%c0_3, %c0_4] : memref<1x128xf32, #tpu.memory_space<vmem>>, vector<1x128xf32>
    %5 = vector.broadcast %4 : vector<1x128xf32> to vector<512x128xf32>
    %6 = arith.addf %3, %5 : vector<512x128xf32>
    %cst = arith.constant 0.000000e+00 : f32
    %7 = vector.broadcast %cst : f32 to vector<512x128xf32>
    %8 = arith.maximumf %6, %7 : vector<512x128xf32>
    %c0_5 = arith.constant 0 : index
    %c0_6 = arith.constant 0 : index
    %9 = vector.load %arg4[%c0_5, %c0_6] : memref<512x128xf32, #tpu.memory_space<vmem>>, vector<512x128xf32>
    tpu.vector_store %arg4[%c0_5, %c0_6], %8 {strides = array<i32>} : memref<512x128xf32, #tpu.memory_space<vmem>>, vector<512x128xf32>,
    return
  }
  func.func @transform_0(%arg0: i32) -> (i32, i32) {
    %c0_i32 = arith.constant 0 : i32
    %c0_i32_0 = arith.constant 0 : i32
    return %arg0, %c0_i32 : i32, i32
  }
  func.func @transform_1(%arg0: i32) -> (i32, i32) {
    %c0_i32 = arith.constant 0 : i32
    %c0_i32_0 = arith.constant 0 : i32
    %c0_i32_1 = arith.constant 0 : i32
    return %c0_i32, %c0_i32_0 : i32, i32
  }
  func.func @transform_2(%arg0: i32) -> (i32, i32) {
    %c0_i32 = arith.constant 0 : i32
    %c0_i32_0 = arith.constant 0 : i32
    %c0_i32_1 = arith.constant 0 : i32
    return %c0_i32, %c0_i32_0 : i32, i32
  }
  func.func @transform_3(%arg0: i32) -> (i32, i32) {
    %c0_i32 = arith.constant 0 : i32
    %c0_i32_0 = arith.constant 0 : i32
    return %arg0, %c0_i32 : i32, i32
  }
}

module attributes {stable_mosaic.version = 11 : i64} {
  func.func @conv_stats_kernel(%arg0: i32, %arg1: memref<512x128xbf16, #tpu.memory_space<vmem>>, %arg2: memref<128x128xbf16, #tpu.memory_space<vmem>>, %arg3: memref<512x128xf32, #tpu.memory_space<vmem>>, %arg4: memref<1x2x128xf32, #tpu.memory_space<vmem>>) attributes {dimension_semantics = [#tpu.dimension_semantics<parallel>], iteration_bounds = array<i64: 2>, scalar_prefetch = 0 : i64, scratch_operands = 0 : i64, tpu.core_type = #tpu.core_type<tc>, window_params = [{transform_indices = @transform_0, window_bounds = array<i64: 512, 128>}, {pipeline_mode = #tpu.pipeline_mode<synchronous>, transform_indices = @transform_1, window_bounds = array<i64: 128, 128>}, {transform_indices = @transform_2, window_bounds = array<i64: 512, 128>}, {transform_indices = @transform_3, window_bounds = array<i64: 1, 2, 128>}]} {
    %c0 = arith.constant 0 : index
    %c0_0 = arith.constant 0 : index
    %0 = vector.load %arg1[%c0, %c0_0] : memref<512x128xbf16, #tpu.memory_space<vmem>>, vector<512x128xbf16>
    %c0_1 = arith.constant 0 : index
    %c0_2 = arith.constant 0 : index
    %1 = vector.load %arg2[%c0_1, %c0_2] : memref<128x128xbf16, #tpu.memory_space<vmem>>, vector<128x128xbf16>
    %cst = arith.constant dense<0.000000e+00> : vector<512x128xf32>
    %2 = tpu.matmul %0, %1, %cst {dimension_numbers = #tpu.dot_dimension_numbers<[1], [0], [0], [1], [0, 0, 1, 1], [], []>} : vector<512x128xbf16>, vector<128x128xbf16>, vector<512x128xf32> -> vector<512x128xf32>
    %c0_3 = arith.constant 0 : index
    %c0_4 = arith.constant 0 : index
    %3 = vector.load %arg3[%c0_3, %c0_4] : memref<512x128xf32, #tpu.memory_space<vmem>>, vector<512x128xf32>
    tpu.vector_store %arg3[%c0_3, %c0_4], %2 {strides = array<i32>} : memref<512x128xf32, #tpu.memory_space<vmem>>, vector<512x128xf32>,
    %cst_5 = arith.constant dense<0.000000e+00> : vector<128xf32>
    %4 = vector.multi_reduction <add>, %2, %cst_5 [0] : vector<512x128xf32> to vector<128xf32>
    %5 = vector.shape_cast %4 : vector<128xf32> to vector<1x128xf32>
    %6 = arith.mulf %2, %2 : vector<512x128xf32>
    %cst_6 = arith.constant dense<0.000000e+00> : vector<128xf32>
    %7 = vector.multi_reduction <add>, %6, %cst_6 [0] : vector<512x128xf32> to vector<128xf32>
    %8 = vector.shape_cast %7 : vector<128xf32> to vector<1x128xf32>
    %9 = tpu.concatenate %5, %8 in 0 : vector<1x128xf32>, vector<1x128xf32> -> vector<2x128xf32>
    %10 = vector.shape_cast %9 : vector<2x128xf32> to vector<1x2x128xf32>
    %c0_7 = arith.constant 0 : index
    %c0_8 = arith.constant 0 : index
    %c0_9 = arith.constant 0 : index
    %11 = vector.load %arg4[%c0_7, %c0_8, %c0_9] : memref<1x2x128xf32, #tpu.memory_space<vmem>>, vector<1x2x128xf32>
    tpu.vector_store %arg4[%c0_7, %c0_8, %c0_9], %10 {strides = array<i32>} : memref<1x2x128xf32, #tpu.memory_space<vmem>>, vector<1x2x128xf32>,
    return
  }
  func.func @transform_0(%arg0: i32) -> (i32, i32) {
    %c0_i32 = arith.constant 0 : i32
    %c0_i32_0 = arith.constant 0 : i32
    return %arg0, %c0_i32 : i32, i32
  }
  func.func @transform_1(%arg0: i32) -> (i32, i32) {
    %c0_i32 = arith.constant 0 : i32
    %c0_i32_0 = arith.constant 0 : i32
    %c0_i32_1 = arith.constant 0 : i32
    return %c0_i32, %c0_i32_0 : i32, i32
  }
  func.func @transform_2(%arg0: i32) -> (i32, i32) {
    %c0_i32 = arith.constant 0 : i32
    %c0_i32_0 = arith.constant 0 : i32
    return %arg0, %c0_i32 : i32, i32
  }
  func.func @transform_3(%arg0: i32) -> (i32, i32, i32) {
    %c0_i32 = arith.constant 0 : i32
    %c0_i32_0 = arith.constant 0 : i32
    %c0_i32_1 = arith.constant 0 : i32
    return %arg0, %c0_i32, %c0_i32_0 : i32, i32, i32
  }
}

module attributes {stable_mosaic.version = 11 : i64} {
  func.func @conv_stats_kernel(%arg0: i32, %arg1: memref<200x128xbf16, #tpu.memory_space<vmem>>, %arg2: memref<128x256xbf16, #tpu.memory_space<vmem>>, %arg3: memref<200x256xf32, #tpu.memory_space<vmem>>, %arg4: memref<1x2x256xf32, #tpu.memory_space<vmem>>) attributes {dimension_semantics = [#tpu.dimension_semantics<parallel>], iteration_bounds = array<i64: 1>, scalar_prefetch = 0 : i64, scratch_operands = 0 : i64, tpu.core_type = #tpu.core_type<tc>, window_params = [{transform_indices = @transform_0, window_bounds = array<i64: 200, 128>}, {pipeline_mode = #tpu.pipeline_mode<synchronous>, transform_indices = @transform_1, window_bounds = array<i64: 128, 256>}, {transform_indices = @transform_2, window_bounds = array<i64: 200, 256>}, {transform_indices = @transform_3, window_bounds = array<i64: 1, 2, 256>}]} {
    %c0 = arith.constant 0 : index
    %c0_0 = arith.constant 0 : index
    %0 = vector.load %arg1[%c0, %c0_0] : memref<200x128xbf16, #tpu.memory_space<vmem>>, vector<200x128xbf16>
    %c0_1 = arith.constant 0 : index
    %c0_2 = arith.constant 0 : index
    %1 = vector.load %arg2[%c0_1, %c0_2] : memref<128x256xbf16, #tpu.memory_space<vmem>>, vector<128x256xbf16>
    %cst = arith.constant dense<0.000000e+00> : vector<200x256xf32>
    %2 = tpu.matmul %0, %1, %cst {dimension_numbers = #tpu.dot_dimension_numbers<[1], [0], [0], [1], [0, 0, 1, 1], [], []>} : vector<200x128xbf16>, vector<128x256xbf16>, vector<200x256xf32> -> vector<200x256xf32>
    %c0_3 = arith.constant 0 : index
    %c0_4 = arith.constant 0 : index
    %3 = vector.load %arg3[%c0_3, %c0_4] : memref<200x256xf32, #tpu.memory_space<vmem>>, vector<200x256xf32>
    tpu.vector_store %arg3[%c0_3, %c0_4], %2 {strides = array<i32>} : memref<200x256xf32, #tpu.memory_space<vmem>>, vector<200x256xf32>,
    %cst_5 = arith.constant dense<0.000000e+00> : vector<256xf32>
    %4 = vector.multi_reduction <add>, %2, %cst_5 [0] : vector<200x256xf32> to vector<256xf32>
    %5 = vector.shape_cast %4 : vector<256xf32> to vector<1x256xf32>
    %6 = arith.mulf %2, %2 : vector<200x256xf32>
    %cst_6 = arith.constant dense<0.000000e+00> : vector<256xf32>
    %7 = vector.multi_reduction <add>, %6, %cst_6 [0] : vector<200x256xf32> to vector<256xf32>
    %8 = vector.shape_cast %7 : vector<256xf32> to vector<1x256xf32>
    %9 = tpu.concatenate %5, %8 in 0 : vector<1x256xf32>, vector<1x256xf32> -> vector<2x256xf32>
    %10 = vector.shape_cast %9 : vector<2x256xf32> to vector<1x2x256xf32>
    %c0_7 = arith.constant 0 : index
    %c0_8 = arith.constant 0 : index
    %c0_9 = arith.constant 0 : index
    %11 = vector.load %arg4[%c0_7, %c0_8, %c0_9] : memref<1x2x256xf32, #tpu.memory_space<vmem>>, vector<1x2x256xf32>
    tpu.vector_store %arg4[%c0_7, %c0_8, %c0_9], %10 {strides = array<i32>} : memref<1x2x256xf32, #tpu.memory_space<vmem>>, vector<1x2x256xf32>,
    return
  }
  func.func @transform_0(%arg0: i32) -> (i32, i32) {
    %c0_i32 = arith.constant 0 : i32
    %c0_i32_0 = arith.constant 0 : i32
    return %arg0, %c0_i32 : i32, i32
  }
  func.func @transform_1(%arg0: i32) -> (i32, i32) {
    %c0_i32 = arith.constant 0 : i32
    %c0_i32_0 = arith.constant 0 : i32
    %c0_i32_1 = arith.constant 0 : i32
    return %c0_i32, %c0_i32_0 : i32, i32
  }
  func.func @transform_2(%arg0: i32) -> (i32, i32) {
    %c0_i32 = arith.constant 0 : i32
    %c0_i32_0 = arith.constant 0 : i32
    return %arg0, %c0_i32 : i32, i32
  }
  func.func @transform_3(%arg0: i32) -> (i32, i32, i32) {
    %c0_i32 = arith.constant 0 : i32
    %c0_i32_0 = arith.constant 0 : i32
    %c0_i32_1 = arith.constant 0 : i32
    return %arg0, %c0_i32, %c0_i32_0 : i32, i32, i32
  }
}

module attributes {stable_mosaic.version = 11 : i64} {
  func.func @scale_shift_relu_kernel(%arg0: i32, %arg1: memref<200x256xf32, #tpu.memory_space<vmem>>, %arg2: memref<1x256xf32, #tpu.memory_space<vmem>>, %arg3: memref<1x256xf32, #tpu.memory_space<vmem>>, %arg4: memref<200x256xf32, #tpu.memory_space<vmem>>) attributes {dimension_semantics = [#tpu.dimension_semantics<parallel>], iteration_bounds = array<i64: 1>, scalar_prefetch = 0 : i64, scratch_operands = 0 : i64, tpu.core_type = #tpu.core_type<tc>, window_params = [{transform_indices = @transform_0, window_bounds = array<i64: 200, 256>}, {pipeline_mode = #tpu.pipeline_mode<synchronous>, transform_indices = @transform_1, window_bounds = array<i64: 1, 256>}, {pipeline_mode = #tpu.pipeline_mode<synchronous>, transform_indices = @transform_2, window_bounds = array<i64: 1, 256>}, {transform_indices = @transform_3, window_bounds = array<i64: 200, 256>}]} {
    %c0 = arith.constant 0 : index
    %c0_0 = arith.constant 0 : index
    %0 = vector.load %arg1[%c0, %c0_0] : memref<200x256xf32, #tpu.memory_space<vmem>>, vector<200x256xf32>
    %c0_1 = arith.constant 0 : index
    %c0_2 = arith.constant 0 : index
    %1 = vector.load %arg2[%c0_1, %c0_2] : memref<1x256xf32, #tpu.memory_space<vmem>>, vector<1x256xf32>
    %2 = vector.broadcast %1 : vector<1x256xf32> to vector<200x256xf32>
    %3 = arith.mulf %0, %2 : vector<200x256xf32>
    %c0_3 = arith.constant 0 : index
    %c0_4 = arith.constant 0 : index
    %4 = vector.load %arg3[%c0_3, %c0_4] : memref<1x256xf32, #tpu.memory_space<vmem>>, vector<1x256xf32>
    %5 = vector.broadcast %4 : vector<1x256xf32> to vector<200x256xf32>
    %6 = arith.addf %3, %5 : vector<200x256xf32>
    %cst = arith.constant 0.000000e+00 : f32
    %7 = vector.broadcast %cst : f32 to vector<200x256xf32>
    %8 = arith.maximumf %6, %7 : vector<200x256xf32>
    %c0_5 = arith.constant 0 : index
    %c0_6 = arith.constant 0 : index
    %9 = vector.load %arg4[%c0_5, %c0_6] : memref<200x256xf32, #tpu.memory_space<vmem>>, vector<200x256xf32>
    tpu.vector_store %arg4[%c0_5, %c0_6], %8 {strides = array<i32>} : memref<200x256xf32, #tpu.memory_space<vmem>>, vector<200x256xf32>,
    return
  }
  func.func @transform_0(%arg0: i32) -> (i32, i32) {
    %c0_i32 = arith.constant 0 : i32
    %c0_i32_0 = arith.constant 0 : i32
    return %arg0, %c0_i32 : i32, i32
  }
  func.func @transform_1(%arg0: i32) -> (i32, i32) {
    %c0_i32 = arith.constant 0 : i32
    %c0_i32_0 = arith.constant 0 : i32
    %c0_i32_1 = arith.constant 0 : i32
    return %c0_i32, %c0_i32_0 : i32, i32
  }
  func.func @transform_2(%arg0: i32) -> (i32, i32) {
    %c0_i32 = arith.constant 0 : i32
    %c0_i32_0 = arith.constant 0 : i32
    %c0_i32_1 = arith.constant 0 : i32
    return %c0_i32, %c0_i32_0 : i32, i32
  }
  func.func @transform_3(%arg0: i32) -> (i32, i32) {
    %c0_i32 = arith.constant 0 : i32
    %c0_i32_0 = arith.constant 0 : i32
    return %arg0, %c0_i32 : i32, i32
  }
}

module attributes {stable_mosaic.version = 11 : i64} {
  func.func @conv_stats_kernel(%arg0: i32, %arg1: memref<56x256xbf16, #tpu.memory_space<vmem>>, %arg2: memref<256x512xbf16, #tpu.memory_space<vmem>>, %arg3: memref<56x512xf32, #tpu.memory_space<vmem>>, %arg4: memref<1x2x512xf32, #tpu.memory_space<vmem>>) attributes {dimension_semantics = [#tpu.dimension_semantics<parallel>], iteration_bounds = array<i64: 1>, scalar_prefetch = 0 : i64, scratch_operands = 0 : i64, tpu.core_type = #tpu.core_type<tc>, window_params = [{transform_indices = @transform_0, window_bounds = array<i64: 56, 256>}, {pipeline_mode = #tpu.pipeline_mode<synchronous>, transform_indices = @transform_1, window_bounds = array<i64: 256, 512>}, {transform_indices = @transform_2, window_bounds = array<i64: 56, 512>}, {transform_indices = @transform_3, window_bounds = array<i64: 1, 2, 512>}]} {
    %c0 = arith.constant 0 : index
    %c0_0 = arith.constant 0 : index
    %0 = vector.load %arg1[%c0, %c0_0] : memref<56x256xbf16, #tpu.memory_space<vmem>>, vector<56x256xbf16>
    %c0_1 = arith.constant 0 : index
    %c0_2 = arith.constant 0 : index
    %1 = vector.load %arg2[%c0_1, %c0_2] : memref<256x512xbf16, #tpu.memory_space<vmem>>, vector<256x512xbf16>
    %cst = arith.constant dense<0.000000e+00> : vector<56x512xf32>
    %2 = tpu.matmul %0, %1, %cst {dimension_numbers = #tpu.dot_dimension_numbers<[1], [0], [0], [1], [0, 0, 1, 1], [], []>} : vector<56x256xbf16>, vector<256x512xbf16>, vector<56x512xf32> -> vector<56x512xf32>
    %c0_3 = arith.constant 0 : index
    %c0_4 = arith.constant 0 : index
    %3 = vector.load %arg3[%c0_3, %c0_4] : memref<56x512xf32, #tpu.memory_space<vmem>>, vector<56x512xf32>
    tpu.vector_store %arg3[%c0_3, %c0_4], %2 {strides = array<i32>} : memref<56x512xf32, #tpu.memory_space<vmem>>, vector<56x512xf32>,
    %cst_5 = arith.constant dense<0.000000e+00> : vector<512xf32>
    %4 = vector.multi_reduction <add>, %2, %cst_5 [0] : vector<56x512xf32> to vector<512xf32>
    %5 = vector.shape_cast %4 : vector<512xf32> to vector<1x512xf32>
    %6 = arith.mulf %2, %2 : vector<56x512xf32>
    %cst_6 = arith.constant dense<0.000000e+00> : vector<512xf32>
    %7 = vector.multi_reduction <add>, %6, %cst_6 [0] : vector<56x512xf32> to vector<512xf32>
    %8 = vector.shape_cast %7 : vector<512xf32> to vector<1x512xf32>
    %9 = tpu.concatenate %5, %8 in 0 : vector<1x512xf32>, vector<1x512xf32> -> vector<2x512xf32>
    %10 = vector.shape_cast %9 : vector<2x512xf32> to vector<1x2x512xf32>
    %c0_7 = arith.constant 0 : index
    %c0_8 = arith.constant 0 : index
    %c0_9 = arith.constant 0 : index
    %11 = vector.load %arg4[%c0_7, %c0_8, %c0_9] : memref<1x2x512xf32, #tpu.memory_space<vmem>>, vector<1x2x512xf32>
    tpu.vector_store %arg4[%c0_7, %c0_8, %c0_9], %10 {strides = array<i32>} : memref<1x2x512xf32, #tpu.memory_space<vmem>>, vector<1x2x512xf32>,
    return
  }
  func.func @transform_0(%arg0: i32) -> (i32, i32) {
    %c0_i32 = arith.constant 0 : i32
    %c0_i32_0 = arith.constant 0 : i32
    return %arg0, %c0_i32 : i32, i32
  }
  func.func @transform_1(%arg0: i32) -> (i32, i32) {
    %c0_i32 = arith.constant 0 : i32
    %c0_i32_0 = arith.constant 0 : i32
    %c0_i32_1 = arith.constant 0 : i32
    return %c0_i32, %c0_i32_0 : i32, i32
  }
  func.func @transform_2(%arg0: i32) -> (i32, i32) {
    %c0_i32 = arith.constant 0 : i32
    %c0_i32_0 = arith.constant 0 : i32
    return %arg0, %c0_i32 : i32, i32
  }
  func.func @transform_3(%arg0: i32) -> (i32, i32, i32) {
    %c0_i32 = arith.constant 0 : i32
    %c0_i32_0 = arith.constant 0 : i32
    %c0_i32_1 = arith.constant 0 : i32
    return %arg0, %c0_i32, %c0_i32_0 : i32, i32, i32
  }
}

module attributes {stable_mosaic.version = 11 : i64} {
  func.func @scale_shift_relu_kernel(%arg0: i32, %arg1: memref<56x512xf32, #tpu.memory_space<vmem>>, %arg2: memref<1x512xf32, #tpu.memory_space<vmem>>, %arg3: memref<1x512xf32, #tpu.memory_space<vmem>>, %arg4: memref<56x512xf32, #tpu.memory_space<vmem>>) attributes {dimension_semantics = [#tpu.dimension_semantics<parallel>], iteration_bounds = array<i64: 1>, scalar_prefetch = 0 : i64, scratch_operands = 0 : i64, tpu.core_type = #tpu.core_type<tc>, window_params = [{transform_indices = @transform_0, window_bounds = array<i64: 56, 512>}, {pipeline_mode = #tpu.pipeline_mode<synchronous>, transform_indices = @transform_1, window_bounds = array<i64: 1, 512>}, {pipeline_mode = #tpu.pipeline_mode<synchronous>, transform_indices = @transform_2, window_bounds = array<i64: 1, 512>}, {transform_indices = @transform_3, window_bounds = array<i64: 56, 512>}]} {
    %c0 = arith.constant 0 : index
    %c0_0 = arith.constant 0 : index
    %0 = vector.load %arg1[%c0, %c0_0] : memref<56x512xf32, #tpu.memory_space<vmem>>, vector<56x512xf32>
    %c0_1 = arith.constant 0 : index
    %c0_2 = arith.constant 0 : index
    %1 = vector.load %arg2[%c0_1, %c0_2] : memref<1x512xf32, #tpu.memory_space<vmem>>, vector<1x512xf32>
    %2 = vector.broadcast %1 : vector<1x512xf32> to vector<56x512xf32>
    %3 = arith.mulf %0, %2 : vector<56x512xf32>
    %c0_3 = arith.constant 0 : index
    %c0_4 = arith.constant 0 : index
    %4 = vector.load %arg3[%c0_3, %c0_4] : memref<1x512xf32, #tpu.memory_space<vmem>>, vector<1x512xf32>
    %5 = vector.broadcast %4 : vector<1x512xf32> to vector<56x512xf32>
    %6 = arith.addf %3, %5 : vector<56x512xf32>
    %cst = arith.constant 0.000000e+00 : f32
    %7 = vector.broadcast %cst : f32 to vector<56x512xf32>
    %8 = arith.maximumf %6, %7 : vector<56x512xf32>
    %c0_5 = arith.constant 0 : index
    %c0_6 = arith.constant 0 : index
    %9 = vector.load %arg4[%c0_5, %c0_6] : memref<56x512xf32, #tpu.memory_space<vmem>>, vector<56x512xf32>
    tpu.vector_store %arg4[%c0_5, %c0_6], %8 {strides = array<i32>} : memref<56x512xf32, #tpu.memory_space<vmem>>, vector<56x512xf32>,
    return
  }
  func.func @transform_0(%arg0: i32) -> (i32, i32) {
    %c0_i32 = arith.constant 0 : i32
    %c0_i32_0 = arith.constant 0 : i32
    return %arg0, %c0_i32 : i32, i32
  }
  func.func @transform_1(%arg0: i32) -> (i32, i32) {
    %c0_i32 = arith.constant 0 : i32
    %c0_i32_0 = arith.constant 0 : i32
    %c0_i32_1 = arith.constant 0 : i32
    return %c0_i32, %c0_i32_0 : i32, i32
  }
  func.func @transform_2(%arg0: i32) -> (i32, i32) {
    %c0_i32 = arith.constant 0 : i32
    %c0_i32_0 = arith.constant 0 : i32
    %c0_i32_1 = arith.constant 0 : i32
    return %c0_i32, %c0_i32_0 : i32, i32
  }
  func.func @transform_3(%arg0: i32) -> (i32, i32) {
    %c0_i32 = arith.constant 0 : i32
    %c0_i32_0 = arith.constant 0 : i32
    return %arg0, %c0_i32 : i32, i32
  }
}

module attributes {stable_mosaic.version = 11 : i64} {
  func.func @linear_kernel(%arg0: memref<2x2048xbf16, #tpu.memory_space<vmem>>, %arg1: memref<2048x512xbf16, #tpu.memory_space<vmem>>, %arg2: memref<1x512xf32, #tpu.memory_space<vmem>>, %arg3: memref<2x512xf32, #tpu.memory_space<vmem>>) attributes {dimension_semantics = [], scalar_prefetch = 0 : i64, scratch_operands = 0 : i64, tpu.core_type = #tpu.core_type<tc>} {
    %c0 = arith.constant 0 : index
    %c0_0 = arith.constant 0 : index
    %0 = vector.load %arg0[%c0, %c0_0] : memref<2x2048xbf16, #tpu.memory_space<vmem>>, vector<2x2048xbf16>
    %c0_1 = arith.constant 0 : index
    %c0_2 = arith.constant 0 : index
    %1 = vector.load %arg1[%c0_1, %c0_2] : memref<2048x512xbf16, #tpu.memory_space<vmem>>, vector<2048x512xbf16>
    %cst = arith.constant dense<0.000000e+00> : vector<2x512xf32>
    %2 = tpu.matmul %0, %1, %cst {dimension_numbers = #tpu.dot_dimension_numbers<[1], [0], [0], [1], [0, 0, 1, 1], [], []>} : vector<2x2048xbf16>, vector<2048x512xbf16>, vector<2x512xf32> -> vector<2x512xf32>
    %c0_3 = arith.constant 0 : index
    %c0_4 = arith.constant 0 : index
    %3 = vector.load %arg2[%c0_3, %c0_4] : memref<1x512xf32, #tpu.memory_space<vmem>>, vector<1x512xf32>
    %4 = vector.broadcast %3 : vector<1x512xf32> to vector<2x512xf32>
    %5 = arith.addf %2, %4 : vector<2x512xf32>
    %cst_5 = arith.constant 0.000000e+00 : f32
    %6 = vector.broadcast %cst_5 : f32 to vector<2x512xf32>
    %7 = arith.maximumf %5, %6 : vector<2x512xf32>
    %c0_6 = arith.constant 0 : index
    %c0_7 = arith.constant 0 : index
    %8 = vector.load %arg3[%c0_6, %c0_7] : memref<2x512xf32, #tpu.memory_space<vmem>>, vector<2x512xf32>
    tpu.vector_store %arg3[%c0_6, %c0_7], %7 {strides = array<i32>} : memref<2x512xf32, #tpu.memory_space<vmem>>, vector<2x512xf32>,
    return
  }
}

module attributes {stable_mosaic.version = 11 : i64} {
  func.func @linear_kernel(%arg0: memref<2x512xbf16, #tpu.memory_space<vmem>>, %arg1: memref<512x32xbf16, #tpu.memory_space<vmem>>, %arg2: memref<1x32xf32, #tpu.memory_space<vmem>>, %arg3: memref<2x32xf32, #tpu.memory_space<vmem>>) attributes {dimension_semantics = [], scalar_prefetch = 0 : i64, scratch_operands = 0 : i64, tpu.core_type = #tpu.core_type<tc>} {
    %c0 = arith.constant 0 : index
    %c0_0 = arith.constant 0 : index
    %0 = vector.load %arg0[%c0, %c0_0] : memref<2x512xbf16, #tpu.memory_space<vmem>>, vector<2x512xbf16>
    %c0_1 = arith.constant 0 : index
    %c0_2 = arith.constant 0 : index
    %1 = vector.load %arg1[%c0_1, %c0_2] : memref<512x32xbf16, #tpu.memory_space<vmem>>, vector<512x32xbf16>
    %cst = arith.constant dense<0.000000e+00> : vector<2x32xf32>
    %2 = tpu.matmul %0, %1, %cst {dimension_numbers = #tpu.dot_dimension_numbers<[1], [0], [0], [1], [0, 0, 1, 1], [], []>} : vector<2x512xbf16>, vector<512x32xbf16>, vector<2x32xf32> -> vector<2x32xf32>
    %c0_3 = arith.constant 0 : index
    %c0_4 = arith.constant 0 : index
    %3 = vector.load %arg2[%c0_3, %c0_4] : memref<1x32xf32, #tpu.memory_space<vmem>>, vector<1x32xf32>
    %4 = vector.broadcast %3 : vector<1x32xf32> to vector<2x32xf32>
    %5 = arith.addf %2, %4 : vector<2x32xf32>
    %c0_5 = arith.constant 0 : index
    %c0_6 = arith.constant 0 : index
    %6 = vector.load %arg3[%c0_5, %c0_6] : memref<2x32xf32, #tpu.memory_space<vmem>>, vector<2x32xf32>
    tpu.vector_store %arg3[%c0_5, %c0_6], %5 {strides = array<i32>} : memref<2x32xf32, #tpu.memory_space<vmem>>, vector<2x32xf32>,
    return
  }
}

</mosaic_0001>

<llo_original>
// kernel: feat_encoder_forward.14
$region0: #{feat_encoder_forward.14}
  #allocation0 [shape = 'u32[]', space=smem, size = 0x4, offset = 0x4, fixed_abs, tag = 'smem constant byte address 0x4 - core index']
  #allocation1 [shape = 'u32[144,128]{1,0:T(1,128)}', space=vmem, size = 0x12000, scoped, tag = 'internal scratch']
  %s0 = inlined_call_operand.vmem [shape: bf16[4608,128], index: 0, kind: input, shape index: {}]
  %s1 = inlined_call_operand.vmem [shape: bf16[128,128], index: 1, kind: input, shape index: {}]
  %s2 = inlined_call_operand.vmem [shape: f32[4608,128], index: 2, kind: output, shape index: {0}]
  %s3 = inlined_call_operand.vmem [shape: f32[9,2,128], index: 3, kind: output, shape index: {1}]
  %4 = xla_tuple %s2, %s3
  %s5 = sld [smem:[#allocation0]]
  $region49: #{feat_encoder_forward.14} parent=0
    _
  %s7 = ssub.s32 1, %s5
  %s8 = scalar_select 0, %s7, %s5
  loop: start=0, step=1, limit=11
  $region2: #{feat_encoder_forward.14} parent=0 // loop_pre_header
    _
  $region3: #{feat_encoder_forward.14} parent=0 // loop_header
    %s10 = sphi 0, %s14
    %p11 = scmp.ge.s32.totalorder %s10, 11
    %s20 = sphi 0, %s22
    %s23 = sphi 0, %s20
    %s24 = sphi 0, %s23
    %s40 = sphi 0, %s24
    %s44 = sphi 0, %s44
    %s46 = sphi 0, %s44
    %s47 = sphi 0, %s46
    %s61 = sphi 0, %s47
    %s67 = sphi 0, %s69
    %s70 = sphi 0, %s67
    %s71 = sphi 0, %s70
    %s87 = sphi 0, %s71
    %s93 = sphi 0, %s95
    %s96 = sphi 0, %s93
    %s97 = sphi 0, %s96
    %s113 = sphi 0, %s97
  $region4: #{feat_encoder_forward.14} parent=0 // loop_header_branch
    %13 = sbr.rel (%p11) target = $region8
  $region5: #{feat_encoder_forward.14} parent=0 // loop_body
    %s15 = ssub.s32 %s10, 1
    %s16 = ssub.s32 %s10, 2
    %s17 = sadd.s32 %s10, 1
    %s18 = ssub.s32 %s10, %s17
    %p19 = scmp.eq.s32.totalorder %s18, 0
    %s21 = sadd.s32 %s20, 1
    %s22 = scalar_select %p19, %s20, %s21
    %p25 = pneg %p19
    %p26 = scmp.eq.s32.totalorder %s10, 8
    %p27 = por %p25, %p26
    %p28 = scmp.ne.s32.totalorder %s20, %s23
    %p29 = scmp.eq.s32.totalorder %s10, 0
    %p30 = por %p28, %p29
    %p31 = scmp.ne.s32.totalorder %s20, %s23
    %p32 = scmp.eq.s32.totalorder %s15, 8
    %p33 = por %p31, %p32
    %p34 = scmp.ne.s32.totalorder %s23, %s24
    %p35 = scmp.eq.s32.totalorder %s15, 0
    %p36 = por %p34, %p35
    %p37 = scmp.ne.s32.totalorder %s23, %s24
    %p38 = scmp.eq.s32.totalorder %s16, 8
    %p39 = por %p37, %p38
    %p41 = scmp.ne.s32.totalorder %s24, %s40
    %p42 = scmp.eq.s32.totalorder %s16, 0
    %p43 = por %p41, %p42
    %s45 = sadd.s32 %s44, 1
    %p48 = scmp.eq.s32.totalorder %s10, 8
    %p49 = scmp.ne.s32.totalorder %s44, %s46
    %p50 = scmp.eq.s32.totalorder %s10, 0
    %p51 = por %p49, %p50
    %p52 = scmp.ne.s32.totalorder %s44, %s46
    %p53 = scmp.eq.s32.totalorder %s15, 8
    %p54 = por %p52, %p53
    %p55 = scmp.ne.s32.totalorder %s46, %s47
    %p56 = scmp.eq.s32.totalorder %s15, 0
    %p57 = por %p55, %p56
    %p58 = scmp.ne.s32.totalorder %s46, %s47
    %p59 = scmp.eq.s32.totalorder %s16, 8
    %p60 = por %p58, %p59
    %p62 = scmp.ne.s32.totalorder %s47, %s61
    %p63 = scmp.eq.s32.totalorder %s16, 0
    %p64 = por %p62, %p63
    %s65 = ssub.s32 %s10, %s17
    %p66 = scmp.eq.s32.totalorder %s65, 0
    %s68 = sadd.s32 %s67, 1
    %s69 = scalar_select %p66, %s67, %s68
    %p72 = pneg %p66
    %p73 = scmp.eq.s32.totalorder %s10, 8
    %p74 = por %p72, %p73
    %p75 = scmp.ne.s32.totalorder %s67, %s70
    %p76 = scmp.eq.s32.totalorder %s10, 0
    %p77 = por %p75, %p76
    %p78 = scmp.ne.s32.totalorder %s67, %s70
    %p79 = scmp.eq.s32.totalorder %s15, 8
    %p80 = por %p78, %p79
    %p81 = scmp.ne.s32.totalorder %s70, %s71
    %p82 = scmp.eq.s32.totalorder %s15, 0
    %p83 = por %p81, %p82
    %p84 = scmp.ne.s32.totalorder %s70, %s71
    %p85 = scmp.eq.s32.totalorder %s16, 8
    %p86 = por %p84, %p85
    %p88 = scmp.ne.s32.totalorder %s71, %s87
    %p89 = scmp.eq.s32.totalorder %s16, 0
    %p90 = por %p88, %p89
    %s91 = ssub.s32 %s10, %s17
    %p92 = scmp.eq.s32.totalorder %s91, 0
    %s94 = sadd.s32 %s93, 1
    %s95 = scalar_select %p92, %s93, %s94
    %p98 = pneg %p92
    %p99 = scmp.eq.s32.totalorder %s10, 8
    %p100 = por %p98, %p99
    %p101 = scmp.ne.s32.totalorder %s93, %s96
    %p102 = scmp.eq.s32.totalorder %s10, 0
    %p103 = por %p101, %p102
    %p104 = scmp.ne.s32.totalorder %s93, %s96
    %p105 = scmp.eq.s32.totalorder %s15, 8
    %p106 = por %p104, %p105
    %p107 = scmp.ne.s32.totalorder %s96, %s97
    %p108 = scmp.eq.s32.totalorder %s15, 0
    %p109 = por %p107, %p108
    %p110 = scmp.ne.s32.totalorder %s96, %s97
    %p111 = scmp.eq.s32.totalorder %s16, 8
    %p112 = por %p110, %p111
    %p114 = scmp.ne.s32.totalorder %s97, %s113
    %p115 = scmp.eq.s32.totalorder %s16, 0
    %p116 = por %p114, %p115
    %p117 = scmp.le.s32.totalorder 1, %s10
    %p118 = scmp.lt.s32.totalorder %s10, 10
    %p119 = pnand %p117, %p118
    %p120 = pneg %p119
    // Predicated region
    $region9: #{feat_encoder_forward.14} parent=5 // pred_check
      _
    $region10: #{feat_encoder_forward.14} parent=5 // pred_check_branch
      %122 = sbr.rel (%p119) target = $region12
    $region11: #{feat_encoder_forward.14} parent=5 // pred_region
      %s123 = ssub.s32 %s10, 1
      // Predicated region
      $region13: #{feat_encoder_forward.14} parent=11 // pred_check
        %p124 = pneg %p57
      $region14: #{feat_encoder_forward.14} parent=11 // pred_check_branch
        %126 = sbr.rel (%p124) target = $region16
      $region15: #{feat_encoder_forward.14} parent=11 // pred_region
        _
      $region16: #{feat_encoder_forward.14} parent=11 // pred_fallthru
        _
    $region12: #{feat_encoder_forward.14} parent=5 // pred_fallthru
      _
    %p127 = scmp.lt.s32.totalorder %s10, 9
    // Predicated region
    $region17: #{feat_encoder_forward.14} parent=5 // pred_check
      %p128 = pneg %p127
    $region18: #{feat_encoder_forward.14} parent=5 // pred_check_branch
      %130 = sbr.rel (%p128) target = $region20
    $region19: #{feat_encoder_forward.14} parent=5 // pred_region
      // Predicated region
      $region21: #{feat_encoder_forward.14} parent=19 // pred_check
        %p131 = pneg %p30
      $region22: #{feat_encoder_forward.14} parent=19 // pred_check_branch
        %133 = sbr.rel (%p131) target = $region24
      $region23: #{feat_encoder_forward.14} parent=19 // pred_region
        %s134 = smul.u32 64, %s10
        %p135 = scmp.lt.s32.totalorder %s134, 575
        %s136 = scalar_select %p135, %s134, 575
        %s137 = smul.addr %s136, 4
        %s138 = scalar_lea.vmem %s0, %s137
        %s139 = smul.u32 64, %s10
      $region24: #{feat_encoder_forward.14} parent=19 // pred_fallthru
        _
    $region20: #{feat_encoder_forward.14} parent=5 // pred_fallthru
      _
    %p140 = scmp.le.s32.totalorder 1, %s10
    %p141 = scmp.lt.s32.totalorder %s10, 10
    %p142 = pnand %p140, %p141
    %p143 = pneg %p142
    // Predicated region
    $region25: #{feat_encoder_forward.14} parent=5 // pred_check
      _
    $region26: #{feat_encoder_forward.14} parent=5 // pred_check_branch
      %145 = sbr.rel (%p142) target = $region28
    $region27: #{feat_encoder_forward.14} parent=5 // pred_region
      %s146 = ssub.s32 %s10, 1
      %s147 = smul.u32 64, %s15
      %p148 = scmp.lt.s32.totalorder %s147, 575
      %s149 = scalar_select %p148, %s147, 575
      %s150 = smul.addr %s149, 4
      %s151 = scalar_lea.vmem %s0, %s150
      %p152 = pneg %p36
      %p153 = pneg %p33
      %p154 = pneg %p57
      %p155 = pneg %p54
      %p156 = pneg %p83
      %p157 = pneg %p80
      %s158 = smul.u32 64, %s15
      %p159 = scmp.lt.s32.totalorder %s158, 575
      %s160 = scalar_select %p159, %s158, 575
      %s161 = smul.addr %s160, 8
      %s162 = scalar_lea.vmem %s2, %s161
      %p163 = pneg %p109
      %p164 = pneg %p106
      %p165 = scmp.lt.s32.totalorder %s15, 8
      %s166 = scalar_select %p165, %s15, 8
      %s167 = smul.addr %s166, 2
      %s168 = scalar_lea.vmem %s3, %s167
      %s169 = smul.u32 64, %s15
      %p170 = scmp.lt.s32.totalorder %s169, 575
      %s171 = scalar_select %p170, %s169, 575
      %s172 = smul.addr %s171, 4
      %s173 = scalar_lea.vmem %s0, %s172
      %s174 = smul.u32 64, %s15
      %s175 = smul.u32 64, %s15
      %p176 = scmp.lt.s32.totalorder %s175, 575
      %s177 = scalar_select %p176, %s175, 575
      %s178 = smul.addr %s177, 8
      %s179 = scalar_lea.vmem %s2, %s178
      %s180 = smul.u32 64, %s15
      %p181 = scmp.lt.s32.totalorder %s15, 8
      %s182 = scalar_select %p181, %s15, 8
      %s183 = smul.addr %s182, 2
      %s184 = scalar_lea.vmem %s3, %s183
      %v186 = vld [vmem:[%s173] sm:$0xf]
      %v187 = vld [vmem:[%s173 + $0x4] sm:$0xf]
      %v188 = vld [vmem:[%s173 + $0x8] sm:$0xf]
      %v189 = vld [vmem:[%s173 + $0xc] sm:$0xf]
      %v190 = vld [vmem:[%s173 + $0x10] sm:$0xf]
      %v191 = vld [vmem:[%s173 + $0x14] sm:$0xf]
      %v192 = vld [vmem:[%s173 + $0x18] sm:$0xf]
      %v193 = vld [vmem:[%s173 + $0x1c] sm:$0xf]
      %v194 = vld [vmem:[%s173 + $0x20] sm:$0xf]
      %v195 = vld [vmem:[%s173 + $0x24] sm:$0xf]
      %v196 = vld [vmem:[%s173 + $0x28] sm:$0xf]
      %v197 = vld [vmem:[%s173 + $0x2c] sm:$0xf]
      %v198 = vld [vmem:[%s173 + $0x30] sm:$0xf]
      %v199 = vld [vmem:[%s173 + $0x34] sm:$0xf]
      %v200 = vld [vmem:[%s173 + $0x38] sm:$0xf]
      %v201 = vld [vmem:[%s173 + $0x3c] sm:$0xf]
      %v202 = vld [vmem:[%s173 + $0x40] sm:$0xf]
      %v203 = vld [vmem:[%s173 + $0x44] sm:$0xf]
      %v204 = vld [vmem:[%s173 + $0x48] sm:$0xf]
      %v205 = vld [vmem:[%s173 + $0x4c] sm:$0xf]
      %v206 = vld [vmem:[%s173 + $0x50] sm:$0xf]
      %v207 = vld [vmem:[%s173 + $0x54] sm:$0xf]
      %v208 = vld [vmem:[%s173 + $0x58] sm:$0xf]
      %v209 = vld [vmem:[%s173 + $0x5c] sm:$0xf]
      %v210 = vld [vmem:[%s173 + $0x60] sm:$0xf]
      %v211 = vld [vmem:[%s173 + $0x64] sm:$0xf]
      %v212 = vld [vmem:[%s173 + $0x68] sm:$0xf]
      %v213 = vld [vmem:[%s173 + $0x6c] sm:$0xf]
      %v214 = vld [vmem:[%s173 + $0x70] sm:$0xf]
      %v215 = vld [vmem:[%s173 + $0x74] sm:$0xf]
      %v216 = vld [vmem:[%s173 + $0x78] sm:$0xf]
      %v217 = vld [vmem:[%s173 + $0x7c] sm:$0xf]
      %v218 = vld [vmem:[%s173 + $0x80] sm:$0xf]
      %v219 = vld [vmem:[%s173 + $0x84] sm:$0xf]
      %v220 = vld [vmem:[%s173 + $0x88] sm:$0xf]
      %v221 = vld [vmem:[%s173 + $0x8c] sm:$0xf]
      %v222 = vld [vmem:[%s173 + $0x90] sm:$0xf]
      %v223 = vld [vmem:[%s173 + $0x94] sm:$0xf]
      %v224 = vld [vmem:[%s173 + $0x98] sm:$0xf]
      %v225 = vld [vmem:[%s173 + $0x9c] sm:$0xf]
      %v226 = vld [vmem:[%s173 + $0xa0] sm:$0xf]
      %v227 = vld [vmem:[%s173 + $0xa4] sm:$0xf]
      %v228 = vld [vmem:[%s173 + $0xa8] sm:$0xf]
      %v229 = vld [vmem:[%s173 + $0xac] sm:$0xf]
      %v230 = vld [vmem:[%s173 + $0xb0] sm:$0xf]
      %v231 = vld [vmem:[%s173 + $0xb4] sm:$0xf]
      %v232 = vld [vmem:[%s173 + $0xb8] sm:$0xf]
      %v233 = vld [vmem:[%s173 + $0xbc] sm:$0xf]
      %v234 = vld [vmem:[%s173 + $0xc0] sm:$0xf]
      %v235 = vld [vmem:[%s173 + $0xc4] sm:$0xf]
      %v236 = vld [vmem:[%s173 + $0xc8] sm:$0xf]
      %v237 = vld [vmem:[%s173 + $0xcc] sm:$0xf]
      %v238 = vld [vmem:[%s173 + $0xd0] sm:$0xf]
      %v239 = vld [vmem:[%s173 + $0xd4] sm:$0xf]
      %v240 = vld [vmem:[%s173 + $0xd8] sm:$0xf]
      %v241 = vld [vmem:[%s173 + $0xdc] sm:$0xf]
      %v242 = vld [vmem:[%s173 + $0xe0] sm:$0xf]
      %v243 = vld [vmem:[%s173 + $0xe4] sm:$0xf]
      %v244 = vld [vmem:[%s173 + $0xe8] sm:$0xf]
      %v245 = vld [vmem:[%s173 + $0xec] sm:$0xf]
      %v246 = vld [vmem:[%s173 + $0xf0] sm:$0xf]
      %v247 = vld [vmem:[%s173 + $0xf4] sm:$0xf]
      %v248 = vld [vmem:[%s173 + $0xf8] sm:$0xf]
      %v249 = vld [vmem:[%s173 + $0xfc] sm:$0xf]
      %v250 = vld [vmem:[%s1] sm:$0xf]
      %v251 = vld [vmem:[%s1 + $0x4] sm:$0xf]
      %v252 = vld [vmem:[%s1 + $0x8] sm:$0xf]
      %v253 = vld [vmem:[%s1 + $0xc] sm:$0xf]
      %v254 = vld [vmem:[%s1 + $0x10] sm:$0xf]
      %v255 = vld [vmem:[%s1 + $0x14] sm:$0xf]
      %v256 = vld [vmem:[%s1 + $0x18] sm:$0xf]
      %v257 = vld [vmem:[%s1 + $0x1c] sm:$0xf]
      %v258 = vld [vmem:[%s1 + $0x20] sm:$0xf]
      %v259 = vld [vmem:[%s1 + $0x24] sm:$0xf]
      %v260 = vld [vmem:[%s1 + $0x28] sm:$0xf]
      %v261 = vld [vmem:[%s1 + $0x2c] sm:$0xf]
      %v262 = vld [vmem:[%s1 + $0x30] sm:$0xf]
      %v263 = vld [vmem:[%s1 + $0x34] sm:$0xf]
      %v264 = vld [vmem:[%s1 + $0x38] sm:$0xf]
      %v265 = vld [vmem:[%s1 + $0x3c] sm:$0xf]
      %v330 = vunpack.c.l.b16 %v186
      %v331 = vunpack.c.l.b16 %v187
      %v332 = vunpack.c.l.b16 %v188
      %v333 = vunpack.c.l.b16 %v189
      %v334 = vunpack.c.l.b16 %v190
      %v335 = vunpack.c.l.b16 %v191
      %v336 = vunpack.c.l.b16 %v192
      %v337 = vunpack.c.l.b16 %v193
      %v338 = vunpack.c.l.b16 %v194
      %v339 = vunpack.c.l.b16 %v195
      %v340 = vunpack.c.l.b16 %v196
      %v341 = vunpack.c.l.b16 %v197
      %v342 = vunpack.c.l.b16 %v198
      %v343 = vunpack.c.l.b16 %v199
      %v344 = vunpack.c.l.b16 %v200
      %v345 = vunpack.c.l.b16 %v201
      %v346 = vunpack.c.l.b16 %v202
      %v347 = vunpack.c.l.b16 %v203
      %v348 = vunpack.c.l.b16 %v204
      %v349 = vunpack.c.l.b16 %v205
      %v350 = vunpack.c.l.b16 %v206
      %v351 = vunpack.c.l.b16 %v207
      %v352 = vunpack.c.l.b16 %v208
      %v353 = vunpack.c.l.b16 %v209
      %v354 = vunpack.c.l.b16 %v210
      %v355 = vunpack.c.l.b16 %v211
      %v356 = vunpack.c.l.b16 %v212
      %v357 = vunpack.c.l.b16 %v213
      %v358 = vunpack.c.l.b16 %v214
      %v359 = vunpack.c.l.b16 %v215
      %v360 = vunpack.c.l.b16 %v216
      %v361 = vunpack.c.l.b16 %v217
      %v362 = vunpack.c.l.b16 %v218
      %v363 = vunpack.c.l.b16 %v219
      %v364 = vunpack.c.l.b16 %v220
      %v365 = vunpack.c.l.b16 %v221
      %v366 = vunpack.c.l.b16 %v222
      %v367 = vunpack.c.l.b16 %v223
      %v368 = vunpack.c.l.b16 %v224
      %v369 = vunpack.c.l.b16 %v225
      %v370 = vunpack.c.l.b16 %v226
      %v371 = vunpack.c.l.b16 %v227
      %v372 = vunpack.c.l.b16 %v228
      %v373 = vunpack.c.l.b16 %v229
      %v374 = vunpack.c.l.b16 %v230
      %v375 = vunpack.c.l.b16 %v231
      %v376 = vunpack.c.l.b16 %v232
      %v377 = vunpack.c.l.b16 %v233
      %v378 = vunpack.c.l.b16 %v234
      %v379 = vunpack.c.l.b16 %v235
      %v380 = vunpack.c.l.b16 %v236
      %v381 = vunpack.c.l.b16 %v237
      %v382 = vunpack.c.l.b16 %v238
      %v383 = vunpack.c.l.b16 %v239
      %v384 = vunpack.c.l.b16 %v240
      %v385 = vunpack.c.l.b16 %v241
      %v386 = vunpack.c.l.b16 %v242
      %v387 = vunpack.c.l.b16 %v243
      %v388 = vunpack.c.l.b16 %v244
      %v389 = vunpack.c.l.b16 %v245
      %v390 = vunpack.c.l.b16 %v246
      %v391 = vunpack.c.l.b16 %v247
      %v392 = vunpack.c.l.b16 %v248
      %v393 = vunpack.c.l.b16 %v249
      %v394 = vpack.c.b16 %v331, %v330
      %v395 = vpack.c.b16 %v333, %v332
      %v396 = vpack.c.b16 %v335, %v334
      %v397 = vpack.c.b16 %v337, %v336
      %v398 = vpack.c.b16 %v339, %v338
      %v399 = vpack.c.b16 %v341, %v340
      %v400 = vpack.c.b16 %v343, %v342
      %v401 = vpack.c.b16 %v345, %v344
      %v402 = vpack.c.b16 %v347, %v346
      %v403 = vpack.c.b16 %v349, %v348
      %v404 = vpack.c.b16 %v351, %v350
      %v405 = vpack.c.b16 %v353, %v352
      %v406 = vpack.c.b16 %v355, %v354
      %v407 = vpack.c.b16 %v357, %v356
      %v408 = vpack.c.b16 %v359, %v358
      %v409 = vpack.c.b16 %v361, %v360
      %v410 = vpack.c.b16 %v363, %v362
      %v411 = vpack.c.b16 %v365, %v364
      %v412 = vpack.c.b16 %v367, %v366
      %v413 = vpack.c.b16 %v369, %v368
      %v414 = vpack.c.b16 %v371, %v370
      %v415 = vpack.c.b16 %v373, %v372
      %v416 = vpack.c.b16 %v375, %v374
      %v417 = vpack.c.b16 %v377, %v376
      %v418 = vpack.c.b16 %v379, %v378
      %v419 = vpack.c.b16 %v381, %v380
      %v420 = vpack.c.b16 %v383, %v382
      %v421 = vpack.c.b16 %v385, %v384
      %v422 = vpack.c.b16 %v387, %v386
      %v423 = vpack.c.b16 %v389, %v388
      %v424 = vpack.c.b16 %v391, %v390
      %v425 = vpack.c.b16 %v393, %v392
      %v474 = vunpack.c.l.b16 %v250
      %v475 = vunpack.c.l.b16 %v251
      %v476 = vunpack.c.l.b16 %v252
      %v477 = vunpack.c.l.b16 %v253
      %v478 = vunpack.c.l.b16 %v254
      %v479 = vunpack.c.l.b16 %v255
      %v480 = vunpack.c.l.b16 %v256
      %v481 = vunpack.c.l.b16 %v257
      %v482 = vunpack.c.l.b16 %v258
      %v483 = vunpack.c.l.b16 %v259
      %v484 = vunpack.c.l.b16 %v260
      %v485 = vunpack.c.l.b16 %v261
      %v486 = vunpack.c.l.b16 %v262
      %v487 = vunpack.c.l.b16 %v263
      %v488 = vunpack.c.l.b16 %v264
      %v489 = vunpack.c.l.b16 %v265
      %v490 = vpack.c.b16 %v475, %v474
      %v491 = vpack.c.b16 %v477, %v476
      %v492 = vpack.c.b16 %v479, %v478
      %v493 = vpack.c.b16 %v481, %v480
      %v494 = vpack.c.b16 %v483, %v482
      %v495 = vpack.c.b16 %v485, %v484
      %v496 = vpack.c.b16 %v487, %v486
      %v497 = vpack.c.b16 %v489, %v488
      %506 = vmatprep.subr.bf16.mxu0 0
      %507 = vmatpush1.bf16.msra.mxu0 %v490
      %508 = vmatprep.subr.bf16.mxu0 0
      %509 = vmatpush1.bf16.msra.mxu0 %v491
      %510 = vmatprep.subr.bf16.mxu0 0
      %511 = vmatpush1.bf16.msra.mxu0 %v492
      %512 = vmatprep.subr.bf16.mxu0 0
      %513 = vmatpush1.bf16.msra.mxu0 %v493
      %514 = vmatprep.subr.bf16.mxu0 0
      %515 = vmatpush1.bf16.msra.mxu0 %v494
      %516 = vmatprep.subr.bf16.mxu0 0
      %517 = vmatpush1.bf16.msra.mxu0 %v495
      %518 = vmatprep.subr.bf16.mxu0 0
      %519 = vmatpush1.bf16.msra.mxu0 %v496
      %520 = vmatprep.subr.bf16.mxu0 0
      %521 = vmatpush1.bf16.msra.mxu0 %v497
      %522 = vmatprep.subr.bf16.mxu0 0
      %523 = vmatpush1.bf16.msra.mxu0 0
      %524 = vmatprep.subr.bf16.mxu0 0
      %525 = vmatpush1.bf16.msra.mxu0 0
      %526 = vmatprep.subr.bf16.mxu0 0
      %527 = vmatpush1.bf16.msra.mxu0 0
      %528 = vmatprep.subr.bf16.mxu0 0
      %529 = vmatpush1.bf16.msra.mxu0 0
      %530 = vmatprep.subr.bf16.mxu0 0
      %531 = vmatpush1.bf16.msra.mxu0 0
      %532 = vmatprep.subr.bf16.mxu0 0
      %533 = vmatpush1.bf16.msra.mxu0 0
      %534 = vmatprep.subr.bf16.mxu0 0
      %535 = vmatpush1.bf16.msra.mxu0 0
      %536 = vmatprep.subr.bf16.mxu0 0
      %537 = vmatpush1.bf16.msra.mxu0 0
      %538 = vmatprep.mubr.bf16.mxu0 0
      %539 = vmatmul.mubr.bf16.gmra.mrb[0].mxu0 %v394
      %v540 = vpop.f32.mrb[0].mxu0
      %v541 = vadd.f32 0.0, %v540
      %v542 = vpop.f32.mrb[0].mxu0
      %v543 = vpop.f32.mrb[0].mxu0
      %v544 = vadd.f32 0.0, %v543
      %v545 = vpop.f32.mrb[0].mxu0
      %546 = vmatprep.mubr.bf16.mxu0 0
      %547 = vmatmul.mubr.bf16.gmra.mrb[0].mxu0 %v395
      %v548 = vpop.f32.mrb[0].mxu0
      %v549 = vadd.f32 0.0, %v548
      %v550 = vpop.f32.mrb[0].mxu0
      %v551 = vpop.f32.mrb[0].mxu0
      %v552 = vadd.f32 0.0, %v551
      %v553 = vpop.f32.mrb[0].mxu0
      %554 = vmatprep.mubr.bf16.mxu0 0
      %555 = vmatmul.mubr.bf16.gmra.mrb[0].mxu0 %v396
      %v556 = vpop.f32.mrb[0].mxu0
      %v557 = vadd.f32 0.0, %v556
      %v558 = vpop.f32.mrb[0].mxu0
      %v559 = vpop.f32.mrb[0].mxu0
      %v560 = vadd.f32 0.0, %v559
      %v561 = vpop.f32.mrb[0].mxu0
      %562 = vmatprep.mubr.bf16.mxu0 0
      %563 = vmatmul.mubr.bf16.gmra.mrb[0].mxu0 %v397
      %v564 = vpop.f32.mrb[0].mxu0
      %v565 = vadd.f32 0.0, %v564
      %v566 = vpop.f32.mrb[0].mxu0
      %v567 = vpop.f32.mrb[0].mxu0
      %v568 = vadd.f32 0.0, %v567
      %v569 = vpop.f32.mrb[0].mxu0
      %570 = vmatprep.mubr.bf16.mxu0 0
      %571 = vmatmul.mubr.bf16.gmra.mrb[0].mxu0 %v398
      %v572 = vpop.f32.mrb[0].mxu0
      %v573 = vadd.f32 0.0, %v572
      %v574 = vpop.f32.mrb[0].mxu0
      %v575 = vpop.f32.mrb[0].mxu0
      %v576 = vadd.f32 0.0, %v575
      %v577 = vpop.f32.mrb[0].mxu0
      %578 = vmatprep.mubr.bf16.mxu0 0
      %579 = vmatmul.mubr.bf16.gmra.mrb[0].mxu0 %v399
      %v580 = vpop.f32.mrb[0].mxu0
      %v581 = vadd.f32 0.0, %v580
      %v582 = vpop.f32.mrb[0].mxu0
      %v583 = vpop.f32.mrb[0].mxu0
      %v584 = vadd.f32 0.0, %v583
      %v585 = vpop.f32.mrb[0].mxu0
      %586 = vmatprep.mubr.bf16.mxu0 0
      %587 = vmatmul.mubr.bf16.gmra.mrb[0].mxu0 %v400
      %v588 = vpop.f32.mrb[0].mxu0
      %v589 = vadd.f32 0.0, %v588
      %v590 = vpop.f32.mrb[0].mxu0
      %v591 = vpop.f32.mrb[0].mxu0
      %v592 = vadd.f32 0.0, %v591
      %v593 = vpop.f32.mrb[0].mxu0
      %594 = vmatprep.mubr.bf16.mxu0 0
      %595 = vmatmul.mubr.bf16.gmra.mrb[0].mxu0 %v401
      %v596 = vpop.f32.mrb[0].mxu0
      %v597 = vadd.f32 0.0, %v596
      %v598 = vpop.f32.mrb[0].mxu0
      %v599 = vpop.f32.mrb[0].mxu0
      %v600 = vadd.f32 0.0, %v599
      %v601 = vpop.f32.mrb[0].mxu0
      %602 = vmatprep.mubr.bf16.mxu0 0
      %603 = vmatmul.mubr.bf16.gmra.mrb[0].mxu0 %v402
      %v604 = vpop.f32.mrb[0].mxu0
      %v605 = vadd.f32 0.0, %v604
      %v606 = vpop.f32.mrb[0].mxu0
      %v607 = vpop.f32.mrb[0].mxu0
      %v608 = vadd.f32 0.0, %v607
      %v609 = vpop.f32.mrb[0].mxu0
      %610 = vmatprep.mubr.bf16.mxu0 0
      %611 = vmatmul.mubr.bf16.gmra.mrb[0].mxu0 %v403
      %v612 = vpop.f32.mrb[0].mxu0
      %v613 = vadd.f32 0.0, %v612
      %v614 = vpop.f32.mrb[0].mxu0
      %v615 = vpop.f32.mrb[0].mxu0
      %v616 = vadd.f32 0.0, %v615
      %v617 = vpop.f32.mrb[0].mxu0
      %618 = vmatprep.mubr.bf16.mxu0 0
      %619 = vmatmul.mubr.bf16.gmra.mrb[0].mxu0 %v404
      %v620 = vpop.f32.mrb[0].mxu0
      %v621 = vadd.f32 0.0, %v620
      %v622 = vpop.f32.mrb[0].mxu0
      %v623 = vpop.f32.mrb[0].mxu0
      %v624 = vadd.f32 0.0, %v623
      %v625 = vpop.f32.mrb[0].mxu0
      %626 = vmatprep.mubr.bf16.mxu0 0
      %627 = vmatmul.mubr.bf16.gmra.mrb[0].mxu0 %v405
      %v628 = vpop.f32.mrb[0].mxu0
      %v629 = vadd.f32 0.0, %v628
      %v630 = vpop.f32.mrb[0].mxu0
      %v631 = vpop.f32.mrb[0].mxu0
      %v632 = vadd.f32 0.0, %v631
      %v633 = vpop.f32.mrb[0].mxu0
      %634 = vmatprep.mubr.bf16.mxu0 0
      %635 = vmatmul.mubr.bf16.gmra.mrb[0].mxu0 %v406
      %v636 = vpop.f32.mrb[0].mxu0
      %v637 = vadd.f32 0.0, %v636
      %v638 = vpop.f32.mrb[0].mxu0
      %v639 = vpop.f32.mrb[0].mxu0
      %v640 = vadd.f32 0.0, %v639
      %v641 = vpop.f32.mrb[0].mxu0
      %642 = vmatprep.mubr.bf16.mxu0 0
      %643 = vmatmul.mubr.bf16.gmra.mrb[0].mxu0 %v407
      %v644 = vpop.f32.mrb[0].mxu0
      %v645 = vadd.f32 0.0, %v644
      %v646 = vpop.f32.mrb[0].mxu0
      %v647 = vpop.f32.mrb[0].mxu0
      %v648 = vadd.f32 0.0, %v647
      %v649 = vpop.f32.mrb[0].mxu0
      %650 = vmatprep.mubr.bf16.mxu0 0
      %651 = vmatmul.mubr.bf16.gmra.mrb[0].mxu0 %v408
      %v652 = vpop.f32.mrb[0].mxu0
      %v653 = vadd.f32 0.0, %v652
      %v654 = vpop.f32.mrb[0].mxu0
      %v655 = vpop.f32.mrb[0].mxu0
      %v656 = vadd.f32 0.0, %v655
      %v657 = vpop.f32.mrb[0].mxu0
      %658 = vmatprep.mubr.bf16.mxu0 0
      %659 = vmatmul.mubr.bf16.gmra.mrb[0].mxu0 %v409
      %v660 = vpop.f32.mrb[0].mxu0
      %v661 = vadd.f32 0.0, %v660
      %v662 = vpop.f32.mrb[0].mxu0
      %v663 = vpop.f32.mrb[0].mxu0
      %v664 = vadd.f32 0.0, %v663
      %v665 = vpop.f32.mrb[0].mxu0
      %666 = vmatprep.mubr.bf16.mxu0 0
      %667 = vmatmul.mubr.bf16.gmra.mrb[0].mxu0 %v410
      %v668 = vpop.f32.mrb[0].mxu0
      %v669 = vadd.f32 0.0, %v668
      %v670 = vpop.f32.mrb[0].mxu0
      %v671 = vpop.f32.mrb[0].mxu0
      %v672 = vadd.f32 0.0, %v671
      %v673 = vpop.f32.mrb[0].mxu0
      %674 = vmatprep.mubr.bf16.mxu0 0
      %675 = vmatmul.mubr.bf16.gmra.mrb[0].mxu0 %v411
      %v676 = vpop.f32.mrb[0].mxu0
      %v677 = vadd.f32 0.0, %v676
      %v678 = vpop.f32.mrb[0].mxu0
      %v679 = vpop.f32.mrb[0].mxu0
      %v680 = vadd.f32 0.0, %v679
      %v681 = vpop.f32.mrb[0].mxu0
      %682 = vmatprep.mubr.bf16.mxu0 0
      %683 = vmatmul.mubr.bf16.gmra.mrb[0].mxu0 %v412
      %v684 = vpop.f32.mrb[0].mxu0
      %v685 = vadd.f32 0.0, %v684
      %v686 = vpop.f32.mrb[0].mxu0
      %v687 = vpop.f32.mrb[0].mxu0
      %v688 = vadd.f32 0.0, %v687
      %v689 = vpop.f32.mrb[0].mxu0
      %690 = vmatprep.mubr.bf16.mxu0 0
      %691 = vmatmul.mubr.bf16.gmra.mrb[0].mxu0 %v413
      %v692 = vpop.f32.mrb[0].mxu0
      %v693 = vadd.f32 0.0, %v692
      %v694 = vpop.f32.mrb[0].mxu0
      %v695 = vpop.f32.mrb[0].mxu0
      %v696 = vadd.f32 0.0, %v695
      %v697 = vpop.f32.mrb[0].mxu0
      %698 = vmatprep.mubr.bf16.mxu0 0
      %699 = vmatmul.mubr.bf16.gmra.mrb[0].mxu0 %v414
      %v700 = vpop.f32.mrb[0].mxu0
      %v701 = vadd.f32 0.0, %v700
      %v702 = vpop.f32.mrb[0].mxu0
      %v703 = vpop.f32.mrb[0].mxu0
      %v704 = vadd.f32 0.0, %v703
      %v705 = vpop.f32.mrb[0].mxu0
      %706 = vmatprep.mubr.bf16.mxu0 0
      %707 = vmatmul.mubr.bf16.gmra.mrb[0].mxu0 %v415
      %v708 = vpop.f32.mrb[0].mxu0
      %v709 = vadd.f32 0.0, %v708
      %v710 = vpop.f32.mrb[0].mxu0
      %v711 = vpop.f32.mrb[0].mxu0
      %v712 = vadd.f32 0.0, %v711
      %v713 = vpop.f32.mrb[0].mxu0
      %714 = vmatprep.mubr.bf16.mxu0 0
      %715 = vmatmul.mubr.bf16.gmra.mrb[0].mxu0 %v416
      %v716 = vpop.f32.mrb[0].mxu0
      %v717 = vadd.f32 0.0, %v716
      %v718 = vpop.f32.mrb[0].mxu0
      %v719 = vpop.f32.mrb[0].mxu0
      %v720 = vadd.f32 0.0, %v719
      %v721 = vpop.f32.mrb[0].mxu0
      %722 = vmatprep.mubr.bf16.mxu0 0
      %723 = vmatmul.mubr.bf16.gmra.mrb[0].mxu0 %v417
      %v724 = vpop.f32.mrb[0].mxu0
      %v725 = vadd.f32 0.0, %v724
      %v726 = vpop.f32.mrb[0].mxu0
      %v727 = vpop.f32.mrb[0].mxu0
      %v728 = vadd.f32 0.0, %v727
      %v729 = vpop.f32.mrb[0].mxu0
      %730 = vmatprep.mubr.bf16.mxu0 0
      %731 = vmatmul.mubr.bf16.gmra.mrb[0].mxu0 %v418
      %v732 = vpop.f32.mrb[0].mxu0
      %v733 = vadd.f32 0.0, %v732
      %v734 = vpop.f32.mrb[0].mxu0
      %v735 = vpop.f32.mrb[0].mxu0
      %v736 = vadd.f32 0.0, %v735
      %v737 = vpop.f32.mrb[0].mxu0
      %738 = vmatprep.mubr.bf16.mxu0 0
      %739 = vmatmul.mubr.bf16.gmra.mrb[0].mxu0 %v419
      %v740 = vpop.f32.mrb[0].mxu0
      %v741 = vadd.f32 0.0, %v740
      %v742 = vpop.f32.mrb[0].mxu0
      %v743 = vpop.f32.mrb[0].mxu0
      %v744 = vadd.f32 0.0, %v743
      %v745 = vpop.f32.mrb[0].mxu0
      %746 = vmatprep.mubr.bf16.mxu0 0
      %747 = vmatmul.mubr.bf16.gmra.mrb[0].mxu0 %v420
      %v748 = vpop.f32.mrb[0].mxu0
      %v749 = vadd.f32 0.0, %v748
      %v750 = vpop.f32.mrb[0].mxu0
      %v751 = vpop.f32.mrb[0].mxu0
      %v752 = vadd.f32 0.0, %v751
      %v753 = vpop.f32.mrb[0].mxu0
      %754 = vmatprep.mubr.bf16.mxu0 0
      %755 = vmatmul.mubr.bf16.gmra.mrb[0].mxu0 %v421
      %v756 = vpop.f32.mrb[0].mxu0
      %v757 = vadd.f32 0.0, %v756
      %v758 = vpop.f32.mrb[0].mxu0
      %v759 = vpop.f32.mrb[0].mxu0
      %v760 = vadd.f32 0.0, %v759
      %v761 = vpop.f32.mrb[0].mxu0
      %762 = vmatprep.mubr.bf16.mxu0 0
      %763 = vmatmul.mubr.bf16.gmra.mrb[0].mxu0 %v422
      %v764 = vpop.f32.mrb[0].mxu0
      %v765 = vadd.f32 0.0, %v764
      %v766 = vpop.f32.mrb[0].mxu0
      %v767 = vpop.f32.mrb[0].mxu0
      %v768 = vadd.f32 0.0, %v767
      %v769 = vpop.f32.mrb[0].mxu0
      %770 = vmatprep.mubr.bf16.mxu0 0
      %771 = vmatmul.mubr.bf16.gmra.mrb[0].mxu0 %v423
      %v772 = vpop.f32.mrb[0].mxu0
      %v773 = vadd.f32 0.0, %v772
      %v774 = vpop.f32.mrb[0].mxu0
      %v775 = vpop.f32.mrb[0].mxu0
      %v776 = vadd.f32 0.0, %v775
      %v777 = vpop.f32.mrb[0].mxu0
      %778 = vmatprep.mubr.bf16.mxu0 0
      %779 = vmatmul.mubr.bf16.gmra.mrb[0].mxu0 %v424
      %v780 = vpop.f32.mrb[0].mxu0
      %v781 = vadd.f32 0.0, %v780
      %v782 = vpop.f32.mrb[0].mxu0
      %v783 = vpop.f32.mrb[0].mxu0
      %v784 = vadd.f32 0.0, %v783
      %v785 = vpop.f32.mrb[0].mxu0
      %786 = vmatprep.mubr.bf16.mxu0 0
      %787 = vmatmul.mubr.bf16.gmra.mrb[0].mxu0 %v425
      %v788 = vpop.f32.mrb[0].mxu0
      %v789 = vadd.f32 0.0, %v788
      %v790 = vpop.f32.mrb[0].mxu0
      %v791 = vpop.f32.mrb[0].mxu0
      %v792 = vadd.f32 0.0, %v791
      %v793 = vpop.f32.mrb[0].mxu0
      %794 = vdwg.mxu0
      %795 = vst [vmem:[%s179] sm:$0xff] %v541
      %796 = vst [vmem:[%s179 + $0x8] sm:$0xff] %v544
      %797 = vst [vmem:[%s179 + $0x10] sm:$0xff] %v549
      %798 = vst [vmem:[%s179 + $0x18] sm:$0xff] %v552
      %799 = vst [vmem:[%s179 + $0x20] sm:$0xff] %v557
      %800 = vst [vmem:[%s179 + $0x28] sm:$0xff] %v560
      %801 = vst [vmem:[%s179 + $0x30] sm:$0xff] %v565
      %802 = vst [vmem:[%s179 + $0x38] sm:$0xff] %v568
      %803 = vst [vmem:[%s179 + $0x40] sm:$0xff] %v573
      %804 = vst [vmem:[%s179 + $0x48] sm:$0xff] %v576
      %805 = vst [vmem:[%s179 + $0x50] sm:$0xff] %v581
      %806 = vst [vmem:[%s179 + $0x58] sm:$0xff] %v584
      %807 = vst [vmem:[%s179 + $0x60] sm:$0xff] %v589
      %808 = vst [vmem:[%s179 + $0x68] sm:$0xff] %v592
      %809 = vst [vmem:[%s179 + $0x70] sm:$0xff] %v597
      %810 = vst [vmem:[%s179 + $0x78] sm:$0xff] %v600
      %811 = vst [vmem:[%s179 + $0x80] sm:$0xff] %v605
      %812 = vst [vmem:[%s179 + $0x88] sm:$0xff] %v608
      %813 = vst [vmem:[%s179 + $0x90] sm:$0xff] %v613
      %814 = vst [vmem:[%s179 + $0x98] sm:$0xff] %v616
      %815 = vst [vmem:[%s179 + $0xa0] sm:$0xff] %v621
      %816 = vst [vmem:[%s179 + $0xa8] sm:$0xff] %v624
      %817 = vst [vmem:[%s179 + $0xb0] sm:$0xff] %v629
      %818 = vst [vmem:[%s179 + $0xb8] sm:$0xff] %v632
      %819 = vst [vmem:[%s179 + $0xc0] sm:$0xff] %v637
      %820 = vst [vmem:[%s179 + $0xc8] sm:$0xff] %v640
      %821 = vst [vmem:[%s179 + $0xd0] sm:$0xff] %v645
      %822 = vst [vmem:[%s179 + $0xd8] sm:$0xff] %v648
      %823 = vst [vmem:[%s179 + $0xe0] sm:$0xff] %v653
      %824 = vst [vmem:[%s179 + $0xe8] sm:$0xff] %v656
      %825 = vst [vmem:[%s179 + $0xf0] sm:$0xff] %v661
      %826 = vst [vmem:[%s179 + $0xf8] sm:$0xff] %v664
      %827 = vst [vmem:[%s179 + $0x100] sm:$0xff] %v669
      %828 = vst [vmem:[%s179 + $0x108] sm:$0xff] %v672
      %829 = vst [vmem:[%s179 + $0x110] sm:$0xff] %v677
      %830 = vst [vmem:[%s179 + $0x118] sm:$0xff] %v680
      %831 = vst [vmem:[%s179 + $0x120] sm:$0xff] %v685
      %832 = vst [vmem:[%s179 + $0x128] sm:$0xff] %v688
      %833 = vst [vmem:[%s179 + $0x130] sm:$0xff] %v693
      %834 = vst [vmem:[%s179 + $0x138] sm:$0xff] %v696
      %835 = vst [vmem:[%s179 + $0x140] sm:$0xff] %v701
      %836 = vst [vmem:[%s179 + $0x148] sm:$0xff] %v704
      %837 = vst [vmem:[%s179 + $0x150] sm:$0xff] %v709
      %838 = vst [vmem:[%s179 + $0x158] sm:$0xff] %v712
      %839 = vst [vmem:[%s179 + $0x160] sm:$0xff] %v717
      %840 = vst [vmem:[%s179 + $0x168] sm:$0xff] %v720
      %841 = vst [vmem:[%s179 + $0x170] sm:$0xff] %v725
      %842 = vst [vmem:[%s179 + $0x178] sm:$0xff] %v728
      %843 = vst [vmem:[%s179 + $0x180] sm:$0xff] %v733
      %844 = vst [vmem:[%s179 + $0x188] sm:$0xff] %v736
      %845 = vst [vmem:[%s179 + $0x190] sm:$0xff] %v741
      %846 = vst [vmem:[%s179 + $0x198] sm:$0xff] %v744
      %847 = vst [vmem:[%s179 + $0x1a0] sm:$0xff] %v749
      %848 = vst [vmem:[%s179 + $0x1a8] sm:$0xff] %v752
      %849 = vst [vmem:[%s179 + $0x1b0] sm:$0xff] %v757
      %850 = vst [vmem:[%s179 + $0x1b8] sm:$0xff] %v760
      %851 = vst [vmem:[%s179 + $0x1c0] sm:$0xff] %v765
      %852 = vst [vmem:[%s179 + $0x1c8] sm:$0xff] %v768
      %853 = vst [vmem:[%s179 + $0x1d0] sm:$0xff] %v773
      %854 = vst [vmem:[%s179 + $0x1d8] sm:$0xff] %v776
      %855 = vst [vmem:[%s179 + $0x1e0] sm:$0xff] %v781
      %856 = vst [vmem:[%s179 + $0x1e8] sm:$0xff] %v784
      %857 = vst [vmem:[%s179 + $0x1f0] sm:$0xff] %v789
      %858 = vst [vmem:[%s179 + $0x1f8] sm:$0xff] %v792
      %v859 = vadd.f32 %v541, %v544
      %v860 = vadd.f32 %v859, %v549
      %v861 = vadd.f32 %v860, %v552
      %v862 = vadd.f32 %v861, %v557
      %v863 = vadd.f32 %v862, %v560
      %v864 = vadd.f32 %v863, %v565
      %v865 = vadd.f32 %v864, %v568
      %v866 = vadd.f32 %v865, %v573
      %v867 = vadd.f32 %v866, %v576
      %v868 = vadd.f32 %v867, %v581
      %v869 = vadd.f32 %v868, %v584
      %v870 = vadd.f32 %v869, %v589
      %v871 = vadd.f32 %v870, %v592
      %v872 = vadd.f32 %v871, %v597
      %v873 = vadd.f32 %v872, %v600
      %v874 = vadd.f32 %v873, %v605
      %v875 = vadd.f32 %v874, %v608
      %v876 = vadd.f32 %v875, %v613
      %v877 = vadd.f32 %v876, %v616
      %v878 = vadd.f32 %v877, %v621
      %v879 = vadd.f32 %v878, %v624
      %v880 = vadd.f32 %v879, %v629
      %v881 = vadd.f32 %v880, %v632
      %v882 = vadd.f32 %v881, %v637
      %v883 = vadd.f32 %v882, %v640
      %v884 = vadd.f32 %v883, %v645
      %v885 = vadd.f32 %v884, %v648
      %v886 = vadd.f32 %v885, %v653
      %v887 = vadd.f32 %v886, %v656
      %v888 = vadd.f32 %v887, %v661
      %v889 = vadd.f32 %v888, %v664
      %v890 = vadd.f32 %v889, %v669
      %v891 = vadd.f32 %v890, %v672
      %v892 = vadd.f32 %v891, %v677
      %v893 = vadd.f32 %v892, %v680
      %v894 = vadd.f32 %v893, %v685
      %v895 = vadd.f32 %v894, %v688
      %v896 = vadd.f32 %v895, %v693
      %v897 = vadd.f32 %v896, %v696
      %v898 = vadd.f32 %v897, %v701
      %v899 = vadd.f32 %v898, %v704
      %v900 = vadd.f32 %v899, %v709
      %v901 = vadd.f32 %v900, %v712
      %v902 = vadd.f32 %v901, %v717
      %v903 = vadd.f32 %v902, %v720
      %v904 = vadd.f32 %v903, %v725
      %v905 = vadd.f32 %v904, %v728
      %v906 = vadd.f32 %v905, %v733
      %v907 = vadd.f32 %v906, %v736
      %v908 = vadd.f32 %v907, %v741
      %v909 = vadd.f32 %v908, %v744
      %v910 = vadd.f32 %v909, %v749
      %v911 = vadd.f32 %v910, %v752
      %v912 = vadd.f32 %v911, %v757
      %v913 = vadd.f32 %v912, %v760
      %v914 = vadd.f32 %v913, %v765
      %v915 = vadd.f32 %v914, %v768
      %v916 = vadd.f32 %v915, %v773
      %v917 = vadd.f32 %v916, %v776
      %v918 = vadd.f32 %v917, %v781
      %v919 = vadd.f32 %v918, %v784
      %v920 = vadd.f32 %v919, %v789
      %v921 = vadd.f32 %v920, %v792
      %v922 = vrot.slane %v921, 4
      %v923 = vadd.f32 %v921, %v922
      %v924 = vrot.slane %v923, 2
      %v925 = vadd.f32 %v923, %v924
      %v926 = vrot.slane %v925, 1
      %v927 = vadd.f32 %v925, %v926
      %v928 = vmul.f32 %v541, %v541
      %v929 = vmul.f32 %v544, %v544
      %v930 = vmul.f32 %v549, %v549
      %v931 = vmul.f32 %v552, %v552
      %v932 = vmul.f32 %v557, %v557
      %v933 = vmul.f32 %v560, %v560
      %v934 = vmul.f32 %v565, %v565
      %v935 = vmul.f32 %v568, %v568
      %v936 = vmul.f32 %v573, %v573
      %v937 = vmul.f32 %v576, %v576
      %v938 = vmul.f32 %v581, %v581
      %v939 = vmul.f32 %v584, %v584
      %v940 = vmul.f32 %v589, %v589
      %v941 = vmul.f32 %v592, %v592
      %v942 = vmul.f32 %v597, %v597
      %v943 = vmul.f32 %v600, %v600
      %v944 = vmul.f32 %v605, %v605
      %v945 = vmul.f32 %v608, %v608
      %v946 = vmul.f32 %v613, %v613
      %v947 = vmul.f32 %v616, %v616
      %v948 = vmul.f32 %v621, %v621
      %v949 = vmul.f32 %v624, %v624
      %v950 = vmul.f32 %v629, %v629
      %v951 = vmul.f32 %v632, %v632
      %v952 = vmul.f32 %v637, %v637
      %v953 = vmul.f32 %v640, %v640
      %v954 = vmul.f32 %v645, %v645
      %v955 = vmul.f32 %v648, %v648
      %v956 = vmul.f32 %v653, %v653
      %v957 = vmul.f32 %v656, %v656
      %v958 = vmul.f32 %v661, %v661
      %v959 = vmul.f32 %v664, %v664
      %v960 = vmul.f32 %v669, %v669
      %v961 = vmul.f32 %v672, %v672
      %v962 = vmul.f32 %v677, %v677
      %v963 = vmul.f32 %v680, %v680
      %v964 = vmul.f32 %v685, %v685
      %v965 = vmul.f32 %v688, %v688
      %v966 = vmul.f32 %v693, %v693
      %v967 = vmul.f32 %v696, %v696
      %v968 = vmul.f32 %v701, %v701
      %v969 = vmul.f32 %v704, %v704
      %v970 = vmul.f32 %v709, %v709
      %v971 = vmul.f32 %v712, %v712
      %v972 = vmul.f32 %v717, %v717
      %v973 = vmul.f32 %v720, %v720
      %v974 = vmul.f32 %v725, %v725
      %v975 = vmul.f32 %v728, %v728
      %v976 = vmul.f32 %v733, %v733
      %v977 = vmul.f32 %v736, %v736
      %v978 = vmul.f32 %v741, %v741
      %v979 = vmul.f32 %v744, %v744
      %v980 = vmul.f32 %v749, %v749
      %v981 = vmul.f32 %v752, %v752
      %v982 = vmul.f32 %v757, %v757
      %v983 = vmul.f32 %v760, %v760
      %v984 = vmul.f32 %v765, %v765
      %v985 = vmul.f32 %v768, %v768
      %v986 = vmul.f32 %v773, %v773
      %v987 = vmul.f32 %v776, %v776
      %v988 = vmul.f32 %v781, %v781
      %v989 = vmul.f32 %v784, %v784
      %v990 = vmul.f32 %v789, %v789
      %v991 = vmul.f32 %v792, %v792
      %v992 = vadd.f32 %v928, %v929
      %v993 = vadd.f32 %v992, %v930
      %v994 = vadd.f32 %v993, %v931
      %v995 = vadd.f32 %v994, %v932
      %v996 = vadd.f32 %v995, %v933
      %v997 = vadd.f32 %v996, %v934
      %v998 = vadd.f32 %v997, %v935
      %v999 = vadd.f32 %v998, %v936
      %v1000 = vadd.f32 %v999, %v937
      %v1001 = vadd.f32 %v1000, %v938
      %v1002 = vadd.f32 %v1001, %v939
      %v1003 = vadd.f32 %v1002, %v940
      %v1004 = vadd.f32 %v1003, %v941
      %v1005 = vadd.f32 %v1004, %v942
      %v1006 = vadd.f32 %v1005, %v943
      %v1007 = vadd.f32 %v1006, %v944
      %v1008 = vadd.f32 %v1007, %v945
      %v1009 = vadd.f32 %v1008, %v946
      %v1010 = vadd.f32 %v1009, %v947
      %v1011 = vadd.f32 %v1010, %v948
      %v1012 = vadd.f32 %v1011, %v949
      %v1013 = vadd.f32 %v1012, %v950
      %v1014 = vadd.f32 %v1013, %v951
      %v1015 = vadd.f32 %v1014, %v952
      %v1016 = vadd.f32 %v1015, %v953
      %v1017 = vadd.f32 %v1016, %v954
      %v1018 = vadd.f32 %v1017, %v955
      %v1019 = vadd.f32 %v1018, %v956
      %v1020 = vadd.f32 %v1019, %v957
      %v1021 = vadd.f32 %v1020, %v958
      %v1022 = vadd.f32 %v1021, %v959
      %v1023 = vadd.f32 %v1022, %v960
      %v1024 = vadd.f32 %v1023, %v961
      %v1025 = vadd.f32 %v1024, %v962
      %v1026 = vadd.f32 %v1025, %v963
      %v1027 = vadd.f32 %v1026, %v964
      %v1028 = vadd.f32 %v1027, %v965
      %v1029 = vadd.f32 %v1028, %v966
      %v1030 = vadd.f32 %v1029, %v967
      %v1031 = vadd.f32 %v1030, %v968
      %v1032 = vadd.f32 %v1031, %v969
      %v1033 = vadd.f32 %v1032, %v970
      %v1034 = vadd.f32 %v1033, %v971
      %v1035 = vadd.f32 %v1034, %v972
      %v1036 = vadd.f32 %v1035, %v973
      %v1037 = vadd.f32 %v1036, %v974
      %v1038 = vadd.f32 %v1037, %v975
      %v1039 = vadd.f32 %v1038, %v976
      %v1040 = vadd.f32 %v1039, %v977
      %v1041 = vadd.f32 %v1040, %v978
      %v1042 = vadd.f32 %v1041, %v979
      %v1043 = vadd.f32 %v1042, %v980
      %v1044 = vadd.f32 %v1043, %v981
      %v1045 = vadd.f32 %v1044, %v982
      %v1046 = vadd.f32 %v1045, %v983
      %v1047 = vadd.f32 %v1046, %v984
      %v1048 = vadd.f32 %v1047, %v985
      %v1049 = vadd.f32 %v1048, %v986
      %v1050 = vadd.f32 %v1049, %v987
      %v1051 = vadd.f32 %v1050, %v988
      %v1052 = vadd.f32 %v1051, %v989
      %v1053 = vadd.f32 %v1052, %v990
      %v1054 = vadd.f32 %v1053, %v991
      %v1055 = vrot.slane %v1054, 4
      %v1056 = vadd.f32 %v1054, %v1055
      %v1057 = vrot.slane %v1056, 2
      %v1058 = vadd.f32 %v1056, %v1057
      %v1059 = vrot.slane %v1058, 1
      %v1060 = vadd.f32 %v1058, %v1059
      %vm1061 = vcmask 1040384
      %v1062 = vsel %vm1061, %v927, %v1060
      %1063 = vst [vmem:[%s184] sm:$0x3] %v1062
      %s1064 = smul.u32 64, %s15
      %p1065 = scmp.lt.s32.totalorder %s1064, 575
      %s1066 = scalar_select %p1065, %s1064, 575
      %s1067 = smul.addr %s1066, 8
      %s1068 = scalar_lea.vmem %s2, %s1067
      %p1069 = scmp.lt.s32.totalorder %s15, 8
      %s1070 = scalar_select %p1069, %s15, 8
      %s1071 = smul.addr %s1070, 2
      %s1072 = scalar_lea.vmem %s3, %s1071
      // Predicated region
      $region29: #{feat_encoder_forward.14} parent=27 // pred_check
        %p1073 = pneg %p80
      $region30: #{feat_encoder_forward.14} parent=27 // pred_check_branch
        %1075 = sbr.rel (%p1073) target = $region32
      $region31: #{feat_encoder_forward.14} parent=27 // pred_region
        %s1076 = smul.u32 64, %s15
      $region32: #{feat_encoder_forward.14} parent=27 // pred_fallthru
        _
      // Predicated region
      $region33: #{feat_encoder_forward.14} parent=27 // pred_check
        %p1077 = pneg %p106
      $region34: #{feat_encoder_forward.14} parent=27 // pred_check_branch
        %1079 = sbr.rel (%p1077) target = $region36
      $region35: #{feat_encoder_forward.14} parent=27 // pred_region
        _
      $region36: #{feat_encoder_forward.14} parent=27 // pred_fallthru
        _
    $region28: #{feat_encoder_forward.14} parent=5 // pred_fallthru
      _
    %p1080 = scmp.le.s32.totalorder 2, %s10
    // Predicated region
    $region37: #{feat_encoder_forward.14} parent=5 // pred_check
      %p1081 = pneg %p1080
    $region38: #{feat_encoder_forward.14} parent=5 // pred_check_branch
      %1083 = sbr.rel (%p1081) target = $region40
    $region39: #{feat_encoder_forward.14} parent=5 // pred_region
      %s1084 = ssub.s32 %s10, 2
      // Predicated region
      $region41: #{feat_encoder_forward.14} parent=39 // pred_check
        %p1085 = pneg %p86
      $region42: #{feat_encoder_forward.14} parent=39 // pred_check_branch
        %1087 = sbr.rel (%p1085) target = $region44
      $region43: #{feat_encoder_forward.14} parent=39 // pred_region
        %s1088 = smul.u32 64, %s16
        %p1089 = scmp.lt.s32.totalorder %s1088, 575
        %s1090 = scalar_select %p1089, %s1088, 575
        %s1091 = smul.addr %s1090, 8
        %s1092 = scalar_lea.vmem %s2, %s1091
      $region44: #{feat_encoder_forward.14} parent=39 // pred_fallthru
        _
      // Predicated region
      $region45: #{feat_encoder_forward.14} parent=39 // pred_check
        %p1093 = pneg %p112
      $region46: #{feat_encoder_forward.14} parent=39 // pred_check_branch
        %1095 = sbr.rel (%p1093) target = $region48
      $region47: #{feat_encoder_forward.14} parent=39 // pred_region
        %p1096 = scmp.lt.s32.totalorder %s16, 8
        %s1097 = scalar_select %p1096, %s16, 8
        %s1098 = smul.addr %s1097, 2
        %s1099 = scalar_lea.vmem %s3, %s1098
      $region48: #{feat_encoder_forward.14} parent=39 // pred_fallthru
        _
    $region40: #{feat_encoder_forward.14} parent=5 // pred_fallthru
      _
  $region6: #{feat_encoder_forward.14} parent=0 // loop_footer
    %s14 = sadd.s32 1, %s10
  $region7: #{feat_encoder_forward.14} parent=0 // loop_footer_branch
    %9 = sbr.rel target = $region3
  $region8: #{feat_encoder_forward.14} parent=0 // loop_exit
    _

// kernel: feat_encoder_forward.15
$region0: #{feat_encoder_forward.15}
  #allocation0 [shape = 'u32[]', space=smem, size = 0x4, offset = 0x4, fixed_abs, tag = 'smem constant byte address 0x4 - core index']
  #allocation1 [shape = 'u32[144,128]{1,0:T(1,128)}', space=vmem, size = 0x12000, scoped, tag = 'internal scratch']
  %s0 = inlined_call_operand.vmem [shape: f32[4608,128], index: 0, kind: input, shape index: {}]
  %s1 = inlined_call_operand.vmem [shape: f32[1,128], index: 1, kind: input, shape index: {}]
  %s2 = inlined_call_operand.vmem [shape: f32[1,128], index: 2, kind: input, shape index: {}]
  %s3 = inlined_call_operand.vmem [shape: f32[4608,128], index: 3, kind: output, shape index: {}]
  %s4 = sld [smem:[#allocation0]]
  $region45: #{feat_encoder_forward.15} parent=0
    _
  %s6 = ssub.s32 1, %s4
  %s7 = scalar_select 0, %s6, %s4
  loop: start=0, step=1, limit=11
  $region2: #{feat_encoder_forward.15} parent=0 // loop_pre_header
    _
  $region3: #{feat_encoder_forward.15} parent=0 // loop_header
    %s9 = sphi 0, %s13
    %p10 = scmp.ge.s32.totalorder %s9, 11
    %s19 = sphi 0, %s21
    %s22 = sphi 0, %s19
    %s23 = sphi 0, %s22
    %s39 = sphi 0, %s23
    %s43 = sphi 0, %s43
    %s45 = sphi 0, %s43
    %s46 = sphi 0, %s45
    %s60 = sphi 0, %s46
    %s64 = sphi 0, %s64
    %s66 = sphi 0, %s64
    %s67 = sphi 0, %s66
    %s81 = sphi 0, %s67
    %s87 = sphi 0, %s89
    %s90 = sphi 0, %s87
    %s91 = sphi 0, %s90
    %s107 = sphi 0, %s91
  $region4: #{feat_encoder_forward.15} parent=0 // loop_header_branch
    %12 = sbr.rel (%p10) target = $region8
  $region5: #{feat_encoder_forward.15} parent=0 // loop_body
    %s14 = ssub.s32 %s9, 1
    %s15 = ssub.s32 %s9, 2
    %s16 = sadd.s32 %s9, 1
    %s17 = ssub.s32 %s9, %s16
    %p18 = scmp.eq.s32.totalorder %s17, 0
    %s20 = sadd.s32 %s19, 1
    %s21 = scalar_select %p18, %s19, %s20
    %p24 = pneg %p18
    %p25 = scmp.eq.s32.totalorder %s9, 8
    %p26 = por %p24, %p25
    %p27 = scmp.ne.s32.totalorder %s19, %s22
    %p28 = scmp.eq.s32.totalorder %s9, 0
    %p29 = por %p27, %p28
    %p30 = scmp.ne.s32.totalorder %s19, %s22
    %p31 = scmp.eq.s32.totalorder %s14, 8
    %p32 = por %p30, %p31
    %p33 = scmp.ne.s32.totalorder %s22, %s23
    %p34 = scmp.eq.s32.totalorder %s14, 0
    %p35 = por %p33, %p34
    %p36 = scmp.ne.s32.totalorder %s22, %s23
    %p37 = scmp.eq.s32.totalorder %s15, 8
    %p38 = por %p36, %p37
    %p40 = scmp.ne.s32.totalorder %s23, %s39
    %p41 = scmp.eq.s32.totalorder %s15, 0
    %p42 = por %p40, %p41
    %s44 = sadd.s32 %s43, 1
    %p47 = scmp.eq.s32.totalorder %s9, 8
    %p48 = scmp.ne.s32.totalorder %s43, %s45
    %p49 = scmp.eq.s32.totalorder %s9, 0
    %p50 = por %p48, %p49
    %p51 = scmp.ne.s32.totalorder %s43, %s45
    %p52 = scmp.eq.s32.totalorder %s14, 8
    %p53 = por %p51, %p52
    %p54 = scmp.ne.s32.totalorder %s45, %s46
    %p55 = scmp.eq.s32.totalorder %s14, 0
    %p56 = por %p54, %p55
    %p57 = scmp.ne.s32.totalorder %s45, %s46
    %p58 = scmp.eq.s32.totalorder %s15, 8
    %p59 = por %p57, %p58
    %p61 = scmp.ne.s32.totalorder %s46, %s60
    %p62 = scmp.eq.s32.totalorder %s15, 0
    %p63 = por %p61, %p62
    %s65 = sadd.s32 %s64, 1
    %p68 = scmp.eq.s32.totalorder %s9, 8
    %p69 = scmp.ne.s32.totalorder %s64, %s66
    %p70 = scmp.eq.s32.totalorder %s9, 0
    %p71 = por %p69, %p70
    %p72 = scmp.ne.s32.totalorder %s64, %s66
    %p73 = scmp.eq.s32.totalorder %s14, 8
    %p74 = por %p72, %p73
    %p75 = scmp.ne.s32.totalorder %s66, %s67
    %p76 = scmp.eq.s32.totalorder %s14, 0
    %p77 = por %p75, %p76
    %p78 = scmp.ne.s32.totalorder %s66, %s67
    %p79 = scmp.eq.s32.totalorder %s15, 8
    %p80 = por %p78, %p79
    %p82 = scmp.ne.s32.totalorder %s67, %s81
    %p83 = scmp.eq.s32.totalorder %s15, 0
    %p84 = por %p82, %p83
    %s85 = ssub.s32 %s9, %s16
    %p86 = scmp.eq.s32.totalorder %s85, 0
    %s88 = sadd.s32 %s87, 1
    %s89 = scalar_select %p86, %s87, %s88
    %p92 = pneg %p86
    %p93 = scmp.eq.s32.totalorder %s9, 8
    %p94 = por %p92, %p93
    %p95 = scmp.ne.s32.totalorder %s87, %s90
    %p96 = scmp.eq.s32.totalorder %s9, 0
    %p97 = por %p95, %p96
    %p98 = scmp.ne.s32.totalorder %s87, %s90
    %p99 = scmp.eq.s32.totalorder %s14, 8
    %p100 = por %p98, %p99
    %p101 = scmp.ne.s32.totalorder %s90, %s91
    %p102 = scmp.eq.s32.totalorder %s14, 0
    %p103 = por %p101, %p102
    %p104 = scmp.ne.s32.totalorder %s90, %s91
    %p105 = scmp.eq.s32.totalorder %s15, 8
    %p106 = por %p104, %p105
    %p108 = scmp.ne.s32.totalorder %s91, %s107
    %p109 = scmp.eq.s32.totalorder %s15, 0
    %p110 = por %p108, %p109
    %p111 = scmp.le.s32.totalorder 1, %s9
    %p112 = scmp.lt.s32.totalorder %s9, 10
    %p113 = pnand %p111, %p112
    %p114 = pneg %p113
    // Predicated region
    $region9: #{feat_encoder_forward.15} parent=5 // pred_check
      _
    $region10: #{feat_encoder_forward.15} parent=5 // pred_check_branch
      %116 = sbr.rel (%p113) target = $region12
    $region11: #{feat_encoder_forward.15} parent=5 // pred_region
      %s117 = ssub.s32 %s9, 1
      // Predicated region
      $region13: #{feat_encoder_forward.15} parent=11 // pred_check
        %p118 = pneg %p56
      $region14: #{feat_encoder_forward.15} parent=11 // pred_check_branch
        %120 = sbr.rel (%p118) target = $region16
      $region15: #{feat_encoder_forward.15} parent=11 // pred_region
        _
      $region16: #{feat_encoder_forward.15} parent=11 // pred_fallthru
        _
      // Predicated region
      $region17: #{feat_encoder_forward.15} parent=11 // pred_check
        %p121 = pneg %p77
      $region18: #{feat_encoder_forward.15} parent=11 // pred_check_branch
        %123 = sbr.rel (%p121) target = $region20
      $region19: #{feat_encoder_forward.15} parent=11 // pred_region
        _
      $region20: #{feat_encoder_forward.15} parent=11 // pred_fallthru
        _
    $region12: #{feat_encoder_forward.15} parent=5 // pred_fallthru
      _
    %p124 = scmp.lt.s32.totalorder %s9, 9
    // Predicated region
    $region21: #{feat_encoder_forward.15} parent=5 // pred_check
      %p125 = pneg %p124
    $region22: #{feat_encoder_forward.15} parent=5 // pred_check_branch
      %127 = sbr.rel (%p125) target = $region24
    $region23: #{feat_encoder_forward.15} parent=5 // pred_region
      // Predicated region
      $region25: #{feat_encoder_forward.15} parent=23 // pred_check
        %p128 = pneg %p29
      $region26: #{feat_encoder_forward.15} parent=23 // pred_check_branch
        %130 = sbr.rel (%p128) target = $region28
      $region27: #{feat_encoder_forward.15} parent=23 // pred_region
        %s131 = smul.u32 64, %s9
        %p132 = scmp.lt.s32.totalorder %s131, 575
        %s133 = scalar_select %p132, %s131, 575
        %s134 = smul.addr %s133, 8
        %s135 = scalar_lea.vmem %s0, %s134
        %s136 = smul.u32 64, %s9
      $region28: #{feat_encoder_forward.15} parent=23 // pred_fallthru
        _
    $region24: #{feat_encoder_forward.15} parent=5 // pred_fallthru
      _
    %p137 = scmp.le.s32.totalorder 1, %s9
    %p138 = scmp.lt.s32.totalorder %s9, 10
    %p139 = pnand %p137, %p138
    %p140 = pneg %p139
    // Predicated region
    $region29: #{feat_encoder_forward.15} parent=5 // pred_check
      _
    $region30: #{feat_encoder_forward.15} parent=5 // pred_check_branch
      %142 = sbr.rel (%p139) target = $region32
    $region31: #{feat_encoder_forward.15} parent=5 // pred_region
      %s143 = ssub.s32 %s9, 1
      %s144 = smul.u32 64, %s14
      %p145 = scmp.lt.s32.totalorder %s144, 575
      %s146 = scalar_select %p145, %s144, 575
      %s147 = smul.addr %s146, 8
      %s148 = scalar_lea.vmem %s0, %s147
      %p149 = pneg %p35
      %p150 = pneg %p32
      %p151 = pneg %p56
      %p152 = pneg %p53
      %p153 = pneg %p77
      %p154 = pneg %p74
      %p155 = pneg %p103
      %p156 = pneg %p100
      %s157 = smul.u32 64, %s14
      %p158 = scmp.lt.s32.totalorder %s157, 575
      %s159 = scalar_select %p158, %s157, 575
      %s160 = smul.addr %s159, 8
      %s161 = scalar_lea.vmem %s3, %s160
      %s162 = smul.u32 64, %s14
      %p163 = scmp.lt.s32.totalorder %s162, 575
      %s164 = scalar_select %p163, %s162, 575
      %s165 = smul.addr %s164, 8
      %s166 = scalar_lea.vmem %s0, %s165
      %s167 = smul.u32 64, %s14
      %s168 = smul.u32 64, %s14
      %p169 = scmp.lt.s32.totalorder %s168, 575
      %s170 = scalar_select %p169, %s168, 575
      %s171 = smul.addr %s170, 8
      %s172 = scalar_lea.vmem %s3, %s171
      %s173 = smul.u32 64, %s14
      %v174 = vld [vmem:[%s166] sm:$0xff]
      %v175 = vld [vmem:[%s166 + $0x8] sm:$0xff]
      %v176 = vld [vmem:[%s166 + $0x10] sm:$0xff]
      %v177 = vld [vmem:[%s166 + $0x18] sm:$0xff]
      %v178 = vld [vmem:[%s166 + $0x20] sm:$0xff]
      %v179 = vld [vmem:[%s166 + $0x28] sm:$0xff]
      %v180 = vld [vmem:[%s166 + $0x30] sm:$0xff]
      %v181 = vld [vmem:[%s166 + $0x38] sm:$0xff]
      %v182 = vld [vmem:[%s166 + $0x40] sm:$0xff]
      %v183 = vld [vmem:[%s166 + $0x48] sm:$0xff]
      %v184 = vld [vmem:[%s166 + $0x50] sm:$0xff]
      %v185 = vld [vmem:[%s166 + $0x58] sm:$0xff]
      %v186 = vld [vmem:[%s166 + $0x60] sm:$0xff]
      %v187 = vld [vmem:[%s166 + $0x68] sm:$0xff]
      %v188 = vld [vmem:[%s166 + $0x70] sm:$0xff]
      %v189 = vld [vmem:[%s166 + $0x78] sm:$0xff]
      %v190 = vld [vmem:[%s166 + $0x80] sm:$0xff]
      %v191 = vld [vmem:[%s166 + $0x88] sm:$0xff]
      %v192 = vld [vmem:[%s166 + $0x90] sm:$0xff]
      %v193 = vld [vmem:[%s166 + $0x98] sm:$0xff]
      %v194 = vld [vmem:[%s166 + $0xa0] sm:$0xff]
      %v195 = vld [vmem:[%s166 + $0xa8] sm:$0xff]
      %v196 = vld [vmem:[%s166 + $0xb0] sm:$0xff]
      %v197 = vld [vmem:[%s166 + $0xb8] sm:$0xff]
      %v198 = vld [vmem:[%s166 + $0xc0] sm:$0xff]
      %v199 = vld [vmem:[%s166 + $0xc8] sm:$0xff]
      %v200 = vld [vmem:[%s166 + $0xd0] sm:$0xff]
      %v201 = vld [vmem:[%s166 + $0xd8] sm:$0xff]
      %v202 = vld [vmem:[%s166 + $0xe0] sm:$0xff]
      %v203 = vld [vmem:[%s166 + $0xe8] sm:$0xff]
      %v204 = vld [vmem:[%s166 + $0xf0] sm:$0xff]
      %v205 = vld [vmem:[%s166 + $0xf8] sm:$0xff]
      %v206 = vld [vmem:[%s166 + $0x100] sm:$0xff]
      %v207 = vld [vmem:[%s166 + $0x108] sm:$0xff]
      %v208 = vld [vmem:[%s166 + $0x110] sm:$0xff]
      %v209 = vld [vmem:[%s166 + $0x118] sm:$0xff]
      %v210 = vld [vmem:[%s166 + $0x120] sm:$0xff]
      %v211 = vld [vmem:[%s166 + $0x128] sm:$0xff]
      %v212 = vld [vmem:[%s166 + $0x130] sm:$0xff]
      %v213 = vld [vmem:[%s166 + $0x138] sm:$0xff]
      %v214 = vld [vmem:[%s166 + $0x140] sm:$0xff]
      %v215 = vld [vmem:[%s166 + $0x148] sm:$0xff]
      %v216 = vld [vmem:[%s166 + $0x150] sm:$0xff]
      %v217 = vld [vmem:[%s166 + $0x158] sm:$0xff]
      %v218 = vld [vmem:[%s166 + $0x160] sm:$0xff]
      %v219 = vld [vmem:[%s166 + $0x168] sm:$0xff]
      %v220 = vld [vmem:[%s166 + $0x170] sm:$0xff]
      %v221 = vld [vmem:[%s166 + $0x178] sm:$0xff]
      %v222 = vld [vmem:[%s166 + $0x180] sm:$0xff]
      %v223 = vld [vmem:[%s166 + $0x188] sm:$0xff]
      %v224 = vld [vmem:[%s166 + $0x190] sm:$0xff]
      %v225 = vld [vmem:[%s166 + $0x198] sm:$0xff]
      %v226 = vld [vmem:[%s166 + $0x1a0] sm:$0xff]
      %v227 = vld [vmem:[%s166 + $0x1a8] sm:$0xff]
      %v228 = vld [vmem:[%s166 + $0x1b0] sm:$0xff]
      %v229 = vld [vmem:[%s166 + $0x1b8] sm:$0xff]
      %v230 = vld [vmem:[%s166 + $0x1c0] sm:$0xff]
      %v231 = vld [vmem:[%s166 + $0x1c8] sm:$0xff]
      %v232 = vld [vmem:[%s166 + $0x1d0] sm:$0xff]
      %v233 = vld [vmem:[%s166 + $0x1d8] sm:$0xff]
      %v234 = vld [vmem:[%s166 + $0x1e0] sm:$0xff]
      %v235 = vld [vmem:[%s166 + $0x1e8] sm:$0xff]
      %v236 = vld [vmem:[%s166 + $0x1f0] sm:$0xff]
      %v237 = vld [vmem:[%s166 + $0x1f8] sm:$0xff]
      %v238 = vld [vmem:[%s1] sm:$0x1]
      %v240 = vlaneseq
      %v241 = vshrl.u32 %v240, 7
      %v242 = vsub.s32 0, %v241
      %v243 = vrot.slane %v238, %v242
      %v245 = vmul.f32 %v174, %v243
      %v246 = vmul.f32 %v175, %v243
      %v247 = vmul.f32 %v176, %v243
      %v248 = vmul.f32 %v177, %v243
      %v249 = vmul.f32 %v178, %v243
      %v250 = vmul.f32 %v179, %v243
      %v251 = vmul.f32 %v180, %v243
      %v252 = vmul.f32 %v181, %v243
      %v253 = vmul.f32 %v182, %v243
      %v254 = vmul.f32 %v183, %v243
      %v255 = vmul.f32 %v184, %v243
      %v256 = vmul.f32 %v185, %v243
      %v257 = vmul.f32 %v186, %v243
      %v258 = vmul.f32 %v187, %v243
      %v259 = vmul.f32 %v188, %v243
      %v260 = vmul.f32 %v189, %v243
      %v261 = vmul.f32 %v190, %v243
      %v262 = vmul.f32 %v191, %v243
      %v263 = vmul.f32 %v192, %v243
      %v264 = vmul.f32 %v193, %v243
      %v265 = vmul.f32 %v194, %v243
      %v266 = vmul.f32 %v195, %v243
      %v267 = vmul.f32 %v196, %v243
      %v268 = vmul.f32 %v197, %v243
      %v269 = vmul.f32 %v198, %v243
      %v270 = vmul.f32 %v199, %v243
      %v271 = vmul.f32 %v200, %v243
      %v272 = vmul.f32 %v201, %v243
      %v273 = vmul.f32 %v202, %v243
      %v274 = vmul.f32 %v203, %v243
      %v275 = vmul.f32 %v204, %v243
      %v276 = vmul.f32 %v205, %v243
      %v277 = vmul.f32 %v206, %v243
      %v278 = vmul.f32 %v207, %v243
      %v279 = vmul.f32 %v208, %v243
      %v280 = vmul.f32 %v209, %v243
      %v281 = vmul.f32 %v210, %v243
      %v282 = vmul.f32 %v211, %v243
      %v283 = vmul.f32 %v212, %v243
      %v284 = vmul.f32 %v213, %v243
      %v285 = vmul.f32 %v214, %v243
      %v286 = vmul.f32 %v215, %v243
      %v287 = vmul.f32 %v216, %v243
      %v288 = vmul.f32 %v217, %v243
      %v289 = vmul.f32 %v218, %v243
      %v290 = vmul.f32 %v219, %v243
      %v291 = vmul.f32 %v220, %v243
      %v292 = vmul.f32 %v221, %v243
      %v293 = vmul.f32 %v222, %v243
      %v294 = vmul.f32 %v223, %v243
      %v295 = vmul.f32 %v224, %v243
      %v296 = vmul.f32 %v225, %v243
      %v297 = vmul.f32 %v226, %v243
      %v298 = vmul.f32 %v227, %v243
      %v299 = vmul.f32 %v228, %v243
      %v300 = vmul.f32 %v229, %v243
      %v301 = vmul.f32 %v230, %v243
      %v302 = vmul.f32 %v231, %v243
      %v303 = vmul.f32 %v232, %v243
      %v304 = vmul.f32 %v233, %v243
      %v305 = vmul.f32 %v234, %v243
      %v306 = vmul.f32 %v235, %v243
      %v307 = vmul.f32 %v236, %v243
      %v308 = vmul.f32 %v237, %v243
      %v309 = vld [vmem:[%s2] sm:$0x1]
      %v311 = vlaneseq
      %v312 = vshrl.u32 %v311, 7
      %v313 = vsub.s32 0, %v312
      %v314 = vrot.slane %v309, %v313
      %v316 = vadd.f32 %v245, %v314
      %v317 = vadd.f32 %v246, %v314
      %v318 = vadd.f32 %v247, %v314
      %v319 = vadd.f32 %v248, %v314
      %v320 = vadd.f32 %v249, %v314
      %v321 = vadd.f32 %v250, %v314
      %v322 = vadd.f32 %v251, %v314
      %v323 = vadd.f32 %v252, %v314
      %v324 = vadd.f32 %v253, %v314
      %v325 = vadd.f32 %v254, %v314
      %v326 = vadd.f32 %v255, %v314
      %v327 = vadd.f32 %v256, %v314
      %v328 = vadd.f32 %v257, %v314
      %v329 = vadd.f32 %v258, %v314
      %v330 = vadd.f32 %v259, %v314
      %v331 = vadd.f32 %v260, %v314
      %v332 = vadd.f32 %v261, %v314
      %v333 = vadd.f32 %v262, %v314
      %v334 = vadd.f32 %v263, %v314
      %v335 = vadd.f32 %v264, %v314
      %v336 = vadd.f32 %v265, %v314
      %v337 = vadd.f32 %v266, %v314
      %v338 = vadd.f32 %v267, %v314
      %v339 = vadd.f32 %v268, %v314
      %v340 = vadd.f32 %v269, %v314
      %v341 = vadd.f32 %v270, %v314
      %v342 = vadd.f32 %v271, %v314
      %v343 = vadd.f32 %v272, %v314
      %v344 = vadd.f32 %v273, %v314
      %v345 = vadd.f32 %v274, %v314
      %v346 = vadd.f32 %v275, %v314
      %v347 = vadd.f32 %v276, %v314
      %v348 = vadd.f32 %v277, %v314
      %v349 = vadd.f32 %v278, %v314
      %v350 = vadd.f32 %v279, %v314
      %v351 = vadd.f32 %v280, %v314
      %v352 = vadd.f32 %v281, %v314
      %v353 = vadd.f32 %v282, %v314
      %v354 = vadd.f32 %v283, %v314
      %v355 = vadd.f32 %v284, %v314
      %v356 = vadd.f32 %v285, %v314
      %v357 = vadd.f32 %v286, %v314
      %v358 = vadd.f32 %v287, %v314
      %v359 = vadd.f32 %v288, %v314
      %v360 = vadd.f32 %v289, %v314
      %v361 = vadd.f32 %v290, %v314
      %v362 = vadd.f32 %v291, %v314
      %v363 = vadd.f32 %v292, %v314
      %v364 = vadd.f32 %v293, %v314
      %v365 = vadd.f32 %v294, %v314
      %v366 = vadd.f32 %v295, %v314
      %v367 = vadd.f32 %v296, %v314
      %v368 = vadd.f32 %v297, %v314
      %v369 = vadd.f32 %v298, %v314
      %v370 = vadd.f32 %v299, %v314
      %v371 = vadd.f32 %v300, %v314
      %v372 = vadd.f32 %v301, %v314
      %v373 = vadd.f32 %v302, %v314
      %v374 = vadd.f32 %v303, %v314
      %v375 = vadd.f32 %v304, %v314
      %v376 = vadd.f32 %v305, %v314
      %v377 = vadd.f32 %v306, %v314
      %v378 = vadd.f32 %v307, %v314
      %v379 = vadd.f32 %v308, %v314
      %v380 = vmax.f32 %v316, 0.0
      %v381 = vmax.f32 %v317, 0.0
      %v382 = vmax.f32 %v318, 0.0
      %v383 = vmax.f32 %v319, 0.0
      %v384 = vmax.f32 %v320, 0.0
      %v385 = vmax.f32 %v321, 0.0
      %v386 = vmax.f32 %v322, 0.0
      %v387 = vmax.f32 %v323, 0.0
      %v388 = vmax.f32 %v324, 0.0
      %v389 = vmax.f32 %v325, 0.0
      %v390 = vmax.f32 %v326, 0.0
      %v391 = vmax.f32 %v327, 0.0
      %v392 = vmax.f32 %v328, 0.0
      %v393 = vmax.f32 %v329, 0.0
      %v394 = vmax.f32 %v330, 0.0
      %v395 = vmax.f32 %v331, 0.0
      %v396 = vmax.f32 %v332, 0.0
      %v397 = vmax.f32 %v333, 0.0
      %v398 = vmax.f32 %v334, 0.0
      %v399 = vmax.f32 %v335, 0.0
      %v400 = vmax.f32 %v336, 0.0
      %v401 = vmax.f32 %v337, 0.0
      %v402 = vmax.f32 %v338, 0.0
      %v403 = vmax.f32 %v339, 0.0
      %v404 = vmax.f32 %v340, 0.0
      %v405 = vmax.f32 %v341, 0.0
      %v406 = vmax.f32 %v342, 0.0
      %v407 = vmax.f32 %v343, 0.0
      %v408 = vmax.f32 %v344, 0.0
      %v409 = vmax.f32 %v345, 0.0
      %v410 = vmax.f32 %v346, 0.0
      %v411 = vmax.f32 %v347, 0.0
      %v412 = vmax.f32 %v348, 0.0
      %v413 = vmax.f32 %v349, 0.0
      %v414 = vmax.f32 %v350, 0.0
      %v415 = vmax.f32 %v351, 0.0
      %v416 = vmax.f32 %v352, 0.0
      %v417 = vmax.f32 %v353, 0.0
      %v418 = vmax.f32 %v354, 0.0
      %v419 = vmax.f32 %v355, 0.0
      %v420 = vmax.f32 %v356, 0.0
      %v421 = vmax.f32 %v357, 0.0
      %v422 = vmax.f32 %v358, 0.0
      %v423 = vmax.f32 %v359, 0.0
      %v424 = vmax.f32 %v360, 0.0
      %v425 = vmax.f32 %v361, 0.0
      %v426 = vmax.f32 %v362, 0.0
      %v427 = vmax.f32 %v363, 0.0
      %v428 = vmax.f32 %v364, 0.0
      %v429 = vmax.f32 %v365, 0.0
      %v430 = vmax.f32 %v366, 0.0
      %v431 = vmax.f32 %v367, 0.0
      %v432 = vmax.f32 %v368, 0.0
      %v433 = vmax.f32 %v369, 0.0
      %v434 = vmax.f32 %v370, 0.0
      %v435 = vmax.f32 %v371, 0.0
      %v436 = vmax.f32 %v372, 0.0
      %v437 = vmax.f32 %v373, 0.0
      %v438 = vmax.f32 %v374, 0.0
      %v439 = vmax.f32 %v375, 0.0
      %v440 = vmax.f32 %v376, 0.0
      %v441 = vmax.f32 %v377, 0.0
      %v442 = vmax.f32 %v378, 0.0
      %v443 = vmax.f32 %v379, 0.0
      %444 = vst [vmem:[%s172] sm:$0xff] %v380
      %445 = vst [vmem:[%s172 + $0x8] sm:$0xff] %v381
      %446 = vst [vmem:[%s172 + $0x10] sm:$0xff] %v382
      %447 = vst [vmem:[%s172 + $0x18] sm:$0xff] %v383
      %448 = vst [vmem:[%s172 + $0x20] sm:$0xff] %v384
      %449 = vst [vmem:[%s172 + $0x28] sm:$0xff] %v385
      %450 = vst [vmem:[%s172 + $0x30] sm:$0xff] %v386
      %451 = vst [vmem:[%s172 + $0x38] sm:$0xff] %v387
      %452 = vst [vmem:[%s172 + $0x40] sm:$0xff] %v388
      %453 = vst [vmem:[%s172 + $0x48] sm:$0xff] %v389
      %454 = vst [vmem:[%s172 + $0x50] sm:$0xff] %v390
      %455 = vst [vmem:[%s172 + $0x58] sm:$0xff] %v391
      %456 = vst [vmem:[%s172 + $0x60] sm:$0xff] %v392
      %457 = vst [vmem:[%s172 + $0x68] sm:$0xff] %v393
      %458 = vst [vmem:[%s172 + $0x70] sm:$0xff] %v394
      %459 = vst [vmem:[%s172 + $0x78] sm:$0xff] %v395
      %460 = vst [vmem:[%s172 + $0x80] sm:$0xff] %v396
      %461 = vst [vmem:[%s172 + $0x88] sm:$0xff] %v397
      %462 = vst [vmem:[%s172 + $0x90] sm:$0xff] %v398
      %463 = vst [vmem:[%s172 + $0x98] sm:$0xff] %v399
      %464 = vst [vmem:[%s172 + $0xa0] sm:$0xff] %v400
      %465 = vst [vmem:[%s172 + $0xa8] sm:$0xff] %v401
      %466 = vst [vmem:[%s172 + $0xb0] sm:$0xff] %v402
      %467 = vst [vmem:[%s172 + $0xb8] sm:$0xff] %v403
      %468 = vst [vmem:[%s172 + $0xc0] sm:$0xff] %v404
      %469 = vst [vmem:[%s172 + $0xc8] sm:$0xff] %v405
      %470 = vst [vmem:[%s172 + $0xd0] sm:$0xff] %v406
      %471 = vst [vmem:[%s172 + $0xd8] sm:$0xff] %v407
      %472 = vst [vmem:[%s172 + $0xe0] sm:$0xff] %v408
      %473 = vst [vmem:[%s172 + $0xe8] sm:$0xff] %v409
      %474 = vst [vmem:[%s172 + $0xf0] sm:$0xff] %v410
      %475 = vst [vmem:[%s172 + $0xf8] sm:$0xff] %v411
      %476 = vst [vmem:[%s172 + $0x100] sm:$0xff] %v412
      %477 = vst [vmem:[%s172 + $0x108] sm:$0xff] %v413
      %478 = vst [vmem:[%s172 + $0x110] sm:$0xff] %v414
      %479 = vst [vmem:[%s172 + $0x118] sm:$0xff] %v415
      %480 = vst [vmem:[%s172 + $0x120] sm:$0xff] %v416
      %481 = vst [vmem:[%s172 + $0x128] sm:$0xff] %v417
      %482 = vst [vmem:[%s172 + $0x130] sm:$0xff] %v418
      %483 = vst [vmem:[%s172 + $0x138] sm:$0xff] %v419
      %484 = vst [vmem:[%s172 + $0x140] sm:$0xff] %v420
      %485 = vst [vmem:[%s172 + $0x148] sm:$0xff] %v421
      %486 = vst [vmem:[%s172 + $0x150] sm:$0xff] %v422
      %487 = vst [vmem:[%s172 + $0x158] sm:$0xff] %v423
      %488 = vst [vmem:[%s172 + $0x160] sm:$0xff] %v424
      %489 = vst [vmem:[%s172 + $0x168] sm:$0xff] %v425
      %490 = vst [vmem:[%s172 + $0x170] sm:$0xff] %v426
      %491 = vst [vmem:[%s172 + $0x178] sm:$0xff] %v427
      %492 = vst [vmem:[%s172 + $0x180] sm:$0xff] %v428
      %493 = vst [vmem:[%s172 + $0x188] sm:$0xff] %v429
      %494 = vst [vmem:[%s172 + $0x190] sm:$0xff] %v430
      %495 = vst [vmem:[%s172 + $0x198] sm:$0xff] %v431
      %496 = vst [vmem:[%s172 + $0x1a0] sm:$0xff] %v432
      %497 = vst [vmem:[%s172 + $0x1a8] sm:$0xff] %v433
      %498 = vst [vmem:[%s172 + $0x1b0] sm:$0xff] %v434
      %499 = vst [vmem:[%s172 + $0x1b8] sm:$0xff] %v435
      %500 = vst [vmem:[%s172 + $0x1c0] sm:$0xff] %v436
      %501 = vst [vmem:[%s172 + $0x1c8] sm:$0xff] %v437
      %502 = vst [vmem:[%s172 + $0x1d0] sm:$0xff] %v438
      %503 = vst [vmem:[%s172 + $0x1d8] sm:$0xff] %v439
      %504 = vst [vmem:[%s172 + $0x1e0] sm:$0xff] %v440
      %505 = vst [vmem:[%s172 + $0x1e8] sm:$0xff] %v441
      %506 = vst [vmem:[%s172 + $0x1f0] sm:$0xff] %v442
      %507 = vst [vmem:[%s172 + $0x1f8] sm:$0xff] %v443
      %s508 = smul.u32 64, %s14
      %p509 = scmp.lt.s32.totalorder %s508, 575
      %s510 = scalar_select %p509, %s508, 575
      %s511 = smul.addr %s510, 8
      %s512 = scalar_lea.vmem %s3, %s511
      // Predicated region
      $region33: #{feat_encoder_forward.15} parent=31 // pred_check
        %p513 = pneg %p100
      $region34: #{feat_encoder_forward.15} parent=31 // pred_check_branch
        %515 = sbr.rel (%p513) target = $region36
      $region35: #{feat_encoder_forward.15} parent=31 // pred_region
        %s516 = smul.u32 64, %s14
      $region36: #{feat_encoder_forward.15} parent=31 // pred_fallthru
        _
    $region32: #{feat_encoder_forward.15} parent=5 // pred_fallthru
      _
    %p517 = scmp.le.s32.totalorder 2, %s9
    // Predicated region
    $region37: #{feat_encoder_forward.15} parent=5 // pred_check
      %p518 = pneg %p517
    $region38: #{feat_encoder_forward.15} parent=5 // pred_check_branch
      %520 = sbr.rel (%p518) target = $region40
    $region39: #{feat_encoder_forward.15} parent=5 // pred_region
      %s521 = ssub.s32 %s9, 2
      // Predicated region
      $region41: #{feat_encoder_forward.15} parent=39 // pred_check
        %p522 = pneg %p106
      $region42: #{feat_encoder_forward.15} parent=39 // pred_check_branch
        %524 = sbr.rel (%p522) target = $region44
      $region43: #{feat_encoder_forward.15} parent=39 // pred_region
        %s525 = smul.u32 64, %s15
        %p526 = scmp.lt.s32.totalorder %s525, 575
        %s527 = scalar_select %p526, %s525, 575
        %s528 = smul.addr %s527, 8
        %s529 = scalar_lea.vmem %s3, %s528
      $region44: #{feat_encoder_forward.15} parent=39 // pred_fallthru
        _
    $region40: #{feat_encoder_forward.15} parent=5 // pred_fallthru
      _
  $region6: #{feat_encoder_forward.15} parent=0 // loop_footer
    %s13 = sadd.s32 1, %s9
  $region7: #{feat_encoder_forward.15} parent=0 // loop_footer_branch
    %8 = sbr.rel target = $region3
  $region8: #{feat_encoder_forward.15} parent=0 // loop_exit
    _

// kernel: feat_encoder_forward.19
$region0: #{feat_encoder_forward.19}
  #allocation0 [shape = 'u32[]', space=smem, size = 0x4, offset = 0x4, fixed_abs, tag = 'smem constant byte address 0x4 - core index']
  #allocation1 [shape = 'u32[144,128]{1,0:T(1,128)}', space=vmem, size = 0x12000, scoped, tag = 'internal scratch']
  %s0 = inlined_call_operand.vmem [shape: f32[1024,128], index: 0, kind: input, shape index: {}]
  %s1 = inlined_call_operand.vmem [shape: f32[1,128], index: 1, kind: input, shape index: {}]
  %s2 = inlined_call_operand.vmem [shape: f32[1,128], index: 2, kind: input, shape index: {}]
  %s3 = inlined_call_operand.vmem [shape: f32[1024,128], index: 3, kind: output, shape index: {}]
  %s4 = sld [smem:[#allocation0]]
  $region45: #{feat_encoder_forward.19} parent=0
    _
  %s6 = ssub.s32 1, %s4
  %s7 = scalar_select 0, %s6, %s4
  loop: start=0, step=1, limit=4
  $region2: #{feat_encoder_forward.19} parent=0 // loop_pre_header
    _
  $region3: #{feat_encoder_forward.19} parent=0 // loop_header
    %s9 = sphi 0, %s13
    %p10 = scmp.ge.s32.totalorder %s9, 4
    %s19 = sphi 0, %s21
    %s22 = sphi 0, %s19
    %s23 = sphi 0, %s22
    %s39 = sphi 0, %s23
    %s43 = sphi 0, %s43
    %s45 = sphi 0, %s43
    %s46 = sphi 0, %s45
    %s60 = sphi 0, %s46
    %s64 = sphi 0, %s64
    %s66 = sphi 0, %s64
    %s67 = sphi 0, %s66
    %s81 = sphi 0, %s67
    %s87 = sphi 0, %s89
    %s90 = sphi 0, %s87
    %s91 = sphi 0, %s90
    %s107 = sphi 0, %s91
  $region4: #{feat_encoder_forward.19} parent=0 // loop_header_branch
    %12 = sbr.rel (%p10) target = $region8
  $region5: #{feat_encoder_forward.19} parent=0 // loop_body
    %s14 = ssub.s32 %s9, 1
    %s15 = ssub.s32 %s9, 2
    %s16 = sadd.s32 %s9, 1
    %s17 = ssub.s32 %s9, %s16
    %p18 = scmp.eq.s32.totalorder %s17, 0
    %s20 = sadd.s32 %s19, 1
    %s21 = scalar_select %p18, %s19, %s20
    %p24 = pneg %p18
    %p25 = scmp.eq.s32.totalorder %s9, 1
    %p26 = por %p24, %p25
    %p27 = scmp.ne.s32.totalorder %s19, %s22
    %p28 = scmp.eq.s32.totalorder %s9, 0
    %p29 = por %p27, %p28
    %p30 = scmp.ne.s32.totalorder %s19, %s22
    %p31 = scmp.eq.s32.totalorder %s14, 1
    %p32 = por %p30, %p31
    %p33 = scmp.ne.s32.totalorder %s22, %s23
    %p34 = scmp.eq.s32.totalorder %s14, 0
    %p35 = por %p33, %p34
    %p36 = scmp.ne.s32.totalorder %s22, %s23
    %p37 = scmp.eq.s32.totalorder %s15, 1
    %p38 = por %p36, %p37
    %p40 = scmp.ne.s32.totalorder %s23, %s39
    %p41 = scmp.eq.s32.totalorder %s15, 0
    %p42 = por %p40, %p41
    %s44 = sadd.s32 %s43, 1
    %p47 = scmp.eq.s32.totalorder %s9, 1
    %p48 = scmp.ne.s32.totalorder %s43, %s45
    %p49 = scmp.eq.s32.totalorder %s9, 0
    %p50 = por %p48, %p49
    %p51 = scmp.ne.s32.totalorder %s43, %s45
    %p52 = scmp.eq.s32.totalorder %s14, 1
    %p53 = por %p51, %p52
    %p54 = scmp.ne.s32.totalorder %s45, %s46
    %p55 = scmp.eq.s32.totalorder %s14, 0
    %p56 = por %p54, %p55
    %p57 = scmp.ne.s32.totalorder %s45, %s46
    %p58 = scmp.eq.s32.totalorder %s15, 1
    %p59 = por %p57, %p58
    %p61 = scmp.ne.s32.totalorder %s46, %s60
    %p62 = scmp.eq.s32.totalorder %s15, 0
    %p63 = por %p61, %p62
    %s65 = sadd.s32 %s64, 1
    %p68 = scmp.eq.s32.totalorder %s9, 1
    %p69 = scmp.ne.s32.totalorder %s64, %s66
    %p70 = scmp.eq.s32.totalorder %s9, 0
    %p71 = por %p69, %p70
    %p72 = scmp.ne.s32.totalorder %s64, %s66
    %p73 = scmp.eq.s32.totalorder %s14, 1
    %p74 = por %p72, %p73
    %p75 = scmp.ne.s32.totalorder %s66, %s67
    %p76 = scmp.eq.s32.totalorder %s14, 0
    %p77 = por %p75, %p76
    %p78 = scmp.ne.s32.totalorder %s66, %s67
    %p79 = scmp.eq.s32.totalorder %s15, 1
    %p80 = por %p78, %p79
    %p82 = scmp.ne.s32.totalorder %s67, %s81
    %p83 = scmp.eq.s32.totalorder %s15, 0
    %p84 = por %p82, %p83
    %s85 = ssub.s32 %s9, %s16
    %p86 = scmp.eq.s32.totalorder %s85, 0
    %s88 = sadd.s32 %s87, 1
    %s89 = scalar_select %p86, %s87, %s88
    %p92 = pneg %p86
    %p93 = scmp.eq.s32.totalorder %s9, 1
    %p94 = por %p92, %p93
    %p95 = scmp.ne.s32.totalorder %s87, %s90
    %p96 = scmp.eq.s32.totalorder %s9, 0
    %p97 = por %p95, %p96
    %p98 = scmp.ne.s32.totalorder %s87, %s90
    %p99 = scmp.eq.s32.totalorder %s14, 1
    %p100 = por %p98, %p99
    %p101 = scmp.ne.s32.totalorder %s90, %s91
    %p102 = scmp.eq.s32.totalorder %s14, 0
    %p103 = por %p101, %p102
    %p104 = scmp.ne.s32.totalorder %s90, %s91
    %p105 = scmp.eq.s32.totalorder %s15, 1
    %p106 = por %p104, %p105
    %p108 = scmp.ne.s32.totalorder %s91, %s107
    %p109 = scmp.eq.s32.totalorder %s15, 0
    %p110 = por %p108, %p109
    %p111 = scmp.le.s32.totalorder 1, %s9
    %p112 = scmp.lt.s32.totalorder %s9, 3
    %p113 = pnand %p111, %p112
    %p114 = pneg %p113
    // Predicated region
    $region9: #{feat_encoder_forward.19} parent=5 // pred_check
      _
    $region10: #{feat_encoder_forward.19} parent=5 // pred_check_branch
      %116 = sbr.rel (%p113) target = $region12
    $region11: #{feat_encoder_forward.19} parent=5 // pred_region
      %s117 = ssub.s32 %s9, 1
      // Predicated region
      $region13: #{feat_encoder_forward.19} parent=11 // pred_check
        %p118 = pneg %p56
      $region14: #{feat_encoder_forward.19} parent=11 // pred_check_branch
        %120 = sbr.rel (%p118) target = $region16
      $region15: #{feat_encoder_forward.19} parent=11 // pred_region
        _
      $region16: #{feat_encoder_forward.19} parent=11 // pred_fallthru
        _
      // Predicated region
      $region17: #{feat_encoder_forward.19} parent=11 // pred_check
        %p121 = pneg %p77
      $region18: #{feat_encoder_forward.19} parent=11 // pred_check_branch
        %123 = sbr.rel (%p121) target = $region20
      $region19: #{feat_encoder_forward.19} parent=11 // pred_region
        _
      $region20: #{feat_encoder_forward.19} parent=11 // pred_fallthru
        _
    $region12: #{feat_encoder_forward.19} parent=5 // pred_fallthru
      _
    %p124 = scmp.lt.s32.totalorder %s9, 2
    // Predicated region
    $region21: #{feat_encoder_forward.19} parent=5 // pred_check
      %p125 = pneg %p124
    $region22: #{feat_encoder_forward.19} parent=5 // pred_check_branch
      %127 = sbr.rel (%p125) target = $region24
    $region23: #{feat_encoder_forward.19} parent=5 // pred_region
      // Predicated region
      $region25: #{feat_encoder_forward.19} parent=23 // pred_check
        %p128 = pneg %p29
      $region26: #{feat_encoder_forward.19} parent=23 // pred_check_branch
        %130 = sbr.rel (%p128) target = $region28
      $region27: #{feat_encoder_forward.19} parent=23 // pred_region
        %s131 = smul.u32 64, %s9
        %p132 = scmp.lt.s32.totalorder %s131, 127
        %s133 = scalar_select %p132, %s131, 127
        %s134 = smul.addr %s133, 8
        %s135 = scalar_lea.vmem %s0, %s134
        %s136 = smul.u32 64, %s9
      $region28: #{feat_encoder_forward.19} parent=23 // pred_fallthru
        _
    $region24: #{feat_encoder_forward.19} parent=5 // pred_fallthru
      _
    %p137 = scmp.le.s32.totalorder 1, %s9
    %p138 = scmp.lt.s32.totalorder %s9, 3
    %p139 = pnand %p137, %p138
    %p140 = pneg %p139
    // Predicated region
    $region29: #{feat_encoder_forward.19} parent=5 // pred_check
      _
    $region30: #{feat_encoder_forward.19} parent=5 // pred_check_branch
      %142 = sbr.rel (%p139) target = $region32
    $region31: #{feat_encoder_forward.19} parent=5 // pred_region
      %s143 = ssub.s32 %s9, 1
      %s144 = smul.u32 64, %s14
      %p145 = scmp.lt.s32.totalorder %s144, 127
      %s146 = scalar_select %p145, %s144, 127
      %s147 = smul.addr %s146, 8
      %s148 = scalar_lea.vmem %s0, %s147
      %p149 = pneg %p35
      %p150 = pneg %p32
      %p151 = pneg %p56
      %p152 = pneg %p53
      %p153 = pneg %p77
      %p154 = pneg %p74
      %p155 = pneg %p103
      %p156 = pneg %p100
      %s157 = smul.u32 64, %s14
      %p158 = scmp.lt.s32.totalorder %s157, 127
      %s159 = scalar_select %p158, %s157, 127
      %s160 = smul.addr %s159, 8
      %s161 = scalar_lea.vmem %s3, %s160
      %s162 = smul.u32 64, %s14
      %p163 = scmp.lt.s32.totalorder %s162, 127
      %s164 = scalar_select %p163, %s162, 127
      %s165 = smul.addr %s164, 8
      %s166 = scalar_lea.vmem %s0, %s165
      %s167 = smul.u32 64, %s14
      %s168 = smul.u32 64, %s14
      %p169 = scmp.lt.s32.totalorder %s168, 127
      %s170 = scalar_select %p169, %s168, 127
      %s171 = smul.addr %s170, 8
      %s172 = scalar_lea.vmem %s3, %s171
      %s173 = smul.u32 64, %s14
      %v174 = vld [vmem:[%s166] sm:$0xff]
      %v175 = vld [vmem:[%s166 + $0x8] sm:$0xff]
      %v176 = vld [vmem:[%s166 + $0x10] sm:$0xff]
      %v177 = vld [vmem:[%s166 + $0x18] sm:$0xff]
      %v178 = vld [vmem:[%s166 + $0x20] sm:$0xff]
      %v179 = vld [vmem:[%s166 + $0x28] sm:$0xff]
      %v180 = vld [vmem:[%s166 + $0x30] sm:$0xff]
      %v181 = vld [vmem:[%s166 + $0x38] sm:$0xff]
      %v182 = vld [vmem:[%s166 + $0x40] sm:$0xff]
      %v183 = vld [vmem:[%s166 + $0x48] sm:$0xff]
      %v184 = vld [vmem:[%s166 + $0x50] sm:$0xff]
      %v185 = vld [vmem:[%s166 + $0x58] sm:$0xff]
      %v186 = vld [vmem:[%s166 + $0x60] sm:$0xff]
      %v187 = vld [vmem:[%s166 + $0x68] sm:$0xff]
      %v188 = vld [vmem:[%s166 + $0x70] sm:$0xff]
      %v189 = vld [vmem:[%s166 + $0x78] sm:$0xff]
      %v190 = vld [vmem:[%s166 + $0x80] sm:$0xff]
      %v191 = vld [vmem:[%s166 + $0x88] sm:$0xff]
      %v192 = vld [vmem:[%s166 + $0x90] sm:$0xff]
      %v193 = vld [vmem:[%s166 + $0x98] sm:$0xff]
      %v194 = vld [vmem:[%s166 + $0xa0] sm:$0xff]
      %v195 = vld [vmem:[%s166 + $0xa8] sm:$0xff]
      %v196 = vld [vmem:[%s166 + $0xb0] sm:$0xff]
      %v197 = vld [vmem:[%s166 + $0xb8] sm:$0xff]
      %v198 = vld [vmem:[%s166 + $0xc0] sm:$0xff]
      %v199 = vld [vmem:[%s166 + $0xc8] sm:$0xff]
      %v200 = vld [vmem:[%s166 + $0xd0] sm:$0xff]
      %v201 = vld [vmem:[%s166 + $0xd8] sm:$0xff]
      %v202 = vld [vmem:[%s166 + $0xe0] sm:$0xff]
      %v203 = vld [vmem:[%s166 + $0xe8] sm:$0xff]
      %v204 = vld [vmem:[%s166 + $0xf0] sm:$0xff]
      %v205 = vld [vmem:[%s166 + $0xf8] sm:$0xff]
      %v206 = vld [vmem:[%s166 + $0x100] sm:$0xff]
      %v207 = vld [vmem:[%s166 + $0x108] sm:$0xff]
      %v208 = vld [vmem:[%s166 + $0x110] sm:$0xff]
      %v209 = vld [vmem:[%s166 + $0x118] sm:$0xff]
      %v210 = vld [vmem:[%s166 + $0x120] sm:$0xff]
      %v211 = vld [vmem:[%s166 + $0x128] sm:$0xff]
      %v212 = vld [vmem:[%s166 + $0x130] sm:$0xff]
      %v213 = vld [vmem:[%s166 + $0x138] sm:$0xff]
      %v214 = vld [vmem:[%s166 + $0x140] sm:$0xff]
      %v215 = vld [vmem:[%s166 + $0x148] sm:$0xff]
      %v216 = vld [vmem:[%s166 + $0x150] sm:$0xff]
      %v217 = vld [vmem:[%s166 + $0x158] sm:$0xff]
      %v218 = vld [vmem:[%s166 + $0x160] sm:$0xff]
      %v219 = vld [vmem:[%s166 + $0x168] sm:$0xff]
      %v220 = vld [vmem:[%s166 + $0x170] sm:$0xff]
      %v221 = vld [vmem:[%s166 + $0x178] sm:$0xff]
      %v222 = vld [vmem:[%s166 + $0x180] sm:$0xff]
      %v223 = vld [vmem:[%s166 + $0x188] sm:$0xff]
      %v224 = vld [vmem:[%s166 + $0x190] sm:$0xff]
      %v225 = vld [vmem:[%s166 + $0x198] sm:$0xff]
      %v226 = vld [vmem:[%s166 + $0x1a0] sm:$0xff]
      %v227 = vld [vmem:[%s166 + $0x1a8] sm:$0xff]
      %v228 = vld [vmem:[%s166 + $0x1b0] sm:$0xff]
      %v229 = vld [vmem:[%s166 + $0x1b8] sm:$0xff]
      %v230 = vld [vmem:[%s166 + $0x1c0] sm:$0xff]
      %v231 = vld [vmem:[%s166 + $0x1c8] sm:$0xff]
      %v232 = vld [vmem:[%s166 + $0x1d0] sm:$0xff]
      %v233 = vld [vmem:[%s166 + $0x1d8] sm:$0xff]
      %v234 = vld [vmem:[%s166 + $0x1e0] sm:$0xff]
      %v235 = vld [vmem:[%s166 + $0x1e8] sm:$0xff]
      %v236 = vld [vmem:[%s166 + $0x1f0] sm:$0xff]
      %v237 = vld [vmem:[%s166 + $0x1f8] sm:$0xff]
      %v238 = vld [vmem:[%s1] sm:$0x1]
      %v240 = vlaneseq
      %v241 = vshrl.u32 %v240, 7
      %v242 = vsub.s32 0, %v241
      %v243 = vrot.slane %v238, %v242
      %v245 = vmul.f32 %v174, %v243
      %v246 = vmul.f32 %v175, %v243
      %v247 = vmul.f32 %v176, %v243
      %v248 = vmul.f32 %v177, %v243
      %v249 = vmul.f32 %v178, %v243
      %v250 = vmul.f32 %v179, %v243
      %v251 = vmul.f32 %v180, %v243
      %v252 = vmul.f32 %v181, %v243
      %v253 = vmul.f32 %v182, %v243
      %v254 = vmul.f32 %v183, %v243
      %v255 = vmul.f32 %v184, %v243
      %v256 = vmul.f32 %v185, %v243
      %v257 = vmul.f32 %v186, %v243
      %v258 = vmul.f32 %v187, %v243
      %v259 = vmul.f32 %v188, %v243
      %v260 = vmul.f32 %v189, %v243
      %v261 = vmul.f32 %v190, %v243
      %v262 = vmul.f32 %v191, %v243
      %v263 = vmul.f32 %v192, %v243
      %v264 = vmul.f32 %v193, %v243
      %v265 = vmul.f32 %v194, %v243
      %v266 = vmul.f32 %v195, %v243
      %v267 = vmul.f32 %v196, %v243
      %v268 = vmul.f32 %v197, %v243
      %v269 = vmul.f32 %v198, %v243
      %v270 = vmul.f32 %v199, %v243
      %v271 = vmul.f32 %v200, %v243
      %v272 = vmul.f32 %v201, %v243
      %v273 = vmul.f32 %v202, %v243
      %v274 = vmul.f32 %v203, %v243
      %v275 = vmul.f32 %v204, %v243
      %v276 = vmul.f32 %v205, %v243
      %v277 = vmul.f32 %v206, %v243
      %v278 = vmul.f32 %v207, %v243
      %v279 = vmul.f32 %v208, %v243
      %v280 = vmul.f32 %v209, %v243
      %v281 = vmul.f32 %v210, %v243
      %v282 = vmul.f32 %v211, %v243
      %v283 = vmul.f32 %v212, %v243
      %v284 = vmul.f32 %v213, %v243
      %v285 = vmul.f32 %v214, %v243
      %v286 = vmul.f32 %v215, %v243
      %v287 = vmul.f32 %v216, %v243
      %v288 = vmul.f32 %v217, %v243
      %v289 = vmul.f32 %v218, %v243
      %v290 = vmul.f32 %v219, %v243
      %v291 = vmul.f32 %v220, %v243
      %v292 = vmul.f32 %v221, %v243
      %v293 = vmul.f32 %v222, %v243
      %v294 = vmul.f32 %v223, %v243
      %v295 = vmul.f32 %v224, %v243
      %v296 = vmul.f32 %v225, %v243
      %v297 = vmul.f32 %v226, %v243
      %v298 = vmul.f32 %v227, %v243
      %v299 = vmul.f32 %v228, %v243
      %v300 = vmul.f32 %v229, %v243
      %v301 = vmul.f32 %v230, %v243
      %v302 = vmul.f32 %v231, %v243
      %v303 = vmul.f32 %v232, %v243
      %v304 = vmul.f32 %v233, %v243
      %v305 = vmul.f32 %v234, %v243
      %v306 = vmul.f32 %v235, %v243
      %v307 = vmul.f32 %v236, %v243
      %v308 = vmul.f32 %v237, %v243
      %v309 = vld [vmem:[%s2] sm:$0x1]
      %v311 = vlaneseq
      %v312 = vshrl.u32 %v311, 7
      %v313 = vsub.s32 0, %v312
      %v314 = vrot.slane %v309, %v313
      %v316 = vadd.f32 %v245, %v314
      %v317 = vadd.f32 %v246, %v314
      %v318 = vadd.f32 %v247, %v314
      %v319 = vadd.f32 %v248, %v314
      %v320 = vadd.f32 %v249, %v314
      %v321 = vadd.f32 %v250, %v314
      %v322 = vadd.f32 %v251, %v314
      %v323 = vadd.f32 %v252, %v314
      %v324 = vadd.f32 %v253, %v314
      %v325 = vadd.f32 %v254, %v314
      %v326 = vadd.f32 %v255, %v314
      %v327 = vadd.f32 %v256, %v314
      %v328 = vadd.f32 %v257, %v314
      %v329 = vadd.f32 %v258, %v314
      %v330 = vadd.f32 %v259, %v314
      %v331 = vadd.f32 %v260, %v314
      %v332 = vadd.f32 %v261, %v314
      %v333 = vadd.f32 %v262, %v314
      %v334 = vadd.f32 %v263, %v314
      %v335 = vadd.f32 %v264, %v314
      %v336 = vadd.f32 %v265, %v314
      %v337 = vadd.f32 %v266, %v314
      %v338 = vadd.f32 %v267, %v314
      %v339 = vadd.f32 %v268, %v314
      %v340 = vadd.f32 %v269, %v314
      %v341 = vadd.f32 %v270, %v314
      %v342 = vadd.f32 %v271, %v314
      %v343 = vadd.f32 %v272, %v314
      %v344 = vadd.f32 %v273, %v314
      %v345 = vadd.f32 %v274, %v314
      %v346 = vadd.f32 %v275, %v314
      %v347 = vadd.f32 %v276, %v314
      %v348 = vadd.f32 %v277, %v314
      %v349 = vadd.f32 %v278, %v314
      %v350 = vadd.f32 %v279, %v314
      %v351 = vadd.f32 %v280, %v314
      %v352 = vadd.f32 %v281, %v314
      %v353 = vadd.f32 %v282, %v314
      %v354 = vadd.f32 %v283, %v314
      %v355 = vadd.f32 %v284, %v314
      %v356 = vadd.f32 %v285, %v314
      %v357 = vadd.f32 %v286, %v314
      %v358 = vadd.f32 %v287, %v314
      %v359 = vadd.f32 %v288, %v314
      %v360 = vadd.f32 %v289, %v314
      %v361 = vadd.f32 %v290, %v314
      %v362 = vadd.f32 %v291, %v314
      %v363 = vadd.f32 %v292, %v314
      %v364 = vadd.f32 %v293, %v314
      %v365 = vadd.f32 %v294, %v314
      %v366 = vadd.f32 %v295, %v314
      %v367 = vadd.f32 %v296, %v314
      %v368 = vadd.f32 %v297, %v314
      %v369 = vadd.f32 %v298, %v314
      %v370 = vadd.f32 %v299, %v314
      %v371 = vadd.f32 %v300, %v314
      %v372 = vadd.f32 %v301, %v314
      %v373 = vadd.f32 %v302, %v314
      %v374 = vadd.f32 %v303, %v314
      %v375 = vadd.f32 %v304, %v314
      %v376 = vadd.f32 %v305, %v314
      %v377 = vadd.f32 %v306, %v314
      %v378 = vadd.f32 %v307, %v314
      %v379 = vadd.f32 %v308, %v314
      %v380 = vmax.f32 %v316, 0.0
      %v381 = vmax.f32 %v317, 0.0
      %v382 = vmax.f32 %v318, 0.0
      %v383 = vmax.f32 %v319, 0.0
      %v384 = vmax.f32 %v320, 0.0
      %v385 = vmax.f32 %v321, 0.0
      %v386 = vmax.f32 %v322, 0.0
      %v387 = vmax.f32 %v323, 0.0
      %v388 = vmax.f32 %v324, 0.0
      %v389 = vmax.f32 %v325, 0.0
      %v390 = vmax.f32 %v326, 0.0
      %v391 = vmax.f32 %v327, 0.0
      %v392 = vmax.f32 %v328, 0.0
      %v393 = vmax.f32 %v329, 0.0
      %v394 = vmax.f32 %v330, 0.0
      %v395 = vmax.f32 %v331, 0.0
      %v396 = vmax.f32 %v332, 0.0
      %v397 = vmax.f32 %v333, 0.0
      %v398 = vmax.f32 %v334, 0.0
      %v399 = vmax.f32 %v335, 0.0
      %v400 = vmax.f32 %v336, 0.0
      %v401 = vmax.f32 %v337, 0.0
      %v402 = vmax.f32 %v338, 0.0
      %v403 = vmax.f32 %v339, 0.0
      %v404 = vmax.f32 %v340, 0.0
      %v405 = vmax.f32 %v341, 0.0
      %v406 = vmax.f32 %v342, 0.0
      %v407 = vmax.f32 %v343, 0.0
      %v408 = vmax.f32 %v344, 0.0
      %v409 = vmax.f32 %v345, 0.0
      %v410 = vmax.f32 %v346, 0.0
      %v411 = vmax.f32 %v347, 0.0
      %v412 = vmax.f32 %v348, 0.0
      %v413 = vmax.f32 %v349, 0.0
      %v414 = vmax.f32 %v350, 0.0
      %v415 = vmax.f32 %v351, 0.0
      %v416 = vmax.f32 %v352, 0.0
      %v417 = vmax.f32 %v353, 0.0
      %v418 = vmax.f32 %v354, 0.0
      %v419 = vmax.f32 %v355, 0.0
      %v420 = vmax.f32 %v356, 0.0
      %v421 = vmax.f32 %v357, 0.0
      %v422 = vmax.f32 %v358, 0.0
      %v423 = vmax.f32 %v359, 0.0
      %v424 = vmax.f32 %v360, 0.0
      %v425 = vmax.f32 %v361, 0.0
      %v426 = vmax.f32 %v362, 0.0
      %v427 = vmax.f32 %v363, 0.0
      %v428 = vmax.f32 %v364, 0.0
      %v429 = vmax.f32 %v365, 0.0
      %v430 = vmax.f32 %v366, 0.0
      %v431 = vmax.f32 %v367, 0.0
      %v432 = vmax.f32 %v368, 0.0
      %v433 = vmax.f32 %v369, 0.0
      %v434 = vmax.f32 %v370, 0.0
      %v435 = vmax.f32 %v371, 0.0
      %v436 = vmax.f32 %v372, 0.0
      %v437 = vmax.f32 %v373, 0.0
      %v438 = vmax.f32 %v374, 0.0
      %v439 = vmax.f32 %v375, 0.0
      %v440 = vmax.f32 %v376, 0.0
      %v441 = vmax.f32 %v377, 0.0
      %v442 = vmax.f32 %v378, 0.0
      %v443 = vmax.f32 %v379, 0.0
      %444 = vst [vmem:[%s172] sm:$0xff] %v380
      %445 = vst [vmem:[%s172 + $0x8] sm:$0xff] %v381
      %446 = vst [vmem:[%s172 + $0x10] sm:$0xff] %v382
      %447 = vst [vmem:[%s172 + $0x18] sm:$0xff] %v383
      %448 = vst [vmem:[%s172 + $0x20] sm:$0xff] %v384
      %449 = vst [vmem:[%s172 + $0x28] sm:$0xff] %v385
      %450 = vst [vmem:[%s172 + $0x30] sm:$0xff] %v386
      %451 = vst [vmem:[%s172 + $0x38] sm:$0xff] %v387
      %452 = vst [vmem:[%s172 + $0x40] sm:$0xff] %v388
      %453 = vst [vmem:[%s172 + $0x48] sm:$0xff] %v389
      %454 = vst [vmem:[%s172 + $0x50] sm:$0xff] %v390
      %455 = vst [vmem:[%s172 + $0x58] sm:$0xff] %v391
      %456 = vst [vmem:[%s172 + $0x60] sm:$0xff] %v392
      %457 = vst [vmem:[%s172 + $0x68] sm:$0xff] %v393
      %458 = vst [vmem:[%s172 + $0x70] sm:$0xff] %v394
      %459 = vst [vmem:[%s172 + $0x78] sm:$0xff] %v395
      %460 = vst [vmem:[%s172 + $0x80] sm:$0xff] %v396
      %461 = vst [vmem:[%s172 + $0x88] sm:$0xff] %v397
      %462 = vst [vmem:[%s172 + $0x90] sm:$0xff] %v398
      %463 = vst [vmem:[%s172 + $0x98] sm:$0xff] %v399
      %464 = vst [vmem:[%s172 + $0xa0] sm:$0xff] %v400
      %465 = vst [vmem:[%s172 + $0xa8] sm:$0xff] %v401
      %466 = vst [vmem:[%s172 + $0xb0] sm:$0xff] %v402
      %467 = vst [vmem:[%s172 + $0xb8] sm:$0xff] %v403
      %468 = vst [vmem:[%s172 + $0xc0] sm:$0xff] %v404
      %469 = vst [vmem:[%s172 + $0xc8] sm:$0xff] %v405
      %470 = vst [vmem:[%s172 + $0xd0] sm:$0xff] %v406
      %471 = vst [vmem:[%s172 + $0xd8] sm:$0xff] %v407
      %472 = vst [vmem:[%s172 + $0xe0] sm:$0xff] %v408
      %473 = vst [vmem:[%s172 + $0xe8] sm:$0xff] %v409
      %474 = vst [vmem:[%s172 + $0xf0] sm:$0xff] %v410
      %475 = vst [vmem:[%s172 + $0xf8] sm:$0xff] %v411
      %476 = vst [vmem:[%s172 + $0x100] sm:$0xff] %v412
      %477 = vst [vmem:[%s172 + $0x108] sm:$0xff] %v413
      %478 = vst [vmem:[%s172 + $0x110] sm:$0xff] %v414
      %479 = vst [vmem:[%s172 + $0x118] sm:$0xff] %v415
      %480 = vst [vmem:[%s172 + $0x120] sm:$0xff] %v416
      %481 = vst [vmem:[%s172 + $0x128] sm:$0xff] %v417
      %482 = vst [vmem:[%s172 + $0x130] sm:$0xff] %v418
      %483 = vst [vmem:[%s172 + $0x138] sm:$0xff] %v419
      %484 = vst [vmem:[%s172 + $0x140] sm:$0xff] %v420
      %485 = vst [vmem:[%s172 + $0x148] sm:$0xff] %v421
      %486 = vst [vmem:[%s172 + $0x150] sm:$0xff] %v422
      %487 = vst [vmem:[%s172 + $0x158] sm:$0xff] %v423
      %488 = vst [vmem:[%s172 + $0x160] sm:$0xff] %v424
      %489 = vst [vmem:[%s172 + $0x168] sm:$0xff] %v425
      %490 = vst [vmem:[%s172 + $0x170] sm:$0xff] %v426
      %491 = vst [vmem:[%s172 + $0x178] sm:$0xff] %v427
      %492 = vst [vmem:[%s172 + $0x180] sm:$0xff] %v428
      %493 = vst [vmem:[%s172 + $0x188] sm:$0xff] %v429
      %494 = vst [vmem:[%s172 + $0x190] sm:$0xff] %v430
      %495 = vst [vmem:[%s172 + $0x198] sm:$0xff] %v431
      %496 = vst [vmem:[%s172 + $0x1a0] sm:$0xff] %v432
      %497 = vst [vmem:[%s172 + $0x1a8] sm:$0xff] %v433
      %498 = vst [vmem:[%s172 + $0x1b0] sm:$0xff] %v434
      %499 = vst [vmem:[%s172 + $0x1b8] sm:$0xff] %v435
      %500 = vst [vmem:[%s172 + $0x1c0] sm:$0xff] %v436
      %501 = vst [vmem:[%s172 + $0x1c8] sm:$0xff] %v437
      %502 = vst [vmem:[%s172 + $0x1d0] sm:$0xff] %v438
      %503 = vst [vmem:[%s172 + $0x1d8] sm:$0xff] %v439
      %504 = vst [vmem:[%s172 + $0x1e0] sm:$0xff] %v440
      %505 = vst [vmem:[%s172 + $0x1e8] sm:$0xff] %v441
      %506 = vst [vmem:[%s172 + $0x1f0] sm:$0xff] %v442
      %507 = vst [vmem:[%s172 + $0x1f8] sm:$0xff] %v443
      %s508 = smul.u32 64, %s14
      %p509 = scmp.lt.s32.totalorder %s508, 127
      %s510 = scalar_select %p509, %s508, 127
      %s511 = smul.addr %s510, 8
      %s512 = scalar_lea.vmem %s3, %s511
      // Predicated region
      $region33: #{feat_encoder_forward.19} parent=31 // pred_check
        %p513 = pneg %p100
      $region34: #{feat_encoder_forward.19} parent=31 // pred_check_branch
        %515 = sbr.rel (%p513) target = $region36
      $region35: #{feat_encoder_forward.19} parent=31 // pred_region
        %s516 = smul.u32 64, %s14
      $region36: #{feat_encoder_forward.19} parent=31 // pred_fallthru
        _
    $region32: #{feat_encoder_forward.19} parent=5 // pred_fallthru
      _
    %p517 = scmp.le.s32.totalorder 2, %s9
    // Predicated region
    $region37: #{feat_encoder_forward.19} parent=5 // pred_check
      %p518 = pneg %p517
    $region38: #{feat_encoder_forward.19} parent=5 // pred_check_branch
      %520 = sbr.rel (%p518) target = $region40
    $region39: #{feat_encoder_forward.19} parent=5 // pred_region
      %s521 = ssub.s32 %s9, 2
      // Predicated region
      $region41: #{feat_encoder_forward.19} parent=39 // pred_check
        %p522 = pneg %p106
      $region42: #{feat_encoder_forward.19} parent=39 // pred_check_branch
        %524 = sbr.rel (%p522) target = $region44
      $region43: #{feat_encoder_forward.19} parent=39 // pred_region
        %s525 = smul.u32 64, %s15
        %p526 = scmp.lt.s32.totalorder %s525, 127
        %s527 = scalar_select %p526, %s525, 127
        %s528 = smul.addr %s527, 8
        %s529 = scalar_lea.vmem %s3, %s528
      $region44: #{feat_encoder_forward.19} parent=39 // pred_fallthru
        _
    $region40: #{feat_encoder_forward.19} parent=5 // pred_fallthru
      _
  $region6: #{feat_encoder_forward.19} parent=0 // loop_footer
    %s13 = sadd.s32 1, %s9
  $region7: #{feat_encoder_forward.19} parent=0 // loop_footer_branch
    %8 = sbr.rel target = $region3
  $region8: #{feat_encoder_forward.19} parent=0 // loop_exit
    _

// kernel: feat_encoder_forward.18
$region0: #{feat_encoder_forward.18}
  #allocation0 [shape = 'u32[]', space=smem, size = 0x4, offset = 0x4, fixed_abs, tag = 'smem constant byte address 0x4 - core index']
  #allocation1 [shape = 'u32[144,128]{1,0:T(1,128)}', space=vmem, size = 0x12000, scoped, tag = 'internal scratch']
  %s0 = inlined_call_operand.vmem [shape: bf16[1024,640], index: 0, kind: input, shape index: {}]
  %s1 = inlined_call_operand.vmem [shape: bf16[640,128], index: 1, kind: input, shape index: {}]
  %s2 = inlined_call_operand.vmem [shape: f32[1024,128], index: 2, kind: output, shape index: {0}]
  %s3 = inlined_call_operand.vmem [shape: f32[2,2,128], index: 3, kind: output, shape index: {1}]
  %4 = xla_tuple %s2, %s3
  %s5 = sld [smem:[#allocation0]]
  $region49: #{feat_encoder_forward.18} parent=0
    _
  %s7 = ssub.s32 1, %s5
  %s8 = scalar_select 0, %s7, %s5
  loop: start=0, step=1, limit=4
  $region2: #{feat_encoder_forward.18} parent=0 // loop_pre_header
    _
  $region3: #{feat_encoder_forward.18} parent=0 // loop_header
    %s10 = sphi 0, %s14
    %p11 = scmp.ge.s32.totalorder %s10, 4
    %s20 = sphi 0, %s22
    %s23 = sphi 0, %s20
    %s24 = sphi 0, %s23
    %s40 = sphi 0, %s24
    %s44 = sphi 0, %s44
    %s46 = sphi 0, %s44
    %s47 = sphi 0, %s46
    %s61 = sphi 0, %s47
    %s67 = sphi 0, %s69
    %s70 = sphi 0, %s67
    %s71 = sphi 0, %s70
    %s87 = sphi 0, %s71
    %s93 = sphi 0, %s95
    %s96 = sphi 0, %s93
    %s97 = sphi 0, %s96
    %s113 = sphi 0, %s97
  $region4: #{feat_encoder_forward.18} parent=0 // loop_header_branch
    %13 = sbr.rel (%p11) target = $region8
  $region5: #{feat_encoder_forward.18} parent=0 // loop_body
    %s15 = ssub.s32 %s10, 1
    %s16 = ssub.s32 %s10, 2
    %s17 = sadd.s32 %s10, 1
    %s18 = ssub.s32 %s10, %s17
    %p19 = scmp.eq.s32.totalorder %s18, 0
    %s21 = sadd.s32 %s20, 1
    %s22 = scalar_select %p19, %s20, %s21
    %p25 = pneg %p19
    %p26 = scmp.eq.s32.totalorder %s10, 1
    %p27 = por %p25, %p26
    %p28 = scmp.ne.s32.totalorder %s20, %s23
    %p29 = scmp.eq.s32.totalorder %s10, 0
    %p30 = por %p28, %p29
    %p31 = scmp.ne.s32.totalorder %s20, %s23
    %p32 = scmp.eq.s32.totalorder %s15, 1
    %p33 = por %p31, %p32
    %p34 = scmp.ne.s32.totalorder %s23, %s24
    %p35 = scmp.eq.s32.totalorder %s15, 0
    %p36 = por %p34, %p35
    %p37 = scmp.ne.s32.totalorder %s23, %s24
    %p38 = scmp.eq.s32.totalorder %s16, 1
    %p39 = por %p37, %p38
    %p41 = scmp.ne.s32.totalorder %s24, %s40
    %p42 = scmp.eq.s32.totalorder %s16, 0
    %p43 = por %p41, %p42
    %s45 = sadd.s32 %s44, 1
    %p48 = scmp.eq.s32.totalorder %s10, 1
    %p49 = scmp.ne.s32.totalorder %s44, %s46
    %p50 = scmp.eq.s32.totalorder %s10, 0
    %p51 = por %p49, %p50
    %p52 = scmp.ne.s32.totalorder %s44, %s46
    %p53 = scmp.eq.s32.totalorder %s15, 1
    %p54 = por %p52, %p53
    %p55 = scmp.ne.s32.totalorder %s46, %s47
    %p56 = scmp.eq.s32.totalorder %s15, 0
    %p57 = por %p55, %p56
    %p58 = scmp.ne.s32.totalorder %s46, %s47
    %p59 = scmp.eq.s32.totalorder %s16, 1
    %p60 = por %p58, %p59
    %p62 = scmp.ne.s32.totalorder %s47, %s61
    %p63 = scmp.eq.s32.totalorder %s16, 0
    %p64 = por %p62, %p63
    %s65 = ssub.s32 %s10, %s17
    %p66 = scmp.eq.s32.totalorder %s65, 0
    %s68 = sadd.s32 %s67, 1
    %s69 = scalar_select %p66, %s67, %s68
    %p72 = pneg %p66
    %p73 = scmp.eq.s32.totalorder %s10, 1
    %p74 = por %p72, %p73
    %p75 = scmp.ne.s32.totalorder %s67, %s70
    %p76 = scmp.eq.s32.totalorder %s10, 0
    %p77 = por %p75, %p76
    %p78 = scmp.ne.s32.totalorder %s67, %s70
    %p79 = scmp.eq.s32.totalorder %s15, 1
    %p80 = por %p78, %p79
    %p81 = scmp.ne.s32.totalorder %s70, %s71
    %p82 = scmp.eq.s32.totalorder %s15, 0
    %p83 = por %p81, %p82
    %p84 = scmp.ne.s32.totalorder %s70, %s71
    %p85 = scmp.eq.s32.totalorder %s16, 1
    %p86 = por %p84, %p85
    %p88 = scmp.ne.s32.totalorder %s71, %s87
    %p89 = scmp.eq.s32.totalorder %s16, 0
    %p90 = por %p88, %p89
    %s91 = ssub.s32 %s10, %s17
    %p92 = scmp.eq.s32.totalorder %s91, 0
    %s94 = sadd.s32 %s93, 1
    %s95 = scalar_select %p92, %s93, %s94
    %p98 = pneg %p92
    %p99 = scmp.eq.s32.totalorder %s10, 1
    %p100 = por %p98, %p99
    %p101 = scmp.ne.s32.totalorder %s93, %s96
    %p102 = scmp.eq.s32.totalorder %s10, 0
    %p103 = por %p101, %p102
    %p104 = scmp.ne.s32.totalorder %s93, %s96
    %p105 = scmp.eq.s32.totalorder %s15, 1
    %p106 = por %p104, %p105
    %p107 = scmp.ne.s32.totalorder %s96, %s97
    %p108 = scmp.eq.s32.totalorder %s15, 0
    %p109 = por %p107, %p108
    %p110 = scmp.ne.s32.totalorder %s96, %s97
    %p111 = scmp.eq.s32.totalorder %s16, 1
    %p112 = por %p110, %p111
    %p114 = scmp.ne.s32.totalorder %s97, %s113
    %p115 = scmp.eq.s32.totalorder %s16, 0
    %p116 = por %p114, %p115
    %p117 = scmp.le.s32.totalorder 1, %s10
    %p118 = scmp.lt.s32.totalorder %s10, 3
    %p119 = pnand %p117, %p118
    %p120 = pneg %p119
    // Predicated region
    $region9: #{feat_encoder_forward.18} parent=5 // pred_check
      _
    $region10: #{feat_encoder_forward.18} parent=5 // pred_check_branch
      %122 = sbr.rel (%p119) target = $region12
    $region11: #{feat_encoder_forward.18} parent=5 // pred_region
      %s123 = ssub.s32 %s10, 1
      // Predicated region
      $region13: #{feat_encoder_forward.18} parent=11 // pred_check
        %p124 = pneg %p57
      $region14: #{feat_encoder_forward.18} parent=11 // pred_check_branch
        %126 = sbr.rel (%p124) target = $region16
      $region15: #{feat_encoder_forward.18} parent=11 // pred_region
        _
      $region16: #{feat_encoder_forward.18} parent=11 // pred_fallthru
        _
    $region12: #{feat_encoder_forward.18} parent=5 // pred_fallthru
      _
    %p127 = scmp.lt.s32.totalorder %s10, 2
    // Predicated region
    $region17: #{feat_encoder_forward.18} parent=5 // pred_check
      %p128 = pneg %p127
    $region18: #{feat_encoder_forward.18} parent=5 // pred_check_branch
      %130 = sbr.rel (%p128) target = $region20
    $region19: #{feat_encoder_forward.18} parent=5 // pred_region
      // Predicated region
      $region21: #{feat_encoder_forward.18} parent=19 // pred_check
        %p131 = pneg %p30
      $region22: #{feat_encoder_forward.18} parent=19 // pred_check_branch
        %133 = sbr.rel (%p131) target = $region24
      $region23: #{feat_encoder_forward.18} parent=19 // pred_region
        %s134 = smul.u32 64, %s10
        %p135 = scmp.lt.s32.totalorder %s134, 127
        %s136 = scalar_select %p135, %s134, 127
        %s137 = smul.addr %s136, 5
        %s138 = smul.addr %s137, 4
        %s139 = scalar_lea.vmem %s0, %s138
        %s140 = smul.u32 64, %s10
      $region24: #{feat_encoder_forward.18} parent=19 // pred_fallthru
        _
    $region20: #{feat_encoder_forward.18} parent=5 // pred_fallthru
      _
    %p141 = scmp.le.s32.totalorder 1, %s10
    %p142 = scmp.lt.s32.totalorder %s10, 3
    %p143 = pnand %p141, %p142
    %p144 = pneg %p143
    // Predicated region
    $region25: #{feat_encoder_forward.18} parent=5 // pred_check
      _
    $region26: #{feat_encoder_forward.18} parent=5 // pred_check_branch
      %146 = sbr.rel (%p143) target = $region28
    $region27: #{feat_encoder_forward.18} parent=5 // pred_region
      %s147 = ssub.s32 %s10, 1
      %s148 = smul.u32 64, %s15
      %p149 = scmp.lt.s32.totalorder %s148, 127
      %s150 = scalar_select %p149, %s148, 127
      %s151 = smul.addr %s150, 5
      %s152 = smul.addr %s151, 4
      %s153 = scalar_lea.vmem %s0, %s152
      %p154 = pneg %p36
      %p155 = pneg %p33
      %p156 = pneg %p57
      %p157 = pneg %p54
      %p158 = pneg %p83
      %p159 = pneg %p80
      %s160 = smul.u32 64, %s15
      %p161 = scmp.lt.s32.totalorder %s160, 127
      %s162 = scalar_select %p161, %s160, 127
      %s163 = smul.addr %s162, 8
      %s164 = scalar_lea.vmem %s2, %s163
      %p165 = pneg %p109
      %p166 = pneg %p106
      %p167 = scmp.lt.s32.totalorder %s15, 1
      %s168 = scalar_select %p167, %s15, 1
      %s169 = smul.addr %s168, 2
      %s170 = scalar_lea.vmem %s3, %s169
      %s171 = smul.u32 64, %s15
      %p172 = scmp.lt.s32.totalorder %s171, 127
      %s173 = scalar_select %p172, %s171, 127
      %s174 = smul.addr %s173, 5
      %s175 = smul.addr %s174, 4
      %s176 = scalar_lea.vmem %s0, %s175
      %s177 = smul.u32 64, %s15
      %s178 = smul.u32 64, %s15
      %p179 = scmp.lt.s32.totalorder %s178, 127
      %s180 = scalar_select %p179, %s178, 127
      %s181 = smul.addr %s180, 8
      %s182 = scalar_lea.vmem %s2, %s181
      %s183 = smul.u32 64, %s15
      %p184 = scmp.lt.s32.totalorder %s15, 1
      %s185 = scalar_select %p184, %s15, 1
      %s186 = smul.addr %s185, 2
      %s187 = scalar_lea.vmem %s3, %s186
      %v189 = vld [vmem:[%s176] sm:$0xff]
      %v190 = vld [vmem:[%s176 + $0x8] sm:$0xff]
      %v191 = vld [vmem:[%s176 + $0x10] sm:$0xf]
      %v192 = vld [vmem:[%s176 + $0x14] sm:$0xff]
      %v193 = vld [vmem:[%s176 + $0x1c] sm:$0xff]
      %v194 = vld [vmem:[%s176 + $0x24] sm:$0xf]
      %v195 = vld [vmem:[%s176 + $0x28] sm:$0xff]
      %v196 = vld [vmem:[%s176 + $0x30] sm:$0xff]
      %v197 = vld [vmem:[%s176 + $0x38] sm:$0xf]
      %v198 = vld [vmem:[%s176 + $0x3c] sm:$0xff]
      %v199 = vld [vmem:[%s176 + $0x44] sm:$0xff]
      %v200 = vld [vmem:[%s176 + $0x4c] sm:$0xf]
      %v201 = vld [vmem:[%s176 + $0x50] sm:$0xff]
      %v202 = vld [vmem:[%s176 + $0x58] sm:$0xff]
      %v203 = vld [vmem:[%s176 + $0x60] sm:$0xf]
      %v204 = vld [vmem:[%s176 + $0x64] sm:$0xff]
      %v205 = vld [vmem:[%s176 + $0x6c] sm:$0xff]
      %v206 = vld [vmem:[%s176 + $0x74] sm:$0xf]
      %v207 = vld [vmem:[%s176 + $0x78] sm:$0xff]
      %v208 = vld [vmem:[%s176 + $0x80] sm:$0xff]
      %v209 = vld [vmem:[%s176 + $0x88] sm:$0xf]
      %v210 = vld [vmem:[%s176 + $0x8c] sm:$0xff]
      %v211 = vld [vmem:[%s176 + $0x94] sm:$0xff]
      %v212 = vld [vmem:[%s176 + $0x9c] sm:$0xf]
      %v213 = vld [vmem:[%s176 + $0xa0] sm:$0xff]
      %v214 = vld [vmem:[%s176 + $0xa8] sm:$0xff]
      %v215 = vld [vmem:[%s176 + $0xb0] sm:$0xf]
      %v216 = vld [vmem:[%s176 + $0xb4] sm:$0xff]
      %v217 = vld [vmem:[%s176 + $0xbc] sm:$0xff]
      %v218 = vld [vmem:[%s176 + $0xc4] sm:$0xf]
      %v219 = vld [vmem:[%s176 + $0xc8] sm:$0xff]
      %v220 = vld [vmem:[%s176 + $0xd0] sm:$0xff]
      %v221 = vld [vmem:[%s176 + $0xd8] sm:$0xf]
      %v222 = vld [vmem:[%s176 + $0xdc] sm:$0xff]
      %v223 = vld [vmem:[%s176 + $0xe4] sm:$0xff]
      %v224 = vld [vmem:[%s176 + $0xec] sm:$0xf]
      %v225 = vld [vmem:[%s176 + $0xf0] sm:$0xff]
      %v226 = vld [vmem:[%s176 + $0xf8] sm:$0xff]
      %v227 = vld [vmem:[%s176 + $0x100] sm:$0xf]
      %v228 = vld [vmem:[%s176 + $0x104] sm:$0xff]
      %v229 = vld [vmem:[%s176 + $0x10c] sm:$0xff]
      %v230 = vld [vmem:[%s176 + $0x114] sm:$0xf]
      %v231 = vld [vmem:[%s176 + $0x118] sm:$0xff]
      %v232 = vld [vmem:[%s176 + $0x120] sm:$0xff]
      %v233 = vld [vmem:[%s176 + $0x128] sm:$0xf]
      %v234 = vld [vmem:[%s176 + $0x12c] sm:$0xff]
      %v235 = vld [vmem:[%s176 + $0x134] sm:$0xff]
      %v236 = vld [vmem:[%s176 + $0x13c] sm:$0xf]
      %v237 = vld [vmem:[%s176 + $0x140] sm:$0xff]
      %v238 = vld [vmem:[%s176 + $0x148] sm:$0xff]
      %v239 = vld [vmem:[%s176 + $0x150] sm:$0xf]
      %v240 = vld [vmem:[%s176 + $0x154] sm:$0xff]
      %v241 = vld [vmem:[%s176 + $0x15c] sm:$0xff]
      %v242 = vld [vmem:[%s176 + $0x164] sm:$0xf]
      %v243 = vld [vmem:[%s176 + $0x168] sm:$0xff]
      %v244 = vld [vmem:[%s176 + $0x170] sm:$0xff]
      %v245 = vld [vmem:[%s176 + $0x178] sm:$0xf]
      %v246 = vld [vmem:[%s176 + $0x17c] sm:$0xff]
      %v247 = vld [vmem:[%s176 + $0x184] sm:$0xff]
      %v248 = vld [vmem:[%s176 + $0x18c] sm:$0xf]
      %v249 = vld [vmem:[%s176 + $0x190] sm:$0xff]
      %v250 = vld [vmem:[%s176 + $0x198] sm:$0xff]
      %v251 = vld [vmem:[%s176 + $0x1a0] sm:$0xf]
      %v252 = vld [vmem:[%s176 + $0x1a4] sm:$0xff]
      %v253 = vld [vmem:[%s176 + $0x1ac] sm:$0xff]
      %v254 = vld [vmem:[%s176 + $0x1b4] sm:$0xf]
      %v255 = vld [vmem:[%s176 + $0x1b8] sm:$0xff]
      %v256 = vld [vmem:[%s176 + $0x1c0] sm:$0xff]
      %v257 = vld [vmem:[%s176 + $0x1c8] sm:$0xf]
      %v258 = vld [vmem:[%s176 + $0x1cc] sm:$0xff]
      %v259 = vld [vmem:[%s176 + $0x1d4] sm:$0xff]
      %v260 = vld [vmem:[%s176 + $0x1dc] sm:$0xf]
      %v261 = vld [vmem:[%s176 + $0x1e0] sm:$0xff]
      %v262 = vld [vmem:[%s176 + $0x1e8] sm:$0xff]
      %v263 = vld [vmem:[%s176 + $0x1f0] sm:$0xf]
      %v264 = vld [vmem:[%s176 + $0x1f4] sm:$0xff]
      %v265 = vld [vmem:[%s176 + $0x1fc] sm:$0xff]
      %v266 = vld [vmem:[%s176 + $0x204] sm:$0xf]
      %v267 = vld [vmem:[%s176 + $0x208] sm:$0xff]
      %v268 = vld [vmem:[%s176 + $0x210] sm:$0xff]
      %v269 = vld [vmem:[%s176 + $0x218] sm:$0xf]
      %v270 = vld [vmem:[%s176 + $0x21c] sm:$0xff]
      %v271 = vld [vmem:[%s176 + $0x224] sm:$0xff]
      %v272 = vld [vmem:[%s176 + $0x22c] sm:$0xf]
      %v273 = vld [vmem:[%s176 + $0x230] sm:$0xff]
      %v274 = vld [vmem:[%s176 + $0x238] sm:$0xff]
      %v275 = vld [vmem:[%s176 + $0x240] sm:$0xf]
      %v276 = vld [vmem:[%s176 + $0x244] sm:$0xff]
      %v277 = vld [vmem:[%s176 + $0x24c] sm:$0xff]
      %v278 = vld [vmem:[%s176 + $0x254] sm:$0xf]
      %v279 = vld [vmem:[%s176 + $0x258] sm:$0xff]
      %v280 = vld [vmem:[%s176 + $0x260] sm:$0xff]
      %v281 = vld [vmem:[%s176 + $0x268] sm:$0xf]
      %v282 = vld [vmem:[%s176 + $0x26c] sm:$0xff]
      %v283 = vld [vmem:[%s176 + $0x274] sm:$0xff]
      %v284 = vld [vmem:[%s176 + $0x27c] sm:$0xf]
      %v285 = vld [vmem:[%s176 + $0x280] sm:$0xff]
      %v286 = vld [vmem:[%s176 + $0x288] sm:$0xff]
      %v287 = vld [vmem:[%s176 + $0x290] sm:$0xf]
      %v288 = vld [vmem:[%s176 + $0x294] sm:$0xff]
      %v289 = vld [vmem:[%s176 + $0x29c] sm:$0xff]
      %v290 = vld [vmem:[%s176 + $0x2a4] sm:$0xf]
      %v291 = vld [vmem:[%s176 + $0x2a8] sm:$0xff]
      %v292 = vld [vmem:[%s176 + $0x2b0] sm:$0xff]
      %v293 = vld [vmem:[%s176 + $0x2b8] sm:$0xf]
      %v294 = vld [vmem:[%s176 + $0x2bc] sm:$0xff]
      %v295 = vld [vmem:[%s176 + $0x2c4] sm:$0xff]
      %v296 = vld [vmem:[%s176 + $0x2cc] sm:$0xf]
      %v297 = vld [vmem:[%s176 + $0x2d0] sm:$0xff]
      %v298 = vld [vmem:[%s176 + $0x2d8] sm:$0xff]
      %v299 = vld [vmem:[%s176 + $0x2e0] sm:$0xf]
      %v300 = vld [vmem:[%s176 + $0x2e4] sm:$0xff]
      %v301 = vld [vmem:[%s176 + $0x2ec] sm:$0xff]
      %v302 = vld [vmem:[%s176 + $0x2f4] sm:$0xf]
      %v303 = vld [vmem:[%s176 + $0x2f8] sm:$0xff]
      %v304 = vld [vmem:[%s176 + $0x300] sm:$0xff]
      %v305 = vld [vmem:[%s176 + $0x308] sm:$0xf]
      %v306 = vld [vmem:[%s176 + $0x30c] sm:$0xff]
      %v307 = vld [vmem:[%s176 + $0x314] sm:$0xff]
      %v308 = vld [vmem:[%s176 + $0x31c] sm:$0xf]
      %v309 = vld [vmem:[%s176 + $0x320] sm:$0xff]
      %v310 = vld [vmem:[%s176 + $0x328] sm:$0xff]
      %v311 = vld [vmem:[%s176 + $0x330] sm:$0xf]
      %v312 = vld [vmem:[%s176 + $0x334] sm:$0xff]
      %v313 = vld [vmem:[%s176 + $0x33c] sm:$0xff]
      %v314 = vld [vmem:[%s176 + $0x344] sm:$0xf]
      %v315 = vld [vmem:[%s176 + $0x348] sm:$0xff]
      %v316 = vld [vmem:[%s176 + $0x350] sm:$0xff]
      %v317 = vld [vmem:[%s176 + $0x358] sm:$0xf]
      %v318 = vld [vmem:[%s176 + $0x35c] sm:$0xff]
      %v319 = vld [vmem:[%s176 + $0x364] sm:$0xff]
      %v320 = vld [vmem:[%s176 + $0x36c] sm:$0xf]
      %v321 = vld [vmem:[%s176 + $0x370] sm:$0xff]
      %v322 = vld [vmem:[%s176 + $0x378] sm:$0xff]
      %v323 = vld [vmem:[%s176 + $0x380] sm:$0xf]
      %v324 = vld [vmem:[%s176 + $0x384] sm:$0xff]
      %v325 = vld [vmem:[%s176 + $0x38c] sm:$0xff]
      %v326 = vld [vmem:[%s176 + $0x394] sm:$0xf]
      %v327 = vld [vmem:[%s176 + $0x398] sm:$0xff]
      %v328 = vld [vmem:[%s176 + $0x3a0] sm:$0xff]
      %v329 = vld [vmem:[%s176 + $0x3a8] sm:$0xf]
      %v330 = vld [vmem:[%s176 + $0x3ac] sm:$0xff]
      %v331 = vld [vmem:[%s176 + $0x3b4] sm:$0xff]
      %v332 = vld [vmem:[%s176 + $0x3bc] sm:$0xf]
      %v333 = vld [vmem:[%s176 + $0x3c0] sm:$0xff]
      %v334 = vld [vmem:[%s176 + $0x3c8] sm:$0xff]
      %v335 = vld [vmem:[%s176 + $0x3d0] sm:$0xf]
      %v336 = vld [vmem:[%s176 + $0x3d4] sm:$0xff]
      %v337 = vld [vmem:[%s176 + $0x3dc] sm:$0xff]
      %v338 = vld [vmem:[%s176 + $0x3e4] sm:$0xf]
      %v339 = vld [vmem:[%s176 + $0x3e8] sm:$0xff]
      %v340 = vld [vmem:[%s176 + $0x3f0] sm:$0xff]
      %v341 = vld [vmem:[%s176 + $0x3f8] sm:$0xf]
      %v342 = vld [vmem:[%s176 + $0x3fc] sm:$0xff]
      %v343 = vld [vmem:[%s176 + $0x404] sm:$0xff]
      %v344 = vld [vmem:[%s176 + $0x40c] sm:$0xf]
      %v345 = vld [vmem:[%s176 + $0x410] sm:$0xff]
      %v346 = vld [vmem:[%s176 + $0x418] sm:$0xff]
      %v347 = vld [vmem:[%s176 + $0x420] sm:$0xf]
      %v348 = vld [vmem:[%s176 + $0x424] sm:$0xff]
      %v349 = vld [vmem:[%s176 + $0x42c] sm:$0xff]
      %v350 = vld [vmem:[%s176 + $0x434] sm:$0xf]
      %v351 = vld [vmem:[%s176 + $0x438] sm:$0xff]
      %v352 = vld [vmem:[%s176 + $0x440] sm:$0xff]
      %v353 = vld [vmem:[%s176 + $0x448] sm:$0xf]
      %v354 = vld [vmem:[%s176 + $0x44c] sm:$0xff]
      %v355 = vld [vmem:[%s176 + $0x454] sm:$0xff]
      %v356 = vld [vmem:[%s176 + $0x45c] sm:$0xf]
      %v357 = vld [vmem:[%s176 + $0x460] sm:$0xff]
      %v358 = vld [vmem:[%s176 + $0x468] sm:$0xff]
      %v359 = vld [vmem:[%s176 + $0x470] sm:$0xf]
      %v360 = vld [vmem:[%s176 + $0x474] sm:$0xff]
      %v361 = vld [vmem:[%s176 + $0x47c] sm:$0xff]
      %v362 = vld [vmem:[%s176 + $0x484] sm:$0xf]
      %v363 = vld [vmem:[%s176 + $0x488] sm:$0xff]
      %v364 = vld [vmem:[%s176 + $0x490] sm:$0xff]
      %v365 = vld [vmem:[%s176 + $0x498] sm:$0xf]
      %v366 = vld [vmem:[%s176 + $0x49c] sm:$0xff]
      %v367 = vld [vmem:[%s176 + $0x4a4] sm:$0xff]
      %v368 = vld [vmem:[%s176 + $0x4ac] sm:$0xf]
      %v369 = vld [vmem:[%s176 + $0x4b0] sm:$0xff]
      %v370 = vld [vmem:[%s176 + $0x4b8] sm:$0xff]
      %v371 = vld [vmem:[%s176 + $0x4c0] sm:$0xf]
      %v372 = vld [vmem:[%s176 + $0x4c4] sm:$0xff]
      %v373 = vld [vmem:[%s176 + $0x4cc] sm:$0xff]
      %v374 = vld [vmem:[%s176 + $0x4d4] sm:$0xf]
      %v375 = vld [vmem:[%s176 + $0x4d8] sm:$0xff]
      %v376 = vld [vmem:[%s176 + $0x4e0] sm:$0xff]
      %v377 = vld [vmem:[%s176 + $0x4e8] sm:$0xf]
      %v378 = vld [vmem:[%s176 + $0x4ec] sm:$0xff]
      %v379 = vld [vmem:[%s176 + $0x4f4] sm:$0xff]
      %v380 = vld [vmem:[%s176 + $0x4fc] sm:$0xf]
      %v381 = vld [vmem:[%s1] sm:$0xf]
      %v382 = vld [vmem:[%s1 + $0x4] sm:$0xf]
      %v383 = vld [vmem:[%s1 + $0x8] sm:$0xf]
      %v384 = vld [vmem:[%s1 + $0xc] sm:$0xf]
      %v385 = vld [vmem:[%s1 + $0x10] sm:$0xf]
      %v386 = vld [vmem:[%s1 + $0x14] sm:$0xf]
      %v387 = vld [vmem:[%s1 + $0x18] sm:$0xf]
      %v388 = vld [vmem:[%s1 + $0x1c] sm:$0xf]
      %v389 = vld [vmem:[%s1 + $0x20] sm:$0xf]
      %v390 = vld [vmem:[%s1 + $0x24] sm:$0xf]
      %v391 = vld [vmem:[%s1 + $0x28] sm:$0xf]
      %v392 = vld [vmem:[%s1 + $0x2c] sm:$0xf]
      %v393 = vld [vmem:[%s1 + $0x30] sm:$0xf]
      %v394 = vld [vmem:[%s1 + $0x34] sm:$0xf]
      %v395 = vld [vmem:[%s1 + $0x38] sm:$0xf]
      %v396 = vld [vmem:[%s1 + $0x3c] sm:$0xf]
      %v397 = vld [vmem:[%s1 + $0x40] sm:$0xf]
      %v398 = vld [vmem:[%s1 + $0x44] sm:$0xf]
      %v399 = vld [vmem:[%s1 + $0x48] sm:$0xf]
      %v400 = vld [vmem:[%s1 + $0x4c] sm:$0xf]
      %v401 = vld [vmem:[%s1 + $0x50] sm:$0xf]
      %v402 = vld [vmem:[%s1 + $0x54] sm:$0xf]
      %v403 = vld [vmem:[%s1 + $0x58] sm:$0xf]
      %v404 = vld [vmem:[%s1 + $0x5c] sm:$0xf]
      %v405 = vld [vmem:[%s1 + $0x60] sm:$0xf]
      %v406 = vld [vmem:[%s1 + $0x64] sm:$0xf]
      %v407 = vld [vmem:[%s1 + $0x68] sm:$0xf]
      %v408 = vld [vmem:[%s1 + $0x6c] sm:$0xf]
      %v409 = vld [vmem:[%s1 + $0x70] sm:$0xf]
      %v410 = vld [vmem:[%s1 + $0x74] sm:$0xf]
      %v411 = vld [vmem:[%s1 + $0x78] sm:$0xf]
      %v412 = vld [vmem:[%s1 + $0x7c] sm:$0xf]
      %v413 = vld [vmem:[%s1 + $0x80] sm:$0xf]
      %v414 = vld [vmem:[%s1 + $0x84] sm:$0xf]
      %v415 = vld [vmem:[%s1 + $0x88] sm:$0xf]
      %v416 = vld [vmem:[%s1 + $0x8c] sm:$0xf]
      %v417 = vld [vmem:[%s1 + $0x90] sm:$0xf]
      %v418 = vld [vmem:[%s1 + $0x94] sm:$0xf]
      %v419 = vld [vmem:[%s1 + $0x98] sm:$0xf]
      %v420 = vld [vmem:[%s1 + $0x9c] sm:$0xf]
      %v421 = vld [vmem:[%s1 + $0xa0] sm:$0xf]
      %v422 = vld [vmem:[%s1 + $0xa4] sm:$0xf]
      %v423 = vld [vmem:[%s1 + $0xa8] sm:$0xf]
      %v424 = vld [vmem:[%s1 + $0xac] sm:$0xf]
      %v425 = vld [vmem:[%s1 + $0xb0] sm:$0xf]
      %v426 = vld [vmem:[%s1 + $0xb4] sm:$0xf]
      %v427 = vld [vmem:[%s1 + $0xb8] sm:$0xf]
      %v428 = vld [vmem:[%s1 + $0xbc] sm:$0xf]
      %v429 = vld [vmem:[%s1 + $0xc0] sm:$0xf]
      %v430 = vld [vmem:[%s1 + $0xc4] sm:$0xf]
      %v431 = vld [vmem:[%s1 + $0xc8] sm:$0xf]
      %v432 = vld [vmem:[%s1 + $0xcc] sm:$0xf]
      %v433 = vld [vmem:[%s1 + $0xd0] sm:$0xf]
      %v434 = vld [vmem:[%s1 + $0xd4] sm:$0xf]
      %v435 = vld [vmem:[%s1 + $0xd8] sm:$0xf]
      %v436 = vld [vmem:[%s1 + $0xdc] sm:$0xf]
      %v437 = vld [vmem:[%s1 + $0xe0] sm:$0xf]
      %v438 = vld [vmem:[%s1 + $0xe4] sm:$0xf]
      %v439 = vld [vmem:[%s1 + $0xe8] sm:$0xf]
      %v440 = vld [vmem:[%s1 + $0xec] sm:$0xf]
      %v441 = vld [vmem:[%s1 + $0xf0] sm:$0xf]
      %v442 = vld [vmem:[%s1 + $0xf4] sm:$0xf]
      %v443 = vld [vmem:[%s1 + $0xf8] sm:$0xf]
      %v444 = vld [vmem:[%s1 + $0xfc] sm:$0xf]
      %v445 = vld [vmem:[%s1 + $0x100] sm:$0xf]
      %v446 = vld [vmem:[%s1 + $0x104] sm:$0xf]
      %v447 = vld [vmem:[%s1 + $0x108] sm:$0xf]
      %v448 = vld [vmem:[%s1 + $0x10c] sm:$0xf]
      %v449 = vld [vmem:[%s1 + $0x110] sm:$0xf]
      %v450 = vld [vmem:[%s1 + $0x114] sm:$0xf]
      %v451 = vld [vmem:[%s1 + $0x118] sm:$0xf]
      %v452 = vld [vmem:[%s1 + $0x11c] sm:$0xf]
      %v453 = vld [vmem:[%s1 + $0x120] sm:$0xf]
      %v454 = vld [vmem:[%s1 + $0x124] sm:$0xf]
      %v455 = vld [vmem:[%s1 + $0x128] sm:$0xf]
      %v456 = vld [vmem:[%s1 + $0x12c] sm:$0xf]
      %v457 = vld [vmem:[%s1 + $0x130] sm:$0xf]
      %v458 = vld [vmem:[%s1 + $0x134] sm:$0xf]
      %v459 = vld [vmem:[%s1 + $0x138] sm:$0xf]
      %v460 = vld [vmem:[%s1 + $0x13c] sm:$0xf]
      %v653 = vunpack.c.l.b16 %v189
      %v654 = vunpack.c.h.b16 %v189
      %v655 = vunpack.c.l.b16 %v190
      %v656 = vunpack.c.h.b16 %v190
      %v657 = vunpack.c.l.b16 %v191
      %v658 = vunpack.c.l.b16 %v192
      %v659 = vunpack.c.h.b16 %v192
      %v660 = vunpack.c.l.b16 %v193
      %v661 = vunpack.c.h.b16 %v193
      %v662 = vunpack.c.l.b16 %v194
      %v663 = vunpack.c.l.b16 %v195
      %v664 = vunpack.c.h.b16 %v195
      %v665 = vunpack.c.l.b16 %v196
      %v666 = vunpack.c.h.b16 %v196
      %v667 = vunpack.c.l.b16 %v197
      %v668 = vunpack.c.l.b16 %v198
      %v669 = vunpack.c.h.b16 %v198
      %v670 = vunpack.c.l.b16 %v199
      %v671 = vunpack.c.h.b16 %v199
      %v672 = vunpack.c.l.b16 %v200
      %v673 = vunpack.c.l.b16 %v201
      %v674 = vunpack.c.h.b16 %v201
      %v675 = vunpack.c.l.b16 %v202
      %v676 = vunpack.c.h.b16 %v202
      %v677 = vunpack.c.l.b16 %v203
      %v678 = vunpack.c.l.b16 %v204
      %v679 = vunpack.c.h.b16 %v204
      %v680 = vunpack.c.l.b16 %v205
      %v681 = vunpack.c.h.b16 %v205
      %v682 = vunpack.c.l.b16 %v206
      %v683 = vunpack.c.l.b16 %v207
      %v684 = vunpack.c.h.b16 %v207
      %v685 = vunpack.c.l.b16 %v208
      %v686 = vunpack.c.h.b16 %v208
      %v687 = vunpack.c.l.b16 %v209
      %v688 = vunpack.c.l.b16 %v210
      %v689 = vunpack.c.h.b16 %v210
      %v690 = vunpack.c.l.b16 %v211
      %v691 = vunpack.c.h.b16 %v211
      %v692 = vunpack.c.l.b16 %v212
      %v693 = vunpack.c.l.b16 %v213
      %v694 = vunpack.c.h.b16 %v213
      %v695 = vunpack.c.l.b16 %v214
      %v696 = vunpack.c.h.b16 %v214
      %v697 = vunpack.c.l.b16 %v215
      %v698 = vunpack.c.l.b16 %v216
      %v699 = vunpack.c.h.b16 %v216
      %v700 = vunpack.c.l.b16 %v217
      %v701 = vunpack.c.h.b16 %v217
      %v702 = vunpack.c.l.b16 %v218
      %v703 = vunpack.c.l.b16 %v219
      %v704 = vunpack.c.h.b16 %v219
      %v705 = vunpack.c.l.b16 %v220
      %v706 = vunpack.c.h.b16 %v220
      %v707 = vunpack.c.l.b16 %v221
      %v708 = vunpack.c.l.b16 %v222
      %v709 = vunpack.c.h.b16 %v222
      %v710 = vunpack.c.l.b16 %v223
      %v711 = vunpack.c.h.b16 %v223
      %v712 = vunpack.c.l.b16 %v224
      %v713 = vunpack.c.l.b16 %v225
      %v714 = vunpack.c.h.b16 %v225
      %v715 = vunpack.c.l.b16 %v226
      %v716 = vunpack.c.h.b16 %v226
      %v717 = vunpack.c.l.b16 %v227
      %v718 = vunpack.c.l.b16 %v228
      %v719 = vunpack.c.h.b16 %v228
      %v720 = vunpack.c.l.b16 %v229
      %v721 = vunpack.c.h.b16 %v229
      %v722 = vunpack.c.l.b16 %v230
      %v723 = vunpack.c.l.b16 %v231
      %v724 = vunpack.c.h.b16 %v231
      %v725 = vunpack.c.l.b16 %v232
      %v726 = vunpack.c.h.b16 %v232
      %v727 = vunpack.c.l.b16 %v233
      %v728 = vunpack.c.l.b16 %v234
      %v729 = vunpack.c.h.b16 %v234
      %v730 = vunpack.c.l.b16 %v235
      %v731 = vunpack.c.h.b16 %v235
      %v732 = vunpack.c.l.b16 %v236
      %v733 = vunpack.c.l.b16 %v237
      %v734 = vunpack.c.h.b16 %v237
      %v735 = vunpack.c.l.b16 %v238
      %v736 = vunpack.c.h.b16 %v238
      %v737 = vunpack.c.l.b16 %v239
      %v738 = vunpack.c.l.b16 %v240
      %v739 = vunpack.c.h.b16 %v240
      %v740 = vunpack.c.l.b16 %v241
      %v741 = vunpack.c.h.b16 %v241
      %v742 = vunpack.c.l.b16 %v242
      %v743 = vunpack.c.l.b16 %v243
      %v744 = vunpack.c.h.b16 %v243
      %v745 = vunpack.c.l.b16 %v244
      %v746 = vunpack.c.h.b16 %v244
      %v747 = vunpack.c.l.b16 %v245
      %v748 = vunpack.c.l.b16 %v246
      %v749 = vunpack.c.h.b16 %v246
      %v750 = vunpack.c.l.b16 %v247
      %v751 = vunpack.c.h.b16 %v247
      %v752 = vunpack.c.l.b16 %v248
      %v753 = vunpack.c.l.b16 %v249
      %v754 = vunpack.c.h.b16 %v249
      %v755 = vunpack.c.l.b16 %v250
      %v756 = vunpack.c.h.b16 %v250
      %v757 = vunpack.c.l.b16 %v251
      %v758 = vunpack.c.l.b16 %v252
      %v759 = vunpack.c.h.b16 %v252
      %v760 = vunpack.c.l.b16 %v253
      %v761 = vunpack.c.h.b16 %v253
      %v762 = vunpack.c.l.b16 %v254
      %v763 = vunpack.c.l.b16 %v255
      %v764 = vunpack.c.h.b16 %v255
      %v765 = vunpack.c.l.b16 %v256
      %v766 = vunpack.c.h.b16 %v256
      %v767 = vunpack.c.l.b16 %v257
      %v768 = vunpack.c.l.b16 %v258
      %v769 = vunpack.c.h.b16 %v258
      %v770 = vunpack.c.l.b16 %v259
      %v771 = vunpack.c.h.b16 %v259
      %v772 = vunpack.c.l.b16 %v260
      %v773 = vunpack.c.l.b16 %v261
      %v774 = vunpack.c.h.b16 %v261
      %v775 = vunpack.c.l.b16 %v262
      %v776 = vunpack.c.h.b16 %v262
      %v777 = vunpack.c.l.b16 %v263
      %v778 = vunpack.c.l.b16 %v264
      %v779 = vunpack.c.h.b16 %v264
      %v780 = vunpack.c.l.b16 %v265
      %v781 = vunpack.c.h.b16 %v265
      %v782 = vunpack.c.l.b16 %v266
      %v783 = vunpack.c.l.b16 %v267
      %v784 = vunpack.c.h.b16 %v267
      %v785 = vunpack.c.l.b16 %v268
      %v786 = vunpack.c.h.b16 %v268
      %v787 = vunpack.c.l.b16 %v269
      %v788 = vunpack.c.l.b16 %v270
      %v789 = vunpack.c.h.b16 %v270
      %v790 = vunpack.c.l.b16 %v271
      %v791 = vunpack.c.h.b16 %v271
      %v792 = vunpack.c.l.b16 %v272
      %v793 = vunpack.c.l.b16 %v273
      %v794 = vunpack.c.h.b16 %v273
      %v795 = vunpack.c.l.b16 %v274
      %v796 = vunpack.c.h.b16 %v274
      %v797 = vunpack.c.l.b16 %v275
      %v798 = vunpack.c.l.b16 %v276
      %v799 = vunpack.c.h.b16 %v276
      %v800 = vunpack.c.l.b16 %v277
      %v801 = vunpack.c.h.b16 %v277
      %v802 = vunpack.c.l.b16 %v278
      %v803 = vunpack.c.l.b16 %v279
      %v804 = vunpack.c.h.b16 %v279
      %v805 = vunpack.c.l.b16 %v280
      %v806 = vunpack.c.h.b16 %v280
      %v807 = vunpack.c.l.b16 %v281
      %v808 = vunpack.c.l.b16 %v282
      %v809 = vunpack.c.h.b16 %v282
      %v810 = vunpack.c.l.b16 %v283
      %v811 = vunpack.c.h.b16 %v283
      %v812 = vunpack.c.l.b16 %v284
      %v813 = vunpack.c.l.b16 %v285
      %v814 = vunpack.c.h.b16 %v285
      %v815 = vunpack.c.l.b16 %v286
      %v816 = vunpack.c.h.b16 %v286
      %v817 = vunpack.c.l.b16 %v287
      %v818 = vunpack.c.l.b16 %v288
      %v819 = vunpack.c.h.b16 %v288
      %v820 = vunpack.c.l.b16 %v289
      %v821 = vunpack.c.h.b16 %v289
      %v822 = vunpack.c.l.b16 %v290
      %v823 = vunpack.c.l.b16 %v291
      %v824 = vunpack.c.h.b16 %v291
      %v825 = vunpack.c.l.b16 %v292
      %v826 = vunpack.c.h.b16 %v292
      %v827 = vunpack.c.l.b16 %v293
      %v828 = vunpack.c.l.b16 %v294
      %v829 = vunpack.c.h.b16 %v294
      %v830 = vunpack.c.l.b16 %v295
      %v831 = vunpack.c.h.b16 %v295
      %v832 = vunpack.c.l.b16 %v296
      %v833 = vunpack.c.l.b16 %v297
      %v834 = vunpack.c.h.b16 %v297
      %v835 = vunpack.c.l.b16 %v298
      %v836 = vunpack.c.h.b16 %v298
      %v837 = vunpack.c.l.b16 %v299
      %v838 = vunpack.c.l.b16 %v300
      %v839 = vunpack.c.h.b16 %v300
      %v840 = vunpack.c.l.b16 %v301
      %v841 = vunpack.c.h.b16 %v301
      %v842 = vunpack.c.l.b16 %v302
      %v843 = vunpack.c.l.b16 %v303
      %v844 = vunpack.c.h.b16 %v303
      %v845 = vunpack.c.l.b16 %v304
      %v846 = vunpack.c.h.b16 %v304
      %v847 = vunpack.c.l.b16 %v305
      %v848 = vunpack.c.l.b16 %v306
      %v849 = vunpack.c.h.b16 %v306
      %v850 = vunpack.c.l.b16 %v307
      %v851 = vunpack.c.h.b16 %v307
      %v852 = vunpack.c.l.b16 %v308
      %v853 = vunpack.c.l.b16 %v309
      %v854 = vunpack.c.h.b16 %v309
      %v855 = vunpack.c.l.b16 %v310
      %v856 = vunpack.c.h.b16 %v310
      %v857 = vunpack.c.l.b16 %v311
      %v858 = vunpack.c.l.b16 %v312
      %v859 = vunpack.c.h.b16 %v312
      %v860 = vunpack.c.l.b16 %v313
      %v861 = vunpack.c.h.b16 %v313
      %v862 = vunpack.c.l.b16 %v314
      %v863 = vunpack.c.l.b16 %v315
      %v864 = vunpack.c.h.b16 %v315
      %v865 = vunpack.c.l.b16 %v316
      %v866 = vunpack.c.h.b16 %v316
      %v867 = vunpack.c.l.b16 %v317
      %v868 = vunpack.c.l.b16 %v318
      %v869 = vunpack.c.h.b16 %v318
      %v870 = vunpack.c.l.b16 %v319
      %v871 = vunpack.c.h.b16 %v319
      %v872 = vunpack.c.l.b16 %v320
      %v873 = vunpack.c.l.b16 %v321
      %v874 = vunpack.c.h.b16 %v321
      %v875 = vunpack.c.l.b16 %v322
      %v876 = vunpack.c.h.b16 %v322
      %v877 = vunpack.c.l.b16 %v323
      %v878 = vunpack.c.l.b16 %v324
      %v879 = vunpack.c.h.b16 %v324
      %v880 = vunpack.c.l.b16 %v325
      %v881 = vunpack.c.h.b16 %v325
      %v882 = vunpack.c.l.b16 %v326
      %v883 = vunpack.c.l.b16 %v327
      %v884 = vunpack.c.h.b16 %v327
      %v885 = vunpack.c.l.b16 %v328
      %v886 = vunpack.c.h.b16 %v328
      %v887 = vunpack.c.l.b16 %v329
      %v888 = vunpack.c.l.b16 %v330
      %v889 = vunpack.c.h.b16 %v330
      %v890 = vunpack.c.l.b16 %v331
      %v891 = vunpack.c.h.b16 %v331
      %v892 = vunpack.c.l.b16 %v332
      %v893 = vunpack.c.l.b16 %v333
      %v894 = vunpack.c.h.b16 %v333
      %v895 = vunpack.c.l.b16 %v334
      %v896 = vunpack.c.h.b16 %v334
      %v897 = vunpack.c.l.b16 %v335
      %v898 = vunpack.c.l.b16 %v336
      %v899 = vunpack.c.h.b16 %v336
      %v900 = vunpack.c.l.b16 %v337
      %v901 = vunpack.c.h.b16 %v337
      %v902 = vunpack.c.l.b16 %v338
      %v903 = vunpack.c.l.b16 %v339
      %v904 = vunpack.c.h.b16 %v339
      %v905 = vunpack.c.l.b16 %v340
      %v906 = vunpack.c.h.b16 %v340
      %v907 = vunpack.c.l.b16 %v341
      %v908 = vunpack.c.l.b16 %v342
      %v909 = vunpack.c.h.b16 %v342
      %v910 = vunpack.c.l.b16 %v343
      %v911 = vunpack.c.h.b16 %v343
      %v912 = vunpack.c.l.b16 %v344
      %v913 = vunpack.c.l.b16 %v345
      %v914 = vunpack.c.h.b16 %v345
      %v915 = vunpack.c.l.b16 %v346
      %v916 = vunpack.c.h.b16 %v346
      %v917 = vunpack.c.l.b16 %v347
      %v918 = vunpack.c.l.b16 %v348
      %v919 = vunpack.c.h.b16 %v348
      %v920 = vunpack.c.l.b16 %v349
      %v921 = vunpack.c.h.b16 %v349
      %v922 = vunpack.c.l.b16 %v350
      %v923 = vunpack.c.l.b16 %v351
      %v924 = vunpack.c.h.b16 %v351
      %v925 = vunpack.c.l.b16 %v352
      %v926 = vunpack.c.h.b16 %v352
      %v927 = vunpack.c.l.b16 %v353
      %v928 = vunpack.c.l.b16 %v354
      %v929 = vunpack.c.h.b16 %v354
      %v930 = vunpack.c.l.b16 %v355
      %v931 = vunpack.c.h.b16 %v355
      %v932 = vunpack.c.l.b16 %v356
      %v933 = vunpack.c.l.b16 %v357
      %v934 = vunpack.c.h.b16 %v357
      %v935 = vunpack.c.l.b16 %v358
      %v936 = vunpack.c.h.b16 %v358
      %v937 = vunpack.c.l.b16 %v359
      %v938 = vunpack.c.l.b16 %v360
      %v939 = vunpack.c.h.b16 %v360
      %v940 = vunpack.c.l.b16 %v361
      %v941 = vunpack.c.h.b16 %v361
      %v942 = vunpack.c.l.b16 %v362
      %v943 = vunpack.c.l.b16 %v363
      %v944 = vunpack.c.h.b16 %v363
      %v945 = vunpack.c.l.b16 %v364
      %v946 = vunpack.c.h.b16 %v364
      %v947 = vunpack.c.l.b16 %v365
      %v948 = vunpack.c.l.b16 %v366
      %v949 = vunpack.c.h.b16 %v366
      %v950 = vunpack.c.l.b16 %v367
      %v951 = vunpack.c.h.b16 %v367
      %v952 = vunpack.c.l.b16 %v368
      %v953 = vunpack.c.l.b16 %v369
      %v954 = vunpack.c.h.b16 %v369
      %v955 = vunpack.c.l.b16 %v370
      %v956 = vunpack.c.h.b16 %v370
      %v957 = vunpack.c.l.b16 %v371
      %v958 = vunpack.c.l.b16 %v372
      %v959 = vunpack.c.h.b16 %v372
      %v960 = vunpack.c.l.b16 %v373
      %v961 = vunpack.c.h.b16 %v373
      %v962 = vunpack.c.l.b16 %v374
      %v963 = vunpack.c.l.b16 %v375
      %v964 = vunpack.c.h.b16 %v375
      %v965 = vunpack.c.l.b16 %v376
      %v966 = vunpack.c.h.b16 %v376
      %v967 = vunpack.c.l.b16 %v377
      %v968 = vunpack.c.l.b16 %v378
      %v969 = vunpack.c.h.b16 %v378
      %v970 = vunpack.c.l.b16 %v379
      %v971 = vunpack.c.h.b16 %v379
      %v972 = vunpack.c.l.b16 %v380
      %v973 = vpack.c.b16 %v658, %v653
      %v974 = vpack.c.b16 %v659, %v654
      %v975 = vpack.c.b16 %v660, %v655
      %v976 = vpack.c.b16 %v661, %v656
      %v977 = vpack.c.b16 %v662, %v657
      %v978 = vpack.c.b16 %v668, %v663
      %v979 = vpack.c.b16 %v669, %v664
      %v980 = vpack.c.b16 %v670, %v665
      %v981 = vpack.c.b16 %v671, %v666
      %v982 = vpack.c.b16 %v672, %v667
      %v983 = vpack.c.b16 %v678, %v673
      %v984 = vpack.c.b16 %v679, %v674
      %v985 = vpack.c.b16 %v680, %v675
      %v986 = vpack.c.b16 %v681, %v676
      %v987 = vpack.c.b16 %v682, %v677
      %v988 = vpack.c.b16 %v688, %v683
      %v989 = vpack.c.b16 %v689, %v684
      %v990 = vpack.c.b16 %v690, %v685
      %v991 = vpack.c.b16 %v691, %v686
      %v992 = vpack.c.b16 %v692, %v687
      %v993 = vpack.c.b16 %v698, %v693
      %v994 = vpack.c.b16 %v699, %v694
      %v995 = vpack.c.b16 %v700, %v695
      %v996 = vpack.c.b16 %v701, %v696
      %v997 = vpack.c.b16 %v702, %v697
      %v998 = vpack.c.b16 %v708, %v703
      %v999 = vpack.c.b16 %v709, %v704
      %v1000 = vpack.c.b16 %v710, %v705
      %v1001 = vpack.c.b16 %v711, %v706
      %v1002 = vpack.c.b16 %v712, %v707
      %v1003 = vpack.c.b16 %v718, %v713
      %v1004 = vpack.c.b16 %v719, %v714
      %v1005 = vpack.c.b16 %v720, %v715
      %v1006 = vpack.c.b16 %v721, %v716
      %v1007 = vpack.c.b16 %v722, %v717
      %v1008 = vpack.c.b16 %v728, %v723
      %v1009 = vpack.c.b16 %v729, %v724
      %v1010 = vpack.c.b16 %v730, %v725
      %v1011 = vpack.c.b16 %v731, %v726
      %v1012 = vpack.c.b16 %v732, %v727
      %v1013 = vpack.c.b16 %v738, %v733
      %v1014 = vpack.c.b16 %v739, %v734
      %v1015 = vpack.c.b16 %v740, %v735
      %v1016 = vpack.c.b16 %v741, %v736
      %v1017 = vpack.c.b16 %v742, %v737
      %v1018 = vpack.c.b16 %v748, %v743
      %v1019 = vpack.c.b16 %v749, %v744
      %v1020 = vpack.c.b16 %v750, %v745
      %v1021 = vpack.c.b16 %v751, %v746
      %v1022 = vpack.c.b16 %v752, %v747
      %v1023 = vpack.c.b16 %v758, %v753
      %v1024 = vpack.c.b16 %v759, %v754
      %v1025 = vpack.c.b16 %v760, %v755
      %v1026 = vpack.c.b16 %v761, %v756
      %v1027 = vpack.c.b16 %v762, %v757
      %v1028 = vpack.c.b16 %v768, %v763
      %v1029 = vpack.c.b16 %v769, %v764
      %v1030 = vpack.c.b16 %v770, %v765
      %v1031 = vpack.c.b16 %v771, %v766
      %v1032 = vpack.c.b16 %v772, %v767
      %v1033 = vpack.c.b16 %v778, %v773
      %v1034 = vpack.c.b16 %v779, %v774
      %v1035 = vpack.c.b16 %v780, %v775
      %v1036 = vpack.c.b16 %v781, %v776
      %v1037 = vpack.c.b16 %v782, %v777
      %v1038 = vpack.c.b16 %v788, %v783
      %v1039 = vpack.c.b16 %v789, %v784
      %v1040 = vpack.c.b16 %v790, %v785
      %v1041 = vpack.c.b16 %v791, %v786
      %v1042 = vpack.c.b16 %v792, %v787
      %v1043 = vpack.c.b16 %v798, %v793
      %v1044 = vpack.c.b16 %v799, %v794
      %v1045 = vpack.c.b16 %v800, %v795
      %v1046 = vpack.c.b16 %v801, %v796
      %v1047 = vpack.c.b16 %v802, %v797
      %v1048 = vpack.c.b16 %v808, %v803
      %v1049 = vpack.c.b16 %v809, %v804
      %v1050 = vpack.c.b16 %v810, %v805
      %v1051 = vpack.c.b16 %v811, %v806
      %v1052 = vpack.c.b16 %v812, %v807
      %v1053 = vpack.c.b16 %v818, %v813
      %v1054 = vpack.c.b16 %v819, %v814
      %v1055 = vpack.c.b16 %v820, %v815
      %v1056 = vpack.c.b16 %v821, %v816
      %v1057 = vpack.c.b16 %v822, %v817
      %v1058 = vpack.c.b16 %v828, %v823
      %v1059 = vpack.c.b16 %v829, %v824
      %v1060 = vpack.c.b16 %v830, %v825
      %v1061 = vpack.c.b16 %v831, %v826
      %v1062 = vpack.c.b16 %v832, %v827
      %v1063 = vpack.c.b16 %v838, %v833
      %v1064 = vpack.c.b16 %v839, %v834
      %v1065 = vpack.c.b16 %v840, %v835
      %v1066 = vpack.c.b16 %v841, %v836
      %v1067 = vpack.c.b16 %v842, %v837
      %v1068 = vpack.c.b16 %v848, %v843
      %v1069 = vpack.c.b16 %v849, %v844
      %v1070 = vpack.c.b16 %v850, %v845
      %v1071 = vpack.c.b16 %v851, %v846
      %v1072 = vpack.c.b16 %v852, %v847
      %v1073 = vpack.c.b16 %v858, %v853
      %v1074 = vpack.c.b16 %v859, %v854
      %v1075 = vpack.c.b16 %v860, %v855
      %v1076 = vpack.c.b16 %v861, %v856
      %v1077 = vpack.c.b16 %v862, %v857
      %v1078 = vpack.c.b16 %v868, %v863
      %v1079 = vpack.c.b16 %v869, %v864
      %v1080 = vpack.c.b16 %v870, %v865
      %v1081 = vpack.c.b16 %v871, %v866
      %v1082 = vpack.c.b16 %v872, %v867
      %v1083 = vpack.c.b16 %v878, %v873
      %v1084 = vpack.c.b16 %v879, %v874
      %v1085 = vpack.c.b16 %v880, %v875
      %v1086 = vpack.c.b16 %v881, %v876
      %v1087 = vpack.c.b16 %v882, %v877
      %v1088 = vpack.c.b16 %v888, %v883
      %v1089 = vpack.c.b16 %v889, %v884
      %v1090 = vpack.c.b16 %v890, %v885
      %v1091 = vpack.c.b16 %v891, %v886
      %v1092 = vpack.c.b16 %v892, %v887
      %v1093 = vpack.c.b16 %v898, %v893
      %v1094 = vpack.c.b16 %v899, %v894
      %v1095 = vpack.c.b16 %v900, %v895
      %v1096 = vpack.c.b16 %v901, %v896
      %v1097 = vpack.c.b16 %v902, %v897
      %v1098 = vpack.c.b16 %v908, %v903
      %v1099 = vpack.c.b16 %v909, %v904
      %v1100 = vpack.c.b16 %v910, %v905
      %v1101 = vpack.c.b16 %v911, %v906
      %v1102 = vpack.c.b16 %v912, %v907
      %v1103 = vpack.c.b16 %v918, %v913
      %v1104 = vpack.c.b16 %v919, %v914
      %v1105 = vpack.c.b16 %v920, %v915
      %v1106 = vpack.c.b16 %v921, %v916
      %v1107 = vpack.c.b16 %v922, %v917
      %v1108 = vpack.c.b16 %v928, %v923
      %v1109 = vpack.c.b16 %v929, %v924
      %v1110 = vpack.c.b16 %v930, %v925
      %v1111 = vpack.c.b16 %v931, %v926
      %v1112 = vpack.c.b16 %v932, %v927
      %v1113 = vpack.c.b16 %v938, %v933
      %v1114 = vpack.c.b16 %v939, %v934
      %v1115 = vpack.c.b16 %v940, %v935
      %v1116 = vpack.c.b16 %v941, %v936
      %v1117 = vpack.c.b16 %v942, %v937
      %v1118 = vpack.c.b16 %v948, %v943
      %v1119 = vpack.c.b16 %v949, %v944
      %v1120 = vpack.c.b16 %v950, %v945
      %v1121 = vpack.c.b16 %v951, %v946
      %v1122 = vpack.c.b16 %v952, %v947
      %v1123 = vpack.c.b16 %v958, %v953
      %v1124 = vpack.c.b16 %v959, %v954
      %v1125 = vpack.c.b16 %v960, %v955
      %v1126 = vpack.c.b16 %v961, %v956
      %v1127 = vpack.c.b16 %v962, %v957
      %v1128 = vpack.c.b16 %v968, %v963
      %v1129 = vpack.c.b16 %v969, %v964
      %v1130 = vpack.c.b16 %v970, %v965
      %v1131 = vpack.c.b16 %v971, %v966
      %v1132 = vpack.c.b16 %v972, %v967
      %v1373 = vunpack.c.l.b16 %v381
      %v1374 = vunpack.c.l.b16 %v382
      %v1375 = vunpack.c.l.b16 %v383
      %v1376 = vunpack.c.l.b16 %v384
      %v1377 = vunpack.c.l.b16 %v385
      %v1378 = vunpack.c.l.b16 %v386
      %v1379 = vunpack.c.l.b16 %v387
      %v1380 = vunpack.c.l.b16 %v388
      %v1381 = vunpack.c.l.b16 %v389
      %v1382 = vunpack.c.l.b16 %v390
      %v1383 = vunpack.c.l.b16 %v391
      %v1384 = vunpack.c.l.b16 %v392
      %v1385 = vunpack.c.l.b16 %v393
      %v1386 = vunpack.c.l.b16 %v394
      %v1387 = vunpack.c.l.b16 %v395
      %v1388 = vunpack.c.l.b16 %v396
      %v1389 = vunpack.c.l.b16 %v397
      %v1390 = vunpack.c.l.b16 %v398
      %v1391 = vunpack.c.l.b16 %v399
      %v1392 = vunpack.c.l.b16 %v400
      %v1393 = vunpack.c.l.b16 %v401
      %v1394 = vunpack.c.l.b16 %v402
      %v1395 = vunpack.c.l.b16 %v403
      %v1396 = vunpack.c.l.b16 %v404
      %v1397 = vunpack.c.l.b16 %v405
      %v1398 = vunpack.c.l.b16 %v406
      %v1399 = vunpack.c.l.b16 %v407
      %v1400 = vunpack.c.l.b16 %v408
      %v1401 = vunpack.c.l.b16 %v409
      %v1402 = vunpack.c.l.b16 %v410
      %v1403 = vunpack.c.l.b16 %v411
      %v1404 = vunpack.c.l.b16 %v412
      %v1405 = vunpack.c.l.b16 %v413
      %v1406 = vunpack.c.l.b16 %v414
      %v1407 = vunpack.c.l.b16 %v415
      %v1408 = vunpack.c.l.b16 %v416
      %v1409 = vunpack.c.l.b16 %v417
      %v1410 = vunpack.c.l.b16 %v418
      %v1411 = vunpack.c.l.b16 %v419
      %v1412 = vunpack.c.l.b16 %v420
      %v1413 = vunpack.c.l.b16 %v421
      %v1414 = vunpack.c.l.b16 %v422
      %v1415 = vunpack.c.l.b16 %v423
      %v1416 = vunpack.c.l.b16 %v424
      %v1417 = vunpack.c.l.b16 %v425
      %v1418 = vunpack.c.l.b16 %v426
      %v1419 = vunpack.c.l.b16 %v427
      %v1420 = vunpack.c.l.b16 %v428
      %v1421 = vunpack.c.l.b16 %v429
      %v1422 = vunpack.c.l.b16 %v430
      %v1423 = vunpack.c.l.b16 %v431
      %v1424 = vunpack.c.l.b16 %v432
      %v1425 = vunpack.c.l.b16 %v433
      %v1426 = vunpack.c.l.b16 %v434
      %v1427 = vunpack.c.l.b16 %v435
      %v1428 = vunpack.c.l.b16 %v436
      %v1429 = vunpack.c.l.b16 %v437
      %v1430 = vunpack.c.l.b16 %v438
      %v1431 = vunpack.c.l.b16 %v439
      %v1432 = vunpack.c.l.b16 %v440
      %v1433 = vunpack.c.l.b16 %v441
      %v1434 = vunpack.c.l.b16 %v442
      %v1435 = vunpack.c.l.b16 %v443
      %v1436 = vunpack.c.l.b16 %v444
      %v1437 = vunpack.c.l.b16 %v445
      %v1438 = vunpack.c.l.b16 %v446
      %v1439 = vunpack.c.l.b16 %v447
      %v1440 = vunpack.c.l.b16 %v448
      %v1441 = vunpack.c.l.b16 %v449
      %v1442 = vunpack.c.l.b16 %v450
      %v1443 = vunpack.c.l.b16 %v451
      %v1444 = vunpack.c.l.b16 %v452
      %v1445 = vunpack.c.l.b16 %v453
      %v1446 = vunpack.c.l.b16 %v454
      %v1447 = vunpack.c.l.b16 %v455
      %v1448 = vunpack.c.l.b16 %v456
      %v1449 = vunpack.c.l.b16 %v457
      %v1450 = vunpack.c.l.b16 %v458
      %v1451 = vunpack.c.l.b16 %v459
      %v1452 = vunpack.c.l.b16 %v460
      %v1453 = vpack.c.b16 %v1374, %v1373
      %v1454 = vpack.c.b16 %v1376, %v1375
      %v1455 = vpack.c.b16 %v1378, %v1377
      %v1456 = vpack.c.b16 %v1380, %v1379
      %v1457 = vpack.c.b16 %v1382, %v1381
      %v1458 = vpack.c.b16 %v1384, %v1383
      %v1459 = vpack.c.b16 %v1386, %v1385
      %v1460 = vpack.c.b16 %v1388, %v1387
      %v1461 = vpack.c.b16 %v1390, %v1389
      %v1462 = vpack.c.b16 %v1392, %v1391
      %v1463 = vpack.c.b16 %v1394, %v1393
      %v1464 = vpack.c.b16 %v1396, %v1395
      %v1465 = vpack.c.b16 %v1398, %v1397
      %v1466 = vpack.c.b16 %v1400, %v1399
      %v1467 = vpack.c.b16 %v1402, %v1401
      %v1468 = vpack.c.b16 %v1404, %v1403
      %v1469 = vpack.c.b16 %v1406, %v1405
      %v1470 = vpack.c.b16 %v1408, %v1407
      %v1471 = vpack.c.b16 %v1410, %v1409
      %v1472 = vpack.c.b16 %v1412, %v1411
      %v1473 = vpack.c.b16 %v1414, %v1413
      %v1474 = vpack.c.b16 %v1416, %v1415
      %v1475 = vpack.c.b16 %v1418, %v1417
      %v1476 = vpack.c.b16 %v1420, %v1419
      %v1477 = vpack.c.b16 %v1422, %v1421
      %v1478 = vpack.c.b16 %v1424, %v1423
      %v1479 = vpack.c.b16 %v1426, %v1425
      %v1480 = vpack.c.b16 %v1428, %v1427
      %v1481 = vpack.c.b16 %v1430, %v1429
      %v1482 = vpack.c.b16 %v1432, %v1431
      %v1483 = vpack.c.b16 %v1434, %v1433
      %v1484 = vpack.c.b16 %v1436, %v1435
      %v1485 = vpack.c.b16 %v1438, %v1437
      %v1486 = vpack.c.b16 %v1440, %v1439
      %v1487 = vpack.c.b16 %v1442, %v1441
      %v1488 = vpack.c.b16 %v1444, %v1443
      %v1489 = vpack.c.b16 %v1446, %v1445
      %v1490 = vpack.c.b16 %v1448, %v1447
      %v1491 = vpack.c.b16 %v1450, %v1449
      %v1492 = vpack.c.b16 %v1452, %v1451
      %1533 = vmatprep.subr.bf16.mxu0 0
      %1534 = vmatpush1.bf16.msra.mxu0 %v1453
      %1535 = vmatprep.subr.bf16.mxu0 0
      %1536 = vmatpush1.bf16.msra.mxu0 %v1454
      %1537 = vmatprep.subr.bf16.mxu0 0
      %1538 = vmatpush1.bf16.msra.mxu0 %v1455
      %1539 = vmatprep.subr.bf16.mxu0 0
      %1540 = vmatpush1.bf16.msra.mxu0 %v1456
      %1541 = vmatprep.subr.bf16.mxu0 0
      %1542 = vmatpush1.bf16.msra.mxu0 %v1457
      %1543 = vmatprep.subr.bf16.mxu0 0
      %1544 = vmatpush1.bf16.msra.mxu0 %v1458
      %1545 = vmatprep.subr.bf16.mxu0 0
      %1546 = vmatpush1.bf16.msra.mxu0 %v1459
      %1547 = vmatprep.subr.bf16.mxu0 0
      %1548 = vmatpush1.bf16.msra.mxu0 %v1460
      %1549 = vmatprep.subr.bf16.mxu0 0
      %1550 = vmatpush1.bf16.msra.mxu0 %v1461
      %1551 = vmatprep.subr.bf16.mxu0 0
      %1552 = vmatpush1.bf16.msra.mxu0 %v1462
      %1553 = vmatprep.subr.bf16.mxu0 0
      %1554 = vmatpush1.bf16.msra.mxu0 %v1463
      %1555 = vmatprep.subr.bf16.mxu0 0
      %1556 = vmatpush1.bf16.msra.mxu0 %v1464
      %1557 = vmatprep.subr.bf16.mxu0 0
      %1558 = vmatpush1.bf16.msra.mxu0 %v1465
      %1559 = vmatprep.subr.bf16.mxu0 0
      %1560 = vmatpush1.bf16.msra.mxu0 %v1466
      %1561 = vmatprep.subr.bf16.mxu0 0
      %1562 = vmatpush1.bf16.msra.mxu0 %v1467
      %1563 = vmatprep.subr.bf16.mxu0 0
      %1564 = vmatpush1.bf16.msra.mxu0 %v1468
      %1565 = vmatprep.mubr.bf16.mxu0 %v974
      %1566 = vmatmul.mubr.bf16.gmra.mrb[0].mxu0 %v973
      %v1567 = vpop.f32.mrb[0].mxu0
      %v1568 = vadd.f32 0.0, %v1567
      %v1569 = vpop.f32.mrb[0].mxu0
      %v1570 = vpop.f32.mrb[0].mxu0
      %v1571 = vadd.f32 0.0, %v1570
      %v1572 = vpop.f32.mrb[0].mxu0
      %1573 = vmatprep.mubr.bf16.mxu0 %v979
      %1574 = vmatmul.mubr.bf16.gmra.mrb[0].mxu0 %v978
      %v1575 = vpop.f32.mrb[0].mxu0
      %v1576 = vadd.f32 0.0, %v1575
      %v1577 = vpop.f32.mrb[0].mxu0
      %v1578 = vpop.f32.mrb[0].mxu0
      %v1579 = vadd.f32 0.0, %v1578
      %v1580 = vpop.f32.mrb[0].mxu0
      %1581 = vmatprep.mubr.bf16.mxu0 %v984
      %1582 = vmatmul.mubr.bf16.gmra.mrb[0].mxu0 %v983
      %v1583 = vpop.f32.mrb[0].mxu0
      %v1584 = vadd.f32 0.0, %v1583
      %v1585 = vpop.f32.mrb[0].mxu0
      %v1586 = vpop.f32.mrb[0].mxu0
      %v1587 = vadd.f32 0.0, %v1586
      %v1588 = vpop.f32.mrb[0].mxu0
      %1589 = vmatprep.mubr.bf16.mxu0 %v989
      %1590 = vmatmul.mubr.bf16.gmra.mrb[0].mxu0 %v988
      %v1591 = vpop.f32.mrb[0].mxu0
      %v1592 = vadd.f32 0.0, %v1591
      %v1593 = vpop.f32.mrb[0].mxu0
      %v1594 = vpop.f32.mrb[0].mxu0
      %v1595 = vadd.f32 0.0, %v1594
      %v1596 = vpop.f32.mrb[0].mxu0
      %1597 = vmatprep.mubr.bf16.mxu0 %v994
      %1598 = vmatmul.mubr.bf16.gmra.mrb[0].mxu0 %v993
      %v1599 = vpop.f32.mrb[0].mxu0
      %v1600 = vadd.f32 0.0, %v1599
      %v1601 = vpop.f32.mrb[0].mxu0
      %v1602 = vpop.f32.mrb[0].mxu0
      %v1603 = vadd.f32 0.0, %v1602
      %v1604 = vpop.f32.mrb[0].mxu0
      %1605 = vmatprep.mubr.bf16.mxu0 %v999
      %1606 = vmatmul.mubr.bf16.gmra.mrb[0].mxu0 %v998
      %v1607 = vpop.f32.mrb[0].mxu0
      %v1608 = vadd.f32 0.0, %v1607
      %v1609 = vpop.f32.mrb[0].mxu0
      %v1610 = vpop.f32.mrb[0].mxu0
      %v1611 = vadd.f32 0.0, %v1610
      %v1612 = vpop.f32.mrb[0].mxu0
      %1613 = vmatprep.mubr.bf16.mxu0 %v1004
      %1614 = vmatmul.mubr.bf16.gmra.mrb[0].mxu0 %v1003
      %v1615 = vpop.f32.mrb[0].mxu0
      %v1616 = vadd.f32 0.0, %v1615
      %v1617 = vpop.f32.mrb[0].mxu0
      %v1618 = vpop.f32.mrb[0].mxu0
      %v1619 = vadd.f32 0.0, %v1618
      %v1620 = vpop.f32.mrb[0].mxu0
      %1621 = vmatprep.mubr.bf16.mxu0 %v1009
      %1622 = vmatmul.mubr.bf16.gmra.mrb[0].mxu0 %v1008
      %v1623 = vpop.f32.mrb[0].mxu0
      %v1624 = vadd.f32 0.0, %v1623
      %v1625 = vpop.f32.mrb[0].mxu0
      %v1626 = vpop.f32.mrb[0].mxu0
      %v1627 = vadd.f32 0.0, %v1626
      %v1628 = vpop.f32.mrb[0].mxu0
      %1629 = vmatprep.mubr.bf16.mxu0 %v1014
      %1630 = vmatmul.mubr.bf16.gmra.mrb[0].mxu0 %v1013
      %v1631 = vpop.f32.mrb[0].mxu0
      %v1632 = vadd.f32 0.0, %v1631
      %v1633 = vpop.f32.mrb[0].mxu0
      %v1634 = vpop.f32.mrb[0].mxu0
      %v1635 = vadd.f32 0.0, %v1634
      %v1636 = vpop.f32.mrb[0].mxu0
      %1637 = vmatprep.mubr.bf16.mxu0 %v1019
      %1638 = vmatmul.mubr.bf16.gmra.mrb[0].mxu0 %v1018
      %v1639 = vpop.f32.mrb[0].mxu0
      %v1640 = vadd.f32 0.0, %v1639
      %v1641 = vpop.f32.mrb[0].mxu0
      %v1642 = vpop.f32.mrb[0].mxu0
      %v1643 = vadd.f32 0.0, %v1642
      %v1644 = vpop.f32.mrb[0].mxu0
      %1645 = vmatprep.mubr.bf16.mxu0 %v1024
      %1646 = vmatmul.mubr.bf16.gmra.mrb[0].mxu0 %v1023
      %v1647 = vpop.f32.mrb[0].mxu0
      %v1648 = vadd.f32 0.0, %v1647
      %v1649 = vpop.f32.mrb[0].mxu0
      %v1650 = vpop.f32.mrb[0].mxu0
      %v1651 = vadd.f32 0.0, %v1650
      %v1652 = vpop.f32.mrb[0].mxu0
      %1653 = vmatprep.mubr.bf16.mxu0 %v1029
      %1654 = vmatmul.mubr.bf16.gmra.mrb[0].mxu0 %v1028
      %v1655 = vpop.f32.mrb[0].mxu0
      %v1656 = vadd.f32 0.0, %v1655
      %v1657 = vpop.f32.mrb[0].mxu0
      %v1658 = vpop.f32.mrb[0].mxu0
      %v1659 = vadd.f32 0.0, %v1658
      %v1660 = vpop.f32.mrb[0].mxu0
      %1661 = vmatprep.mubr.bf16.mxu0 %v1034
      %1662 = vmatmul.mubr.bf16.gmra.mrb[0].mxu0 %v1033
      %v1663 = vpop.f32.mrb[0].mxu0
      %v1664 = vadd.f32 0.0, %v1663
      %v1665 = vpop.f32.mrb[0].mxu0
      %v1666 = vpop.f32.mrb[0].mxu0
      %v1667 = vadd.f32 0.0, %v1666
      %v1668 = vpop.f32.mrb[0].mxu0
      %1669 = vmatprep.mubr.bf16.mxu0 %v1039
      %1670 = vmatmul.mubr.bf16.gmra.mrb[0].mxu0 %v1038
      %v1671 = vpop.f32.mrb[0].mxu0
      %v1672 = vadd.f32 0.0, %v1671
      %v1673 = vpop.f32.mrb[0].mxu0
      %v1674 = vpop.f32.mrb[0].mxu0
      %v1675 = vadd.f32 0.0, %v1674
      %v1676 = vpop.f32.mrb[0].mxu0
      %1677 = vmatprep.mubr.bf16.mxu0 %v1044
      %1678 = vmatmul.mubr.bf16.gmra.mrb[0].mxu0 %v1043
      %v1679 = vpop.f32.mrb[0].mxu0
      %v1680 = vadd.f32 0.0, %v1679
      %v1681 = vpop.f32.mrb[0].mxu0
      %v1682 = vpop.f32.mrb[0].mxu0
      %v1683 = vadd.f32 0.0, %v1682
      %v1684 = vpop.f32.mrb[0].mxu0
      %1685 = vmatprep.mubr.bf16.mxu0 %v1049
      %1686 = vmatmul.mubr.bf16.gmra.mrb[0].mxu0 %v1048
      %v1687 = vpop.f32.mrb[0].mxu0
      %v1688 = vadd.f32 0.0, %v1687
      %v1689 = vpop.f32.mrb[0].mxu0
      %v1690 = vpop.f32.mrb[0].mxu0
      %v1691 = vadd.f32 0.0, %v1690
      %v1692 = vpop.f32.mrb[0].mxu0
      %1693 = vmatprep.mubr.bf16.mxu0 %v1054
      %1694 = vmatmul.mubr.bf16.gmra.mrb[0].mxu0 %v1053
      %v1695 = vpop.f32.mrb[0].mxu0
      %v1696 = vadd.f32 0.0, %v1695
      %v1697 = vpop.f32.mrb[0].mxu0
      %v1698 = vpop.f32.mrb[0].mxu0
      %v1699 = vadd.f32 0.0, %v1698
      %v1700 = vpop.f32.mrb[0].mxu0
      %1701 = vmatprep.mubr.bf16.mxu0 %v1059
      %1702 = vmatmul.mubr.bf16.gmra.mrb[0].mxu0 %v1058
      %v1703 = vpop.f32.mrb[0].mxu0
      %v1704 = vadd.f32 0.0, %v1703
      %v1705 = vpop.f32.mrb[0].mxu0
      %v1706 = vpop.f32.mrb[0].mxu0
      %v1707 = vadd.f32 0.0, %v1706
      %v1708 = vpop.f32.mrb[0].mxu0
      %1709 = vmatprep.mubr.bf16.mxu0 %v1064
      %1710 = vmatmul.mubr.bf16.gmra.mrb[0].mxu0 %v1063
      %v1711 = vpop.f32.mrb[0].mxu0
      %v1712 = vadd.f32 0.0, %v1711
      %v1713 = vpop.f32.mrb[0].mxu0
      %v1714 = vpop.f32.mrb[0].mxu0
      %v1715 = vadd.f32 0.0, %v1714
      %v1716 = vpop.f32.mrb[0].mxu0
      %1717 = vmatprep.mubr.bf16.mxu0 %v1069
      %1718 = vmatmul.mubr.bf16.gmra.mrb[0].mxu0 %v1068
      %v1719 = vpop.f32.mrb[0].mxu0
      %v1720 = vadd.f32 0.0, %v1719
      %v1721 = vpop.f32.mrb[0].mxu0
      %v1722 = vpop.f32.mrb[0].mxu0
      %v1723 = vadd.f32 0.0, %v1722
      %v1724 = vpop.f32.mrb[0].mxu0
      %1725 = vmatprep.mubr.bf16.mxu0 %v1074
      %1726 = vmatmul.mubr.bf16.gmra.mrb[0].mxu0 %v1073
      %v1727 = vpop.f32.mrb[0].mxu0
      %v1728 = vadd.f32 0.0, %v1727
      %v1729 = vpop.f32.mrb[0].mxu0
      %v1730 = vpop.f32.mrb[0].mxu0
      %v1731 = vadd.f32 0.0, %v1730
      %v1732 = vpop.f32.mrb[0].mxu0
      %1733 = vmatprep.mubr.bf16.mxu0 %v1079
      %1734 = vmatmul.mubr.bf16.gmra.mrb[0].mxu0 %v1078
      %v1735 = vpop.f32.mrb[0].mxu0
      %v1736 = vadd.f32 0.0, %v1735
      %v1737 = vpop.f32.mrb[0].mxu0
      %v1738 = vpop.f32.mrb[0].mxu0
      %v1739 = vadd.f32 0.0, %v1738
      %v1740 = vpop.f32.mrb[0].mxu0
      %1741 = vmatprep.mubr.bf16.mxu0 %v1084
      %1742 = vmatmul.mubr.bf16.gmra.mrb[0].mxu0 %v1083
      %v1743 = vpop.f32.mrb[0].mxu0
      %v1744 = vadd.f32 0.0, %v1743
      %v1745 = vpop.f32.mrb[0].mxu0
      %v1746 = vpop.f32.mrb[0].mxu0
      %v1747 = vadd.f32 0.0, %v1746
      %v1748 = vpop.f32.mrb[0].mxu0
      %1749 = vmatprep.mubr.bf16.mxu0 %v1089
      %1750 = vmatmul.mubr.bf16.gmra.mrb[0].mxu0 %v1088
      %v1751 = vpop.f32.mrb[0].mxu0
      %v1752 = vadd.f32 0.0, %v1751
      %v1753 = vpop.f32.mrb[0].mxu0
      %v1754 = vpop.f32.mrb[0].mxu0
      %v1755 = vadd.f32 0.0, %v1754
      %v1756 = vpop.f32.mrb[0].mxu0
      %1757 = vmatprep.mubr.bf16.mxu0 %v1094
      %1758 = vmatmul.mubr.bf16.gmra.mrb[0].mxu0 %v1093
      %v1759 = vpop.f32.mrb[0].mxu0
      %v1760 = vadd.f32 0.0, %v1759
      %v1761 = vpop.f32.mrb[0].mxu0
      %v1762 = vpop.f32.mrb[0].mxu0
      %v1763 = vadd.f32 0.0, %v1762
      %v1764 = vpop.f32.mrb[0].mxu0
      %1765 = vmatprep.mubr.bf16.mxu0 %v1099
      %1766 = vmatmul.mubr.bf16.gmra.mrb[0].mxu0 %v1098
      %v1767 = vpop.f32.mrb[0].mxu0
      %v1768 = vadd.f32 0.0, %v1767
      %v1769 = vpop.f32.mrb[0].mxu0
      %v1770 = vpop.f32.mrb[0].mxu0
      %v1771 = vadd.f32 0.0, %v1770
      %v1772 = vpop.f32.mrb[0].mxu0
      %1773 = vmatprep.mubr.bf16.mxu0 %v1104
      %1774 = vmatmul.mubr.bf16.gmra.mrb[0].mxu0 %v1103
      %v1775 = vpop.f32.mrb[0].mxu0
      %v1776 = vadd.f32 0.0, %v1775
      %v1777 = vpop.f32.mrb[0].mxu0
      %v1778 = vpop.f32.mrb[0].mxu0
      %v1779 = vadd.f32 0.0, %v1778
      %v1780 = vpop.f32.mrb[0].mxu0
      %1781 = vmatprep.mubr.bf16.mxu0 %v1109
      %1782 = vmatmul.mubr.bf16.gmra.mrb[0].mxu0 %v1108
      %v1783 = vpop.f32.mrb[0].mxu0
      %v1784 = vadd.f32 0.0, %v1783
      %v1785 = vpop.f32.mrb[0].mxu0
      %v1786 = vpop.f32.mrb[0].mxu0
      %v1787 = vadd.f32 0.0, %v1786
      %v1788 = vpop.f32.mrb[0].mxu0
      %1789 = vmatprep.mubr.bf16.mxu0 %v1114
      %1790 = vmatmul.mubr.bf16.gmra.mrb[0].mxu0 %v1113
      %v1791 = vpop.f32.mrb[0].mxu0
      %v1792 = vadd.f32 0.0, %v1791
      %v1793 = vpop.f32.mrb[0].mxu0
      %v1794 = vpop.f32.mrb[0].mxu0
      %v1795 = vadd.f32 0.0, %v1794
      %v1796 = vpop.f32.mrb[0].mxu0
      %1797 = vmatprep.mubr.bf16.mxu0 %v1119
      %1798 = vmatmul.mubr.bf16.gmra.mrb[0].mxu0 %v1118
      %v1799 = vpop.f32.mrb[0].mxu0
      %v1800 = vadd.f32 0.0, %v1799
      %v1801 = vpop.f32.mrb[0].mxu0
      %v1802 = vpop.f32.mrb[0].mxu0
      %v1803 = vadd.f32 0.0, %v1802
      %v1804 = vpop.f32.mrb[0].mxu0
      %1805 = vmatprep.mubr.bf16.mxu0 %v1124
      %1806 = vmatmul.mubr.bf16.gmra.mrb[0].mxu0 %v1123
      %v1807 = vpop.f32.mrb[0].mxu0
      %v1808 = vadd.f32 0.0, %v1807
      %v1809 = vpop.f32.mrb[0].mxu0
      %v1810 = vpop.f32.mrb[0].mxu0
      %v1811 = vadd.f32 0.0, %v1810
      %v1812 = vpop.f32.mrb[0].mxu0
      %1813 = vmatprep.mubr.bf16.mxu0 %v1129
      %1814 = vmatmul.mubr.bf16.gmra.mrb[0].mxu0 %v1128
      %v1815 = vpop.f32.mrb[0].mxu0
      %v1816 = vadd.f32 0.0, %v1815
      %v1817 = vpop.f32.mrb[0].mxu0
      %v1818 = vpop.f32.mrb[0].mxu0
      %v1819 = vadd.f32 0.0, %v1818
      %v1820 = vpop.f32.mrb[0].mxu0
      %1821 = vdwg.mxu0
      %1822 = vmatprep.subr.bf16.mxu0 0
      %1823 = vmatpush1.bf16.msra.mxu0 %v1469
      %1824 = vmatprep.subr.bf16.mxu0 0
      %1825 = vmatpush1.bf16.msra.mxu0 %v1470
      %1826 = vmatprep.subr.bf16.mxu0 0
      %1827 = vmatpush1.bf16.msra.mxu0 %v1471
      %1828 = vmatprep.subr.bf16.mxu0 0
      %1829 = vmatpush1.bf16.msra.mxu0 %v1472
      %1830 = vmatprep.subr.bf16.mxu0 0
      %1831 = vmatpush1.bf16.msra.mxu0 %v1473
      %1832 = vmatprep.subr.bf16.mxu0 0
      %1833 = vmatpush1.bf16.msra.mxu0 %v1474
      %1834 = vmatprep.subr.bf16.mxu0 0
      %1835 = vmatpush1.bf16.msra.mxu0 %v1475
      %1836 = vmatprep.subr.bf16.mxu0 0
      %1837 = vmatpush1.bf16.msra.mxu0 %v1476
      %1838 = vmatprep.subr.bf16.mxu0 0
      %1839 = vmatpush1.bf16.msra.mxu0 %v1477
      %1840 = vmatprep.subr.bf16.mxu0 0
      %1841 = vmatpush1.bf16.msra.mxu0 %v1478
      %1842 = vmatprep.subr.bf16.mxu0 0
      %1843 = vmatpush1.bf16.msra.mxu0 %v1479
      %1844 = vmatprep.subr.bf16.mxu0 0
      %1845 = vmatpush1.bf16.msra.mxu0 %v1480
      %1846 = vmatprep.subr.bf16.mxu0 0
      %1847 = vmatpush1.bf16.msra.mxu0 %v1481
      %1848 = vmatprep.subr.bf16.mxu0 0
      %1849 = vmatpush1.bf16.msra.mxu0 %v1482
      %1850 = vmatprep.subr.bf16.mxu0 0
      %1851 = vmatpush1.bf16.msra.mxu0 %v1483
      %1852 = vmatprep.subr.bf16.mxu0 0
      %1853 = vmatpush1.bf16.msra.mxu0 %v1484
      %1854 = vmatprep.mubr.bf16.mxu0 %v976
      %1855 = vmatmul.mubr.bf16.gmra.mrb[0].mxu0 %v975
      %v1856 = vpop.f32.mrb[0].mxu0
      %v1857 = vadd.f32 %v1568, %v1856
      %v1858 = vpop.f32.mrb[0].mxu0
      %v1859 = vpop.f32.mrb[0].mxu0
      %v1860 = vadd.f32 %v1571, %v1859
      %v1861 = vpop.f32.mrb[0].mxu0
      %1862 = vmatprep.mubr.bf16.mxu0 %v981
      %1863 = vmatmul.mubr.bf16.gmra.mrb[0].mxu0 %v980
      %v1864 = vpop.f32.mrb[0].mxu0
      %v1865 = vadd.f32 %v1576, %v1864
      %v1866 = vpop.f32.mrb[0].mxu0
      %v1867 = vpop.f32.mrb[0].mxu0
      %v1868 = vadd.f32 %v1579, %v1867
      %v1869 = vpop.f32.mrb[0].mxu0
      %1870 = vmatprep.mubr.bf16.mxu0 %v986
      %1871 = vmatmul.mubr.bf16.gmra.mrb[0].mxu0 %v985
      %v1872 = vpop.f32.mrb[0].mxu0
      %v1873 = vadd.f32 %v1584, %v1872
      %v1874 = vpop.f32.mrb[0].mxu0
      %v1875 = vpop.f32.mrb[0].mxu0
      %v1876 = vadd.f32 %v1587, %v1875
      %v1877 = vpop.f32.mrb[0].mxu0
      %1878 = vmatprep.mubr.bf16.mxu0 %v991
      %1879 = vmatmul.mubr.bf16.gmra.mrb[0].mxu0 %v990
      %v1880 = vpop.f32.mrb[0].mxu0
      %v1881 = vadd.f32 %v1592, %v1880
      %v1882 = vpop.f32.mrb[0].mxu0
      %v1883 = vpop.f32.mrb[0].mxu0
      %v1884 = vadd.f32 %v1595, %v1883
      %v1885 = vpop.f32.mrb[0].mxu0
      %1886 = vmatprep.mubr.bf16.mxu0 %v996
      %1887 = vmatmul.mubr.bf16.gmra.mrb[0].mxu0 %v995
      %v1888 = vpop.f32.mrb[0].mxu0
      %v1889 = vadd.f32 %v1600, %v1888
      %v1890 = vpop.f32.mrb[0].mxu0
      %v1891 = vpop.f32.mrb[0].mxu0
      %v1892 = vadd.f32 %v1603, %v1891
      %v1893 = vpop.f32.mrb[0].mxu0
      %1894 = vmatprep.mubr.bf16.mxu0 %v1001
      %1895 = vmatmul.mubr.bf16.gmra.mrb[0].mxu0 %v1000
      %v1896 = vpop.f32.mrb[0].mxu0
      %v1897 = vadd.f32 %v1608, %v1896
      %v1898 = vpop.f32.mrb[0].mxu0
      %v1899 = vpop.f32.mrb[0].mxu0
      %v1900 = vadd.f32 %v1611, %v1899
      %v1901 = vpop.f32.mrb[0].mxu0
      %1902 = vmatprep.mubr.bf16.mxu0 %v1006
      %1903 = vmatmul.mubr.bf16.gmra.mrb[0].mxu0 %v1005
      %v1904 = vpop.f32.mrb[0].mxu0
      %v1905 = vadd.f32 %v1616, %v1904
      %v1906 = vpop.f32.mrb[0].mxu0
      %v1907 = vpop.f32.mrb[0].mxu0
      %v1908 = vadd.f32 %v1619, %v1907
      %v1909 = vpop.f32.mrb[0].mxu0
      %1910 = vmatprep.mubr.bf16.mxu0 %v1011
      %1911 = vmatmul.mubr.bf16.gmra.mrb[0].mxu0 %v1010
      %v1912 = vpop.f32.mrb[0].mxu0
      %v1913 = vadd.f32 %v1624, %v1912
      %v1914 = vpop.f32.mrb[0].mxu0
      %v1915 = vpop.f32.mrb[0].mxu0
      %v1916 = vadd.f32 %v1627, %v1915
      %v1917 = vpop.f32.mrb[0].mxu0
      %1918 = vmatprep.mubr.bf16.mxu0 %v1016
      %1919 = vmatmul.mubr.bf16.gmra.mrb[0].mxu0 %v1015
      %v1920 = vpop.f32.mrb[0].mxu0
      %v1921 = vadd.f32 %v1632, %v1920
      %v1922 = vpop.f32.mrb[0].mxu0
      %v1923 = vpop.f32.mrb[0].mxu0
      %v1924 = vadd.f32 %v1635, %v1923
      %v1925 = vpop.f32.mrb[0].mxu0
      %1926 = vmatprep.mubr.bf16.mxu0 %v1021
      %1927 = vmatmul.mubr.bf16.gmra.mrb[0].mxu0 %v1020
      %v1928 = vpop.f32.mrb[0].mxu0
      %v1929 = vadd.f32 %v1640, %v1928
      %v1930 = vpop.f32.mrb[0].mxu0
      %v1931 = vpop.f32.mrb[0].mxu0
      %v1932 = vadd.f32 %v1643, %v1931
      %v1933 = vpop.f32.mrb[0].mxu0
      %1934 = vmatprep.mubr.bf16.mxu0 %v1026
      %1935 = vmatmul.mubr.bf16.gmra.mrb[0].mxu0 %v1025
      %v1936 = vpop.f32.mrb[0].mxu0
      %v1937 = vadd.f32 %v1648, %v1936
      %v1938 = vpop.f32.mrb[0].mxu0
      %v1939 = vpop.f32.mrb[0].mxu0
      %v1940 = vadd.f32 %v1651, %v1939
      %v1941 = vpop.f32.mrb[0].mxu0
      %1942 = vmatprep.mubr.bf16.mxu0 %v1031
      %1943 = vmatmul.mubr.bf16.gmra.mrb[0].mxu0 %v1030
      %v1944 = vpop.f32.mrb[0].mxu0
      %v1945 = vadd.f32 %v1656, %v1944
      %v1946 = vpop.f32.mrb[0].mxu0
      %v1947 = vpop.f32.mrb[0].mxu0
      %v1948 = vadd.f32 %v1659, %v1947
      %v1949 = vpop.f32.mrb[0].mxu0
      %1950 = vmatprep.mubr.bf16.mxu0 %v1036
      %1951 = vmatmul.mubr.bf16.gmra.mrb[0].mxu0 %v1035
      %v1952 = vpop.f32.mrb[0].mxu0
      %v1953 = vadd.f32 %v1664, %v1952
      %v1954 = vpop.f32.mrb[0].mxu0
      %v1955 = vpop.f32.mrb[0].mxu0
      %v1956 = vadd.f32 %v1667, %v1955
      %v1957 = vpop.f32.mrb[0].mxu0
      %1958 = vmatprep.mubr.bf16.mxu0 %v1041
      %1959 = vmatmul.mubr.bf16.gmra.mrb[0].mxu0 %v1040
      %v1960 = vpop.f32.mrb[0].mxu0
      %v1961 = vadd.f32 %v1672, %v1960
      %v1962 = vpop.f32.mrb[0].mxu0
      %v1963 = vpop.f32.mrb[0].mxu0
      %v1964 = vadd.f32 %v1675, %v1963
      %v1965 = vpop.f32.mrb[0].mxu0
      %1966 = vmatprep.mubr.bf16.mxu0 %v1046
      %1967 = vmatmul.mubr.bf16.gmra.mrb[0].mxu0 %v1045
      %v1968 = vpop.f32.mrb[0].mxu0
      %v1969 = vadd.f32 %v1680, %v1968
      %v1970 = vpop.f32.mrb[0].mxu0
      %v1971 = vpop.f32.mrb[0].mxu0
      %v1972 = vadd.f32 %v1683, %v1971
      %v1973 = vpop.f32.mrb[0].mxu0
      %1974 = vmatprep.mubr.bf16.mxu0 %v1051
      %1975 = vmatmul.mubr.bf16.gmra.mrb[0].mxu0 %v1050
      %v1976 = vpop.f32.mrb[0].mxu0
      %v1977 = vadd.f32 %v1688, %v1976
      %v1978 = vpop.f32.mrb[0].mxu0
      %v1979 = vpop.f32.mrb[0].mxu0
      %v1980 = vadd.f32 %v1691, %v1979
      %v1981 = vpop.f32.mrb[0].mxu0
      %1982 = vmatprep.mubr.bf16.mxu0 %v1056
      %1983 = vmatmul.mubr.bf16.gmra.mrb[0].mxu0 %v1055
      %v1984 = vpop.f32.mrb[0].mxu0
      %v1985 = vadd.f32 %v1696, %v1984
      %v1986 = vpop.f32.mrb[0].mxu0
      %v1987 = vpop.f32.mrb[0].mxu0
      %v1988 = vadd.f32 %v1699, %v1987
      %v1989 = vpop.f32.mrb[0].mxu0
      %1990 = vmatprep.mubr.bf16.mxu0 %v1061
      %1991 = vmatmul.mubr.bf16.gmra.mrb[0].mxu0 %v1060
      %v1992 = vpop.f32.mrb[0].mxu0
      %v1993 = vadd.f32 %v1704, %v1992
      %v1994 = vpop.f32.mrb[0].mxu0
      %v1995 = vpop.f32.mrb[0].mxu0
      %v1996 = vadd.f32 %v1707, %v1995
      %v1997 = vpop.f32.mrb[0].mxu0
      %1998 = vmatprep.mubr.bf16.mxu0 %v1066
      %1999 = vmatmul.mubr.bf16.gmra.mrb[0].mxu0 %v1065
      %v2000 = vpop.f32.mrb[0].mxu0
      %v2001 = vadd.f32 %v1712, %v2000
      %v2002 = vpop.f32.mrb[0].mxu0
      %v2003 = vpop.f32.mrb[0].mxu0
      %v2004 = vadd.f32 %v1715, %v2003
      %v2005 = vpop.f32.mrb[0].mxu0
      %2006 = vmatprep.mubr.bf16.mxu0 %v1071
      %2007 = vmatmul.mubr.bf16.gmra.mrb[0].mxu0 %v1070
      %v2008 = vpop.f32.mrb[0].mxu0
      %v2009 = vadd.f32 %v1720, %v2008
      %v2010 = vpop.f32.mrb[0].mxu0
      %v2011 = vpop.f32.mrb[0].mxu0
      %v2012 = vadd.f32 %v1723, %v2011
      %v2013 = vpop.f32.mrb[0].mxu0
      %2014 = vmatprep.mubr.bf16.mxu0 %v1076
      %2015 = vmatmul.mubr.bf16.gmra.mrb[0].mxu0 %v1075
      %v2016 = vpop.f32.mrb[0].mxu0
      %v2017 = vadd.f32 %v1728, %v2016
      %v2018 = vpop.f32.mrb[0].mxu0
      %v2019 = vpop.f32.mrb[0].mxu0
      %v2020 = vadd.f32 %v1731, %v2019
      %v2021 = vpop.f32.mrb[0].mxu0
      %2022 = vmatprep.mubr.bf16.mxu0 %v1081
      %2023 = vmatmul.mubr.bf16.gmra.mrb[0].mxu0 %v1080
      %v2024 = vpop.f32.mrb[0].mxu0
      %v2025 = vadd.f32 %v1736, %v2024
      %v2026 = vpop.f32.mrb[0].mxu0
      %v2027 = vpop.f32.mrb[0].mxu0
      %v2028 = vadd.f32 %v1739, %v2027
      %v2029 = vpop.f32.mrb[0].mxu0
      %2030 = vmatprep.mubr.bf16.mxu0 %v1086
      %2031 = vmatmul.mubr.bf16.gmra.mrb[0].mxu0 %v1085
      %v2032 = vpop.f32.mrb[0].mxu0
      %v2033 = vadd.f32 %v1744, %v2032
      %v2034 = vpop.f32.mrb[0].mxu0
      %v2035 = vpop.f32.mrb[0].mxu0
      %v2036 = vadd.f32 %v1747, %v2035
      %v2037 = vpop.f32.mrb[0].mxu0
      %2038 = vmatprep.mubr.bf16.mxu0 %v1091
      %2039 = vmatmul.mubr.bf16.gmra.mrb[0].mxu0 %v1090
      %v2040 = vpop.f32.mrb[0].mxu0
      %v2041 = vadd.f32 %v1752, %v2040
      %v2042 = vpop.f32.mrb[0].mxu0
      %v2043 = vpop.f32.mrb[0].mxu0
      %v2044 = vadd.f32 %v1755, %v2043
      %v2045 = vpop.f32.mrb[0].mxu0
      %2046 = vmatprep.mubr.bf16.mxu0 %v1096
      %2047 = vmatmul.mubr.bf16.gmra.mrb[0].mxu0 %v1095
      %v2048 = vpop.f32.mrb[0].mxu0
      %v2049 = vadd.f32 %v1760, %v2048
      %v2050 = vpop.f32.mrb[0].mxu0
      %v2051 = vpop.f32.mrb[0].mxu0
      %v2052 = vadd.f32 %v1763, %v2051
      %v2053 = vpop.f32.mrb[0].mxu0
      %2054 = vmatprep.mubr.bf16.mxu0 %v1101
      %2055 = vmatmul.mubr.bf16.gmra.mrb[0].mxu0 %v1100
      %v2056 = vpop.f32.mrb[0].mxu0
      %v2057 = vadd.f32 %v1768, %v2056
      %v2058 = vpop.f32.mrb[0].mxu0
      %v2059 = vpop.f32.mrb[0].mxu0
      %v2060 = vadd.f32 %v1771, %v2059
      %v2061 = vpop.f32.mrb[0].mxu0
      %2062 = vmatprep.mubr.bf16.mxu0 %v1106
      %2063 = vmatmul.mubr.bf16.gmra.mrb[0].mxu0 %v1105
      %v2064 = vpop.f32.mrb[0].mxu0
      %v2065 = vadd.f32 %v1776, %v2064
      %v2066 = vpop.f32.mrb[0].mxu0
      %v2067 = vpop.f32.mrb[0].mxu0
      %v2068 = vadd.f32 %v1779, %v2067
      %v2069 = vpop.f32.mrb[0].mxu0
      %2070 = vmatprep.mubr.bf16.mxu0 %v1111
      %2071 = vmatmul.mubr.bf16.gmra.mrb[0].mxu0 %v1110
      %v2072 = vpop.f32.mrb[0].mxu0
      %v2073 = vadd.f32 %v1784, %v2072
      %v2074 = vpop.f32.mrb[0].mxu0
      %v2075 = vpop.f32.mrb[0].mxu0
      %v2076 = vadd.f32 %v1787, %v2075
      %v2077 = vpop.f32.mrb[0].mxu0
      %2078 = vmatprep.mubr.bf16.mxu0 %v1116
      %2079 = vmatmul.mubr.bf16.gmra.mrb[0].mxu0 %v1115
      %v2080 = vpop.f32.mrb[0].mxu0
      %v2081 = vadd.f32 %v1792, %v2080
      %v2082 = vpop.f32.mrb[0].mxu0
      %v2083 = vpop.f32.mrb[0].mxu0
      %v2084 = vadd.f32 %v1795, %v2083
      %v2085 = vpop.f32.mrb[0].mxu0
      %2086 = vmatprep.mubr.bf16.mxu0 %v1121
      %2087 = vmatmul.mubr.bf16.gmra.mrb[0].mxu0 %v1120
      %v2088 = vpop.f32.mrb[0].mxu0
      %v2089 = vadd.f32 %v1800, %v2088
      %v2090 = vpop.f32.mrb[0].mxu0
      %v2091 = vpop.f32.mrb[0].mxu0
      %v2092 = vadd.f32 %v1803, %v2091
      %v2093 = vpop.f32.mrb[0].mxu0
      %2094 = vmatprep.mubr.bf16.mxu0 %v1126
      %2095 = vmatmul.mubr.bf16.gmra.mrb[0].mxu0 %v1125
      %v2096 = vpop.f32.mrb[0].mxu0
      %v2097 = vadd.f32 %v1808, %v2096
      %v2098 = vpop.f32.mrb[0].mxu0
      %v2099 = vpop.f32.mrb[0].mxu0
      %v2100 = vadd.f32 %v1811, %v2099
      %v2101 = vpop.f32.mrb[0].mxu0
      %2102 = vmatprep.mubr.bf16.mxu0 %v1131
      %2103 = vmatmul.mubr.bf16.gmra.mrb[0].mxu0 %v1130
      %v2104 = vpop.f32.mrb[0].mxu0
      %v2105 = vadd.f32 %v1816, %v2104
      %v2106 = vpop.f32.mrb[0].mxu0
      %v2107 = vpop.f32.mrb[0].mxu0
      %v2108 = vadd.f32 %v1819, %v2107
      %v2109 = vpop.f32.mrb[0].mxu0
      %2110 = vdwg.mxu0
      %2111 = vmatprep.subr.bf16.mxu0 0
      %2112 = vmatpush1.bf16.msra.mxu0 %v1485
      %2113 = vmatprep.subr.bf16.mxu0 0
      %2114 = vmatpush1.bf16.msra.mxu0 %v1486
      %2115 = vmatprep.subr.bf16.mxu0 0
      %2116 = vmatpush1.bf16.msra.mxu0 %v1487
      %2117 = vmatprep.subr.bf16.mxu0 0
      %2118 = vmatpush1.bf16.msra.mxu0 %v1488
      %2119 = vmatprep.subr.bf16.mxu0 0
      %2120 = vmatpush1.bf16.msra.mxu0 %v1489
      %2121 = vmatprep.subr.bf16.mxu0 0
      %2122 = vmatpush1.bf16.msra.mxu0 %v1490
      %2123 = vmatprep.subr.bf16.mxu0 0
      %2124 = vmatpush1.bf16.msra.mxu0 %v1491
      %2125 = vmatprep.subr.bf16.mxu0 0
      %2126 = vmatpush1.bf16.msra.mxu0 %v1492
      %2127 = vmatprep.subr.bf16.mxu0 0
      %2128 = vmatpush1.bf16.msra.mxu0 0
      %2129 = vmatprep.subr.bf16.mxu0 0
      %2130 = vmatpush1.bf16.msra.mxu0 0
      %2131 = vmatprep.subr.bf16.mxu0 0
      %2132 = vmatpush1.bf16.msra.mxu0 0
      %2133 = vmatprep.subr.bf16.mxu0 0
      %2134 = vmatpush1.bf16.msra.mxu0 0
      %2135 = vmatprep.subr.bf16.mxu0 0
      %2136 = vmatpush1.bf16.msra.mxu0 0
      %2137 = vmatprep.subr.bf16.mxu0 0
      %2138 = vmatpush1.bf16.msra.mxu0 0
      %2139 = vmatprep.subr.bf16.mxu0 0
      %2140 = vmatpush1.bf16.msra.mxu0 0
      %2141 = vmatprep.subr.bf16.mxu0 0
      %2142 = vmatpush1.bf16.msra.mxu0 0
      %2143 = vmatprep.mubr.bf16.mxu0 0
      %2144 = vmatmul.mubr.bf16.gmra.mrb[0].mxu0 %v977
      %v2145 = vpop.f32.mrb[0].mxu0
      %v2146 = vadd.f32 %v1857, %v2145
      %v2147 = vpop.f32.mrb[0].mxu0
      %v2148 = vpop.f32.mrb[0].mxu0
      %v2149 = vadd.f32 %v1860, %v2148
      %v2150 = vpop.f32.mrb[0].mxu0
      %2151 = vmatprep.mubr.bf16.mxu0 0
      %2152 = vmatmul.mubr.bf16.gmra.mrb[0].mxu0 %v982
      %v2153 = vpop.f32.mrb[0].mxu0
      %v2154 = vadd.f32 %v1865, %v2153
      %v2155 = vpop.f32.mrb[0].mxu0
      %v2156 = vpop.f32.mrb[0].mxu0
      %v2157 = vadd.f32 %v1868, %v2156
      %v2158 = vpop.f32.mrb[0].mxu0
      %2159 = vmatprep.mubr.bf16.mxu0 0
      %2160 = vmatmul.mubr.bf16.gmra.mrb[0].mxu0 %v987
      %v2161 = vpop.f32.mrb[0].mxu0
      %v2162 = vadd.f32 %v1873, %v2161
      %v2163 = vpop.f32.mrb[0].mxu0
      %v2164 = vpop.f32.mrb[0].mxu0
      %v2165 = vadd.f32 %v1876, %v2164
      %v2166 = vpop.f32.mrb[0].mxu0
      %2167 = vmatprep.mubr.bf16.mxu0 0
      %2168 = vmatmul.mubr.bf16.gmra.mrb[0].mxu0 %v992
      %v2169 = vpop.f32.mrb[0].mxu0
      %v2170 = vadd.f32 %v1881, %v2169
      %v2171 = vpop.f32.mrb[0].mxu0
      %v2172 = vpop.f32.mrb[0].mxu0
      %v2173 = vadd.f32 %v1884, %v2172
      %v2174 = vpop.f32.mrb[0].mxu0
      %2175 = vmatprep.mubr.bf16.mxu0 0
      %2176 = vmatmul.mubr.bf16.gmra.mrb[0].mxu0 %v997
      %v2177 = vpop.f32.mrb[0].mxu0
      %v2178 = vadd.f32 %v1889, %v2177
      %v2179 = vpop.f32.mrb[0].mxu0
      %v2180 = vpop.f32.mrb[0].mxu0
      %v2181 = vadd.f32 %v1892, %v2180
      %v2182 = vpop.f32.mrb[0].mxu0
      %2183 = vmatprep.mubr.bf16.mxu0 0
      %2184 = vmatmul.mubr.bf16.gmra.mrb[0].mxu0 %v1002
      %v2185 = vpop.f32.mrb[0].mxu0
      %v2186 = vadd.f32 %v1897, %v2185
      %v2187 = vpop.f32.mrb[0].mxu0
      %v2188 = vpop.f32.mrb[0].mxu0
      %v2189 = vadd.f32 %v1900, %v2188
      %v2190 = vpop.f32.mrb[0].mxu0
      %2191 = vmatprep.mubr.bf16.mxu0 0
      %2192 = vmatmul.mubr.bf16.gmra.mrb[0].mxu0 %v1007
      %v2193 = vpop.f32.mrb[0].mxu0
      %v2194 = vadd.f32 %v1905, %v2193
      %v2195 = vpop.f32.mrb[0].mxu0
      %v2196 = vpop.f32.mrb[0].mxu0
      %v2197 = vadd.f32 %v1908, %v2196
      %v2198 = vpop.f32.mrb[0].mxu0
      %2199 = vmatprep.mubr.bf16.mxu0 0
      %2200 = vmatmul.mubr.bf16.gmra.mrb[0].mxu0 %v1012
      %v2201 = vpop.f32.mrb[0].mxu0
      %v2202 = vadd.f32 %v1913, %v2201
      %v2203 = vpop.f32.mrb[0].mxu0
      %v2204 = vpop.f32.mrb[0].mxu0
      %v2205 = vadd.f32 %v1916, %v2204
      %v2206 = vpop.f32.mrb[0].mxu0
      %2207 = vmatprep.mubr.bf16.mxu0 0
      %2208 = vmatmul.mubr.bf16.gmra.mrb[0].mxu0 %v1017
      %v2209 = vpop.f32.mrb[0].mxu0
      %v2210 = vadd.f32 %v1921, %v2209
      %v2211 = vpop.f32.mrb[0].mxu0
      %v2212 = vpop.f32.mrb[0].mxu0
      %v2213 = vadd.f32 %v1924, %v2212
      %v2214 = vpop.f32.mrb[0].mxu0
      %2215 = vmatprep.mubr.bf16.mxu0 0
      %2216 = vmatmul.mubr.bf16.gmra.mrb[0].mxu0 %v1022
      %v2217 = vpop.f32.mrb[0].mxu0
      %v2218 = vadd.f32 %v1929, %v2217
      %v2219 = vpop.f32.mrb[0].mxu0
      %v2220 = vpop.f32.mrb[0].mxu0
      %v2221 = vadd.f32 %v1932, %v2220
      %v2222 = vpop.f32.mrb[0].mxu0
      %2223 = vmatprep.mubr.bf16.mxu0 0
      %2224 = vmatmul.mubr.bf16.gmra.mrb[0].mxu0 %v1027
      %v2225 = vpop.f32.mrb[0].mxu0
      %v2226 = vadd.f32 %v1937, %v2225
      %v2227 = vpop.f32.mrb[0].mxu0
      %v2228 = vpop.f32.mrb[0].mxu0
      %v2229 = vadd.f32 %v1940, %v2228
      %v2230 = vpop.f32.mrb[0].mxu0
      %2231 = vmatprep.mubr.bf16.mxu0 0
      %2232 = vmatmul.mubr.bf16.gmra.mrb[0].mxu0 %v1032
      %v2233 = vpop.f32.mrb[0].mxu0
      %v2234 = vadd.f32 %v1945, %v2233
      %v2235 = vpop.f32.mrb[0].mxu0
      %v2236 = vpop.f32.mrb[0].mxu0
      %v2237 = vadd.f32 %v1948, %v2236
      %v2238 = vpop.f32.mrb[0].mxu0
      %2239 = vmatprep.mubr.bf16.mxu0 0
      %2240 = vmatmul.mubr.bf16.gmra.mrb[0].mxu0 %v1037
      %v2241 = vpop.f32.mrb[0].mxu0
      %v2242 = vadd.f32 %v1953, %v2241
      %v2243 = vpop.f32.mrb[0].mxu0
      %v2244 = vpop.f32.mrb[0].mxu0
      %v2245 = vadd.f32 %v1956, %v2244
      %v2246 = vpop.f32.mrb[0].mxu0
      %2247 = vmatprep.mubr.bf16.mxu0 0
      %2248 = vmatmul.mubr.bf16.gmra.mrb[0].mxu0 %v1042
      %v2249 = vpop.f32.mrb[0].mxu0
      %v2250 = vadd.f32 %v1961, %v2249
      %v2251 = vpop.f32.mrb[0].mxu0
      %v2252 = vpop.f32.mrb[0].mxu0
      %v2253 = vadd.f32 %v1964, %v2252
      %v2254 = vpop.f32.mrb[0].mxu0
      %2255 = vmatprep.mubr.bf16.mxu0 0
      %2256 = vmatmul.mubr.bf16.gmra.mrb[0].mxu0 %v1047
      %v2257 = vpop.f32.mrb[0].mxu0
      %v2258 = vadd.f32 %v1969, %v2257
      %v2259 = vpop.f32.mrb[0].mxu0
      %v2260 = vpop.f32.mrb[0].mxu0
      %v2261 = vadd.f32 %v1972, %v2260
      %v2262 = vpop.f32.mrb[0].mxu0
      %2263 = vmatprep.mubr.bf16.mxu0 0
      %2264 = vmatmul.mubr.bf16.gmra.mrb[0].mxu0 %v1052
      %v2265 = vpop.f32.mrb[0].mxu0
      %v2266 = vadd.f32 %v1977, %v2265
      %v2267 = vpop.f32.mrb[0].mxu0
      %v2268 = vpop.f32.mrb[0].mxu0
      %v2269 = vadd.f32 %v1980, %v2268
      %v2270 = vpop.f32.mrb[0].mxu0
      %2271 = vmatprep.mubr.bf16.mxu0 0
      %2272 = vmatmul.mubr.bf16.gmra.mrb[0].mxu0 %v1057
      %v2273 = vpop.f32.mrb[0].mxu0
      %v2274 = vadd.f32 %v1985, %v2273
      %v2275 = vpop.f32.mrb[0].mxu0
      %v2276 = vpop.f32.mrb[0].mxu0
      %v2277 = vadd.f32 %v1988, %v2276
      %v2278 = vpop.f32.mrb[0].mxu0
      %2279 = vmatprep.mubr.bf16.mxu0 0
      %2280 = vmatmul.mubr.bf16.gmra.mrb[0].mxu0 %v1062
      %v2281 = vpop.f32.mrb[0].mxu0
      %v2282 = vadd.f32 %v1993, %v2281
      %v2283 = vpop.f32.mrb[0].mxu0
      %v2284 = vpop.f32.mrb[0].mxu0
      %v2285 = vadd.f32 %v1996, %v2284
      %v2286 = vpop.f32.mrb[0].mxu0
      %2287 = vmatprep.mubr.bf16.mxu0 0
      %2288 = vmatmul.mubr.bf16.gmra.mrb[0].mxu0 %v1067
      %v2289 = vpop.f32.mrb[0].mxu0
      %v2290 = vadd.f32 %v2001, %v2289
      %v2291 = vpop.f32.mrb[0].mxu0
      %v2292 = vpop.f32.mrb[0].mxu0
      %v2293 = vadd.f32 %v2004, %v2292
      %v2294 = vpop.f32.mrb[0].mxu0
      %2295 = vmatprep.mubr.bf16.mxu0 0
      %2296 = vmatmul.mubr.bf16.gmra.mrb[0].mxu0 %v1072
      %v2297 = vpop.f32.mrb[0].mxu0
      %v2298 = vadd.f32 %v2009, %v2297
      %v2299 = vpop.f32.mrb[0].mxu0
      %v2300 = vpop.f32.mrb[0].mxu0
      %v2301 = vadd.f32 %v2012, %v2300
      %v2302 = vpop.f32.mrb[0].mxu0
      %2303 = vmatprep.mubr.bf16.mxu0 0
      %2304 = vmatmul.mubr.bf16.gmra.mrb[0].mxu0 %v1077
      %v2305 = vpop.f32.mrb[0].mxu0
      %v2306 = vadd.f32 %v2017, %v2305
      %v2307 = vpop.f32.mrb[0].mxu0
      %v2308 = vpop.f32.mrb[0].mxu0
      %v2309 = vadd.f32 %v2020, %v2308
      %v2310 = vpop.f32.mrb[0].mxu0
      %2311 = vmatprep.mubr.bf16.mxu0 0
      %2312 = vmatmul.mubr.bf16.gmra.mrb[0].mxu0 %v1082
      %v2313 = vpop.f32.mrb[0].mxu0
      %v2314 = vadd.f32 %v2025, %v2313
      %v2315 = vpop.f32.mrb[0].mxu0
      %v2316 = vpop.f32.mrb[0].mxu0
      %v2317 = vadd.f32 %v2028, %v2316
      %v2318 = vpop.f32.mrb[0].mxu0
      %2319 = vmatprep.mubr.bf16.mxu0 0
      %2320 = vmatmul.mubr.bf16.gmra.mrb[0].mxu0 %v1087
      %v2321 = vpop.f32.mrb[0].mxu0
      %v2322 = vadd.f32 %v2033, %v2321
      %v2323 = vpop.f32.mrb[0].mxu0
      %v2324 = vpop.f32.mrb[0].mxu0
      %v2325 = vadd.f32 %v2036, %v2324
      %v2326 = vpop.f32.mrb[0].mxu0
      %2327 = vmatprep.mubr.bf16.mxu0 0
      %2328 = vmatmul.mubr.bf16.gmra.mrb[0].mxu0 %v1092
      %v2329 = vpop.f32.mrb[0].mxu0
      %v2330 = vadd.f32 %v2041, %v2329
      %v2331 = vpop.f32.mrb[0].mxu0
      %v2332 = vpop.f32.mrb[0].mxu0
      %v2333 = vadd.f32 %v2044, %v2332
      %v2334 = vpop.f32.mrb[0].mxu0
      %2335 = vmatprep.mubr.bf16.mxu0 0
      %2336 = vmatmul.mubr.bf16.gmra.mrb[0].mxu0 %v1097
      %v2337 = vpop.f32.mrb[0].mxu0
      %v2338 = vadd.f32 %v2049, %v2337
      %v2339 = vpop.f32.mrb[0].mxu0
      %v2340 = vpop.f32.mrb[0].mxu0
      %v2341 = vadd.f32 %v2052, %v2340
      %v2342 = vpop.f32.mrb[0].mxu0
      %2343 = vmatprep.mubr.bf16.mxu0 0
      %2344 = vmatmul.mubr.bf16.gmra.mrb[0].mxu0 %v1102
      %v2345 = vpop.f32.mrb[0].mxu0
      %v2346 = vadd.f32 %v2057, %v2345
      %v2347 = vpop.f32.mrb[0].mxu0
      %v2348 = vpop.f32.mrb[0].mxu0
      %v2349 = vadd.f32 %v2060, %v2348
      %v2350 = vpop.f32.mrb[0].mxu0
      %2351 = vmatprep.mubr.bf16.mxu0 0
      %2352 = vmatmul.mubr.bf16.gmra.mrb[0].mxu0 %v1107
      %v2353 = vpop.f32.mrb[0].mxu0
      %v2354 = vadd.f32 %v2065, %v2353
      %v2355 = vpop.f32.mrb[0].mxu0
      %v2356 = vpop.f32.mrb[0].mxu0
      %v2357 = vadd.f32 %v2068, %v2356
      %v2358 = vpop.f32.mrb[0].mxu0
      %2359 = vmatprep.mubr.bf16.mxu0 0
      %2360 = vmatmul.mubr.bf16.gmra.mrb[0].mxu0 %v1112
      %v2361 = vpop.f32.mrb[0].mxu0
      %v2362 = vadd.f32 %v2073, %v2361
      %v2363 = vpop.f32.mrb[0].mxu0
      %v2364 = vpop.f32.mrb[0].mxu0
      %v2365 = vadd.f32 %v2076, %v2364
      %v2366 = vpop.f32.mrb[0].mxu0
      %2367 = vmatprep.mubr.bf16.mxu0 0
      %2368 = vmatmul.mubr.bf16.gmra.mrb[0].mxu0 %v1117
      %v2369 = vpop.f32.mrb[0].mxu0
      %v2370 = vadd.f32 %v2081, %v2369
      %v2371 = vpop.f32.mrb[0].mxu0
      %v2372 = vpop.f32.mrb[0].mxu0
      %v2373 = vadd.f32 %v2084, %v2372
      %v2374 = vpop.f32.mrb[0].mxu0
      %2375 = vmatprep.mubr.bf16.mxu0 0
      %2376 = vmatmul.mubr.bf16.gmra.mrb[0].mxu0 %v1122
      %v2377 = vpop.f32.mrb[0].mxu0
      %v2378 = vadd.f32 %v2089, %v2377
      %v2379 = vpop.f32.mrb[0].mxu0
      %v2380 = vpop.f32.mrb[0].mxu0
      %v2381 = vadd.f32 %v2092, %v2380
      %v2382 = vpop.f32.mrb[0].mxu0
      %2383 = vmatprep.mubr.bf16.mxu0 0
      %2384 = vmatmul.mubr.bf16.gmra.mrb[0].mxu0 %v1127
      %v2385 = vpop.f32.mrb[0].mxu0
      %v2386 = vadd.f32 %v2097, %v2385
      %v2387 = vpop.f32.mrb[0].mxu0
      %v2388 = vpop.f32.mrb[0].mxu0
      %v2389 = vadd.f32 %v2100, %v2388
      %v2390 = vpop.f32.mrb[0].mxu0
      %2391 = vmatprep.mubr.bf16.mxu0 0
      %2392 = vmatmul.mubr.bf16.gmra.mrb[0].mxu0 %v1132
      %v2393 = vpop.f32.mrb[0].mxu0
      %v2394 = vadd.f32 %v2105, %v2393
      %v2395 = vpop.f32.mrb[0].mxu0
      %v2396 = vpop.f32.mrb[0].mxu0
      %v2397 = vadd.f32 %v2108, %v2396
      %v2398 = vpop.f32.mrb[0].mxu0
      %2399 = vdwg.mxu0
      %2400 = vst [vmem:[%s182] sm:$0xff] %v2146
      %2401 = vst [vmem:[%s182 + $0x8] sm:$0xff] %v2149
      %2402 = vst [vmem:[%s182 + $0x10] sm:$0xff] %v2154
      %2403 = vst [vmem:[%s182 + $0x18] sm:$0xff] %v2157
      %2404 = vst [vmem:[%s182 + $0x20] sm:$0xff] %v2162
      %2405 = vst [vmem:[%s182 + $0x28] sm:$0xff] %v2165
      %2406 = vst [vmem:[%s182 + $0x30] sm:$0xff] %v2170
      %2407 = vst [vmem:[%s182 + $0x38] sm:$0xff] %v2173
      %2408 = vst [vmem:[%s182 + $0x40] sm:$0xff] %v2178
      %2409 = vst [vmem:[%s182 + $0x48] sm:$0xff] %v2181
      %2410 = vst [vmem:[%s182 + $0x50] sm:$0xff] %v2186
      %2411 = vst [vmem:[%s182 + $0x58] sm:$0xff] %v2189
      %2412 = vst [vmem:[%s182 + $0x60] sm:$0xff] %v2194
      %2413 = vst [vmem:[%s182 + $0x68] sm:$0xff] %v2197
      %2414 = vst [vmem:[%s182 + $0x70] sm:$0xff] %v2202
      %2415 = vst [vmem:[%s182 + $0x78] sm:$0xff] %v2205
      %2416 = vst [vmem:[%s182 + $0x80] sm:$0xff] %v2210
      %2417 = vst [vmem:[%s182 + $0x88] sm:$0xff] %v2213
      %2418 = vst [vmem:[%s182 + $0x90] sm:$0xff] %v2218
      %2419 = vst [vmem:[%s182 + $0x98] sm:$0xff] %v2221
      %2420 = vst [vmem:[%s182 + $0xa0] sm:$0xff] %v2226
      %2421 = vst [vmem:[%s182 + $0xa8] sm:$0xff] %v2229
      %2422 = vst [vmem:[%s182 + $0xb0] sm:$0xff] %v2234
      %2423 = vst [vmem:[%s182 + $0xb8] sm:$0xff] %v2237
      %2424 = vst [vmem:[%s182 + $0xc0] sm:$0xff] %v2242
      %2425 = vst [vmem:[%s182 + $0xc8] sm:$0xff] %v2245
      %2426 = vst [vmem:[%s182 + $0xd0] sm:$0xff] %v2250
      %2427 = vst [vmem:[%s182 + $0xd8] sm:$0xff] %v2253
      %2428 = vst [vmem:[%s182 + $0xe0] sm:$0xff] %v2258
      %2429 = vst [vmem:[%s182 + $0xe8] sm:$0xff] %v2261
      %2430 = vst [vmem:[%s182 + $0xf0] sm:$0xff] %v2266
      %2431 = vst [vmem:[%s182 + $0xf8] sm:$0xff] %v2269
      %2432 = vst [vmem:[%s182 + $0x100] sm:$0xff] %v2274
      %2433 = vst [vmem:[%s182 + $0x108] sm:$0xff] %v2277
      %2434 = vst [vmem:[%s182 + $0x110] sm:$0xff] %v2282
      %2435 = vst [vmem:[%s182 + $0x118] sm:$0xff] %v2285
      %2436 = vst [vmem:[%s182 + $0x120] sm:$0xff] %v2290
      %2437 = vst [vmem:[%s182 + $0x128] sm:$0xff] %v2293
      %2438 = vst [vmem:[%s182 + $0x130] sm:$0xff] %v2298
      %2439 = vst [vmem:[%s182 + $0x138] sm:$0xff] %v2301
      %2440 = vst [vmem:[%s182 + $0x140] sm:$0xff] %v2306
      %2441 = vst [vmem:[%s182 + $0x148] sm:$0xff] %v2309
      %2442 = vst [vmem:[%s182 + $0x150] sm:$0xff] %v2314
      %2443 = vst [vmem:[%s182 + $0x158] sm:$0xff] %v2317
      %2444 = vst [vmem:[%s182 + $0x160] sm:$0xff] %v2322
      %2445 = vst [vmem:[%s182 + $0x168] sm:$0xff] %v2325
      %2446 = vst [vmem:[%s182 + $0x170] sm:$0xff] %v2330
      %2447 = vst [vmem:[%s182 + $0x178] sm:$0xff] %v2333
      %2448 = vst [vmem:[%s182 + $0x180] sm:$0xff] %v2338
      %2449 = vst [vmem:[%s182 + $0x188] sm:$0xff] %v2341
      %2450 = vst [vmem:[%s182 + $0x190] sm:$0xff] %v2346
      %2451 = vst [vmem:[%s182 + $0x198] sm:$0xff] %v2349
      %2452 = vst [vmem:[%s182 + $0x1a0] sm:$0xff] %v2354
      %2453 = vst [vmem:[%s182 + $0x1a8] sm:$0xff] %v2357
      %2454 = vst [vmem:[%s182 + $0x1b0] sm:$0xff] %v2362
      %2455 = vst [vmem:[%s182 + $0x1b8] sm:$0xff] %v2365
      %2456 = vst [vmem:[%s182 + $0x1c0] sm:$0xff] %v2370
      %2457 = vst [vmem:[%s182 + $0x1c8] sm:$0xff] %v2373
      %2458 = vst [vmem:[%s182 + $0x1d0] sm:$0xff] %v2378
      %2459 = vst [vmem:[%s182 + $0x1d8] sm:$0xff] %v2381
      %2460 = vst [vmem:[%s182 + $0x1e0] sm:$0xff] %v2386
      %2461 = vst [vmem:[%s182 + $0x1e8] sm:$0xff] %v2389
      %2462 = vst [vmem:[%s182 + $0x1f0] sm:$0xff] %v2394
      %2463 = vst [vmem:[%s182 + $0x1f8] sm:$0xff] %v2397
      %v2464 = vadd.f32 %v2146, %v2149
      %v2465 = vadd.f32 %v2464, %v2154
      %v2466 = vadd.f32 %v2465, %v2157
      %v2467 = vadd.f32 %v2466, %v2162
      %v2468 = vadd.f32 %v2467, %v2165
      %v2469 = vadd.f32 %v2468, %v2170
      %v2470 = vadd.f32 %v2469, %v2173
      %v2471 = vadd.f32 %v2470, %v2178
      %v2472 = vadd.f32 %v2471, %v2181
      %v2473 = vadd.f32 %v2472, %v2186
      %v2474 = vadd.f32 %v2473, %v2189
      %v2475 = vadd.f32 %v2474, %v2194
      %v2476 = vadd.f32 %v2475, %v2197
      %v2477 = vadd.f32 %v2476, %v2202
      %v2478 = vadd.f32 %v2477, %v2205
      %v2479 = vadd.f32 %v2478, %v2210
      %v2480 = vadd.f32 %v2479, %v2213
      %v2481 = vadd.f32 %v2480, %v2218
      %v2482 = vadd.f32 %v2481, %v2221
      %v2483 = vadd.f32 %v2482, %v2226
      %v2484 = vadd.f32 %v2483, %v2229
      %v2485 = vadd.f32 %v2484, %v2234
      %v2486 = vadd.f32 %v2485, %v2237
      %v2487 = vadd.f32 %v2486, %v2242
      %v2488 = vadd.f32 %v2487, %v2245
      %v2489 = vadd.f32 %v2488, %v2250
      %v2490 = vadd.f32 %v2489, %v2253
      %v2491 = vadd.f32 %v2490, %v2258
      %v2492 = vadd.f32 %v2491, %v2261
      %v2493 = vadd.f32 %v2492, %v2266
      %v2494 = vadd.f32 %v2493, %v2269
      %v2495 = vadd.f32 %v2494, %v2274
      %v2496 = vadd.f32 %v2495, %v2277
      %v2497 = vadd.f32 %v2496, %v2282
      %v2498 = vadd.f32 %v2497, %v2285
      %v2499 = vadd.f32 %v2498, %v2290
      %v2500 = vadd.f32 %v2499, %v2293
      %v2501 = vadd.f32 %v2500, %v2298
      %v2502 = vadd.f32 %v2501, %v2301
      %v2503 = vadd.f32 %v2502, %v2306
      %v2504 = vadd.f32 %v2503, %v2309
      %v2505 = vadd.f32 %v2504, %v2314
      %v2506 = vadd.f32 %v2505, %v2317
      %v2507 = vadd.f32 %v2506, %v2322
      %v2508 = vadd.f32 %v2507, %v2325
      %v2509 = vadd.f32 %v2508, %v2330
      %v2510 = vadd.f32 %v2509, %v2333
      %v2511 = vadd.f32 %v2510, %v2338
      %v2512 = vadd.f32 %v2511, %v2341
      %v2513 = vadd.f32 %v2512, %v2346
      %v2514 = vadd.f32 %v2513, %v2349
      %v2515 = vadd.f32 %v2514, %v2354
      %v2516 = vadd.f32 %v2515, %v2357
      %v2517 = vadd.f32 %v2516, %v2362
      %v2518 = vadd.f32 %v2517, %v2365
      %v2519 = vadd.f32 %v2518, %v2370
      %v2520 = vadd.f32 %v2519, %v2373
      %v2521 = vadd.f32 %v2520, %v2378
      %v2522 = vadd.f32 %v2521, %v2381
      %v2523 = vadd.f32 %v2522, %v2386
      %v2524 = vadd.f32 %v2523, %v2389
      %v2525 = vadd.f32 %v2524, %v2394
      %v2526 = vadd.f32 %v2525, %v2397
      %v2527 = vrot.slane %v2526, 4
      %v2528 = vadd.f32 %v2526, %v2527
      %v2529 = vrot.slane %v2528, 2
      %v2530 = vadd.f32 %v2528, %v2529
      %v2531 = vrot.slane %v2530, 1
      %v2532 = vadd.f32 %v2530, %v2531
      %v2533 = vmul.f32 %v2146, %v2146
      %v2534 = vmul.f32 %v2149, %v2149
      %v2535 = vmul.f32 %v2154, %v2154
      %v2536 = vmul.f32 %v2157, %v2157
      %v2537 = vmul.f32 %v2162, %v2162
      %v2538 = vmul.f32 %v2165, %v2165
      %v2539 = vmul.f32 %v2170, %v2170
      %v2540 = vmul.f32 %v2173, %v2173
      %v2541 = vmul.f32 %v2178, %v2178
      %v2542 = vmul.f32 %v2181, %v2181
      %v2543 = vmul.f32 %v2186, %v2186
      %v2544 = vmul.f32 %v2189, %v2189
      %v2545 = vmul.f32 %v2194, %v2194
      %v2546 = vmul.f32 %v2197, %v2197
      %v2547 = vmul.f32 %v2202, %v2202
      %v2548 = vmul.f32 %v2205, %v2205
      %v2549 = vmul.f32 %v2210, %v2210
      %v2550 = vmul.f32 %v2213, %v2213
      %v2551 = vmul.f32 %v2218, %v2218
      %v2552 = vmul.f32 %v2221, %v2221
      %v2553 = vmul.f32 %v2226, %v2226
      %v2554 = vmul.f32 %v2229, %v2229
      %v2555 = vmul.f32 %v2234, %v2234
      %v2556 = vmul.f32 %v2237, %v2237
      %v2557 = vmul.f32 %v2242, %v2242
      %v2558 = vmul.f32 %v2245, %v2245
      %v2559 = vmul.f32 %v2250, %v2250
      %v2560 = vmul.f32 %v2253, %v2253
      %v2561 = vmul.f32 %v2258, %v2258
      %v2562 = vmul.f32 %v2261, %v2261
      %v2563 = vmul.f32 %v2266, %v2266
      %v2564 = vmul.f32 %v2269, %v2269
      %v2565 = vmul.f32 %v2274, %v2274
      %v2566 = vmul.f32 %v2277, %v2277
      %v2567 = vmul.f32 %v2282, %v2282
      %v2568 = vmul.f32 %v2285, %v2285
      %v2569 = vmul.f32 %v2290, %v2290
      %v2570 = vmul.f32 %v2293, %v2293
      %v2571 = vmul.f32 %v2298, %v2298
      %v2572 = vmul.f32 %v2301, %v2301
      %v2573 = vmul.f32 %v2306, %v2306
      %v2574 = vmul.f32 %v2309, %v2309
      %v2575 = vmul.f32 %v2314, %v2314
      %v2576 = vmul.f32 %v2317, %v2317
      %v2577 = vmul.f32 %v2322, %v2322
      %v2578 = vmul.f32 %v2325, %v2325
      %v2579 = vmul.f32 %v2330, %v2330
      %v2580 = vmul.f32 %v2333, %v2333
      %v2581 = vmul.f32 %v2338, %v2338
      %v2582 = vmul.f32 %v2341, %v2341
      %v2583 = vmul.f32 %v2346, %v2346
      %v2584 = vmul.f32 %v2349, %v2349
      %v2585 = vmul.f32 %v2354, %v2354
      %v2586 = vmul.f32 %v2357, %v2357
      %v2587 = vmul.f32 %v2362, %v2362
      %v2588 = vmul.f32 %v2365, %v2365
      %v2589 = vmul.f32 %v2370, %v2370
      %v2590 = vmul.f32 %v2373, %v2373
      %v2591 = vmul.f32 %v2378, %v2378
      %v2592 = vmul.f32 %v2381, %v2381
      %v2593 = vmul.f32 %v2386, %v2386
      %v2594 = vmul.f32 %v2389, %v2389
      %v2595 = vmul.f32 %v2394, %v2394
      %v2596 = vmul.f32 %v2397, %v2397
      %v2597 = vadd.f32 %v2533, %v2534
      %v2598 = vadd.f32 %v2597, %v2535
      %v2599 = vadd.f32 %v2598, %v2536
      %v2600 = vadd.f32 %v2599, %v2537
      %v2601 = vadd.f32 %v2600, %v2538
      %v2602 = vadd.f32 %v2601, %v2539
      %v2603 = vadd.f32 %v2602, %v2540
      %v2604 = vadd.f32 %v2603, %v2541
      %v2605 = vadd.f32 %v2604, %v2542
      %v2606 = vadd.f32 %v2605, %v2543
      %v2607 = vadd.f32 %v2606, %v2544
      %v2608 = vadd.f32 %v2607, %v2545
      %v2609 = vadd.f32 %v2608, %v2546
      %v2610 = vadd.f32 %v2609, %v2547
      %v2611 = vadd.f32 %v2610, %v2548
      %v2612 = vadd.f32 %v2611, %v2549
      %v2613 = vadd.f32 %v2612, %v2550
      %v2614 = vadd.f32 %v2613, %v2551
      %v2615 = vadd.f32 %v2614, %v2552
      %v2616 = vadd.f32 %v2615, %v2553
      %v2617 = vadd.f32 %v2616, %v2554
      %v2618 = vadd.f32 %v2617, %v2555
      %v2619 = vadd.f32 %v2618, %v2556
      %v2620 = vadd.f32 %v2619, %v2557
      %v2621 = vadd.f32 %v2620, %v2558
      %v2622 = vadd.f32 %v2621, %v2559
      %v2623 = vadd.f32 %v2622, %v2560
      %v2624 = vadd.f32 %v2623, %v2561
      %v2625 = vadd.f32 %v2624, %v2562
      %v2626 = vadd.f32 %v2625, %v2563
      %v2627 = vadd.f32 %v2626, %v2564
      %v2628 = vadd.f32 %v2627, %v2565
      %v2629 = vadd.f32 %v2628, %v2566
      %v2630 = vadd.f32 %v2629, %v2567
      %v2631 = vadd.f32 %v2630, %v2568
      %v2632 = vadd.f32 %v2631, %v2569
      %v2633 = vadd.f32 %v2632, %v2570
      %v2634 = vadd.f32 %v2633, %v2571
      %v2635 = vadd.f32 %v2634, %v2572
      %v2636 = vadd.f32 %v2635, %v2573
      %v2637 = vadd.f32 %v2636, %v2574
      %v2638 = vadd.f32 %v2637, %v2575
      %v2639 = vadd.f32 %v2638, %v2576
      %v2640 = vadd.f32 %v2639, %v2577
      %v2641 = vadd.f32 %v2640, %v2578
      %v2642 = vadd.f32 %v2641, %v2579
      %v2643 = vadd.f32 %v2642, %v2580
      %v2644 = vadd.f32 %v2643, %v2581
      %v2645 = vadd.f32 %v2644, %v2582
      %v2646 = vadd.f32 %v2645, %v2583
      %v2647 = vadd.f32 %v2646, %v2584
      %v2648 = vadd.f32 %v2647, %v2585
      %v2649 = vadd.f32 %v2648, %v2586
      %v2650 = vadd.f32 %v2649, %v2587
      %v2651 = vadd.f32 %v2650, %v2588
      %v2652 = vadd.f32 %v2651, %v2589
      %v2653 = vadd.f32 %v2652, %v2590
      %v2654 = vadd.f32 %v2653, %v2591
      %v2655 = vadd.f32 %v2654, %v2592
      %v2656 = vadd.f32 %v2655, %v2593
      %v2657 = vadd.f32 %v2656, %v2594
      %v2658 = vadd.f32 %v2657, %v2595
      %v2659 = vadd.f32 %v2658, %v2596
      %v2660 = vrot.slane %v2659, 4
      %v2661 = vadd.f32 %v2659, %v2660
      %v2662 = vrot.slane %v2661, 2
      %v2663 = vadd.f32 %v2661, %v2662
      %v2664 = vrot.slane %v2663, 1
      %v2665 = vadd.f32 %v2663, %v2664
      %vm2666 = vcmask 1040384
      %v2667 = vsel %vm2666, %v2532, %v2665
      %2668 = vst [vmem:[%s187] sm:$0x3] %v2667
      %s2669 = smul.u32 64, %s15
      %p2670 = scmp.lt.s32.totalorder %s2669, 127
      %s2671 = scalar_select %p2670, %s2669, 127
      %s2672 = smul.addr %s2671, 8
      %s2673 = scalar_lea.vmem %s2, %s2672
      %p2674 = scmp.lt.s32.totalorder %s15, 1
      %s2675 = scalar_select %p2674, %s15, 1
      %s2676 = smul.addr %s2675, 2
      %s2677 = scalar_lea.vmem %s3, %s2676
      // Predicated region
      $region29: #{feat_encoder_forward.18} parent=27 // pred_check
        %p2678 = pneg %p80
      $region30: #{feat_encoder_forward.18} parent=27 // pred_check_branch
        %2680 = sbr.rel (%p2678) target = $region32
      $region31: #{feat_encoder_forward.18} parent=27 // pred_region
        %s2681 = smul.u32 64, %s15
      $region32: #{feat_encoder_forward.18} parent=27 // pred_fallthru
        _
      // Predicated region
      $region33: #{feat_encoder_forward.18} parent=27 // pred_check
        %p2682 = pneg %p106
      $region34: #{feat_encoder_forward.18} parent=27 // pred_check_branch
        %2684 = sbr.rel (%p2682) target = $region36
      $region35: #{feat_encoder_forward.18} parent=27 // pred_region
        _
      $region36: #{feat_encoder_forward.18} parent=27 // pred_fallthru
        _
    $region28: #{feat_encoder_forward.18} parent=5 // pred_fallthru
      _
    %p2685 = scmp.le.s32.totalorder 2, %s10
    // Predicated region
    $region37: #{feat_encoder_forward.18} parent=5 // pred_check
      %p2686 = pneg %p2685
    $region38: #{feat_encoder_forward.18} parent=5 // pred_check_branch
      %2688 = sbr.rel (%p2686) target = $region40
    $region39: #{feat_encoder_forward.18} parent=5 // pred_region
      %s2689 = ssub.s32 %s10, 2
      // Predicated region
      $region41: #{feat_encoder_forward.18} parent=39 // pred_check
        %p2690 = pneg %p86
      $region42: #{feat_encoder_forward.18} parent=39 // pred_check_branch
        %2692 = sbr.rel (%p2690) target = $region44
      $region43: #{feat_encoder_forward.18} parent=39 // pred_region
        %s2693 = smul.u32 64, %s16
        %p2694 = scmp.lt.s32.totalorder %s2693, 127
        %s2695 = scalar_select %p2694, %s2693, 127
        %s2696 = smul.addr %s2695, 8
        %s2697 = scalar_lea.vmem %s2, %s2696
      $region44: #{feat_encoder_forward.18} parent=39 // pred_fallthru
        _
      // Predicated region
      $region45: #{feat_encoder_forward.18} parent=39 // pred_check
        %p2698 = pneg %p112
      $region46: #{feat_encoder_forward.18} parent=39 // pred_check_branch
        %2700 = sbr.rel (%p2698) target = $region48
      $region47: #{feat_encoder_forward.18} parent=39 // pred_region
        %p2701 = scmp.lt.s32.totalorder %s16, 1
        %s2702 = scalar_select %p2701, %s16, 1
        %s2703 = smul.addr %s2702, 2
        %s2704 = scalar_lea.vmem %s3, %s2703
      $region48: #{feat_encoder_forward.18} parent=39 // pred_fallthru
        _
    $region40: #{feat_encoder_forward.18} parent=5 // pred_fallthru
      _
  $region6: #{feat_encoder_forward.18} parent=0 // loop_footer
    %s14 = sadd.s32 1, %s10
  $region7: #{feat_encoder_forward.18} parent=0 // loop_footer_branch
    %9 = sbr.rel target = $region3
  $region8: #{feat_encoder_forward.18} parent=0 // loop_exit
    _

// kernel: feat_encoder_forward.20
$region0: #{feat_encoder_forward.20}
  #allocation0 [shape = 'u32[]', space=smem, size = 0x4, offset = 0x4, fixed_abs, tag = 'smem constant byte address 0x4 - core index']
  #allocation1 [shape = 'u32[144,128]{1,0:T(1,128)}', space=vmem, size = 0x12000, scoped, tag = 'internal scratch']
  %s0 = inlined_call_operand.vmem [shape: bf16[1024,128], index: 0, kind: input, shape index: {}]
  %s1 = inlined_call_operand.vmem [shape: bf16[128,128], index: 1, kind: input, shape index: {}]
  %s2 = inlined_call_operand.vmem [shape: f32[1024,128], index: 2, kind: output, shape index: {0}]
  %s3 = inlined_call_operand.vmem [shape: f32[2,2,128], index: 3, kind: output, shape index: {1}]
  %4 = xla_tuple %s2, %s3
  %s5 = sld [smem:[#allocation0]]
  $region49: #{feat_encoder_forward.20} parent=0
    _
  %s7 = ssub.s32 1, %s5
  %s8 = scalar_select 0, %s7, %s5
  loop: start=0, step=1, limit=4
  $region2: #{feat_encoder_forward.20} parent=0 // loop_pre_header
    _
  $region3: #{feat_encoder_forward.20} parent=0 // loop_header
    %s10 = sphi 0, %s14
    %p11 = scmp.ge.s32.totalorder %s10, 4
    %s20 = sphi 0, %s22
    %s23 = sphi 0, %s20
    %s24 = sphi 0, %s23
    %s40 = sphi 0, %s24
    %s44 = sphi 0, %s44
    %s46 = sphi 0, %s44
    %s47 = sphi 0, %s46
    %s61 = sphi 0, %s47
    %s67 = sphi 0, %s69
    %s70 = sphi 0, %s67
    %s71 = sphi 0, %s70
    %s87 = sphi 0, %s71
    %s93 = sphi 0, %s95
    %s96 = sphi 0, %s93
    %s97 = sphi 0, %s96
    %s113 = sphi 0, %s97
  $region4: #{feat_encoder_forward.20} parent=0 // loop_header_branch
    %13 = sbr.rel (%p11) target = $region8
  $region5: #{feat_encoder_forward.20} parent=0 // loop_body
    %s15 = ssub.s32 %s10, 1
    %s16 = ssub.s32 %s10, 2
    %s17 = sadd.s32 %s10, 1
    %s18 = ssub.s32 %s10, %s17
    %p19 = scmp.eq.s32.totalorder %s18, 0
    %s21 = sadd.s32 %s20, 1
    %s22 = scalar_select %p19, %s20, %s21
    %p25 = pneg %p19
    %p26 = scmp.eq.s32.totalorder %s10, 1
    %p27 = por %p25, %p26
    %p28 = scmp.ne.s32.totalorder %s20, %s23
    %p29 = scmp.eq.s32.totalorder %s10, 0
    %p30 = por %p28, %p29
    %p31 = scmp.ne.s32.totalorder %s20, %s23
    %p32 = scmp.eq.s32.totalorder %s15, 1
    %p33 = por %p31, %p32
    %p34 = scmp.ne.s32.totalorder %s23, %s24
    %p35 = scmp.eq.s32.totalorder %s15, 0
    %p36 = por %p34, %p35
    %p37 = scmp.ne.s32.totalorder %s23, %s24
    %p38 = scmp.eq.s32.totalorder %s16, 1
    %p39 = por %p37, %p38
    %p41 = scmp.ne.s32.totalorder %s24, %s40
    %p42 = scmp.eq.s32.totalorder %s16, 0
    %p43 = por %p41, %p42
    %s45 = sadd.s32 %s44, 1
    %p48 = scmp.eq.s32.totalorder %s10, 1
    %p49 = scmp.ne.s32.totalorder %s44, %s46
    %p50 = scmp.eq.s32.totalorder %s10, 0
    %p51 = por %p49, %p50
    %p52 = scmp.ne.s32.totalorder %s44, %s46
    %p53 = scmp.eq.s32.totalorder %s15, 1
    %p54 = por %p52, %p53
    %p55 = scmp.ne.s32.totalorder %s46, %s47
    %p56 = scmp.eq.s32.totalorder %s15, 0
    %p57 = por %p55, %p56
    %p58 = scmp.ne.s32.totalorder %s46, %s47
    %p59 = scmp.eq.s32.totalorder %s16, 1
    %p60 = por %p58, %p59
    %p62 = scmp.ne.s32.totalorder %s47, %s61
    %p63 = scmp.eq.s32.totalorder %s16, 0
    %p64 = por %p62, %p63
    %s65 = ssub.s32 %s10, %s17
    %p66 = scmp.eq.s32.totalorder %s65, 0
    %s68 = sadd.s32 %s67, 1
    %s69 = scalar_select %p66, %s67, %s68
    %p72 = pneg %p66
    %p73 = scmp.eq.s32.totalorder %s10, 1
    %p74 = por %p72, %p73
    %p75 = scmp.ne.s32.totalorder %s67, %s70
    %p76 = scmp.eq.s32.totalorder %s10, 0
    %p77 = por %p75, %p76
    %p78 = scmp.ne.s32.totalorder %s67, %s70
    %p79 = scmp.eq.s32.totalorder %s15, 1
    %p80 = por %p78, %p79
    %p81 = scmp.ne.s32.totalorder %s70, %s71
    %p82 = scmp.eq.s32.totalorder %s15, 0
    %p83 = por %p81, %p82
    %p84 = scmp.ne.s32.totalorder %s70, %s71
    %p85 = scmp.eq.s32.totalorder %s16, 1
    %p86 = por %p84, %p85
    %p88 = scmp.ne.s32.totalorder %s71, %s87
    %p89 = scmp.eq.s32.totalorder %s16, 0
    %p90 = por %p88, %p89
    %s91 = ssub.s32 %s10, %s17
    %p92 = scmp.eq.s32.totalorder %s91, 0
    %s94 = sadd.s32 %s93, 1
    %s95 = scalar_select %p92, %s93, %s94
    %p98 = pneg %p92
    %p99 = scmp.eq.s32.totalorder %s10, 1
    %p100 = por %p98, %p99
    %p101 = scmp.ne.s32.totalorder %s93, %s96
    %p102 = scmp.eq.s32.totalorder %s10, 0
    %p103 = por %p101, %p102
    %p104 = scmp.ne.s32.totalorder %s93, %s96
    %p105 = scmp.eq.s32.totalorder %s15, 1
    %p106 = por %p104, %p105
    %p107 = scmp.ne.s32.totalorder %s96, %s97
    %p108 = scmp.eq.s32.totalorder %s15, 0
    %p109 = por %p107, %p108
    %p110 = scmp.ne.s32.totalorder %s96, %s97
    %p111 = scmp.eq.s32.totalorder %s16, 1
    %p112 = por %p110, %p111
    %p114 = scmp.ne.s32.totalorder %s97, %s113
    %p115 = scmp.eq.s32.totalorder %s16, 0
    %p116 = por %p114, %p115
    %p117 = scmp.le.s32.totalorder 1, %s10
    %p118 = scmp.lt.s32.totalorder %s10, 3
    %p119 = pnand %p117, %p118
    %p120 = pneg %p119
    // Predicated region
    $region9: #{feat_encoder_forward.20} parent=5 // pred_check
      _
    $region10: #{feat_encoder_forward.20} parent=5 // pred_check_branch
      %122 = sbr.rel (%p119) target = $region12
    $region11: #{feat_encoder_forward.20} parent=5 // pred_region
      %s123 = ssub.s32 %s10, 1
      // Predicated region
      $region13: #{feat_encoder_forward.20} parent=11 // pred_check
        %p124 = pneg %p57
      $region14: #{feat_encoder_forward.20} parent=11 // pred_check_branch
        %126 = sbr.rel (%p124) target = $region16
      $region15: #{feat_encoder_forward.20} parent=11 // pred_region
        _
      $region16: #{feat_encoder_forward.20} parent=11 // pred_fallthru
        _
    $region12: #{feat_encoder_forward.20} parent=5 // pred_fallthru
      _
    %p127 = scmp.lt.s32.totalorder %s10, 2
    // Predicated region
    $region17: #{feat_encoder_forward.20} parent=5 // pred_check
      %p128 = pneg %p127
    $region18: #{feat_encoder_forward.20} parent=5 // pred_check_branch
      %130 = sbr.rel (%p128) target = $region20
    $region19: #{feat_encoder_forward.20} parent=5 // pred_region
      // Predicated region
      $region21: #{feat_encoder_forward.20} parent=19 // pred_check
        %p131 = pneg %p30
      $region22: #{feat_encoder_forward.20} parent=19 // pred_check_branch
        %133 = sbr.rel (%p131) target = $region24
      $region23: #{feat_encoder_forward.20} parent=19 // pred_region
        %s134 = smul.u32 64, %s10
        %p135 = scmp.lt.s32.totalorder %s134, 127
        %s136 = scalar_select %p135, %s134, 127
        %s137 = smul.addr %s136, 4
        %s138 = scalar_lea.vmem %s0, %s137
        %s139 = smul.u32 64, %s10
      $region24: #{feat_encoder_forward.20} parent=19 // pred_fallthru
        _
    $region20: #{feat_encoder_forward.20} parent=5 // pred_fallthru
      _
    %p140 = scmp.le.s32.totalorder 1, %s10
    %p141 = scmp.lt.s32.totalorder %s10, 3
    %p142 = pnand %p140, %p141
    %p143 = pneg %p142
    // Predicated region
    $region25: #{feat_encoder_forward.20} parent=5 // pred_check
      _
    $region26: #{feat_encoder_forward.20} parent=5 // pred_check_branch
      %145 = sbr.rel (%p142) target = $region28
    $region27: #{feat_encoder_forward.20} parent=5 // pred_region
      %s146 = ssub.s32 %s10, 1
      %s147 = smul.u32 64, %s15
      %p148 = scmp.lt.s32.totalorder %s147, 127
      %s149 = scalar_select %p148, %s147, 127
      %s150 = smul.addr %s149, 4
      %s151 = scalar_lea.vmem %s0, %s150
      %p152 = pneg %p36
      %p153 = pneg %p33
      %p154 = pneg %p57
      %p155 = pneg %p54
      %p156 = pneg %p83
      %p157 = pneg %p80
      %s158 = smul.u32 64, %s15
      %p159 = scmp.lt.s32.totalorder %s158, 127
      %s160 = scalar_select %p159, %s158, 127
      %s161 = smul.addr %s160, 8
      %s162 = scalar_lea.vmem %s2, %s161
      %p163 = pneg %p109
      %p164 = pneg %p106
      %p165 = scmp.lt.s32.totalorder %s15, 1
      %s166 = scalar_select %p165, %s15, 1
      %s167 = smul.addr %s166, 2
      %s168 = scalar_lea.vmem %s3, %s167
      %s169 = smul.u32 64, %s15
      %p170 = scmp.lt.s32.totalorder %s169, 127
      %s171 = scalar_select %p170, %s169, 127
      %s172 = smul.addr %s171, 4
      %s173 = scalar_lea.vmem %s0, %s172
      %s174 = smul.u32 64, %s15
      %s175 = smul.u32 64, %s15
      %p176 = scmp.lt.s32.totalorder %s175, 127
      %s177 = scalar_select %p176, %s175, 127
      %s178 = smul.addr %s177, 8
      %s179 = scalar_lea.vmem %s2, %s178
      %s180 = smul.u32 64, %s15
      %p181 = scmp.lt.s32.totalorder %s15, 1
      %s182 = scalar_select %p181, %s15, 1
      %s183 = smul.addr %s182, 2
      %s184 = scalar_lea.vmem %s3, %s183
      %v186 = vld [vmem:[%s173] sm:$0xf]
      %v187 = vld [vmem:[%s173 + $0x4] sm:$0xf]
      %v188 = vld [vmem:[%s173 + $0x8] sm:$0xf]
      %v189 = vld [vmem:[%s173 + $0xc] sm:$0xf]
      %v190 = vld [vmem:[%s173 + $0x10] sm:$0xf]
      %v191 = vld [vmem:[%s173 + $0x14] sm:$0xf]
      %v192 = vld [vmem:[%s173 + $0x18] sm:$0xf]
      %v193 = vld [vmem:[%s173 + $0x1c] sm:$0xf]
      %v194 = vld [vmem:[%s173 + $0x20] sm:$0xf]
      %v195 = vld [vmem:[%s173 + $0x24] sm:$0xf]
      %v196 = vld [vmem:[%s173 + $0x28] sm:$0xf]
      %v197 = vld [vmem:[%s173 + $0x2c] sm:$0xf]
      %v198 = vld [vmem:[%s173 + $0x30] sm:$0xf]
      %v199 = vld [vmem:[%s173 + $0x34] sm:$0xf]
      %v200 = vld [vmem:[%s173 + $0x38] sm:$0xf]
      %v201 = vld [vmem:[%s173 + $0x3c] sm:$0xf]
      %v202 = vld [vmem:[%s173 + $0x40] sm:$0xf]
      %v203 = vld [vmem:[%s173 + $0x44] sm:$0xf]
      %v204 = vld [vmem:[%s173 + $0x48] sm:$0xf]
      %v205 = vld [vmem:[%s173 + $0x4c] sm:$0xf]
      %v206 = vld [vmem:[%s173 + $0x50] sm:$0xf]
      %v207 = vld [vmem:[%s173 + $0x54] sm:$0xf]
      %v208 = vld [vmem:[%s173 + $0x58] sm:$0xf]
      %v209 = vld [vmem:[%s173 + $0x5c] sm:$0xf]
      %v210 = vld [vmem:[%s173 + $0x60] sm:$0xf]
      %v211 = vld [vmem:[%s173 + $0x64] sm:$0xf]
      %v212 = vld [vmem:[%s173 + $0x68] sm:$0xf]
      %v213 = vld [vmem:[%s173 + $0x6c] sm:$0xf]
      %v214 = vld [vmem:[%s173 + $0x70] sm:$0xf]
      %v215 = vld [vmem:[%s173 + $0x74] sm:$0xf]
      %v216 = vld [vmem:[%s173 + $0x78] sm:$0xf]
      %v217 = vld [vmem:[%s173 + $0x7c] sm:$0xf]
      %v218 = vld [vmem:[%s173 + $0x80] sm:$0xf]
      %v219 = vld [vmem:[%s173 + $0x84] sm:$0xf]
      %v220 = vld [vmem:[%s173 + $0x88] sm:$0xf]
      %v221 = vld [vmem:[%s173 + $0x8c] sm:$0xf]
      %v222 = vld [vmem:[%s173 + $0x90] sm:$0xf]
      %v223 = vld [vmem:[%s173 + $0x94] sm:$0xf]
      %v224 = vld [vmem:[%s173 + $0x98] sm:$0xf]
      %v225 = vld [vmem:[%s173 + $0x9c] sm:$0xf]
      %v226 = vld [vmem:[%s173 + $0xa0] sm:$0xf]
      %v227 = vld [vmem:[%s173 + $0xa4] sm:$0xf]
      %v228 = vld [vmem:[%s173 + $0xa8] sm:$0xf]
      %v229 = vld [vmem:[%s173 + $0xac] sm:$0xf]
      %v230 = vld [vmem:[%s173 + $0xb0] sm:$0xf]
      %v231 = vld [vmem:[%s173 + $0xb4] sm:$0xf]
      %v232 = vld [vmem:[%s173 + $0xb8] sm:$0xf]
      %v233 = vld [vmem:[%s173 + $0xbc] sm:$0xf]
      %v234 = vld [vmem:[%s173 + $0xc0] sm:$0xf]
      %v235 = vld [vmem:[%s173 + $0xc4] sm:$0xf]
      %v236 = vld [vmem:[%s173 + $0xc8] sm:$0xf]
      %v237 = vld [vmem:[%s173 + $0xcc] sm:$0xf]
      %v238 = vld [vmem:[%s173 + $0xd0] sm:$0xf]
      %v239 = vld [vmem:[%s173 + $0xd4] sm:$0xf]
      %v240 = vld [vmem:[%s173 + $0xd8] sm:$0xf]
      %v241 = vld [vmem:[%s173 + $0xdc] sm:$0xf]
      %v242 = vld [vmem:[%s173 + $0xe0] sm:$0xf]
      %v243 = vld [vmem:[%s173 + $0xe4] sm:$0xf]
      %v244 = vld [vmem:[%s173 + $0xe8] sm:$0xf]
      %v245 = vld [vmem:[%s173 + $0xec] sm:$0xf]
      %v246 = vld [vmem:[%s173 + $0xf0] sm:$0xf]
      %v247 = vld [vmem:[%s173 + $0xf4] sm:$0xf]
      %v248 = vld [vmem:[%s173 + $0xf8] sm:$0xf]
      %v249 = vld [vmem:[%s173 + $0xfc] sm:$0xf]
      %v250 = vld [vmem:[%s1] sm:$0xf]
      %v251 = vld [vmem:[%s1 + $0x4] sm:$0xf]
      %v252 = vld [vmem:[%s1 + $0x8] sm:$0xf]
      %v253 = vld [vmem:[%s1 + $0xc] sm:$0xf]
      %v254 = vld [vmem:[%s1 + $0x10] sm:$0xf]
      %v255 = vld [vmem:[%s1 + $0x14] sm:$0xf]
      %v256 = vld [vmem:[%s1 + $0x18] sm:$0xf]
      %v257 = vld [vmem:[%s1 + $0x1c] sm:$0xf]
      %v258 = vld [vmem:[%s1 + $0x20] sm:$0xf]
      %v259 = vld [vmem:[%s1 + $0x24] sm:$0xf]
      %v260 = vld [vmem:[%s1 + $0x28] sm:$0xf]
      %v261 = vld [vmem:[%s1 + $0x2c] sm:$0xf]
      %v262 = vld [vmem:[%s1 + $0x30] sm:$0xf]
      %v263 = vld [vmem:[%s1 + $0x34] sm:$0xf]
      %v264 = vld [vmem:[%s1 + $0x38] sm:$0xf]
      %v265 = vld [vmem:[%s1 + $0x3c] sm:$0xf]
      %v330 = vunpack.c.l.b16 %v186
      %v331 = vunpack.c.l.b16 %v187
      %v332 = vunpack.c.l.b16 %v188
      %v333 = vunpack.c.l.b16 %v189
      %v334 = vunpack.c.l.b16 %v190
      %v335 = vunpack.c.l.b16 %v191
      %v336 = vunpack.c.l.b16 %v192
      %v337 = vunpack.c.l.b16 %v193
      %v338 = vunpack.c.l.b16 %v194
      %v339 = vunpack.c.l.b16 %v195
      %v340 = vunpack.c.l.b16 %v196
      %v341 = vunpack.c.l.b16 %v197
      %v342 = vunpack.c.l.b16 %v198
      %v343 = vunpack.c.l.b16 %v199
      %v344 = vunpack.c.l.b16 %v200
      %v345 = vunpack.c.l.b16 %v201
      %v346 = vunpack.c.l.b16 %v202
      %v347 = vunpack.c.l.b16 %v203
      %v348 = vunpack.c.l.b16 %v204
      %v349 = vunpack.c.l.b16 %v205
      %v350 = vunpack.c.l.b16 %v206
      %v351 = vunpack.c.l.b16 %v207
      %v352 = vunpack.c.l.b16 %v208
      %v353 = vunpack.c.l.b16 %v209
      %v354 = vunpack.c.l.b16 %v210
      %v355 = vunpack.c.l.b16 %v211
      %v356 = vunpack.c.l.b16 %v212
      %v357 = vunpack.c.l.b16 %v213
      %v358 = vunpack.c.l.b16 %v214
      %v359 = vunpack.c.l.b16 %v215
      %v360 = vunpack.c.l.b16 %v216
      %v361 = vunpack.c.l.b16 %v217
      %v362 = vunpack.c.l.b16 %v218
      %v363 = vunpack.c.l.b16 %v219
      %v364 = vunpack.c.l.b16 %v220
      %v365 = vunpack.c.l.b16 %v221
      %v366 = vunpack.c.l.b16 %v222
      %v367 = vunpack.c.l.b16 %v223
      %v368 = vunpack.c.l.b16 %v224
      %v369 = vunpack.c.l.b16 %v225
      %v370 = vunpack.c.l.b16 %v226
      %v371 = vunpack.c.l.b16 %v227
      %v372 = vunpack.c.l.b16 %v228
      %v373 = vunpack.c.l.b16 %v229
      %v374 = vunpack.c.l.b16 %v230
      %v375 = vunpack.c.l.b16 %v231
      %v376 = vunpack.c.l.b16 %v232
      %v377 = vunpack.c.l.b16 %v233
      %v378 = vunpack.c.l.b16 %v234
      %v379 = vunpack.c.l.b16 %v235
      %v380 = vunpack.c.l.b16 %v236
      %v381 = vunpack.c.l.b16 %v237
      %v382 = vunpack.c.l.b16 %v238
      %v383 = vunpack.c.l.b16 %v239
      %v384 = vunpack.c.l.b16 %v240
      %v385 = vunpack.c.l.b16 %v241
      %v386 = vunpack.c.l.b16 %v242
      %v387 = vunpack.c.l.b16 %v243
      %v388 = vunpack.c.l.b16 %v244
      %v389 = vunpack.c.l.b16 %v245
      %v390 = vunpack.c.l.b16 %v246
      %v391 = vunpack.c.l.b16 %v247
      %v392 = vunpack.c.l.b16 %v248
      %v393 = vunpack.c.l.b16 %v249
      %v394 = vpack.c.b16 %v331, %v330
      %v395 = vpack.c.b16 %v333, %v332
      %v396 = vpack.c.b16 %v335, %v334
      %v397 = vpack.c.b16 %v337, %v336
      %v398 = vpack.c.b16 %v339, %v338
      %v399 = vpack.c.b16 %v341, %v340
      %v400 = vpack.c.b16 %v343, %v342
      %v401 = vpack.c.b16 %v345, %v344
      %v402 = vpack.c.b16 %v347, %v346
      %v403 = vpack.c.b16 %v349, %v348
      %v404 = vpack.c.b16 %v351, %v350
      %v405 = vpack.c.b16 %v353, %v352
      %v406 = vpack.c.b16 %v355, %v354
      %v407 = vpack.c.b16 %v357, %v356
      %v408 = vpack.c.b16 %v359, %v358
      %v409 = vpack.c.b16 %v361, %v360
      %v410 = vpack.c.b16 %v363, %v362
      %v411 = vpack.c.b16 %v365, %v364
      %v412 = vpack.c.b16 %v367, %v366
      %v413 = vpack.c.b16 %v369, %v368
      %v414 = vpack.c.b16 %v371, %v370
      %v415 = vpack.c.b16 %v373, %v372
      %v416 = vpack.c.b16 %v375, %v374
      %v417 = vpack.c.b16 %v377, %v376
      %v418 = vpack.c.b16 %v379, %v378
      %v419 = vpack.c.b16 %v381, %v380
      %v420 = vpack.c.b16 %v383, %v382
      %v421 = vpack.c.b16 %v385, %v384
      %v422 = vpack.c.b16 %v387, %v386
      %v423 = vpack.c.b16 %v389, %v388
      %v424 = vpack.c.b16 %v391, %v390
      %v425 = vpack.c.b16 %v393, %v392
      %v474 = vunpack.c.l.b16 %v250
      %v475 = vunpack.c.l.b16 %v251
      %v476 = vunpack.c.l.b16 %v252
      %v477 = vunpack.c.l.b16 %v253
      %v478 = vunpack.c.l.b16 %v254
      %v479 = vunpack.c.l.b16 %v255
      %v480 = vunpack.c.l.b16 %v256
      %v481 = vunpack.c.l.b16 %v257
      %v482 = vunpack.c.l.b16 %v258
      %v483 = vunpack.c.l.b16 %v259
      %v484 = vunpack.c.l.b16 %v260
      %v485 = vunpack.c.l.b16 %v261
      %v486 = vunpack.c.l.b16 %v262
      %v487 = vunpack.c.l.b16 %v263
      %v488 = vunpack.c.l.b16 %v264
      %v489 = vunpack.c.l.b16 %v265
      %v490 = vpack.c.b16 %v475, %v474
      %v491 = vpack.c.b16 %v477, %v476
      %v492 = vpack.c.b16 %v479, %v478
      %v493 = vpack.c.b16 %v481, %v480
      %v494 = vpack.c.b16 %v483, %v482
      %v495 = vpack.c.b16 %v485, %v484
      %v496 = vpack.c.b16 %v487, %v486
      %v497 = vpack.c.b16 %v489, %v488
      %506 = vmatprep.subr.bf16.mxu0 0
      %507 = vmatpush1.bf16.msra.mxu0 %v490
      %508 = vmatprep.subr.bf16.mxu0 0
      %509 = vmatpush1.bf16.msra.mxu0 %v491
      %510 = vmatprep.subr.bf16.mxu0 0
      %511 = vmatpush1.bf16.msra.mxu0 %v492
      %512 = vmatprep.subr.bf16.mxu0 0
      %513 = vmatpush1.bf16.msra.mxu0 %v493
      %514 = vmatprep.subr.bf16.mxu0 0
      %515 = vmatpush1.bf16.msra.mxu0 %v494
      %516 = vmatprep.subr.bf16.mxu0 0
      %517 = vmatpush1.bf16.msra.mxu0 %v495
      %518 = vmatprep.subr.bf16.mxu0 0
      %519 = vmatpush1.bf16.msra.mxu0 %v496
      %520 = vmatprep.subr.bf16.mxu0 0
      %521 = vmatpush1.bf16.msra.mxu0 %v497
      %522 = vmatprep.subr.bf16.mxu0 0
      %523 = vmatpush1.bf16.msra.mxu0 0
      %524 = vmatprep.subr.bf16.mxu0 0
      %525 = vmatpush1.bf16.msra.mxu0 0
      %526 = vmatprep.subr.bf16.mxu0 0
      %527 = vmatpush1.bf16.msra.mxu0 0
      %528 = vmatprep.subr.bf16.mxu0 0
      %529 = vmatpush1.bf16.msra.mxu0 0
      %530 = vmatprep.subr.bf16.mxu0 0
      %531 = vmatpush1.bf16.msra.mxu0 0
      %532 = vmatprep.subr.bf16.mxu0 0
      %533 = vmatpush1.bf16.msra.mxu0 0
      %534 = vmatprep.subr.bf16.mxu0 0
      %535 = vmatpush1.bf16.msra.mxu0 0
      %536 = vmatprep.subr.bf16.mxu0 0
      %537 = vmatpush1.bf16.msra.mxu0 0
      %538 = vmatprep.mubr.bf16.mxu0 0
      %539 = vmatmul.mubr.bf16.gmra.mrb[0].mxu0 %v394
      %v540 = vpop.f32.mrb[0].mxu0
      %v541 = vadd.f32 0.0, %v540
      %v542 = vpop.f32.mrb[0].mxu0
      %v543 = vpop.f32.mrb[0].mxu0
      %v544 = vadd.f32 0.0, %v543
      %v545 = vpop.f32.mrb[0].mxu0
      %546 = vmatprep.mubr.bf16.mxu0 0
      %547 = vmatmul.mubr.bf16.gmra.mrb[0].mxu0 %v395
      %v548 = vpop.f32.mrb[0].mxu0
      %v549 = vadd.f32 0.0, %v548
      %v550 = vpop.f32.mrb[0].mxu0
      %v551 = vpop.f32.mrb[0].mxu0
      %v552 = vadd.f32 0.0, %v551
      %v553 = vpop.f32.mrb[0].mxu0
      %554 = vmatprep.mubr.bf16.mxu0 0
      %555 = vmatmul.mubr.bf16.gmra.mrb[0].mxu0 %v396
      %v556 = vpop.f32.mrb[0].mxu0
      %v557 = vadd.f32 0.0, %v556
      %v558 = vpop.f32.mrb[0].mxu0
      %v559 = vpop.f32.mrb[0].mxu0
      %v560 = vadd.f32 0.0, %v559
      %v561 = vpop.f32.mrb[0].mxu0
      %562 = vmatprep.mubr.bf16.mxu0 0
      %563 = vmatmul.mubr.bf16.gmra.mrb[0].mxu0 %v397
      %v564 = vpop.f32.mrb[0].mxu0
      %v565 = vadd.f32 0.0, %v564
      %v566 = vpop.f32.mrb[0].mxu0
      %v567 = vpop.f32.mrb[0].mxu0
      %v568 = vadd.f32 0.0, %v567
      %v569 = vpop.f32.mrb[0].mxu0
      %570 = vmatprep.mubr.bf16.mxu0 0
      %571 = vmatmul.mubr.bf16.gmra.mrb[0].mxu0 %v398
      %v572 = vpop.f32.mrb[0].mxu0
      %v573 = vadd.f32 0.0, %v572
      %v574 = vpop.f32.mrb[0].mxu0
      %v575 = vpop.f32.mrb[0].mxu0
      %v576 = vadd.f32 0.0, %v575
      %v577 = vpop.f32.mrb[0].mxu0
      %578 = vmatprep.mubr.bf16.mxu0 0
      %579 = vmatmul.mubr.bf16.gmra.mrb[0].mxu0 %v399
      %v580 = vpop.f32.mrb[0].mxu0
      %v581 = vadd.f32 0.0, %v580
      %v582 = vpop.f32.mrb[0].mxu0
      %v583 = vpop.f32.mrb[0].mxu0
      %v584 = vadd.f32 0.0, %v583
      %v585 = vpop.f32.mrb[0].mxu0
      %586 = vmatprep.mubr.bf16.mxu0 0
      %587 = vmatmul.mubr.bf16.gmra.mrb[0].mxu0 %v400
      %v588 = vpop.f32.mrb[0].mxu0
      %v589 = vadd.f32 0.0, %v588
      %v590 = vpop.f32.mrb[0].mxu0
      %v591 = vpop.f32.mrb[0].mxu0
      %v592 = vadd.f32 0.0, %v591
      %v593 = vpop.f32.mrb[0].mxu0
      %594 = vmatprep.mubr.bf16.mxu0 0
      %595 = vmatmul.mubr.bf16.gmra.mrb[0].mxu0 %v401
      %v596 = vpop.f32.mrb[0].mxu0
      %v597 = vadd.f32 0.0, %v596
      %v598 = vpop.f32.mrb[0].mxu0
      %v599 = vpop.f32.mrb[0].mxu0
      %v600 = vadd.f32 0.0, %v599
      %v601 = vpop.f32.mrb[0].mxu0
      %602 = vmatprep.mubr.bf16.mxu0 0
      %603 = vmatmul.mubr.bf16.gmra.mrb[0].mxu0 %v402
      %v604 = vpop.f32.mrb[0].mxu0
      %v605 = vadd.f32 0.0, %v604
      %v606 = vpop.f32.mrb[0].mxu0
      %v607 = vpop.f32.mrb[0].mxu0
      %v608 = vadd.f32 0.0, %v607
      %v609 = vpop.f32.mrb[0].mxu0
      %610 = vmatprep.mubr.bf16.mxu0 0
      %611 = vmatmul.mubr.bf16.gmra.mrb[0].mxu0 %v403
      %v612 = vpop.f32.mrb[0].mxu0
      %v613 = vadd.f32 0.0, %v612
      %v614 = vpop.f32.mrb[0].mxu0
      %v615 = vpop.f32.mrb[0].mxu0
      %v616 = vadd.f32 0.0, %v615
      %v617 = vpop.f32.mrb[0].mxu0
      %618 = vmatprep.mubr.bf16.mxu0 0
      %619 = vmatmul.mubr.bf16.gmra.mrb[0].mxu0 %v404
      %v620 = vpop.f32.mrb[0].mxu0
      %v621 = vadd.f32 0.0, %v620
      %v622 = vpop.f32.mrb[0].mxu0
      %v623 = vpop.f32.mrb[0].mxu0
      %v624 = vadd.f32 0.0, %v623
      %v625 = vpop.f32.mrb[0].mxu0
      %626 = vmatprep.mubr.bf16.mxu0 0
      %627 = vmatmul.mubr.bf16.gmra.mrb[0].mxu0 %v405
      %v628 = vpop.f32.mrb[0].mxu0
      %v629 = vadd.f32 0.0, %v628
      %v630 = vpop.f32.mrb[0].mxu0
      %v631 = vpop.f32.mrb[0].mxu0
      %v632 = vadd.f32 0.0, %v631
      %v633 = vpop.f32.mrb[0].mxu0
      %634 = vmatprep.mubr.bf16.mxu0 0
      %635 = vmatmul.mubr.bf16.gmra.mrb[0].mxu0 %v406
      %v636 = vpop.f32.mrb[0].mxu0
      %v637 = vadd.f32 0.0, %v636
      %v638 = vpop.f32.mrb[0].mxu0
      %v639 = vpop.f32.mrb[0].mxu0
      %v640 = vadd.f32 0.0, %v639
      %v641 = vpop.f32.mrb[0].mxu0
      %642 = vmatprep.mubr.bf16.mxu0 0
      %643 = vmatmul.mubr.bf16.gmra.mrb[0].mxu0 %v407
      %v644 = vpop.f32.mrb[0].mxu0
      %v645 = vadd.f32 0.0, %v644
      %v646 = vpop.f32.mrb[0].mxu0
      %v647 = vpop.f32.mrb[0].mxu0
      %v648 = vadd.f32 0.0, %v647
      %v649 = vpop.f32.mrb[0].mxu0
      %650 = vmatprep.mubr.bf16.mxu0 0
      %651 = vmatmul.mubr.bf16.gmra.mrb[0].mxu0 %v408
      %v652 = vpop.f32.mrb[0].mxu0
      %v653 = vadd.f32 0.0, %v652
      %v654 = vpop.f32.mrb[0].mxu0
      %v655 = vpop.f32.mrb[0].mxu0
      %v656 = vadd.f32 0.0, %v655
      %v657 = vpop.f32.mrb[0].mxu0
      %658 = vmatprep.mubr.bf16.mxu0 0
      %659 = vmatmul.mubr.bf16.gmra.mrb[0].mxu0 %v409
      %v660 = vpop.f32.mrb[0].mxu0
      %v661 = vadd.f32 0.0, %v660
      %v662 = vpop.f32.mrb[0].mxu0
      %v663 = vpop.f32.mrb[0].mxu0
      %v664 = vadd.f32 0.0, %v663
      %v665 = vpop.f32.mrb[0].mxu0
      %666 = vmatprep.mubr.bf16.mxu0 0
      %667 = vmatmul.mubr.bf16.gmra.mrb[0].mxu0 %v410
      %v668 = vpop.f32.mrb[0].mxu0
      %v669 = vadd.f32 0.0, %v668
      %v670 = vpop.f32.mrb[0].mxu0
      %v671 = vpop.f32.mrb[0].mxu0
      %v672 = vadd.f32 0.0, %v671
      %v673 = vpop.f32.mrb[0].mxu0
      %674 = vmatprep.mubr.bf16.mxu0 0
      %675 = vmatmul.mubr.bf16.gmra.mrb[0].mxu0 %v411
      %v676 = vpop.f32.mrb[0].mxu0
      %v677 = vadd.f32 0.0, %v676
      %v678 = vpop.f32.mrb[0].mxu0
      %v679 = vpop.f32.mrb[0].mxu0
      %v680 = vadd.f32 0.0, %v679
      %v681 = vpop.f32.mrb[0].mxu0
      %682 = vmatprep.mubr.bf16.mxu0 0
      %683 = vmatmul.mubr.bf16.gmra.mrb[0].mxu0 %v412
      %v684 = vpop.f32.mrb[0].mxu0
      %v685 = vadd.f32 0.0, %v684
      %v686 = vpop.f32.mrb[0].mxu0
      %v687 = vpop.f32.mrb[0].mxu0
      %v688 = vadd.f32 0.0, %v687
      %v689 = vpop.f32.mrb[0].mxu0
      %690 = vmatprep.mubr.bf16.mxu0 0
      %691 = vmatmul.mubr.bf16.gmra.mrb[0].mxu0 %v413
      %v692 = vpop.f32.mrb[0].mxu0
      %v693 = vadd.f32 0.0, %v692
      %v694 = vpop.f32.mrb[0].mxu0
      %v695 = vpop.f32.mrb[0].mxu0
      %v696 = vadd.f32 0.0, %v695
      %v697 = vpop.f32.mrb[0].mxu0
      %698 = vmatprep.mubr.bf16.mxu0 0
      %699 = vmatmul.mubr.bf16.gmra.mrb[0].mxu0 %v414
      %v700 = vpop.f32.mrb[0].mxu0
      %v701 = vadd.f32 0.0, %v700
      %v702 = vpop.f32.mrb[0].mxu0
      %v703 = vpop.f32.mrb[0].mxu0
      %v704 = vadd.f32 0.0, %v703
      %v705 = vpop.f32.mrb[0].mxu0
      %706 = vmatprep.mubr.bf16.mxu0 0
      %707 = vmatmul.mubr.bf16.gmra.mrb[0].mxu0 %v415
      %v708 = vpop.f32.mrb[0].mxu0
      %v709 = vadd.f32 0.0, %v708
      %v710 = vpop.f32.mrb[0].mxu0
      %v711 = vpop.f32.mrb[0].mxu0
      %v712 = vadd.f32 0.0, %v711
      %v713 = vpop.f32.mrb[0].mxu0
      %714 = vmatprep.mubr.bf16.mxu0 0
      %715 = vmatmul.mubr.bf16.gmra.mrb[0].mxu0 %v416
      %v716 = vpop.f32.mrb[0].mxu0
      %v717 = vadd.f32 0.0, %v716
      %v718 = vpop.f32.mrb[0].mxu0
      %v719 = vpop.f32.mrb[0].mxu0
      %v720 = vadd.f32 0.0, %v719
      %v721 = vpop.f32.mrb[0].mxu0
      %722 = vmatprep.mubr.bf16.mxu0 0
      %723 = vmatmul.mubr.bf16.gmra.mrb[0].mxu0 %v417
      %v724 = vpop.f32.mrb[0].mxu0
      %v725 = vadd.f32 0.0, %v724
      %v726 = vpop.f32.mrb[0].mxu0
      %v727 = vpop.f32.mrb[0].mxu0
      %v728 = vadd.f32 0.0, %v727
      %v729 = vpop.f32.mrb[0].mxu0
      %730 = vmatprep.mubr.bf16.mxu0 0
      %731 = vmatmul.mubr.bf16.gmra.mrb[0].mxu0 %v418
      %v732 = vpop.f32.mrb[0].mxu0
      %v733 = vadd.f32 0.0, %v732
      %v734 = vpop.f32.mrb[0].mxu0
      %v735 = vpop.f32.mrb[0].mxu0
      %v736 = vadd.f32 0.0, %v735
      %v737 = vpop.f32.mrb[0].mxu0
      %738 = vmatprep.mubr.bf16.mxu0 0
      %739 = vmatmul.mubr.bf16.gmra.mrb[0].mxu0 %v419
      %v740 = vpop.f32.mrb[0].mxu0
      %v741 = vadd.f32 0.0, %v740
      %v742 = vpop.f32.mrb[0].mxu0
      %v743 = vpop.f32.mrb[0].mxu0
      %v744 = vadd.f32 0.0, %v743
      %v745 = vpop.f32.mrb[0].mxu0
      %746 = vmatprep.mubr.bf16.mxu0 0
      %747 = vmatmul.mubr.bf16.gmra.mrb[0].mxu0 %v420
      %v748 = vpop.f32.mrb[0].mxu0
      %v749 = vadd.f32 0.0, %v748
      %v750 = vpop.f32.mrb[0].mxu0
      %v751 = vpop.f32.mrb[0].mxu0
      %v752 = vadd.f32 0.0, %v751
      %v753 = vpop.f32.mrb[0].mxu0
      %754 = vmatprep.mubr.bf16.mxu0 0
      %755 = vmatmul.mubr.bf16.gmra.mrb[0].mxu0 %v421
      %v756 = vpop.f32.mrb[0].mxu0
      %v757 = vadd.f32 0.0, %v756
      %v758 = vpop.f32.mrb[0].mxu0
      %v759 = vpop.f32.mrb[0].mxu0
      %v760 = vadd.f32 0.0, %v759
      %v761 = vpop.f32.mrb[0].mxu0
      %762 = vmatprep.mubr.bf16.mxu0 0
      %763 = vmatmul.mubr.bf16.gmra.mrb[0].mxu0 %v422
      %v764 = vpop.f32.mrb[0].mxu0
      %v765 = vadd.f32 0.0, %v764
      %v766 = vpop.f32.mrb[0].mxu0
      %v767 = vpop.f32.mrb[0].mxu0
      %v768 = vadd.f32 0.0, %v767
      %v769 = vpop.f32.mrb[0].mxu0
      %770 = vmatprep.mubr.bf16.mxu0 0
      %771 = vmatmul.mubr.bf16.gmra.mrb[0].mxu0 %v423
      %v772 = vpop.f32.mrb[0].mxu0
      %v773 = vadd.f32 0.0, %v772
      %v774 = vpop.f32.mrb[0].mxu0
      %v775 = vpop.f32.mrb[0].mxu0
      %v776 = vadd.f32 0.0, %v775
      %v777 = vpop.f32.mrb[0].mxu0
      %778 = vmatprep.mubr.bf16.mxu0 0
      %779 = vmatmul.mubr.bf16.gmra.mrb[0].mxu0 %v424
      %v780 = vpop.f32.mrb[0].mxu0
      %v781 = vadd.f32 0.0, %v780
      %v782 = vpop.f32.mrb[0].mxu0
      %v783 = vpop.f32.mrb[0].mxu0
      %v784 = vadd.f32 0.0, %v783
      %v785 = vpop.f32.mrb[0].mxu0
      %786 = vmatprep.mubr.bf16.mxu0 0
      %787 = vmatmul.mubr.bf16.gmra.mrb[0].mxu0 %v425
      %v788 = vpop.f32.mrb[0].mxu0
      %v789 = vadd.f32 0.0, %v788
      %v790 = vpop.f32.mrb[0].mxu0
      %v791 = vpop.f32.mrb[0].mxu0
      %v792 = vadd.f32 0.0, %v791
      %v793 = vpop.f32.mrb[0].mxu0
      %794 = vdwg.mxu0
      %795 = vst [vmem:[%s179] sm:$0xff] %v541
      %796 = vst [vmem:[%s179 + $0x8] sm:$0xff] %v544
      %797 = vst [vmem:[%s179 + $0x10] sm:$0xff] %v549
      %798 = vst [vmem:[%s179 + $0x18] sm:$0xff] %v552
      %799 = vst [vmem:[%s179 + $0x20] sm:$0xff] %v557
      %800 = vst [vmem:[%s179 + $0x28] sm:$0xff] %v560
      %801 = vst [vmem:[%s179 + $0x30] sm:$0xff] %v565
      %802 = vst [vmem:[%s179 + $0x38] sm:$0xff] %v568
      %803 = vst [vmem:[%s179 + $0x40] sm:$0xff] %v573
      %804 = vst [vmem:[%s179 + $0x48] sm:$0xff] %v576
      %805 = vst [vmem:[%s179 + $0x50] sm:$0xff] %v581
      %806 = vst [vmem:[%s179 + $0x58] sm:$0xff] %v584
      %807 = vst [vmem:[%s179 + $0x60] sm:$0xff] %v589
      %808 = vst [vmem:[%s179 + $0x68] sm:$0xff] %v592
      %809 = vst [vmem:[%s179 + $0x70] sm:$0xff] %v597
      %810 = vst [vmem:[%s179 + $0x78] sm:$0xff] %v600
      %811 = vst [vmem:[%s179 + $0x80] sm:$0xff] %v605
      %812 = vst [vmem:[%s179 + $0x88] sm:$0xff] %v608
      %813 = vst [vmem:[%s179 + $0x90] sm:$0xff] %v613
      %814 = vst [vmem:[%s179 + $0x98] sm:$0xff] %v616
      %815 = vst [vmem:[%s179 + $0xa0] sm:$0xff] %v621
      %816 = vst [vmem:[%s179 + $0xa8] sm:$0xff] %v624
      %817 = vst [vmem:[%s179 + $0xb0] sm:$0xff] %v629
      %818 = vst [vmem:[%s179 + $0xb8] sm:$0xff] %v632
      %819 = vst [vmem:[%s179 + $0xc0] sm:$0xff] %v637
      %820 = vst [vmem:[%s179 + $0xc8] sm:$0xff] %v640
      %821 = vst [vmem:[%s179 + $0xd0] sm:$0xff] %v645
      %822 = vst [vmem:[%s179 + $0xd8] sm:$0xff] %v648
      %823 = vst [vmem:[%s179 + $0xe0] sm:$0xff] %v653
      %824 = vst [vmem:[%s179 + $0xe8] sm:$0xff] %v656
      %825 = vst [vmem:[%s179 + $0xf0] sm:$0xff] %v661
      %826 = vst [vmem:[%s179 + $0xf8] sm:$0xff] %v664
      %827 = vst [vmem:[%s179 + $0x100] sm:$0xff] %v669
      %828 = vst [vmem:[%s179 + $0x108] sm:$0xff] %v672
      %829 = vst [vmem:[%s179 + $0x110] sm:$0xff] %v677
      %830 = vst [vmem:[%s179 + $0x118] sm:$0xff] %v680
      %831 = vst [vmem:[%s179 + $0x120] sm:$0xff] %v685
      %832 = vst [vmem:[%s179 + $0x128] sm:$0xff] %v688
      %833 = vst [vmem:[%s179 + $0x130] sm:$0xff] %v693
      %834 = vst [vmem:[%s179 + $0x138] sm:$0xff] %v696
      %835 = vst [vmem:[%s179 + $0x140] sm:$0xff] %v701
      %836 = vst [vmem:[%s179 + $0x148] sm:$0xff] %v704
      %837 = vst [vmem:[%s179 + $0x150] sm:$0xff] %v709
      %838 = vst [vmem:[%s179 + $0x158] sm:$0xff] %v712
      %839 = vst [vmem:[%s179 + $0x160] sm:$0xff] %v717
      %840 = vst [vmem:[%s179 + $0x168] sm:$0xff] %v720
      %841 = vst [vmem:[%s179 + $0x170] sm:$0xff] %v725
      %842 = vst [vmem:[%s179 + $0x178] sm:$0xff] %v728
      %843 = vst [vmem:[%s179 + $0x180] sm:$0xff] %v733
      %844 = vst [vmem:[%s179 + $0x188] sm:$0xff] %v736
      %845 = vst [vmem:[%s179 + $0x190] sm:$0xff] %v741
      %846 = vst [vmem:[%s179 + $0x198] sm:$0xff] %v744
      %847 = vst [vmem:[%s179 + $0x1a0] sm:$0xff] %v749
      %848 = vst [vmem:[%s179 + $0x1a8] sm:$0xff] %v752
      %849 = vst [vmem:[%s179 + $0x1b0] sm:$0xff] %v757
      %850 = vst [vmem:[%s179 + $0x1b8] sm:$0xff] %v760
      %851 = vst [vmem:[%s179 + $0x1c0] sm:$0xff] %v765
      %852 = vst [vmem:[%s179 + $0x1c8] sm:$0xff] %v768
      %853 = vst [vmem:[%s179 + $0x1d0] sm:$0xff] %v773
      %854 = vst [vmem:[%s179 + $0x1d8] sm:$0xff] %v776
      %855 = vst [vmem:[%s179 + $0x1e0] sm:$0xff] %v781
      %856 = vst [vmem:[%s179 + $0x1e8] sm:$0xff] %v784
      %857 = vst [vmem:[%s179 + $0x1f0] sm:$0xff] %v789
      %858 = vst [vmem:[%s179 + $0x1f8] sm:$0xff] %v792
      %v859 = vadd.f32 %v541, %v544
      %v860 = vadd.f32 %v859, %v549
      %v861 = vadd.f32 %v860, %v552
      %v862 = vadd.f32 %v861, %v557
      %v863 = vadd.f32 %v862, %v560
      %v864 = vadd.f32 %v863, %v565
      %v865 = vadd.f32 %v864, %v568
      %v866 = vadd.f32 %v865, %v573
      %v867 = vadd.f32 %v866, %v576
      %v868 = vadd.f32 %v867, %v581
      %v869 = vadd.f32 %v868, %v584
      %v870 = vadd.f32 %v869, %v589
      %v871 = vadd.f32 %v870, %v592
      %v872 = vadd.f32 %v871, %v597
      %v873 = vadd.f32 %v872, %v600
      %v874 = vadd.f32 %v873, %v605
      %v875 = vadd.f32 %v874, %v608
      %v876 = vadd.f32 %v875, %v613
      %v877 = vadd.f32 %v876, %v616
      %v878 = vadd.f32 %v877, %v621
      %v879 = vadd.f32 %v878, %v624
      %v880 = vadd.f32 %v879, %v629
      %v881 = vadd.f32 %v880, %v632
      %v882 = vadd.f32 %v881, %v637
      %v883 = vadd.f32 %v882, %v640
      %v884 = vadd.f32 %v883, %v645
      %v885 = vadd.f32 %v884, %v648
      %v886 = vadd.f32 %v885, %v653
      %v887 = vadd.f32 %v886, %v656
      %v888 = vadd.f32 %v887, %v661
      %v889 = vadd.f32 %v888, %v664
      %v890 = vadd.f32 %v889, %v669
      %v891 = vadd.f32 %v890, %v672
      %v892 = vadd.f32 %v891, %v677
      %v893 = vadd.f32 %v892, %v680
      %v894 = vadd.f32 %v893, %v685
      %v895 = vadd.f32 %v894, %v688
      %v896 = vadd.f32 %v895, %v693
      %v897 = vadd.f32 %v896, %v696
      %v898 = vadd.f32 %v897, %v701
      %v899 = vadd.f32 %v898, %v704
      %v900 = vadd.f32 %v899, %v709
      %v901 = vadd.f32 %v900, %v712
      %v902 = vadd.f32 %v901, %v717
      %v903 = vadd.f32 %v902, %v720
      %v904 = vadd.f32 %v903, %v725
      %v905 = vadd.f32 %v904, %v728
      %v906 = vadd.f32 %v905, %v733
      %v907 = vadd.f32 %v906, %v736
      %v908 = vadd.f32 %v907, %v741
      %v909 = vadd.f32 %v908, %v744
      %v910 = vadd.f32 %v909, %v749
      %v911 = vadd.f32 %v910, %v752
      %v912 = vadd.f32 %v911, %v757
      %v913 = vadd.f32 %v912, %v760
      %v914 = vadd.f32 %v913, %v765
      %v915 = vadd.f32 %v914, %v768
      %v916 = vadd.f32 %v915, %v773
      %v917 = vadd.f32 %v916, %v776
      %v918 = vadd.f32 %v917, %v781
      %v919 = vadd.f32 %v918, %v784
      %v920 = vadd.f32 %v919, %v789
      %v921 = vadd.f32 %v920, %v792
      %v922 = vrot.slane %v921, 4
      %v923 = vadd.f32 %v921, %v922
      %v924 = vrot.slane %v923, 2
      %v925 = vadd.f32 %v923, %v924
      %v926 = vrot.slane %v925, 1
      %v927 = vadd.f32 %v925, %v926
      %v928 = vmul.f32 %v541, %v541
      %v929 = vmul.f32 %v544, %v544
      %v930 = vmul.f32 %v549, %v549
      %v931 = vmul.f32 %v552, %v552
      %v932 = vmul.f32 %v557, %v557
      %v933 = vmul.f32 %v560, %v560
      %v934 = vmul.f32 %v565, %v565
      %v935 = vmul.f32 %v568, %v568
      %v936 = vmul.f32 %v573, %v573
      %v937 = vmul.f32 %v576, %v576
      %v938 = vmul.f32 %v581, %v581
      %v939 = vmul.f32 %v584, %v584
      %v940 = vmul.f32 %v589, %v589
      %v941 = vmul.f32 %v592, %v592
      %v942 = vmul.f32 %v597, %v597
      %v943 = vmul.f32 %v600, %v600
      %v944 = vmul.f32 %v605, %v605
      %v945 = vmul.f32 %v608, %v608
      %v946 = vmul.f32 %v613, %v613
      %v947 = vmul.f32 %v616, %v616
      %v948 = vmul.f32 %v621, %v621
      %v949 = vmul.f32 %v624, %v624
      %v950 = vmul.f32 %v629, %v629
      %v951 = vmul.f32 %v632, %v632
      %v952 = vmul.f32 %v637, %v637
      %v953 = vmul.f32 %v640, %v640
      %v954 = vmul.f32 %v645, %v645
      %v955 = vmul.f32 %v648, %v648
      %v956 = vmul.f32 %v653, %v653
      %v957 = vmul.f32 %v656, %v656
      %v958 = vmul.f32 %v661, %v661
      %v959 = vmul.f32 %v664, %v664
      %v960 = vmul.f32 %v669, %v669
      %v961 = vmul.f32 %v672, %v672
      %v962 = vmul.f32 %v677, %v677
      %v963 = vmul.f32 %v680, %v680
      %v964 = vmul.f32 %v685, %v685
      %v965 = vmul.f32 %v688, %v688
      %v966 = vmul.f32 %v693, %v693
      %v967 = vmul.f32 %v696, %v696
      %v968 = vmul.f32 %v701, %v701
      %v969 = vmul.f32 %v704, %v704
      %v970 = vmul.f32 %v709, %v709
      %v971 = vmul.f32 %v712, %v712
      %v972 = vmul.f32 %v717, %v717
      %v973 = vmul.f32 %v720, %v720
      %v974 = vmul.f32 %v725, %v725
      %v975 = vmul.f32 %v728, %v728
      %v976 = vmul.f32 %v733, %v733
      %v977 = vmul.f32 %v736, %v736
      %v978 = vmul.f32 %v741, %v741
      %v979 = vmul.f32 %v744, %v744
      %v980 = vmul.f32 %v749, %v749
      %v981 = vmul.f32 %v752, %v752
      %v982 = vmul.f32 %v757, %v757
      %v983 = vmul.f32 %v760, %v760
      %v984 = vmul.f32 %v765, %v765
      %v985 = vmul.f32 %v768, %v768
      %v986 = vmul.f32 %v773, %v773
      %v987 = vmul.f32 %v776, %v776
      %v988 = vmul.f32 %v781, %v781
      %v989 = vmul.f32 %v784, %v784
      %v990 = vmul.f32 %v789, %v789
      %v991 = vmul.f32 %v792, %v792
      %v992 = vadd.f32 %v928, %v929
      %v993 = vadd.f32 %v992, %v930
      %v994 = vadd.f32 %v993, %v931
      %v995 = vadd.f32 %v994, %v932
      %v996 = vadd.f32 %v995, %v933
      %v997 = vadd.f32 %v996, %v934
      %v998 = vadd.f32 %v997, %v935
      %v999 = vadd.f32 %v998, %v936
      %v1000 = vadd.f32 %v999, %v937
      %v1001 = vadd.f32 %v1000, %v938
      %v1002 = vadd.f32 %v1001, %v939
      %v1003 = vadd.f32 %v1002, %v940
      %v1004 = vadd.f32 %v1003, %v941
      %v1005 = vadd.f32 %v1004, %v942
      %v1006 = vadd.f32 %v1005, %v943
      %v1007 = vadd.f32 %v1006, %v944
      %v1008 = vadd.f32 %v1007, %v945
      %v1009 = vadd.f32 %v1008, %v946
      %v1010 = vadd.f32 %v1009, %v947
      %v1011 = vadd.f32 %v1010, %v948
      %v1012 = vadd.f32 %v1011, %v949
      %v1013 = vadd.f32 %v1012, %v950
      %v1014 = vadd.f32 %v1013, %v951
      %v1015 = vadd.f32 %v1014, %v952
      %v1016 = vadd.f32 %v1015, %v953
      %v1017 = vadd.f32 %v1016, %v954
      %v1018 = vadd.f32 %v1017, %v955
      %v1019 = vadd.f32 %v1018, %v956
      %v1020 = vadd.f32 %v1019, %v957
      %v1021 = vadd.f32 %v1020, %v958
      %v1022 = vadd.f32 %v1021, %v959
      %v1023 = vadd.f32 %v1022, %v960
      %v1024 = vadd.f32 %v1023, %v961
      %v1025 = vadd.f32 %v1024, %v962
      %v1026 = vadd.f32 %v1025, %v963
      %v1027 = vadd.f32 %v1026, %v964
      %v1028 = vadd.f32 %v1027, %v965
      %v1029 = vadd.f32 %v1028, %v966
      %v1030 = vadd.f32 %v1029, %v967
      %v1031 = vadd.f32 %v1030, %v968
      %v1032 = vadd.f32 %v1031, %v969
      %v1033 = vadd.f32 %v1032, %v970
      %v1034 = vadd.f32 %v1033, %v971
      %v1035 = vadd.f32 %v1034, %v972
      %v1036 = vadd.f32 %v1035, %v973
      %v1037 = vadd.f32 %v1036, %v974
      %v1038 = vadd.f32 %v1037, %v975
      %v1039 = vadd.f32 %v1038, %v976
      %v1040 = vadd.f32 %v1039, %v977
      %v1041 = vadd.f32 %v1040, %v978
      %v1042 = vadd.f32 %v1041, %v979
      %v1043 = vadd.f32 %v1042, %v980
      %v1044 = vadd.f32 %v1043, %v981
      %v1045 = vadd.f32 %v1044, %v982
      %v1046 = vadd.f32 %v1045, %v983
      %v1047 = vadd.f32 %v1046, %v984
      %v1048 = vadd.f32 %v1047, %v985
      %v1049 = vadd.f32 %v1048, %v986
      %v1050 = vadd.f32 %v1049, %v987
      %v1051 = vadd.f32 %v1050, %v988
      %v1052 = vadd.f32 %v1051, %v989
      %v1053 = vadd.f32 %v1052, %v990
      %v1054 = vadd.f32 %v1053, %v991
      %v1055 = vrot.slane %v1054, 4
      %v1056 = vadd.f32 %v1054, %v1055
      %v1057 = vrot.slane %v1056, 2
      %v1058 = vadd.f32 %v1056, %v1057
      %v1059 = vrot.slane %v1058, 1
      %v1060 = vadd.f32 %v1058, %v1059
      %vm1061 = vcmask 1040384
      %v1062 = vsel %vm1061, %v927, %v1060
      %1063 = vst [vmem:[%s184] sm:$0x3] %v1062
      %s1064 = smul.u32 64, %s15
      %p1065 = scmp.lt.s32.totalorder %s1064, 127
      %s1066 = scalar_select %p1065, %s1064, 127
      %s1067 = smul.addr %s1066, 8
      %s1068 = scalar_lea.vmem %s2, %s1067
      %p1069 = scmp.lt.s32.totalorder %s15, 1
      %s1070 = scalar_select %p1069, %s15, 1
      %s1071 = smul.addr %s1070, 2
      %s1072 = scalar_lea.vmem %s3, %s1071
      // Predicated region
      $region29: #{feat_encoder_forward.20} parent=27 // pred_check
        %p1073 = pneg %p80
      $region30: #{feat_encoder_forward.20} parent=27 // pred_check_branch
        %1075 = sbr.rel (%p1073) target = $region32
      $region31: #{feat_encoder_forward.20} parent=27 // pred_region
        %s1076 = smul.u32 64, %s15
      $region32: #{feat_encoder_forward.20} parent=27 // pred_fallthru
        _
      // Predicated region
      $region33: #{feat_encoder_forward.20} parent=27 // pred_check
        %p1077 = pneg %p106
      $region34: #{feat_encoder_forward.20} parent=27 // pred_check_branch
        %1079 = sbr.rel (%p1077) target = $region36
      $region35: #{feat_encoder_forward.20} parent=27 // pred_region
        _
      $region36: #{feat_encoder_forward.20} parent=27 // pred_fallthru
        _
    $region28: #{feat_encoder_forward.20} parent=5 // pred_fallthru
      _
    %p1080 = scmp.le.s32.totalorder 2, %s10
    // Predicated region
    $region37: #{feat_encoder_forward.20} parent=5 // pred_check
      %p1081 = pneg %p1080
    $region38: #{feat_encoder_forward.20} parent=5 // pred_check_branch
      %1083 = sbr.rel (%p1081) target = $region40
    $region39: #{feat_encoder_forward.20} parent=5 // pred_region
      %s1084 = ssub.s32 %s10, 2
      // Predicated region
      $region41: #{feat_encoder_forward.20} parent=39 // pred_check
        %p1085 = pneg %p86
      $region42: #{feat_encoder_forward.20} parent=39 // pred_check_branch
        %1087 = sbr.rel (%p1085) target = $region44
      $region43: #{feat_encoder_forward.20} parent=39 // pred_region
        %s1088 = smul.u32 64, %s16
        %p1089 = scmp.lt.s32.totalorder %s1088, 127
        %s1090 = scalar_select %p1089, %s1088, 127
        %s1091 = smul.addr %s1090, 8
        %s1092 = scalar_lea.vmem %s2, %s1091
      $region44: #{feat_encoder_forward.20} parent=39 // pred_fallthru
        _
      // Predicated region
      $region45: #{feat_encoder_forward.20} parent=39 // pred_check
        %p1093 = pneg %p112
      $region46: #{feat_encoder_forward.20} parent=39 // pred_check_branch
        %1095 = sbr.rel (%p1093) target = $region48
      $region47: #{feat_encoder_forward.20} parent=39 // pred_region
        %p1096 = scmp.lt.s32.totalorder %s16, 1
        %s1097 = scalar_select %p1096, %s16, 1
        %s1098 = smul.addr %s1097, 2
        %s1099 = scalar_lea.vmem %s3, %s1098
      $region48: #{feat_encoder_forward.20} parent=39 // pred_fallthru
        _
    $region40: #{feat_encoder_forward.20} parent=5 // pred_fallthru
      _
  $region6: #{feat_encoder_forward.20} parent=0 // loop_footer
    %s14 = sadd.s32 1, %s10
  $region7: #{feat_encoder_forward.20} parent=0 // loop_footer_branch
    %9 = sbr.rel target = $region3
  $region8: #{feat_encoder_forward.20} parent=0 // loop_exit
    _

// kernel: feat_encoder_forward.22
$region0: #{feat_encoder_forward.22}
  #allocation0 [shape = 'u32[]', space=smem, size = 0x4, offset = 0x4, fixed_abs, tag = 'smem constant byte address 0x4 - core index']
  #allocation1 [shape = 'u32[144,128]{1,0:T(1,128)}', space=vmem, size = 0x12000, scoped, tag = 'internal scratch']
  %s0 = inlined_call_operand.vmem [shape: bf16[200,128], index: 0, kind: input, shape index: {}]
  %s1 = inlined_call_operand.vmem [shape: bf16[128,256], index: 1, kind: input, shape index: {}]
  %s2 = inlined_call_operand.vmem [shape: f32[200,256], index: 2, kind: output, shape index: {0}]
  %s3 = inlined_call_operand.vmem [shape: f32[1,2,256], index: 3, kind: output, shape index: {1}]
  %4 = xla_tuple %s2, %s3
  %s5 = sld [smem:[#allocation0]]
  $region26: #{feat_encoder_forward.22} parent=0
    _
  %s7 = ssub.s32 1, %s5
  %s8 = scalar_select 0, %s7, %s5
  // Predicated region
  $region2: #{feat_encoder_forward.22} parent=0 // pred_check
    _
  $region3: #{feat_encoder_forward.22} parent=0 // pred_check_branch
    %10 = sbr.rel (0) target = $region5
  $region4: #{feat_encoder_forward.22} parent=0 // pred_region
    _
  $region5: #{feat_encoder_forward.22} parent=0 // pred_fallthru
    _
  // Predicated region
  $region6: #{feat_encoder_forward.22} parent=0 // pred_check
    _
  $region7: #{feat_encoder_forward.22} parent=0 // pred_check_branch
    %12 = sbr.rel (0) target = $region9
  $region8: #{feat_encoder_forward.22} parent=0 // pred_region
    _
  $region9: #{feat_encoder_forward.22} parent=0 // pred_fallthru
    _
  %v14 = vld [vmem:[%s0] sm:$0xf]
  %v15 = vld [vmem:[%s0 + $0x4] sm:$0xf]
  %v16 = vld [vmem:[%s0 + $0x8] sm:$0xf]
  %v17 = vld [vmem:[%s0 + $0xc] sm:$0xf]
  %v18 = vld [vmem:[%s0 + $0x10] sm:$0xf]
  %v19 = vld [vmem:[%s0 + $0x14] sm:$0xf]
  %v20 = vld [vmem:[%s0 + $0x18] sm:$0xf]
  %v21 = vld [vmem:[%s0 + $0x1c] sm:$0xf]
  %v22 = vld [vmem:[%s0 + $0x20] sm:$0xf]
  %v23 = vld [vmem:[%s0 + $0x24] sm:$0xf]
  %v24 = vld [vmem:[%s0 + $0x28] sm:$0xf]
  %v25 = vld [vmem:[%s0 + $0x2c] sm:$0xf]
  %v26 = vld [vmem:[%s0 + $0x30] sm:$0xf]
  %v27 = vld [vmem:[%s0 + $0x34] sm:$0xf]
  %v28 = vld [vmem:[%s0 + $0x38] sm:$0xf]
  %v29 = vld [vmem:[%s0 + $0x3c] sm:$0xf]
  %v30 = vld [vmem:[%s0 + $0x40] sm:$0xf]
  %v31 = vld [vmem:[%s0 + $0x44] sm:$0xf]
  %v32 = vld [vmem:[%s0 + $0x48] sm:$0xf]
  %v33 = vld [vmem:[%s0 + $0x4c] sm:$0xf]
  %v34 = vld [vmem:[%s0 + $0x50] sm:$0xf]
  %v35 = vld [vmem:[%s0 + $0x54] sm:$0xf]
  %v36 = vld [vmem:[%s0 + $0x58] sm:$0xf]
  %v37 = vld [vmem:[%s0 + $0x5c] sm:$0xf]
  %v38 = vld [vmem:[%s0 + $0x60] sm:$0xf]
  %v39 = vld [vmem:[%s1] sm:$0xff]
  %v40 = vld [vmem:[%s1 + $0x8] sm:$0xff]
  %v41 = vld [vmem:[%s1 + $0x10] sm:$0xff]
  %v42 = vld [vmem:[%s1 + $0x18] sm:$0xff]
  %v43 = vld [vmem:[%s1 + $0x20] sm:$0xff]
  %v44 = vld [vmem:[%s1 + $0x28] sm:$0xff]
  %v45 = vld [vmem:[%s1 + $0x30] sm:$0xff]
  %v46 = vld [vmem:[%s1 + $0x38] sm:$0xff]
  %v47 = vld [vmem:[%s1 + $0x40] sm:$0xff]
  %v48 = vld [vmem:[%s1 + $0x48] sm:$0xff]
  %v49 = vld [vmem:[%s1 + $0x50] sm:$0xff]
  %v50 = vld [vmem:[%s1 + $0x58] sm:$0xff]
  %v51 = vld [vmem:[%s1 + $0x60] sm:$0xff]
  %v52 = vld [vmem:[%s1 + $0x68] sm:$0xff]
  %v53 = vld [vmem:[%s1 + $0x70] sm:$0xff]
  %v54 = vld [vmem:[%s1 + $0x78] sm:$0xff]
  %v80 = vunpack.c.l.b16 %v14
  %v81 = vunpack.c.l.b16 %v15
  %v82 = vunpack.c.l.b16 %v16
  %v83 = vunpack.c.l.b16 %v17
  %v84 = vunpack.c.l.b16 %v18
  %v85 = vunpack.c.l.b16 %v19
  %v86 = vunpack.c.l.b16 %v20
  %v87 = vunpack.c.l.b16 %v21
  %v88 = vunpack.c.l.b16 %v22
  %v89 = vunpack.c.l.b16 %v23
  %v90 = vunpack.c.l.b16 %v24
  %v91 = vunpack.c.l.b16 %v25
  %v92 = vunpack.c.l.b16 %v26
  %v93 = vunpack.c.l.b16 %v27
  %v94 = vunpack.c.l.b16 %v28
  %v95 = vunpack.c.l.b16 %v29
  %v96 = vunpack.c.l.b16 %v30
  %v97 = vunpack.c.l.b16 %v31
  %v98 = vunpack.c.l.b16 %v32
  %v99 = vunpack.c.l.b16 %v33
  %v100 = vunpack.c.l.b16 %v34
  %v101 = vunpack.c.l.b16 %v35
  %v102 = vunpack.c.l.b16 %v36
  %v103 = vunpack.c.l.b16 %v37
  %v104 = vunpack.c.l.b16 %v38
  %v105 = vpack.c.b16 %v81, %v80
  %v106 = vpack.c.b16 %v83, %v82
  %v107 = vpack.c.b16 %v85, %v84
  %v108 = vpack.c.b16 %v87, %v86
  %v109 = vpack.c.b16 %v89, %v88
  %v110 = vpack.c.b16 %v91, %v90
  %v111 = vpack.c.b16 %v93, %v92
  %v112 = vpack.c.b16 %v95, %v94
  %v113 = vpack.c.b16 %v97, %v96
  %v114 = vpack.c.b16 %v99, %v98
  %v115 = vpack.c.b16 %v101, %v100
  %v116 = vpack.c.b16 %v103, %v102
  %v117 = vpack.c.b16 %v104, %v104
  %v147 = vunpack.c.l.b16 %v39
  %v148 = vunpack.c.h.b16 %v39
  %v149 = vunpack.c.l.b16 %v40
  %v150 = vunpack.c.h.b16 %v40
  %v151 = vunpack.c.l.b16 %v41
  %v152 = vunpack.c.h.b16 %v41
  %v153 = vunpack.c.l.b16 %v42
  %v154 = vunpack.c.h.b16 %v42
  %v155 = vunpack.c.l.b16 %v43
  %v156 = vunpack.c.h.b16 %v43
  %v157 = vunpack.c.l.b16 %v44
  %v158 = vunpack.c.h.b16 %v44
  %v159 = vunpack.c.l.b16 %v45
  %v160 = vunpack.c.h.b16 %v45
  %v161 = vunpack.c.l.b16 %v46
  %v162 = vunpack.c.h.b16 %v46
  %v163 = vunpack.c.l.b16 %v47
  %v164 = vunpack.c.h.b16 %v47
  %v165 = vunpack.c.l.b16 %v48
  %v166 = vunpack.c.h.b16 %v48
  %v167 = vunpack.c.l.b16 %v49
  %v168 = vunpack.c.h.b16 %v49
  %v169 = vunpack.c.l.b16 %v50
  %v170 = vunpack.c.h.b16 %v50
  %v171 = vunpack.c.l.b16 %v51
  %v172 = vunpack.c.h.b16 %v51
  %v173 = vunpack.c.l.b16 %v52
  %v174 = vunpack.c.h.b16 %v52
  %v175 = vunpack.c.l.b16 %v53
  %v176 = vunpack.c.h.b16 %v53
  %v177 = vunpack.c.l.b16 %v54
  %v178 = vunpack.c.h.b16 %v54
  %v179 = vpack.c.b16 %v149, %v147
  %v180 = vpack.c.b16 %v150, %v148
  %v181 = vpack.c.b16 %v153, %v151
  %v182 = vpack.c.b16 %v154, %v152
  %v183 = vpack.c.b16 %v157, %v155
  %v184 = vpack.c.b16 %v158, %v156
  %v185 = vpack.c.b16 %v161, %v159
  %v186 = vpack.c.b16 %v162, %v160
  %v187 = vpack.c.b16 %v165, %v163
  %v188 = vpack.c.b16 %v166, %v164
  %v189 = vpack.c.b16 %v169, %v167
  %v190 = vpack.c.b16 %v170, %v168
  %v191 = vpack.c.b16 %v173, %v171
  %v192 = vpack.c.b16 %v174, %v172
  %v193 = vpack.c.b16 %v177, %v175
  %v194 = vpack.c.b16 %v178, %v176
  %211 = vmatprep.subr.bf16.mxu0 %v180
  %212 = vmatpush1.bf16.msra.mxu0 %v179
  %213 = vmatprep.subr.bf16.mxu0 %v182
  %214 = vmatpush1.bf16.msra.mxu0 %v181
  %215 = vmatprep.subr.bf16.mxu0 %v184
  %216 = vmatpush1.bf16.msra.mxu0 %v183
  %217 = vmatprep.subr.bf16.mxu0 %v186
  %218 = vmatpush1.bf16.msra.mxu0 %v185
  %219 = vmatprep.subr.bf16.mxu0 %v188
  %220 = vmatpush1.bf16.msra.mxu0 %v187
  %221 = vmatprep.subr.bf16.mxu0 %v190
  %222 = vmatpush1.bf16.msra.mxu0 %v189
  %223 = vmatprep.subr.bf16.mxu0 %v192
  %224 = vmatpush1.bf16.msra.mxu0 %v191
  %225 = vmatprep.subr.bf16.mxu0 %v194
  %226 = vmatpush1.bf16.msra.mxu0 %v193
  %227 = vmatprep.subr.bf16.mxu0 0
  %228 = vmatpush1.bf16.msra.mxu0 0
  %229 = vmatprep.subr.bf16.mxu0 0
  %230 = vmatpush1.bf16.msra.mxu0 0
  %231 = vmatprep.subr.bf16.mxu0 0
  %232 = vmatpush1.bf16.msra.mxu0 0
  %233 = vmatprep.subr.bf16.mxu0 0
  %234 = vmatpush1.bf16.msra.mxu0 0
  %235 = vmatprep.subr.bf16.mxu0 0
  %236 = vmatpush1.bf16.msra.mxu0 0
  %237 = vmatprep.subr.bf16.mxu0 0
  %238 = vmatpush1.bf16.msra.mxu0 0
  %239 = vmatprep.subr.bf16.mxu0 0
  %240 = vmatpush1.bf16.msra.mxu0 0
  %241 = vmatprep.subr.bf16.mxu0 0
  %242 = vmatpush1.bf16.msra.mxu0 0
  %243 = vmatprep.mubr.bf16.mxu0 0
  %244 = vmatmul.mubr.bf16.gmra.mrb[0].mxu0 %v105
  %v245 = vpop.f32.mrb[0].mxu0
  %v246 = vadd.f32 0.0, %v245
  %v247 = vpop.f32.mrb[0].mxu0
  %v248 = vadd.f32 0.0, %v247
  %v249 = vpop.f32.mrb[0].mxu0
  %v250 = vadd.f32 0.0, %v249
  %v251 = vpop.f32.mrb[0].mxu0
  %v252 = vadd.f32 0.0, %v251
  %253 = vmatprep.mubr.bf16.mxu0 0
  %254 = vmatmul.mubr.bf16.gmra.mrb[0].mxu0 %v106
  %v255 = vpop.f32.mrb[0].mxu0
  %v256 = vadd.f32 0.0, %v255
  %v257 = vpop.f32.mrb[0].mxu0
  %v258 = vadd.f32 0.0, %v257
  %v259 = vpop.f32.mrb[0].mxu0
  %v260 = vadd.f32 0.0, %v259
  %v261 = vpop.f32.mrb[0].mxu0
  %v262 = vadd.f32 0.0, %v261
  %263 = vmatprep.mubr.bf16.mxu0 0
  %264 = vmatmul.mubr.bf16.gmra.mrb[0].mxu0 %v107
  %v265 = vpop.f32.mrb[0].mxu0
  %v266 = vadd.f32 0.0, %v265
  %v267 = vpop.f32.mrb[0].mxu0
  %v268 = vadd.f32 0.0, %v267
  %v269 = vpop.f32.mrb[0].mxu0
  %v270 = vadd.f32 0.0, %v269
  %v271 = vpop.f32.mrb[0].mxu0
  %v272 = vadd.f32 0.0, %v271
  %273 = vmatprep.mubr.bf16.mxu0 0
  %274 = vmatmul.mubr.bf16.gmra.mrb[0].mxu0 %v108
  %v275 = vpop.f32.mrb[0].mxu0
  %v276 = vadd.f32 0.0, %v275
  %v277 = vpop.f32.mrb[0].mxu0
  %v278 = vadd.f32 0.0, %v277
  %v279 = vpop.f32.mrb[0].mxu0
  %v280 = vadd.f32 0.0, %v279
  %v281 = vpop.f32.mrb[0].mxu0
  %v282 = vadd.f32 0.0, %v281
  %283 = vmatprep.mubr.bf16.mxu0 0
  %284 = vmatmul.mubr.bf16.gmra.mrb[0].mxu0 %v109
  %v285 = vpop.f32.mrb[0].mxu0
  %v286 = vadd.f32 0.0, %v285
  %v287 = vpop.f32.mrb[0].mxu0
  %v288 = vadd.f32 0.0, %v287
  %v289 = vpop.f32.mrb[0].mxu0
  %v290 = vadd.f32 0.0, %v289
  %v291 = vpop.f32.mrb[0].mxu0
  %v292 = vadd.f32 0.0, %v291
  %293 = vmatprep.mubr.bf16.mxu0 0
  %294 = vmatmul.mubr.bf16.gmra.mrb[0].mxu0 %v110
  %v295 = vpop.f32.mrb[0].mxu0
  %v296 = vadd.f32 0.0, %v295
  %v297 = vpop.f32.mrb[0].mxu0
  %v298 = vadd.f32 0.0, %v297
  %v299 = vpop.f32.mrb[0].mxu0
  %v300 = vadd.f32 0.0, %v299
  %v301 = vpop.f32.mrb[0].mxu0
  %v302 = vadd.f32 0.0, %v301
  %303 = vmatprep.mubr.bf16.mxu0 0
  %304 = vmatmul.mubr.bf16.gmra.mrb[0].mxu0 %v111
  %v305 = vpop.f32.mrb[0].mxu0
  %v306 = vadd.f32 0.0, %v305
  %v307 = vpop.f32.mrb[0].mxu0
  %v308 = vadd.f32 0.0, %v307
  %v309 = vpop.f32.mrb[0].mxu0
  %v310 = vadd.f32 0.0, %v309
  %v311 = vpop.f32.mrb[0].mxu0
  %v312 = vadd.f32 0.0, %v311
  %313 = vmatprep.mubr.bf16.mxu0 0
  %314 = vmatmul.mubr.bf16.gmra.mrb[0].mxu0 %v112
  %v315 = vpop.f32.mrb[0].mxu0
  %v316 = vadd.f32 0.0, %v315
  %v317 = vpop.f32.mrb[0].mxu0
  %v318 = vadd.f32 0.0, %v317
  %v319 = vpop.f32.mrb[0].mxu0
  %v320 = vadd.f32 0.0, %v319
  %v321 = vpop.f32.mrb[0].mxu0
  %v322 = vadd.f32 0.0, %v321
  %323 = vmatprep.mubr.bf16.mxu0 0
  %324 = vmatmul.mubr.bf16.gmra.mrb[0].mxu0 %v113
  %v325 = vpop.f32.mrb[0].mxu0
  %v326 = vadd.f32 0.0, %v325
  %v327 = vpop.f32.mrb[0].mxu0
  %v328 = vadd.f32 0.0, %v327
  %v329 = vpop.f32.mrb[0].mxu0
  %v330 = vadd.f32 0.0, %v329
  %v331 = vpop.f32.mrb[0].mxu0
  %v332 = vadd.f32 0.0, %v331
  %333 = vmatprep.mubr.bf16.mxu0 0
  %334 = vmatmul.mubr.bf16.gmra.mrb[0].mxu0 %v114
  %v335 = vpop.f32.mrb[0].mxu0
  %v336 = vadd.f32 0.0, %v335
  %v337 = vpop.f32.mrb[0].mxu0
  %v338 = vadd.f32 0.0, %v337
  %v339 = vpop.f32.mrb[0].mxu0
  %v340 = vadd.f32 0.0, %v339
  %v341 = vpop.f32.mrb[0].mxu0
  %v342 = vadd.f32 0.0, %v341
  %343 = vmatprep.mubr.bf16.mxu0 0
  %344 = vmatmul.mubr.bf16.gmra.mrb[0].mxu0 %v115
  %v345 = vpop.f32.mrb[0].mxu0
  %v346 = vadd.f32 0.0, %v345
  %v347 = vpop.f32.mrb[0].mxu0
  %v348 = vadd.f32 0.0, %v347
  %v349 = vpop.f32.mrb[0].mxu0
  %v350 = vadd.f32 0.0, %v349
  %v351 = vpop.f32.mrb[0].mxu0
  %v352 = vadd.f32 0.0, %v351
  %353 = vmatprep.mubr.bf16.mxu0 0
  %354 = vmatmul.mubr.bf16.gmra.mrb[0].mxu0 %v116
  %v355 = vpop.f32.mrb[0].mxu0
  %v356 = vadd.f32 0.0, %v355
  %v357 = vpop.f32.mrb[0].mxu0
  %v358 = vadd.f32 0.0, %v357
  %v359 = vpop.f32.mrb[0].mxu0
  %v360 = vadd.f32 0.0, %v359
  %v361 = vpop.f32.mrb[0].mxu0
  %v362 = vadd.f32 0.0, %v361
  %363 = vmatprep.mubr.bf16.mxu0 0
  %364 = vmatmul.mubr.bf16.gmra.mrb[0].mxu0 %v117
  %v365 = vpop.f32.mrb[0].mxu0
  %v366 = vadd.f32 0.0, %v365
  %v367 = vpop.f32.mrb[0].mxu0
  %v368 = vadd.f32 0.0, %v367
  %v369 = vpop.f32.mrb[0].mxu0
  %v370 = vpop.f32.mrb[0].mxu0
  %371 = vdwg.mxu0
  %372 = vst [vmem:[%s2] sm:$0xff] %v246
  %373 = vst [vmem:[%s2 + $0x8] sm:$0xff] %v248
  %374 = vst [vmem:[%s2 + $0x10] sm:$0xff] %v250
  %375 = vst [vmem:[%s2 + $0x18] sm:$0xff] %v252
  %376 = vst [vmem:[%s2 + $0x20] sm:$0xff] %v256
  %377 = vst [vmem:[%s2 + $0x28] sm:$0xff] %v258
  %378 = vst [vmem:[%s2 + $0x30] sm:$0xff] %v260
  %379 = vst [vmem:[%s2 + $0x38] sm:$0xff] %v262
  %380 = vst [vmem:[%s2 + $0x40] sm:$0xff] %v266
  %381 = vst [vmem:[%s2 + $0x48] sm:$0xff] %v268
  %382 = vst [vmem:[%s2 + $0x50] sm:$0xff] %v270
  %383 = vst [vmem:[%s2 + $0x58] sm:$0xff] %v272
  %384 = vst [vmem:[%s2 + $0x60] sm:$0xff] %v276
  %385 = vst [vmem:[%s2 + $0x68] sm:$0xff] %v278
  %386 = vst [vmem:[%s2 + $0x70] sm:$0xff] %v280
  %387 = vst [vmem:[%s2 + $0x78] sm:$0xff] %v282
  %388 = vst [vmem:[%s2 + $0x80] sm:$0xff] %v286
  %389 = vst [vmem:[%s2 + $0x88] sm:$0xff] %v288
  %390 = vst [vmem:[%s2 + $0x90] sm:$0xff] %v290
  %391 = vst [vmem:[%s2 + $0x98] sm:$0xff] %v292
  %392 = vst [vmem:[%s2 + $0xa0] sm:$0xff] %v296
  %393 = vst [vmem:[%s2 + $0xa8] sm:$0xff] %v298
  %394 = vst [vmem:[%s2 + $0xb0] sm:$0xff] %v300
  %395 = vst [vmem:[%s2 + $0xb8] sm:$0xff] %v302
  %396 = vst [vmem:[%s2 + $0xc0] sm:$0xff] %v306
  %397 = vst [vmem:[%s2 + $0xc8] sm:$0xff] %v308
  %398 = vst [vmem:[%s2 + $0xd0] sm:$0xff] %v310
  %399 = vst [vmem:[%s2 + $0xd8] sm:$0xff] %v312
  %400 = vst [vmem:[%s2 + $0xe0] sm:$0xff] %v316
  %401 = vst [vmem:[%s2 + $0xe8] sm:$0xff] %v318
  %402 = vst [vmem:[%s2 + $0xf0] sm:$0xff] %v320
  %403 = vst [vmem:[%s2 + $0xf8] sm:$0xff] %v322
  %404 = vst [vmem:[%s2 + $0x100] sm:$0xff] %v326
  %405 = vst [vmem:[%s2 + $0x108] sm:$0xff] %v328
  %406 = vst [vmem:[%s2 + $0x110] sm:$0xff] %v330
  %407 = vst [vmem:[%s2 + $0x118] sm:$0xff] %v332
  %408 = vst [vmem:[%s2 + $0x120] sm:$0xff] %v336
  %409 = vst [vmem:[%s2 + $0x128] sm:$0xff] %v338
  %410 = vst [vmem:[%s2 + $0x130] sm:$0xff] %v340
  %411 = vst [vmem:[%s2 + $0x138] sm:$0xff] %v342
  %412 = vst [vmem:[%s2 + $0x140] sm:$0xff] %v346
  %413 = vst [vmem:[%s2 + $0x148] sm:$0xff] %v348
  %414 = vst [vmem:[%s2 + $0x150] sm:$0xff] %v350
  %415 = vst [vmem:[%s2 + $0x158] sm:$0xff] %v352
  %416 = vst [vmem:[%s2 + $0x160] sm:$0xff] %v356
  %417 = vst [vmem:[%s2 + $0x168] sm:$0xff] %v358
  %418 = vst [vmem:[%s2 + $0x170] sm:$0xff] %v360
  %419 = vst [vmem:[%s2 + $0x178] sm:$0xff] %v362
  %420 = vst [vmem:[%s2 + $0x180] sm:$0xff] %v366
  %421 = vst [vmem:[%s2 + $0x188] sm:$0xff] %v368
  %v422 = vadd.f32 %v246, %v250
  %v423 = vadd.f32 %v422, %v256
  %v424 = vadd.f32 %v423, %v260
  %v425 = vadd.f32 %v424, %v266
  %v426 = vadd.f32 %v425, %v270
  %v427 = vadd.f32 %v426, %v276
  %v428 = vadd.f32 %v427, %v280
  %v429 = vadd.f32 %v428, %v286
  %v430 = vadd.f32 %v429, %v290
  %v431 = vadd.f32 %v430, %v296
  %v432 = vadd.f32 %v431, %v300
  %v433 = vadd.f32 %v432, %v306
  %v434 = vadd.f32 %v433, %v310
  %v435 = vadd.f32 %v434, %v316
  %v436 = vadd.f32 %v435, %v320
  %v437 = vadd.f32 %v436, %v326
  %v438 = vadd.f32 %v437, %v330
  %v439 = vadd.f32 %v438, %v336
  %v440 = vadd.f32 %v439, %v340
  %v441 = vadd.f32 %v440, %v346
  %v442 = vadd.f32 %v441, %v350
  %v443 = vadd.f32 %v442, %v356
  %v444 = vadd.f32 %v443, %v360
  %v445 = vadd.f32 %v444, %v366
  %v446 = vrot.slane %v445, 4
  %v447 = vadd.f32 %v445, %v446
  %v448 = vrot.slane %v447, 2
  %v449 = vadd.f32 %v447, %v448
  %v450 = vrot.slane %v449, 1
  %v451 = vadd.f32 %v449, %v450
  %v452 = vadd.f32 %v248, %v252
  %v453 = vadd.f32 %v452, %v258
  %v454 = vadd.f32 %v453, %v262
  %v455 = vadd.f32 %v454, %v268
  %v456 = vadd.f32 %v455, %v272
  %v457 = vadd.f32 %v456, %v278
  %v458 = vadd.f32 %v457, %v282
  %v459 = vadd.f32 %v458, %v288
  %v460 = vadd.f32 %v459, %v292
  %v461 = vadd.f32 %v460, %v298
  %v462 = vadd.f32 %v461, %v302
  %v463 = vadd.f32 %v462, %v308
  %v464 = vadd.f32 %v463, %v312
  %v465 = vadd.f32 %v464, %v318
  %v466 = vadd.f32 %v465, %v322
  %v467 = vadd.f32 %v466, %v328
  %v468 = vadd.f32 %v467, %v332
  %v469 = vadd.f32 %v468, %v338
  %v470 = vadd.f32 %v469, %v342
  %v471 = vadd.f32 %v470, %v348
  %v472 = vadd.f32 %v471, %v352
  %v473 = vadd.f32 %v472, %v358
  %v474 = vadd.f32 %v473, %v362
  %v475 = vadd.f32 %v474, %v368
  %v476 = vrot.slane %v475, 4
  %v477 = vadd.f32 %v475, %v476
  %v478 = vrot.slane %v477, 2
  %v479 = vadd.f32 %v477, %v478
  %v480 = vrot.slane %v479, 1
  %v481 = vadd.f32 %v479, %v480
  %v482 = vmul.f32 %v246, %v246
  %v483 = vmul.f32 %v248, %v248
  %v484 = vmul.f32 %v250, %v250
  %v485 = vmul.f32 %v252, %v252
  %v486 = vmul.f32 %v256, %v256
  %v487 = vmul.f32 %v258, %v258
  %v488 = vmul.f32 %v260, %v260
  %v489 = vmul.f32 %v262, %v262
  %v490 = vmul.f32 %v266, %v266
  %v491 = vmul.f32 %v268, %v268
  %v492 = vmul.f32 %v270, %v270
  %v493 = vmul.f32 %v272, %v272
  %v494 = vmul.f32 %v276, %v276
  %v495 = vmul.f32 %v278, %v278
  %v496 = vmul.f32 %v280, %v280
  %v497 = vmul.f32 %v282, %v282
  %v498 = vmul.f32 %v286, %v286
  %v499 = vmul.f32 %v288, %v288
  %v500 = vmul.f32 %v290, %v290
  %v501 = vmul.f32 %v292, %v292
  %v502 = vmul.f32 %v296, %v296
  %v503 = vmul.f32 %v298, %v298
  %v504 = vmul.f32 %v300, %v300
  %v505 = vmul.f32 %v302, %v302
  %v506 = vmul.f32 %v306, %v306
  %v507 = vmul.f32 %v308, %v308
  %v508 = vmul.f32 %v310, %v310
  %v509 = vmul.f32 %v312, %v312
  %v510 = vmul.f32 %v316, %v316
  %v511 = vmul.f32 %v318, %v318
  %v512 = vmul.f32 %v320, %v320
  %v513 = vmul.f32 %v322, %v322
  %v514 = vmul.f32 %v326, %v326
  %v515 = vmul.f32 %v328, %v328
  %v516 = vmul.f32 %v330, %v330
  %v517 = vmul.f32 %v332, %v332
  %v518 = vmul.f32 %v336, %v336
  %v519 = vmul.f32 %v338, %v338
  %v520 = vmul.f32 %v340, %v340
  %v521 = vmul.f32 %v342, %v342
  %v522 = vmul.f32 %v346, %v346
  %v523 = vmul.f32 %v348, %v348
  %v524 = vmul.f32 %v350, %v350
  %v525 = vmul.f32 %v352, %v352
  %v526 = vmul.f32 %v356, %v356
  %v527 = vmul.f32 %v358, %v358
  %v528 = vmul.f32 %v360, %v360
  %v529 = vmul.f32 %v362, %v362
  %v530 = vmul.f32 %v366, %v366
  %v531 = vmul.f32 %v368, %v368
  %v532 = vadd.f32 %v482, %v484
  %v533 = vadd.f32 %v532, %v486
  %v534 = vadd.f32 %v533, %v488
  %v535 = vadd.f32 %v534, %v490
  %v536 = vadd.f32 %v535, %v492
  %v537 = vadd.f32 %v536, %v494
  %v538 = vadd.f32 %v537, %v496
  %v539 = vadd.f32 %v538, %v498
  %v540 = vadd.f32 %v539, %v500
  %v541 = vadd.f32 %v540, %v502
  %v542 = vadd.f32 %v541, %v504
  %v543 = vadd.f32 %v542, %v506
  %v544 = vadd.f32 %v543, %v508
  %v545 = vadd.f32 %v544, %v510
  %v546 = vadd.f32 %v545, %v512
  %v547 = vadd.f32 %v546, %v514
  %v548 = vadd.f32 %v547, %v516
  %v549 = vadd.f32 %v548, %v518
  %v550 = vadd.f32 %v549, %v520
  %v551 = vadd.f32 %v550, %v522
  %v552 = vadd.f32 %v551, %v524
  %v553 = vadd.f32 %v552, %v526
  %v554 = vadd.f32 %v553, %v528
  %v555 = vadd.f32 %v554, %v530
  %v556 = vrot.slane %v555, 4
  %v557 = vadd.f32 %v555, %v556
  %v558 = vrot.slane %v557, 2
  %v559 = vadd.f32 %v557, %v558
  %v560 = vrot.slane %v559, 1
  %v561 = vadd.f32 %v559, %v560
  %v562 = vadd.f32 %v483, %v485
  %v563 = vadd.f32 %v562, %v487
  %v564 = vadd.f32 %v563, %v489
  %v565 = vadd.f32 %v564, %v491
  %v566 = vadd.f32 %v565, %v493
  %v567 = vadd.f32 %v566, %v495
  %v568 = vadd.f32 %v567, %v497
  %v569 = vadd.f32 %v568, %v499
  %v570 = vadd.f32 %v569, %v501
  %v571 = vadd.f32 %v570, %v503
  %v572 = vadd.f32 %v571, %v505
  %v573 = vadd.f32 %v572, %v507
  %v574 = vadd.f32 %v573, %v509
  %v575 = vadd.f32 %v574, %v511
  %v576 = vadd.f32 %v575, %v513
  %v577 = vadd.f32 %v576, %v515
  %v578 = vadd.f32 %v577, %v517
  %v579 = vadd.f32 %v578, %v519
  %v580 = vadd.f32 %v579, %v521
  %v581 = vadd.f32 %v580, %v523
  %v582 = vadd.f32 %v581, %v525
  %v583 = vadd.f32 %v582, %v527
  %v584 = vadd.f32 %v583, %v529
  %v585 = vadd.f32 %v584, %v531
  %v586 = vrot.slane %v585, 4
  %v587 = vadd.f32 %v585, %v586
  %v588 = vrot.slane %v587, 2
  %v589 = vadd.f32 %v587, %v588
  %v590 = vrot.slane %v589, 1
  %v591 = vadd.f32 %v589, %v590
  %vm592 = vcmask 1040384
  %v593 = vsel %vm592, %v451, %v561
  %v594 = vsel %vm592, %v481, %v591
  %v597 = vcombine.low %v593, %v594
  %v599 = vunpack.c.l.s4 1983009808
  %v600 = vunpack.c.0.s8 %v599
  %v601 = vlaneseq
  %v602 = vshrl.u32 %v601, 7
  %v603 = vsub.s32 %v600, %v602
  %v604 = vrot.slane %v597, %v603
  %606 = vst [vmem:[%s3] sm:$0xf] %v604
  // Predicated region
  $region10: #{feat_encoder_forward.22} parent=0 // pred_check
    _
  $region11: #{feat_encoder_forward.22} parent=0 // pred_check_branch
    %608 = sbr.rel (0) target = $region13
  $region12: #{feat_encoder_forward.22} parent=0 // pred_region
    _
  $region13: #{feat_encoder_forward.22} parent=0 // pred_fallthru
    _
  // Predicated region
  $region14: #{feat_encoder_forward.22} parent=0 // pred_check
    _
  $region15: #{feat_encoder_forward.22} parent=0 // pred_check_branch
    %610 = sbr.rel (0) target = $region17
  $region16: #{feat_encoder_forward.22} parent=0 // pred_region
    _
  $region17: #{feat_encoder_forward.22} parent=0 // pred_fallthru
    _
  // Predicated region
  $region18: #{feat_encoder_forward.22} parent=0 // pred_check
    _
  $region19: #{feat_encoder_forward.22} parent=0 // pred_check_branch
    %612 = sbr.rel (0) target = $region21
  $region20: #{feat_encoder_forward.22} parent=0 // pred_region
    _
  $region21: #{feat_encoder_forward.22} parent=0 // pred_fallthru
    _
  // Predicated region
  $region22: #{feat_encoder_forward.22} parent=0 // pred_check
    _
  $region23: #{feat_encoder_forward.22} parent=0 // pred_check_branch
    %614 = sbr.rel (0) target = $region25
  $region24: #{feat_encoder_forward.22} parent=0 // pred_region
    _
  $region25: #{feat_encoder_forward.22} parent=0 // pred_fallthru
    _

// kernel: feat_encoder_forward.23
$region0: #{feat_encoder_forward.23}
  #allocation0 [shape = 'u32[]', space=smem, size = 0x4, offset = 0x4, fixed_abs, tag = 'smem constant byte address 0x4 - core index']
  #allocation1 [shape = 'u32[144,128]{1,0:T(1,128)}', space=vmem, size = 0x12000, scoped, tag = 'internal scratch']
  %s0 = inlined_call_operand.vmem [shape: f32[200,256], index: 0, kind: input, shape index: {}]
  %s1 = inlined_call_operand.vmem [shape: f32[1,256], index: 1, kind: input, shape index: {}]
  %s2 = inlined_call_operand.vmem [shape: f32[1,256], index: 2, kind: input, shape index: {}]
  %s3 = inlined_call_operand.vmem [shape: f32[200,256], index: 3, kind: output, shape index: {}]
  %s4 = sld [smem:[#allocation0]]
  $region22: #{feat_encoder_forward.23} parent=0
    _
  %s6 = ssub.s32 1, %s4
  %s7 = scalar_select 0, %s6, %s4
  // Predicated region
  $region2: #{feat_encoder_forward.23} parent=0 // pred_check
    _
  $region3: #{feat_encoder_forward.23} parent=0 // pred_check_branch
    %9 = sbr.rel (0) target = $region5
  $region4: #{feat_encoder_forward.23} parent=0 // pred_region
    _
  $region5: #{feat_encoder_forward.23} parent=0 // pred_fallthru
    _
  // Predicated region
  $region6: #{feat_encoder_forward.23} parent=0 // pred_check
    _
  $region7: #{feat_encoder_forward.23} parent=0 // pred_check_branch
    %11 = sbr.rel (0) target = $region9
  $region8: #{feat_encoder_forward.23} parent=0 // pred_region
    _
  $region9: #{feat_encoder_forward.23} parent=0 // pred_fallthru
    _
  // Predicated region
  $region10: #{feat_encoder_forward.23} parent=0 // pred_check
    _
  $region11: #{feat_encoder_forward.23} parent=0 // pred_check_branch
    %13 = sbr.rel (0) target = $region13
  $region12: #{feat_encoder_forward.23} parent=0 // pred_region
    _
  $region13: #{feat_encoder_forward.23} parent=0 // pred_fallthru
    _
  %v14 = vld [vmem:[%s0] sm:$0xff]
  %v15 = vld [vmem:[%s0 + $0x8] sm:$0xff]
  %v16 = vld [vmem:[%s0 + $0x10] sm:$0xff]
  %v17 = vld [vmem:[%s0 + $0x18] sm:$0xff]
  %v18 = vld [vmem:[%s0 + $0x20] sm:$0xff]
  %v19 = vld [vmem:[%s0 + $0x28] sm:$0xff]
  %v20 = vld [vmem:[%s0 + $0x30] sm:$0xff]
  %v21 = vld [vmem:[%s0 + $0x38] sm:$0xff]
  %v22 = vld [vmem:[%s0 + $0x40] sm:$0xff]
  %v23 = vld [vmem:[%s0 + $0x48] sm:$0xff]
  %v24 = vld [vmem:[%s0 + $0x50] sm:$0xff]
  %v25 = vld [vmem:[%s0 + $0x58] sm:$0xff]
  %v26 = vld [vmem:[%s0 + $0x60] sm:$0xff]
  %v27 = vld [vmem:[%s0 + $0x68] sm:$0xff]
  %v28 = vld [vmem:[%s0 + $0x70] sm:$0xff]
  %v29 = vld [vmem:[%s0 + $0x78] sm:$0xff]
  %v30 = vld [vmem:[%s0 + $0x80] sm:$0xff]
  %v31 = vld [vmem:[%s0 + $0x88] sm:$0xff]
  %v32 = vld [vmem:[%s0 + $0x90] sm:$0xff]
  %v33 = vld [vmem:[%s0 + $0x98] sm:$0xff]
  %v34 = vld [vmem:[%s0 + $0xa0] sm:$0xff]
  %v35 = vld [vmem:[%s0 + $0xa8] sm:$0xff]
  %v36 = vld [vmem:[%s0 + $0xb0] sm:$0xff]
  %v37 = vld [vmem:[%s0 + $0xb8] sm:$0xff]
  %v38 = vld [vmem:[%s0 + $0xc0] sm:$0xff]
  %v39 = vld [vmem:[%s0 + $0xc8] sm:$0xff]
  %v40 = vld [vmem:[%s0 + $0xd0] sm:$0xff]
  %v41 = vld [vmem:[%s0 + $0xd8] sm:$0xff]
  %v42 = vld [vmem:[%s0 + $0xe0] sm:$0xff]
  %v43 = vld [vmem:[%s0 + $0xe8] sm:$0xff]
  %v44 = vld [vmem:[%s0 + $0xf0] sm:$0xff]
  %v45 = vld [vmem:[%s0 + $0xf8] sm:$0xff]
  %v46 = vld [vmem:[%s0 + $0x100] sm:$0xff]
  %v47 = vld [vmem:[%s0 + $0x108] sm:$0xff]
  %v48 = vld [vmem:[%s0 + $0x110] sm:$0xff]
  %v49 = vld [vmem:[%s0 + $0x118] sm:$0xff]
  %v50 = vld [vmem:[%s0 + $0x120] sm:$0xff]
  %v51 = vld [vmem:[%s0 + $0x128] sm:$0xff]
  %v52 = vld [vmem:[%s0 + $0x130] sm:$0xff]
  %v53 = vld [vmem:[%s0 + $0x138] sm:$0xff]
  %v54 = vld [vmem:[%s0 + $0x140] sm:$0xff]
  %v55 = vld [vmem:[%s0 + $0x148] sm:$0xff]
  %v56 = vld [vmem:[%s0 + $0x150] sm:$0xff]
  %v57 = vld [vmem:[%s0 + $0x158] sm:$0xff]
  %v58 = vld [vmem:[%s0 + $0x160] sm:$0xff]
  %v59 = vld [vmem:[%s0 + $0x168] sm:$0xff]
  %v60 = vld [vmem:[%s0 + $0x170] sm:$0xff]
  %v61 = vld [vmem:[%s0 + $0x178] sm:$0xff]
  %v62 = vld [vmem:[%s0 + $0x180] sm:$0xff]
  %v63 = vld [vmem:[%s0 + $0x188] sm:$0xff]
  %v64 = vld [vmem:[%s1] sm:$0x3]
  %v66 = vlaneseq
  %v67 = vshrl.u32 %v66, 7
  %v68 = vsub.s32 0, %v67
  %v69 = vrot.slane %v64, %v68
  %v70 = vlaneseq
  %v71 = vshrl.u32 %v70, 7
  %v72 = vsub.s32 1, %v71
  %v73 = vrot.slane %v64, %v72
  %v76 = vmul.f32 %v14, %v69
  %v77 = vmul.f32 %v15, %v73
  %v78 = vmul.f32 %v16, %v69
  %v79 = vmul.f32 %v17, %v73
  %v80 = vmul.f32 %v18, %v69
  %v81 = vmul.f32 %v19, %v73
  %v82 = vmul.f32 %v20, %v69
  %v83 = vmul.f32 %v21, %v73
  %v84 = vmul.f32 %v22, %v69
  %v85 = vmul.f32 %v23, %v73
  %v86 = vmul.f32 %v24, %v69
  %v87 = vmul.f32 %v25, %v73
  %v88 = vmul.f32 %v26, %v69
  %v89 = vmul.f32 %v27, %v73
  %v90 = vmul.f32 %v28, %v69
  %v91 = vmul.f32 %v29, %v73
  %v92 = vmul.f32 %v30, %v69
  %v93 = vmul.f32 %v31, %v73
  %v94 = vmul.f32 %v32, %v69
  %v95 = vmul.f32 %v33, %v73
  %v96 = vmul.f32 %v34, %v69
  %v97 = vmul.f32 %v35, %v73
  %v98 = vmul.f32 %v36, %v69
  %v99 = vmul.f32 %v37, %v73
  %v100 = vmul.f32 %v38, %v69
  %v101 = vmul.f32 %v39, %v73
  %v102 = vmul.f32 %v40, %v69
  %v103 = vmul.f32 %v41, %v73
  %v104 = vmul.f32 %v42, %v69
  %v105 = vmul.f32 %v43, %v73
  %v106 = vmul.f32 %v44, %v69
  %v107 = vmul.f32 %v45, %v73
  %v108 = vmul.f32 %v46, %v69
  %v109 = vmul.f32 %v47, %v73
  %v110 = vmul.f32 %v48, %v69
  %v111 = vmul.f32 %v49, %v73
  %v112 = vmul.f32 %v50, %v69
  %v113 = vmul.f32 %v51, %v73
  %v114 = vmul.f32 %v52, %v69
  %v115 = vmul.f32 %v53, %v73
  %v116 = vmul.f32 %v54, %v69
  %v117 = vmul.f32 %v55, %v73
  %v118 = vmul.f32 %v56, %v69
  %v119 = vmul.f32 %v57, %v73
  %v120 = vmul.f32 %v58, %v69
  %v121 = vmul.f32 %v59, %v73
  %v122 = vmul.f32 %v60, %v69
  %v123 = vmul.f32 %v61, %v73
  %v124 = vmul.f32 %v62, %v69
  %v125 = vmul.f32 %v63, %v73
  %v126 = vld [vmem:[%s2] sm:$0x3]
  %v128 = vlaneseq
  %v129 = vshrl.u32 %v128, 7
  %v130 = vsub.s32 0, %v129
  %v131 = vrot.slane %v126, %v130
  %v132 = vlaneseq
  %v133 = vshrl.u32 %v132, 7
  %v134 = vsub.s32 1, %v133
  %v135 = vrot.slane %v126, %v134
  %v138 = vadd.f32 %v76, %v131
  %v139 = vadd.f32 %v77, %v135
  %v140 = vadd.f32 %v78, %v131
  %v141 = vadd.f32 %v79, %v135
  %v142 = vadd.f32 %v80, %v131
  %v143 = vadd.f32 %v81, %v135
  %v144 = vadd.f32 %v82, %v131
  %v145 = vadd.f32 %v83, %v135
  %v146 = vadd.f32 %v84, %v131
  %v147 = vadd.f32 %v85, %v135
  %v148 = vadd.f32 %v86, %v131
  %v149 = vadd.f32 %v87, %v135
  %v150 = vadd.f32 %v88, %v131
  %v151 = vadd.f32 %v89, %v135
  %v152 = vadd.f32 %v90, %v131
  %v153 = vadd.f32 %v91, %v135
  %v154 = vadd.f32 %v92, %v131
  %v155 = vadd.f32 %v93, %v135
  %v156 = vadd.f32 %v94, %v131
  %v157 = vadd.f32 %v95, %v135
  %v158 = vadd.f32 %v96, %v131
  %v159 = vadd.f32 %v97, %v135
  %v160 = vadd.f32 %v98, %v131
  %v161 = vadd.f32 %v99, %v135
  %v162 = vadd.f32 %v100, %v131
  %v163 = vadd.f32 %v101, %v135
  %v164 = vadd.f32 %v102, %v131
  %v165 = vadd.f32 %v103, %v135
  %v166 = vadd.f32 %v104, %v131
  %v167 = vadd.f32 %v105, %v135
  %v168 = vadd.f32 %v106, %v131
  %v169 = vadd.f32 %v107, %v135
  %v170 = vadd.f32 %v108, %v131
  %v171 = vadd.f32 %v109, %v135
  %v172 = vadd.f32 %v110, %v131
  %v173 = vadd.f32 %v111, %v135
  %v174 = vadd.f32 %v112, %v131
  %v175 = vadd.f32 %v113, %v135
  %v176 = vadd.f32 %v114, %v131
  %v177 = vadd.f32 %v115, %v135
  %v178 = vadd.f32 %v116, %v131
  %v179 = vadd.f32 %v117, %v135
  %v180 = vadd.f32 %v118, %v131
  %v181 = vadd.f32 %v119, %v135
  %v182 = vadd.f32 %v120, %v131
  %v183 = vadd.f32 %v121, %v135
  %v184 = vadd.f32 %v122, %v131
  %v185 = vadd.f32 %v123, %v135
  %v186 = vadd.f32 %v124, %v131
  %v187 = vadd.f32 %v125, %v135
  %v188 = vmax.f32 %v138, 0.0
  %v189 = vmax.f32 %v139, 0.0
  %v190 = vmax.f32 %v140, 0.0
  %v191 = vmax.f32 %v141, 0.0
  %v192 = vmax.f32 %v142, 0.0
  %v193 = vmax.f32 %v143, 0.0
  %v194 = vmax.f32 %v144, 0.0
  %v195 = vmax.f32 %v145, 0.0
  %v196 = vmax.f32 %v146, 0.0
  %v197 = vmax.f32 %v147, 0.0
  %v198 = vmax.f32 %v148, 0.0
  %v199 = vmax.f32 %v149, 0.0
  %v200 = vmax.f32 %v150, 0.0
  %v201 = vmax.f32 %v151, 0.0
  %v202 = vmax.f32 %v152, 0.0
  %v203 = vmax.f32 %v153, 0.0
  %v204 = vmax.f32 %v154, 0.0
  %v205 = vmax.f32 %v155, 0.0
  %v206 = vmax.f32 %v156, 0.0
  %v207 = vmax.f32 %v157, 0.0
  %v208 = vmax.f32 %v158, 0.0
  %v209 = vmax.f32 %v159, 0.0
  %v210 = vmax.f32 %v160, 0.0
  %v211 = vmax.f32 %v161, 0.0
  %v212 = vmax.f32 %v162, 0.0
  %v213 = vmax.f32 %v163, 0.0
  %v214 = vmax.f32 %v164, 0.0
  %v215 = vmax.f32 %v165, 0.0
  %v216 = vmax.f32 %v166, 0.0
  %v217 = vmax.f32 %v167, 0.0
  %v218 = vmax.f32 %v168, 0.0
  %v219 = vmax.f32 %v169, 0.0
  %v220 = vmax.f32 %v170, 0.0
  %v221 = vmax.f32 %v171, 0.0
  %v222 = vmax.f32 %v172, 0.0
  %v223 = vmax.f32 %v173, 0.0
  %v224 = vmax.f32 %v174, 0.0
  %v225 = vmax.f32 %v175, 0.0
  %v226 = vmax.f32 %v176, 0.0
  %v227 = vmax.f32 %v177, 0.0
  %v228 = vmax.f32 %v178, 0.0
  %v229 = vmax.f32 %v179, 0.0
  %v230 = vmax.f32 %v180, 0.0
  %v231 = vmax.f32 %v181, 0.0
  %v232 = vmax.f32 %v182, 0.0
  %v233 = vmax.f32 %v183, 0.0
  %v234 = vmax.f32 %v184, 0.0
  %v235 = vmax.f32 %v185, 0.0
  %v236 = vmax.f32 %v186, 0.0
  %v237 = vmax.f32 %v187, 0.0
  %238 = vst [vmem:[%s3] sm:$0xff] %v188
  %239 = vst [vmem:[%s3 + $0x8] sm:$0xff] %v189
  %240 = vst [vmem:[%s3 + $0x10] sm:$0xff] %v190
  %241 = vst [vmem:[%s3 + $0x18] sm:$0xff] %v191
  %242 = vst [vmem:[%s3 + $0x20] sm:$0xff] %v192
  %243 = vst [vmem:[%s3 + $0x28] sm:$0xff] %v193
  %244 = vst [vmem:[%s3 + $0x30] sm:$0xff] %v194
  %245 = vst [vmem:[%s3 + $0x38] sm:$0xff] %v195
  %246 = vst [vmem:[%s3 + $0x40] sm:$0xff] %v196
  %247 = vst [vmem:[%s3 + $0x48] sm:$0xff] %v197
  %248 = vst [vmem:[%s3 + $0x50] sm:$0xff] %v198
  %249 = vst [vmem:[%s3 + $0x58] sm:$0xff] %v199
  %250 = vst [vmem:[%s3 + $0x60] sm:$0xff] %v200
  %251 = vst [vmem:[%s3 + $0x68] sm:$0xff] %v201
  %252 = vst [vmem:[%s3 + $0x70] sm:$0xff] %v202
  %253 = vst [vmem:[%s3 + $0x78] sm:$0xff] %v203
  %254 = vst [vmem:[%s3 + $0x80] sm:$0xff] %v204
  %255 = vst [vmem:[%s3 + $0x88] sm:$0xff] %v205
  %256 = vst [vmem:[%s3 + $0x90] sm:$0xff] %v206
  %257 = vst [vmem:[%s3 + $0x98] sm:$0xff] %v207
  %258 = vst [vmem:[%s3 + $0xa0] sm:$0xff] %v208
  %259 = vst [vmem:[%s3 + $0xa8] sm:$0xff] %v209
  %260 = vst [vmem:[%s3 + $0xb0] sm:$0xff] %v210
  %261 = vst [vmem:[%s3 + $0xb8] sm:$0xff] %v211
  %262 = vst [vmem:[%s3 + $0xc0] sm:$0xff] %v212
  %263 = vst [vmem:[%s3 + $0xc8] sm:$0xff] %v213
  %264 = vst [vmem:[%s3 + $0xd0] sm:$0xff] %v214
  %265 = vst [vmem:[%s3 + $0xd8] sm:$0xff] %v215
  %266 = vst [vmem:[%s3 + $0xe0] sm:$0xff] %v216
  %267 = vst [vmem:[%s3 + $0xe8] sm:$0xff] %v217
  %268 = vst [vmem:[%s3 + $0xf0] sm:$0xff] %v218
  %269 = vst [vmem:[%s3 + $0xf8] sm:$0xff] %v219
  %270 = vst [vmem:[%s3 + $0x100] sm:$0xff] %v220
  %271 = vst [vmem:[%s3 + $0x108] sm:$0xff] %v221
  %272 = vst [vmem:[%s3 + $0x110] sm:$0xff] %v222
  %273 = vst [vmem:[%s3 + $0x118] sm:$0xff] %v223
  %274 = vst [vmem:[%s3 + $0x120] sm:$0xff] %v224
  %275 = vst [vmem:[%s3 + $0x128] sm:$0xff] %v225
  %276 = vst [vmem:[%s3 + $0x130] sm:$0xff] %v226
  %277 = vst [vmem:[%s3 + $0x138] sm:$0xff] %v227
  %278 = vst [vmem:[%s3 + $0x140] sm:$0xff] %v228
  %279 = vst [vmem:[%s3 + $0x148] sm:$0xff] %v229
  %280 = vst [vmem:[%s3 + $0x150] sm:$0xff] %v230
  %281 = vst [vmem:[%s3 + $0x158] sm:$0xff] %v231
  %282 = vst [vmem:[%s3 + $0x160] sm:$0xff] %v232
  %283 = vst [vmem:[%s3 + $0x168] sm:$0xff] %v233
  %284 = vst [vmem:[%s3 + $0x170] sm:$0xff] %v234
  %285 = vst [vmem:[%s3 + $0x178] sm:$0xff] %v235
  %286 = vst [vmem:[%s3 + $0x180] sm:$0xff] %v236
  %287 = vst [vmem:[%s3 + $0x188] sm:$0xff] %v237
  // Predicated region
  $region14: #{feat_encoder_forward.23} parent=0 // pred_check
    _
  $region15: #{feat_encoder_forward.23} parent=0 // pred_check_branch
    %289 = sbr.rel (0) target = $region17
  $region16: #{feat_encoder_forward.23} parent=0 // pred_region
    _
  $region17: #{feat_encoder_forward.23} parent=0 // pred_fallthru
    _
  // Predicated region
  $region18: #{feat_encoder_forward.23} parent=0 // pred_check
    _
  $region19: #{feat_encoder_forward.23} parent=0 // pred_check_branch
    %291 = sbr.rel (0) target = $region21
  $region20: #{feat_encoder_forward.23} parent=0 // pred_region
    _
  $region21: #{feat_encoder_forward.23} parent=0 // pred_fallthru
    _

// kernel: feat_encoder_forward.24
$region0: #{feat_encoder_forward.24}
  #allocation0 [shape = 'u32[]', space=smem, size = 0x4, offset = 0x4, fixed_abs, tag = 'smem constant byte address 0x4 - core index']
  #allocation1 [shape = 'u32[144,128]{1,0:T(1,128)}', space=vmem, size = 0x12000, scoped, tag = 'internal scratch']
  %s0 = inlined_call_operand.vmem [shape: bf16[56,256], index: 0, kind: input, shape index: {}]
  %s1 = inlined_call_operand.vmem [shape: bf16[256,512], index: 1, kind: input, shape index: {}]
  %s2 = inlined_call_operand.vmem [shape: f32[56,512], index: 2, kind: output, shape index: {0}]
  %s3 = inlined_call_operand.vmem [shape: f32[1,2,512], index: 3, kind: output, shape index: {1}]
  %4 = xla_tuple %s2, %s3
  %s5 = sld [smem:[#allocation0]]
  $region26: #{feat_encoder_forward.24} parent=0
    _
  %s7 = ssub.s32 1, %s5
  %s8 = scalar_select 0, %s7, %s5
  // Predicated region
  $region2: #{feat_encoder_forward.24} parent=0 // pred_check
    _
  $region3: #{feat_encoder_forward.24} parent=0 // pred_check_branch
    %10 = sbr.rel (0) target = $region5
  $region4: #{feat_encoder_forward.24} parent=0 // pred_region
    _
  $region5: #{feat_encoder_forward.24} parent=0 // pred_fallthru
    _
  // Predicated region
  $region6: #{feat_encoder_forward.24} parent=0 // pred_check
    _
  $region7: #{feat_encoder_forward.24} parent=0 // pred_check_branch
    %12 = sbr.rel (0) target = $region9
  $region8: #{feat_encoder_forward.24} parent=0 // pred_region
    _
  $region9: #{feat_encoder_forward.24} parent=0 // pred_fallthru
    _
  %v13 = vld [vmem:[%s0] sm:$0xff]
  %v14 = vld [vmem:[%s0 + $0x8] sm:$0xff]
  %v15 = vld [vmem:[%s0 + $0x10] sm:$0xff]
  %v16 = vld [vmem:[%s0 + $0x18] sm:$0xff]
  %v17 = vld [vmem:[%s0 + $0x20] sm:$0xff]
  %v18 = vld [vmem:[%s0 + $0x28] sm:$0xff]
  %v19 = vld [vmem:[%s0 + $0x30] sm:$0xff]
  %v20 = vld [vmem:[%s1] sm:$0xff]
  %v21 = vld [vmem:[%s1 + $0x8] sm:$0xff]
  %v22 = vld [vmem:[%s1 + $0x10] sm:$0xff]
  %v23 = vld [vmem:[%s1 + $0x18] sm:$0xff]
  %v24 = vld [vmem:[%s1 + $0x20] sm:$0xff]
  %v25 = vld [vmem:[%s1 + $0x28] sm:$0xff]
  %v26 = vld [vmem:[%s1 + $0x30] sm:$0xff]
  %v27 = vld [vmem:[%s1 + $0x38] sm:$0xff]
  %v28 = vld [vmem:[%s1 + $0x40] sm:$0xff]
  %v29 = vld [vmem:[%s1 + $0x48] sm:$0xff]
  %v30 = vld [vmem:[%s1 + $0x50] sm:$0xff]
  %v31 = vld [vmem:[%s1 + $0x58] sm:$0xff]
  %v32 = vld [vmem:[%s1 + $0x60] sm:$0xff]
  %v33 = vld [vmem:[%s1 + $0x68] sm:$0xff]
  %v34 = vld [vmem:[%s1 + $0x70] sm:$0xff]
  %v35 = vld [vmem:[%s1 + $0x78] sm:$0xff]
  %v36 = vld [vmem:[%s1 + $0x80] sm:$0xff]
  %v37 = vld [vmem:[%s1 + $0x88] sm:$0xff]
  %v38 = vld [vmem:[%s1 + $0x90] sm:$0xff]
  %v39 = vld [vmem:[%s1 + $0x98] sm:$0xff]
  %v40 = vld [vmem:[%s1 + $0xa0] sm:$0xff]
  %v41 = vld [vmem:[%s1 + $0xa8] sm:$0xff]
  %v42 = vld [vmem:[%s1 + $0xb0] sm:$0xff]
  %v43 = vld [vmem:[%s1 + $0xb8] sm:$0xff]
  %v44 = vld [vmem:[%s1 + $0xc0] sm:$0xff]
  %v45 = vld [vmem:[%s1 + $0xc8] sm:$0xff]
  %v46 = vld [vmem:[%s1 + $0xd0] sm:$0xff]
  %v47 = vld [vmem:[%s1 + $0xd8] sm:$0xff]
  %v48 = vld [vmem:[%s1 + $0xe0] sm:$0xff]
  %v49 = vld [vmem:[%s1 + $0xe8] sm:$0xff]
  %v50 = vld [vmem:[%s1 + $0xf0] sm:$0xff]
  %v51 = vld [vmem:[%s1 + $0xf8] sm:$0xff]
  %v52 = vld [vmem:[%s1 + $0x100] sm:$0xff]
  %v53 = vld [vmem:[%s1 + $0x108] sm:$0xff]
  %v54 = vld [vmem:[%s1 + $0x110] sm:$0xff]
  %v55 = vld [vmem:[%s1 + $0x118] sm:$0xff]
  %v56 = vld [vmem:[%s1 + $0x120] sm:$0xff]
  %v57 = vld [vmem:[%s1 + $0x128] sm:$0xff]
  %v58 = vld [vmem:[%s1 + $0x130] sm:$0xff]
  %v59 = vld [vmem:[%s1 + $0x138] sm:$0xff]
  %v60 = vld [vmem:[%s1 + $0x140] sm:$0xff]
  %v61 = vld [vmem:[%s1 + $0x148] sm:$0xff]
  %v62 = vld [vmem:[%s1 + $0x150] sm:$0xff]
  %v63 = vld [vmem:[%s1 + $0x158] sm:$0xff]
  %v64 = vld [vmem:[%s1 + $0x160] sm:$0xff]
  %v65 = vld [vmem:[%s1 + $0x168] sm:$0xff]
  %v66 = vld [vmem:[%s1 + $0x170] sm:$0xff]
  %v67 = vld [vmem:[%s1 + $0x178] sm:$0xff]
  %v68 = vld [vmem:[%s1 + $0x180] sm:$0xff]
  %v69 = vld [vmem:[%s1 + $0x188] sm:$0xff]
  %v70 = vld [vmem:[%s1 + $0x190] sm:$0xff]
  %v71 = vld [vmem:[%s1 + $0x198] sm:$0xff]
  %v72 = vld [vmem:[%s1 + $0x1a0] sm:$0xff]
  %v73 = vld [vmem:[%s1 + $0x1a8] sm:$0xff]
  %v74 = vld [vmem:[%s1 + $0x1b0] sm:$0xff]
  %v75 = vld [vmem:[%s1 + $0x1b8] sm:$0xff]
  %v76 = vld [vmem:[%s1 + $0x1c0] sm:$0xff]
  %v77 = vld [vmem:[%s1 + $0x1c8] sm:$0xff]
  %v78 = vld [vmem:[%s1 + $0x1d0] sm:$0xff]
  %v79 = vld [vmem:[%s1 + $0x1d8] sm:$0xff]
  %v80 = vld [vmem:[%s1 + $0x1e0] sm:$0xff]
  %v81 = vld [vmem:[%s1 + $0x1e8] sm:$0xff]
  %v82 = vld [vmem:[%s1 + $0x1f0] sm:$0xff]
  %v83 = vld [vmem:[%s1 + $0x1f8] sm:$0xff]
  %v91 = vunpack.c.l.b16 %v13
  %v92 = vunpack.c.h.b16 %v13
  %v93 = vunpack.c.l.b16 %v14
  %v94 = vunpack.c.h.b16 %v14
  %v95 = vunpack.c.l.b16 %v15
  %v96 = vunpack.c.h.b16 %v15
  %v97 = vunpack.c.l.b16 %v16
  %v98 = vunpack.c.h.b16 %v16
  %v99 = vunpack.c.l.b16 %v17
  %v100 = vunpack.c.h.b16 %v17
  %v101 = vunpack.c.l.b16 %v18
  %v102 = vunpack.c.h.b16 %v18
  %v103 = vunpack.c.l.b16 %v19
  %v104 = vunpack.c.h.b16 %v19
  %v105 = vpack.c.b16 %v93, %v91
  %v106 = vpack.c.b16 %v94, %v92
  %v107 = vpack.c.b16 %v97, %v95
  %v108 = vpack.c.b16 %v98, %v96
  %v109 = vpack.c.b16 %v101, %v99
  %v110 = vpack.c.b16 %v102, %v100
  %v111 = vpack.c.b16 %v103, %v103
  %v112 = vpack.c.b16 %v104, %v104
  %v185 = vunpack.c.l.b16 %v20
  %v186 = vunpack.c.h.b16 %v20
  %v187 = vunpack.c.l.b16 %v21
  %v188 = vunpack.c.h.b16 %v21
  %v189 = vunpack.c.l.b16 %v22
  %v190 = vunpack.c.h.b16 %v22
  %v191 = vunpack.c.l.b16 %v23
  %v192 = vunpack.c.h.b16 %v23
  %v193 = vunpack.c.l.b16 %v24
  %v194 = vunpack.c.h.b16 %v24
  %v195 = vunpack.c.l.b16 %v25
  %v196 = vunpack.c.h.b16 %v25
  %v197 = vunpack.c.l.b16 %v26
  %v198 = vunpack.c.h.b16 %v26
  %v199 = vunpack.c.l.b16 %v27
  %v200 = vunpack.c.h.b16 %v27
  %v201 = vunpack.c.l.b16 %v28
  %v202 = vunpack.c.h.b16 %v28
  %v203 = vunpack.c.l.b16 %v29
  %v204 = vunpack.c.h.b16 %v29
  %v205 = vunpack.c.l.b16 %v30
  %v206 = vunpack.c.h.b16 %v30
  %v207 = vunpack.c.l.b16 %v31
  %v208 = vunpack.c.h.b16 %v31
  %v209 = vunpack.c.l.b16 %v32
  %v210 = vunpack.c.h.b16 %v32
  %v211 = vunpack.c.l.b16 %v33
  %v212 = vunpack.c.h.b16 %v33
  %v213 = vunpack.c.l.b16 %v34
  %v214 = vunpack.c.h.b16 %v34
  %v215 = vunpack.c.l.b16 %v35
  %v216 = vunpack.c.h.b16 %v35
  %v217 = vunpack.c.l.b16 %v36
  %v218 = vunpack.c.h.b16 %v36
  %v219 = vunpack.c.l.b16 %v37
  %v220 = vunpack.c.h.b16 %v37
  %v221 = vunpack.c.l.b16 %v38
  %v222 = vunpack.c.h.b16 %v38
  %v223 = vunpack.c.l.b16 %v39
  %v224 = vunpack.c.h.b16 %v39
  %v225 = vunpack.c.l.b16 %v40
  %v226 = vunpack.c.h.b16 %v40
  %v227 = vunpack.c.l.b16 %v41
  %v228 = vunpack.c.h.b16 %v41
  %v229 = vunpack.c.l.b16 %v42
  %v230 = vunpack.c.h.b16 %v42
  %v231 = vunpack.c.l.b16 %v43
  %v232 = vunpack.c.h.b16 %v43
  %v233 = vunpack.c.l.b16 %v44
  %v234 = vunpack.c.h.b16 %v44
  %v235 = vunpack.c.l.b16 %v45
  %v236 = vunpack.c.h.b16 %v45
  %v237 = vunpack.c.l.b16 %v46
  %v238 = vunpack.c.h.b16 %v46
  %v239 = vunpack.c.l.b16 %v47
  %v240 = vunpack.c.h.b16 %v47
  %v241 = vunpack.c.l.b16 %v48
  %v242 = vunpack.c.h.b16 %v48
  %v243 = vunpack.c.l.b16 %v49
  %v244 = vunpack.c.h.b16 %v49
  %v245 = vunpack.c.l.b16 %v50
  %v246 = vunpack.c.h.b16 %v50
  %v247 = vunpack.c.l.b16 %v51
  %v248 = vunpack.c.h.b16 %v51
  %v249 = vunpack.c.l.b16 %v52
  %v250 = vunpack.c.h.b16 %v52
  %v251 = vunpack.c.l.b16 %v53
  %v252 = vunpack.c.h.b16 %v53
  %v253 = vunpack.c.l.b16 %v54
  %v254 = vunpack.c.h.b16 %v54
  %v255 = vunpack.c.l.b16 %v55
  %v256 = vunpack.c.h.b16 %v55
  %v257 = vunpack.c.l.b16 %v56
  %v258 = vunpack.c.h.b16 %v56
  %v259 = vunpack.c.l.b16 %v57
  %v260 = vunpack.c.h.b16 %v57
  %v261 = vunpack.c.l.b16 %v58
  %v262 = vunpack.c.h.b16 %v58
  %v263 = vunpack.c.l.b16 %v59
  %v264 = vunpack.c.h.b16 %v59
  %v265 = vunpack.c.l.b16 %v60
  %v266 = vunpack.c.h.b16 %v60
  %v267 = vunpack.c.l.b16 %v61
  %v268 = vunpack.c.h.b16 %v61
  %v269 = vunpack.c.l.b16 %v62
  %v270 = vunpack.c.h.b16 %v62
  %v271 = vunpack.c.l.b16 %v63
  %v272 = vunpack.c.h.b16 %v63
  %v273 = vunpack.c.l.b16 %v64
  %v274 = vunpack.c.h.b16 %v64
  %v275 = vunpack.c.l.b16 %v65
  %v276 = vunpack.c.h.b16 %v65
  %v277 = vunpack.c.l.b16 %v66
  %v278 = vunpack.c.h.b16 %v66
  %v279 = vunpack.c.l.b16 %v67
  %v280 = vunpack.c.h.b16 %v67
  %v281 = vunpack.c.l.b16 %v68
  %v282 = vunpack.c.h.b16 %v68
  %v283 = vunpack.c.l.b16 %v69
  %v284 = vunpack.c.h.b16 %v69
  %v285 = vunpack.c.l.b16 %v70
  %v286 = vunpack.c.h.b16 %v70
  %v287 = vunpack.c.l.b16 %v71
  %v288 = vunpack.c.h.b16 %v71
  %v289 = vunpack.c.l.b16 %v72
  %v290 = vunpack.c.h.b16 %v72
  %v291 = vunpack.c.l.b16 %v73
  %v292 = vunpack.c.h.b16 %v73
  %v293 = vunpack.c.l.b16 %v74
  %v294 = vunpack.c.h.b16 %v74
  %v295 = vunpack.c.l.b16 %v75
  %v296 = vunpack.c.h.b16 %v75
  %v297 = vunpack.c.l.b16 %v76
  %v298 = vunpack.c.h.b16 %v76
  %v299 = vunpack.c.l.b16 %v77
  %v300 = vunpack.c.h.b16 %v77
  %v301 = vunpack.c.l.b16 %v78
  %v302 = vunpack.c.h.b16 %v78
  %v303 = vunpack.c.l.b16 %v79
  %v304 = vunpack.c.h.b16 %v79
  %v305 = vunpack.c.l.b16 %v80
  %v306 = vunpack.c.h.b16 %v80
  %v307 = vunpack.c.l.b16 %v81
  %v308 = vunpack.c.h.b16 %v81
  %v309 = vunpack.c.l.b16 %v82
  %v310 = vunpack.c.h.b16 %v82
  %v311 = vunpack.c.l.b16 %v83
  %v312 = vunpack.c.h.b16 %v83
  %v313 = vpack.c.b16 %v189, %v185
  %v314 = vpack.c.b16 %v190, %v186
  %v315 = vpack.c.b16 %v191, %v187
  %v316 = vpack.c.b16 %v192, %v188
  %v317 = vpack.c.b16 %v197, %v193
  %v318 = vpack.c.b16 %v198, %v194
  %v319 = vpack.c.b16 %v199, %v195
  %v320 = vpack.c.b16 %v200, %v196
  %v321 = vpack.c.b16 %v205, %v201
  %v322 = vpack.c.b16 %v206, %v202
  %v323 = vpack.c.b16 %v207, %v203
  %v324 = vpack.c.b16 %v208, %v204
  %v325 = vpack.c.b16 %v213, %v209
  %v326 = vpack.c.b16 %v214, %v210
  %v327 = vpack.c.b16 %v215, %v211
  %v328 = vpack.c.b16 %v216, %v212
  %v329 = vpack.c.b16 %v221, %v217
  %v330 = vpack.c.b16 %v222, %v218
  %v331 = vpack.c.b16 %v223, %v219
  %v332 = vpack.c.b16 %v224, %v220
  %v333 = vpack.c.b16 %v229, %v225
  %v334 = vpack.c.b16 %v230, %v226
  %v335 = vpack.c.b16 %v231, %v227
  %v336 = vpack.c.b16 %v232, %v228
  %v337 = vpack.c.b16 %v237, %v233
  %v338 = vpack.c.b16 %v238, %v234
  %v339 = vpack.c.b16 %v239, %v235
  %v340 = vpack.c.b16 %v240, %v236
  %v341 = vpack.c.b16 %v245, %v241
  %v342 = vpack.c.b16 %v246, %v242
  %v343 = vpack.c.b16 %v247, %v243
  %v344 = vpack.c.b16 %v248, %v244
  %v345 = vpack.c.b16 %v253, %v249
  %v346 = vpack.c.b16 %v254, %v250
  %v347 = vpack.c.b16 %v255, %v251
  %v348 = vpack.c.b16 %v256, %v252
  %v349 = vpack.c.b16 %v261, %v257
  %v350 = vpack.c.b16 %v262, %v258
  %v351 = vpack.c.b16 %v263, %v259
  %v352 = vpack.c.b16 %v264, %v260
  %v353 = vpack.c.b16 %v269, %v265
  %v354 = vpack.c.b16 %v270, %v266
  %v355 = vpack.c.b16 %v271, %v267
  %v356 = vpack.c.b16 %v272, %v268
  %v357 = vpack.c.b16 %v277, %v273
  %v358 = vpack.c.b16 %v278, %v274
  %v359 = vpack.c.b16 %v279, %v275
  %v360 = vpack.c.b16 %v280, %v276
  %v361 = vpack.c.b16 %v285, %v281
  %v362 = vpack.c.b16 %v286, %v282
  %v363 = vpack.c.b16 %v287, %v283
  %v364 = vpack.c.b16 %v288, %v284
  %v365 = vpack.c.b16 %v293, %v289
  %v366 = vpack.c.b16 %v294, %v290
  %v367 = vpack.c.b16 %v295, %v291
  %v368 = vpack.c.b16 %v296, %v292
  %v369 = vpack.c.b16 %v301, %v297
  %v370 = vpack.c.b16 %v302, %v298
  %v371 = vpack.c.b16 %v303, %v299
  %v372 = vpack.c.b16 %v304, %v300
  %v373 = vpack.c.b16 %v309, %v305
  %v374 = vpack.c.b16 %v310, %v306
  %v375 = vpack.c.b16 %v311, %v307
  %v376 = vpack.c.b16 %v312, %v308
  %441 = vmatprep.subr.bf16.mxu0 %v314
  %442 = vmatpush1.bf16.msra.mxu0 %v313
  %443 = vmatprep.subr.bf16.mxu0 %v318
  %444 = vmatpush1.bf16.msra.mxu0 %v317
  %445 = vmatprep.subr.bf16.mxu0 %v322
  %446 = vmatpush1.bf16.msra.mxu0 %v321
  %447 = vmatprep.subr.bf16.mxu0 %v326
  %448 = vmatpush1.bf16.msra.mxu0 %v325
  %449 = vmatprep.subr.bf16.mxu0 %v330
  %450 = vmatpush1.bf16.msra.mxu0 %v329
  %451 = vmatprep.subr.bf16.mxu0 %v334
  %452 = vmatpush1.bf16.msra.mxu0 %v333
  %453 = vmatprep.subr.bf16.mxu0 %v338
  %454 = vmatpush1.bf16.msra.mxu0 %v337
  %455 = vmatprep.subr.bf16.mxu0 %v342
  %456 = vmatpush1.bf16.msra.mxu0 %v341
  %457 = vmatprep.subr.bf16.mxu0 %v346
  %458 = vmatpush1.bf16.msra.mxu0 %v345
  %459 = vmatprep.subr.bf16.mxu0 %v350
  %460 = vmatpush1.bf16.msra.mxu0 %v349
  %461 = vmatprep.subr.bf16.mxu0 %v354
  %462 = vmatpush1.bf16.msra.mxu0 %v353
  %463 = vmatprep.subr.bf16.mxu0 %v358
  %464 = vmatpush1.bf16.msra.mxu0 %v357
  %465 = vmatprep.subr.bf16.mxu0 %v362
  %466 = vmatpush1.bf16.msra.mxu0 %v361
  %467 = vmatprep.subr.bf16.mxu0 %v366
  %468 = vmatpush1.bf16.msra.mxu0 %v365
  %469 = vmatprep.subr.bf16.mxu0 %v370
  %470 = vmatpush1.bf16.msra.mxu0 %v369
  %471 = vmatprep.subr.bf16.mxu0 %v374
  %472 = vmatpush1.bf16.msra.mxu0 %v373
  %473 = vmatprep.mubr.bf16.mxu0 %v106
  %474 = vmatmul.mubr.bf16.gmra.mrb[0].mxu0 %v105
  %v475 = vpop.f32.mrb[0].mxu0
  %v476 = vadd.f32 0.0, %v475
  %v477 = vpop.f32.mrb[0].mxu0
  %v478 = vadd.f32 0.0, %v477
  %v479 = vpop.f32.mrb[0].mxu0
  %v480 = vadd.f32 0.0, %v479
  %v481 = vpop.f32.mrb[0].mxu0
  %v482 = vadd.f32 0.0, %v481
  %483 = vmatprep.mubr.bf16.mxu0 %v108
  %484 = vmatmul.mubr.bf16.gmra.mrb[0].mxu0 %v107
  %v485 = vpop.f32.mrb[0].mxu0
  %v486 = vadd.f32 0.0, %v485
  %v487 = vpop.f32.mrb[0].mxu0
  %v488 = vadd.f32 0.0, %v487
  %v489 = vpop.f32.mrb[0].mxu0
  %v490 = vadd.f32 0.0, %v489
  %v491 = vpop.f32.mrb[0].mxu0
  %v492 = vadd.f32 0.0, %v491
  %493 = vmatprep.mubr.bf16.mxu0 %v110
  %494 = vmatmul.mubr.bf16.gmra.mrb[0].mxu0 %v109
  %v495 = vpop.f32.mrb[0].mxu0
  %v496 = vadd.f32 0.0, %v495
  %v497 = vpop.f32.mrb[0].mxu0
  %v498 = vadd.f32 0.0, %v497
  %v499 = vpop.f32.mrb[0].mxu0
  %v500 = vadd.f32 0.0, %v499
  %v501 = vpop.f32.mrb[0].mxu0
  %v502 = vadd.f32 0.0, %v501
  %503 = vmatprep.mubr.bf16.mxu0 %v112
  %504 = vmatmul.mubr.bf16.gmra.mrb[0].mxu0 %v111
  %v505 = vpop.f32.mrb[0].mxu0
  %v506 = vadd.f32 0.0, %v505
  %v507 = vpop.f32.mrb[0].mxu0
  %v508 = vadd.f32 0.0, %v507
  %v509 = vpop.f32.mrb[0].mxu0
  %v510 = vpop.f32.mrb[0].mxu0
  %511 = vdwg.mxu0
  %512 = vmatprep.subr.bf16.mxu0 %v316
  %513 = vmatpush1.bf16.msra.mxu0 %v315
  %514 = vmatprep.subr.bf16.mxu0 %v320
  %515 = vmatpush1.bf16.msra.mxu0 %v319
  %516 = vmatprep.subr.bf16.mxu0 %v324
  %517 = vmatpush1.bf16.msra.mxu0 %v323
  %518 = vmatprep.subr.bf16.mxu0 %v328
  %519 = vmatpush1.bf16.msra.mxu0 %v327
  %520 = vmatprep.subr.bf16.mxu0 %v332
  %521 = vmatpush1.bf16.msra.mxu0 %v331
  %522 = vmatprep.subr.bf16.mxu0 %v336
  %523 = vmatpush1.bf16.msra.mxu0 %v335
  %524 = vmatprep.subr.bf16.mxu0 %v340
  %525 = vmatpush1.bf16.msra.mxu0 %v339
  %526 = vmatprep.subr.bf16.mxu0 %v344
  %527 = vmatpush1.bf16.msra.mxu0 %v343
  %528 = vmatprep.subr.bf16.mxu0 %v348
  %529 = vmatpush1.bf16.msra.mxu0 %v347
  %530 = vmatprep.subr.bf16.mxu0 %v352
  %531 = vmatpush1.bf16.msra.mxu0 %v351
  %532 = vmatprep.subr.bf16.mxu0 %v356
  %533 = vmatpush1.bf16.msra.mxu0 %v355
  %534 = vmatprep.subr.bf16.mxu0 %v360
  %535 = vmatpush1.bf16.msra.mxu0 %v359
  %536 = vmatprep.subr.bf16.mxu0 %v364
  %537 = vmatpush1.bf16.msra.mxu0 %v363
  %538 = vmatprep.subr.bf16.mxu0 %v368
  %539 = vmatpush1.bf16.msra.mxu0 %v367
  %540 = vmatprep.subr.bf16.mxu0 %v372
  %541 = vmatpush1.bf16.msra.mxu0 %v371
  %542 = vmatprep.subr.bf16.mxu0 %v376
  %543 = vmatpush1.bf16.msra.mxu0 %v375
  %544 = vmatprep.mubr.bf16.mxu0 %v106
  %545 = vmatmul.mubr.bf16.gmra.mrb[0].mxu0 %v105
  %v546 = vpop.f32.mrb[0].mxu0
  %v547 = vadd.f32 0.0, %v546
  %v548 = vpop.f32.mrb[0].mxu0
  %v549 = vadd.f32 0.0, %v548
  %v550 = vpop.f32.mrb[0].mxu0
  %v551 = vadd.f32 0.0, %v550
  %v552 = vpop.f32.mrb[0].mxu0
  %v553 = vadd.f32 0.0, %v552
  %554 = vmatprep.mubr.bf16.mxu0 %v108
  %555 = vmatmul.mubr.bf16.gmra.mrb[0].mxu0 %v107
  %v556 = vpop.f32.mrb[0].mxu0
  %v557 = vadd.f32 0.0, %v556
  %v558 = vpop.f32.mrb[0].mxu0
  %v559 = vadd.f32 0.0, %v558
  %v560 = vpop.f32.mrb[0].mxu0
  %v561 = vadd.f32 0.0, %v560
  %v562 = vpop.f32.mrb[0].mxu0
  %v563 = vadd.f32 0.0, %v562
  %564 = vmatprep.mubr.bf16.mxu0 %v110
  %565 = vmatmul.mubr.bf16.gmra.mrb[0].mxu0 %v109
  %v566 = vpop.f32.mrb[0].mxu0
  %v567 = vadd.f32 0.0, %v566
  %v568 = vpop.f32.mrb[0].mxu0
  %v569 = vadd.f32 0.0, %v568
  %v570 = vpop.f32.mrb[0].mxu0
  %v571 = vadd.f32 0.0, %v570
  %v572 = vpop.f32.mrb[0].mxu0
  %v573 = vadd.f32 0.0, %v572
  %574 = vmatprep.mubr.bf16.mxu0 %v112
  %575 = vmatmul.mubr.bf16.gmra.mrb[0].mxu0 %v111
  %v576 = vpop.f32.mrb[0].mxu0
  %v577 = vadd.f32 0.0, %v576
  %v578 = vpop.f32.mrb[0].mxu0
  %v579 = vadd.f32 0.0, %v578
  %v580 = vpop.f32.mrb[0].mxu0
  %v581 = vpop.f32.mrb[0].mxu0
  %582 = vdwg.mxu0
  %583 = vst [vmem:[%s2] sm:$0xff] %v476
  %584 = vst [vmem:[%s2 + $0x8] sm:$0xff] %v478
  %585 = vst [vmem:[%s2 + $0x10] sm:$0xff] %v547
  %586 = vst [vmem:[%s2 + $0x18] sm:$0xff] %v549
  %587 = vst [vmem:[%s2 + $0x20] sm:$0xff] %v480
  %588 = vst [vmem:[%s2 + $0x28] sm:$0xff] %v482
  %589 = vst [vmem:[%s2 + $0x30] sm:$0xff] %v551
  %590 = vst [vmem:[%s2 + $0x38] sm:$0xff] %v553
  %591 = vst [vmem:[%s2 + $0x40] sm:$0xff] %v486
  %592 = vst [vmem:[%s2 + $0x48] sm:$0xff] %v488
  %593 = vst [vmem:[%s2 + $0x50] sm:$0xff] %v557
  %594 = vst [vmem:[%s2 + $0x58] sm:$0xff] %v559
  %595 = vst [vmem:[%s2 + $0x60] sm:$0xff] %v490
  %596 = vst [vmem:[%s2 + $0x68] sm:$0xff] %v492
  %597 = vst [vmem:[%s2 + $0x70] sm:$0xff] %v561
  %598 = vst [vmem:[%s2 + $0x78] sm:$0xff] %v563
  %599 = vst [vmem:[%s2 + $0x80] sm:$0xff] %v496
  %600 = vst [vmem:[%s2 + $0x88] sm:$0xff] %v498
  %601 = vst [vmem:[%s2 + $0x90] sm:$0xff] %v567
  %602 = vst [vmem:[%s2 + $0x98] sm:$0xff] %v569
  %603 = vst [vmem:[%s2 + $0xa0] sm:$0xff] %v500
  %604 = vst [vmem:[%s2 + $0xa8] sm:$0xff] %v502
  %605 = vst [vmem:[%s2 + $0xb0] sm:$0xff] %v571
  %606 = vst [vmem:[%s2 + $0xb8] sm:$0xff] %v573
  %607 = vst [vmem:[%s2 + $0xc0] sm:$0xff] %v506
  %608 = vst [vmem:[%s2 + $0xc8] sm:$0xff] %v508
  %609 = vst [vmem:[%s2 + $0xd0] sm:$0xff] %v577
  %610 = vst [vmem:[%s2 + $0xd8] sm:$0xff] %v579
  %v611 = vadd.f32 %v476, %v480
  %v612 = vadd.f32 %v611, %v486
  %v613 = vadd.f32 %v612, %v490
  %v614 = vadd.f32 %v613, %v496
  %v615 = vadd.f32 %v614, %v500
  %v616 = vadd.f32 %v615, %v506
  %v617 = vrot.slane %v616, 4
  %v618 = vadd.f32 %v616, %v617
  %v619 = vrot.slane %v618, 2
  %v620 = vadd.f32 %v618, %v619
  %v621 = vrot.slane %v620, 1
  %v622 = vadd.f32 %v620, %v621
  %v623 = vadd.f32 %v478, %v482
  %v624 = vadd.f32 %v623, %v488
  %v625 = vadd.f32 %v624, %v492
  %v626 = vadd.f32 %v625, %v498
  %v627 = vadd.f32 %v626, %v502
  %v628 = vadd.f32 %v627, %v508
  %v629 = vrot.slane %v628, 4
  %v630 = vadd.f32 %v628, %v629
  %v631 = vrot.slane %v630, 2
  %v632 = vadd.f32 %v630, %v631
  %v633 = vrot.slane %v632, 1
  %v634 = vadd.f32 %v632, %v633
  %v635 = vadd.f32 %v547, %v551
  %v636 = vadd.f32 %v635, %v557
  %v637 = vadd.f32 %v636, %v561
  %v638 = vadd.f32 %v637, %v567
  %v639 = vadd.f32 %v638, %v571
  %v640 = vadd.f32 %v639, %v577
  %v641 = vrot.slane %v640, 4
  %v642 = vadd.f32 %v640, %v641
  %v643 = vrot.slane %v642, 2
  %v644 = vadd.f32 %v642, %v643
  %v645 = vrot.slane %v644, 1
  %v646 = vadd.f32 %v644, %v645
  %v647 = vadd.f32 %v549, %v553
  %v648 = vadd.f32 %v647, %v559
  %v649 = vadd.f32 %v648, %v563
  %v650 = vadd.f32 %v649, %v569
  %v651 = vadd.f32 %v650, %v573
  %v652 = vadd.f32 %v651, %v579
  %v653 = vrot.slane %v652, 4
  %v654 = vadd.f32 %v652, %v653
  %v655 = vrot.slane %v654, 2
  %v656 = vadd.f32 %v654, %v655
  %v657 = vrot.slane %v656, 1
  %v658 = vadd.f32 %v656, %v657
  %v659 = vmul.f32 %v476, %v476
  %v660 = vmul.f32 %v478, %v478
  %v661 = vmul.f32 %v547, %v547
  %v662 = vmul.f32 %v549, %v549
  %v663 = vmul.f32 %v480, %v480
  %v664 = vmul.f32 %v482, %v482
  %v665 = vmul.f32 %v551, %v551
  %v666 = vmul.f32 %v553, %v553
  %v667 = vmul.f32 %v486, %v486
  %v668 = vmul.f32 %v488, %v488
  %v669 = vmul.f32 %v557, %v557
  %v670 = vmul.f32 %v559, %v559
  %v671 = vmul.f32 %v490, %v490
  %v672 = vmul.f32 %v492, %v492
  %v673 = vmul.f32 %v561, %v561
  %v674 = vmul.f32 %v563, %v563
  %v675 = vmul.f32 %v496, %v496
  %v676 = vmul.f32 %v498, %v498
  %v677 = vmul.f32 %v567, %v567
  %v678 = vmul.f32 %v569, %v569
  %v679 = vmul.f32 %v500, %v500
  %v680 = vmul.f32 %v502, %v502
  %v681 = vmul.f32 %v571, %v571
  %v682 = vmul.f32 %v573, %v573
  %v683 = vmul.f32 %v506, %v506
  %v684 = vmul.f32 %v508, %v508
  %v685 = vmul.f32 %v577, %v577
  %v686 = vmul.f32 %v579, %v579
  %v687 = vadd.f32 %v659, %v663
  %v688 = vadd.f32 %v687, %v667
  %v689 = vadd.f32 %v688, %v671
  %v690 = vadd.f32 %v689, %v675
  %v691 = vadd.f32 %v690, %v679
  %v692 = vadd.f32 %v691, %v683
  %v693 = vrot.slane %v692, 4
  %v694 = vadd.f32 %v692, %v693
  %v695 = vrot.slane %v694, 2
  %v696 = vadd.f32 %v694, %v695
  %v697 = vrot.slane %v696, 1
  %v698 = vadd.f32 %v696, %v697
  %v699 = vadd.f32 %v660, %v664
  %v700 = vadd.f32 %v699, %v668
  %v701 = vadd.f32 %v700, %v672
  %v702 = vadd.f32 %v701, %v676
  %v703 = vadd.f32 %v702, %v680
  %v704 = vadd.f32 %v703, %v684
  %v705 = vrot.slane %v704, 4
  %v706 = vadd.f32 %v704, %v705
  %v707 = vrot.slane %v706, 2
  %v708 = vadd.f32 %v706, %v707
  %v709 = vrot.slane %v708, 1
  %v710 = vadd.f32 %v708, %v709
  %v711 = vadd.f32 %v661, %v665
  %v712 = vadd.f32 %v711, %v669
  %v713 = vadd.f32 %v712, %v673
  %v714 = vadd.f32 %v713, %v677
  %v715 = vadd.f32 %v714, %v681
  %v716 = vadd.f32 %v715, %v685
  %v717 = vrot.slane %v716, 4
  %v718 = vadd.f32 %v716, %v717
  %v719 = vrot.slane %v718, 2
  %v720 = vadd.f32 %v718, %v719
  %v721 = vrot.slane %v720, 1
  %v722 = vadd.f32 %v720, %v721
  %v723 = vadd.f32 %v662, %v666
  %v724 = vadd.f32 %v723, %v670
  %v725 = vadd.f32 %v724, %v674
  %v726 = vadd.f32 %v725, %v678
  %v727 = vadd.f32 %v726, %v682
  %v728 = vadd.f32 %v727, %v686
  %v729 = vrot.slane %v728, 4
  %v730 = vadd.f32 %v728, %v729
  %v731 = vrot.slane %v730, 2
  %v732 = vadd.f32 %v730, %v731
  %v733 = vrot.slane %v732, 1
  %v734 = vadd.f32 %v732, %v733
  %vm735 = vcmask 1040384
  %v736 = vsel %vm735, %v622, %v698
  %v737 = vsel %vm735, %v634, %v710
  %v738 = vsel %vm735, %v646, %v722
  %v739 = vsel %vm735, %v658, %v734
  %v744 = vcombine.low %v736, %v737
  %v745 = vcombine.low %v738, %v739
  %v747 = vunpack.c.l.s4 1983009808
  %v748 = vunpack.c.0.s8 %v747
  %v749 = vlaneseq
  %v750 = vshrl.u32 %v749, 7
  %v751 = vsub.s32 %v748, %v750
  %v752 = vrot.slane %v744, %v751
  %v754 = vunpack.c.l.s4 1983009808
  %v755 = vunpack.c.0.s8 %v754
  %v756 = vlaneseq
  %v757 = vshrl.u32 %v756, 7
  %v758 = vsub.s32 %v755, %v757
  %v759 = vrot.slane %v745, %v758
  %v760 = vcombine.low %v752, %v759
  %762 = vst [vmem:[%s3] sm:$0xff] %v760
  // Predicated region
  $region10: #{feat_encoder_forward.24} parent=0 // pred_check
    _
  $region11: #{feat_encoder_forward.24} parent=0 // pred_check_branch
    %764 = sbr.rel (0) target = $region13
  $region12: #{feat_encoder_forward.24} parent=0 // pred_region
    _
  $region13: #{feat_encoder_forward.24} parent=0 // pred_fallthru
    _
  // Predicated region
  $region14: #{feat_encoder_forward.24} parent=0 // pred_check
    _
  $region15: #{feat_encoder_forward.24} parent=0 // pred_check_branch
    %766 = sbr.rel (0) target = $region17
  $region16: #{feat_encoder_forward.24} parent=0 // pred_region
    _
  $region17: #{feat_encoder_forward.24} parent=0 // pred_fallthru
    _
  // Predicated region
  $region18: #{feat_encoder_forward.24} parent=0 // pred_check
    _
  $region19: #{feat_encoder_forward.24} parent=0 // pred_check_branch
    %768 = sbr.rel (0) target = $region21
  $region20: #{feat_encoder_forward.24} parent=0 // pred_region
    _
  $region21: #{feat_encoder_forward.24} parent=0 // pred_fallthru
    _
  // Predicated region
  $region22: #{feat_encoder_forward.24} parent=0 // pred_check
    _
  $region23: #{feat_encoder_forward.24} parent=0 // pred_check_branch
    %770 = sbr.rel (0) target = $region25
  $region24: #{feat_encoder_forward.24} parent=0 // pred_region
    _
  $region25: #{feat_encoder_forward.24} parent=0 // pred_fallthru
    _

// kernel: feat_encoder_forward.25
$region0: #{feat_encoder_forward.25}
  #allocation0 [shape = 'u32[]', space=smem, size = 0x4, offset = 0x4, fixed_abs, tag = 'smem constant byte address 0x4 - core index']
  #allocation1 [shape = 'u32[144,128]{1,0:T(1,128)}', space=vmem, size = 0x12000, scoped, tag = 'internal scratch']
  %s0 = inlined_call_operand.vmem [shape: f32[56,512], index: 0, kind: input, shape index: {}]
  %s1 = inlined_call_operand.vmem [shape: f32[1,512], index: 1, kind: input, shape index: {}]
  %s2 = inlined_call_operand.vmem [shape: f32[1,512], index: 2, kind: input, shape index: {}]
  %s3 = inlined_call_operand.vmem [shape: f32[56,512], index: 3, kind: output, shape index: {}]
  %s4 = sld [smem:[#allocation0]]
  $region22: #{feat_encoder_forward.25} parent=0
    _
  %s6 = ssub.s32 1, %s4
  %s7 = scalar_select 0, %s6, %s4
  // Predicated region
  $region2: #{feat_encoder_forward.25} parent=0 // pred_check
    _
  $region3: #{feat_encoder_forward.25} parent=0 // pred_check_branch
    %9 = sbr.rel (0) target = $region5
  $region4: #{feat_encoder_forward.25} parent=0 // pred_region
    _
  $region5: #{feat_encoder_forward.25} parent=0 // pred_fallthru
    _
  // Predicated region
  $region6: #{feat_encoder_forward.25} parent=0 // pred_check
    _
  $region7: #{feat_encoder_forward.25} parent=0 // pred_check_branch
    %11 = sbr.rel (0) target = $region9
  $region8: #{feat_encoder_forward.25} parent=0 // pred_region
    _
  $region9: #{feat_encoder_forward.25} parent=0 // pred_fallthru
    _
  // Predicated region
  $region10: #{feat_encoder_forward.25} parent=0 // pred_check
    _
  $region11: #{feat_encoder_forward.25} parent=0 // pred_check_branch
    %13 = sbr.rel (0) target = $region13
  $region12: #{feat_encoder_forward.25} parent=0 // pred_region
    _
  $region13: #{feat_encoder_forward.25} parent=0 // pred_fallthru
    _
  %v14 = vld [vmem:[%s0] sm:$0xff]
  %v15 = vld [vmem:[%s0 + $0x8] sm:$0xff]
  %v16 = vld [vmem:[%s0 + $0x10] sm:$0xff]
  %v17 = vld [vmem:[%s0 + $0x18] sm:$0xff]
  %v18 = vld [vmem:[%s0 + $0x20] sm:$0xff]
  %v19 = vld [vmem:[%s0 + $0x28] sm:$0xff]
  %v20 = vld [vmem:[%s0 + $0x30] sm:$0xff]
  %v21 = vld [vmem:[%s0 + $0x38] sm:$0xff]
  %v22 = vld [vmem:[%s0 + $0x40] sm:$0xff]
  %v23 = vld [vmem:[%s0 + $0x48] sm:$0xff]
  %v24 = vld [vmem:[%s0 + $0x50] sm:$0xff]
  %v25 = vld [vmem:[%s0 + $0x58] sm:$0xff]
  %v26 = vld [vmem:[%s0 + $0x60] sm:$0xff]
  %v27 = vld [vmem:[%s0 + $0x68] sm:$0xff]
  %v28 = vld [vmem:[%s0 + $0x70] sm:$0xff]
  %v29 = vld [vmem:[%s0 + $0x78] sm:$0xff]
  %v30 = vld [vmem:[%s0 + $0x80] sm:$0xff]
  %v31 = vld [vmem:[%s0 + $0x88] sm:$0xff]
  %v32 = vld [vmem:[%s0 + $0x90] sm:$0xff]
  %v33 = vld [vmem:[%s0 + $0x98] sm:$0xff]
  %v34 = vld [vmem:[%s0 + $0xa0] sm:$0xff]
  %v35 = vld [vmem:[%s0 + $0xa8] sm:$0xff]
  %v36 = vld [vmem:[%s0 + $0xb0] sm:$0xff]
  %v37 = vld [vmem:[%s0 + $0xb8] sm:$0xff]
  %v38 = vld [vmem:[%s0 + $0xc0] sm:$0xff]
  %v39 = vld [vmem:[%s0 + $0xc8] sm:$0xff]
  %v40 = vld [vmem:[%s0 + $0xd0] sm:$0xff]
  %v41 = vld [vmem:[%s0 + $0xd8] sm:$0xff]
  %v42 = vld [vmem:[%s1] sm:$0xf]
  %v44 = vlaneseq
  %v45 = vshrl.u32 %v44, 7
  %v46 = vsub.s32 0, %v45
  %v47 = vrot.slane %v42, %v46
  %v48 = vlaneseq
  %v49 = vshrl.u32 %v48, 7
  %v50 = vsub.s32 1, %v49
  %v51 = vrot.slane %v42, %v50
  %v52 = vlaneseq
  %v53 = vshrl.u32 %v52, 7
  %v54 = vsub.s32 2, %v53
  %v55 = vrot.slane %v42, %v54
  %v56 = vlaneseq
  %v57 = vshrl.u32 %v56, 7
  %v58 = vsub.s32 3, %v57
  %v59 = vrot.slane %v42, %v58
  %v64 = vmul.f32 %v14, %v47
  %v65 = vmul.f32 %v15, %v51
  %v66 = vmul.f32 %v16, %v55
  %v67 = vmul.f32 %v17, %v59
  %v68 = vmul.f32 %v18, %v47
  %v69 = vmul.f32 %v19, %v51
  %v70 = vmul.f32 %v20, %v55
  %v71 = vmul.f32 %v21, %v59
  %v72 = vmul.f32 %v22, %v47
  %v73 = vmul.f32 %v23, %v51
  %v74 = vmul.f32 %v24, %v55
  %v75 = vmul.f32 %v25, %v59
  %v76 = vmul.f32 %v26, %v47
  %v77 = vmul.f32 %v27, %v51
  %v78 = vmul.f32 %v28, %v55
  %v79 = vmul.f32 %v29, %v59
  %v80 = vmul.f32 %v30, %v47
  %v81 = vmul.f32 %v31, %v51
  %v82 = vmul.f32 %v32, %v55
  %v83 = vmul.f32 %v33, %v59
  %v84 = vmul.f32 %v34, %v47
  %v85 = vmul.f32 %v35, %v51
  %v86 = vmul.f32 %v36, %v55
  %v87 = vmul.f32 %v37, %v59
  %v88 = vmul.f32 %v38, %v47
  %v89 = vmul.f32 %v39, %v51
  %v90 = vmul.f32 %v40, %v55
  %v91 = vmul.f32 %v41, %v59
  %v92 = vld [vmem:[%s2] sm:$0xf]
  %v94 = vlaneseq
  %v95 = vshrl.u32 %v94, 7
  %v96 = vsub.s32 0, %v95
  %v97 = vrot.slane %v92, %v96
  %v98 = vlaneseq
  %v99 = vshrl.u32 %v98, 7
  %v100 = vsub.s32 1, %v99
  %v101 = vrot.slane %v92, %v100
  %v102 = vlaneseq
  %v103 = vshrl.u32 %v102, 7
  %v104 = vsub.s32 2, %v103
  %v105 = vrot.slane %v92, %v104
  %v106 = vlaneseq
  %v107 = vshrl.u32 %v106, 7
  %v108 = vsub.s32 3, %v107
  %v109 = vrot.slane %v92, %v108
  %v114 = vadd.f32 %v64, %v97
  %v115 = vadd.f32 %v65, %v101
  %v116 = vadd.f32 %v66, %v105
  %v117 = vadd.f32 %v67, %v109
  %v118 = vadd.f32 %v68, %v97
  %v119 = vadd.f32 %v69, %v101
  %v120 = vadd.f32 %v70, %v105
  %v121 = vadd.f32 %v71, %v109
  %v122 = vadd.f32 %v72, %v97
  %v123 = vadd.f32 %v73, %v101
  %v124 = vadd.f32 %v74, %v105
  %v125 = vadd.f32 %v75, %v109
  %v126 = vadd.f32 %v76, %v97
  %v127 = vadd.f32 %v77, %v101
  %v128 = vadd.f32 %v78, %v105
  %v129 = vadd.f32 %v79, %v109
  %v130 = vadd.f32 %v80, %v97
  %v131 = vadd.f32 %v81, %v101
  %v132 = vadd.f32 %v82, %v105
  %v133 = vadd.f32 %v83, %v109
  %v134 = vadd.f32 %v84, %v97
  %v135 = vadd.f32 %v85, %v101
  %v136 = vadd.f32 %v86, %v105
  %v137 = vadd.f32 %v87, %v109
  %v138 = vadd.f32 %v88, %v97
  %v139 = vadd.f32 %v89, %v101
  %v140 = vadd.f32 %v90, %v105
  %v141 = vadd.f32 %v91, %v109
  %v142 = vmax.f32 %v114, 0.0
  %v143 = vmax.f32 %v115, 0.0
  %v144 = vmax.f32 %v116, 0.0
  %v145 = vmax.f32 %v117, 0.0
  %v146 = vmax.f32 %v118, 0.0
  %v147 = vmax.f32 %v119, 0.0
  %v148 = vmax.f32 %v120, 0.0
  %v149 = vmax.f32 %v121, 0.0
  %v150 = vmax.f32 %v122, 0.0
  %v151 = vmax.f32 %v123, 0.0
  %v152 = vmax.f32 %v124, 0.0
  %v153 = vmax.f32 %v125, 0.0
  %v154 = vmax.f32 %v126, 0.0
  %v155 = vmax.f32 %v127, 0.0
  %v156 = vmax.f32 %v128, 0.0
  %v157 = vmax.f32 %v129, 0.0
  %v158 = vmax.f32 %v130, 0.0
  %v159 = vmax.f32 %v131, 0.0
  %v160 = vmax.f32 %v132, 0.0
  %v161 = vmax.f32 %v133, 0.0
  %v162 = vmax.f32 %v134, 0.0
  %v163 = vmax.f32 %v135, 0.0
  %v164 = vmax.f32 %v136, 0.0
  %v165 = vmax.f32 %v137, 0.0
  %v166 = vmax.f32 %v138, 0.0
  %v167 = vmax.f32 %v139, 0.0
  %v168 = vmax.f32 %v140, 0.0
  %v169 = vmax.f32 %v141, 0.0
  %170 = vst [vmem:[%s3] sm:$0xff] %v142
  %171 = vst [vmem:[%s3 + $0x8] sm:$0xff] %v143
  %172 = vst [vmem:[%s3 + $0x10] sm:$0xff] %v144
  %173 = vst [vmem:[%s3 + $0x18] sm:$0xff] %v145
  %174 = vst [vmem:[%s3 + $0x20] sm:$0xff] %v146
  %175 = vst [vmem:[%s3 + $0x28] sm:$0xff] %v147
  %176 = vst [vmem:[%s3 + $0x30] sm:$0xff] %v148
  %177 = vst [vmem:[%s3 + $0x38] sm:$0xff] %v149
  %178 = vst [vmem:[%s3 + $0x40] sm:$0xff] %v150
  %179 = vst [vmem:[%s3 + $0x48] sm:$0xff] %v151
  %180 = vst [vmem:[%s3 + $0x50] sm:$0xff] %v152
  %181 = vst [vmem:[%s3 + $0x58] sm:$0xff] %v153
  %182 = vst [vmem:[%s3 + $0x60] sm:$0xff] %v154
  %183 = vst [vmem:[%s3 + $0x68] sm:$0xff] %v155
  %184 = vst [vmem:[%s3 + $0x70] sm:$0xff] %v156
  %185 = vst [vmem:[%s3 + $0x78] sm:$0xff] %v157
  %186 = vst [vmem:[%s3 + $0x80] sm:$0xff] %v158
  %187 = vst [vmem:[%s3 + $0x88] sm:$0xff] %v159
  %188 = vst [vmem:[%s3 + $0x90] sm:$0xff] %v160
  %189 = vst [vmem:[%s3 + $0x98] sm:$0xff] %v161
  %190 = vst [vmem:[%s3 + $0xa0] sm:$0xff] %v162
  %191 = vst [vmem:[%s3 + $0xa8] sm:$0xff] %v163
  %192 = vst [vmem:[%s3 + $0xb0] sm:$0xff] %v164
  %193 = vst [vmem:[%s3 + $0xb8] sm:$0xff] %v165
  %194 = vst [vmem:[%s3 + $0xc0] sm:$0xff] %v166
  %195 = vst [vmem:[%s3 + $0xc8] sm:$0xff] %v167
  %196 = vst [vmem:[%s3 + $0xd0] sm:$0xff] %v168
  %197 = vst [vmem:[%s3 + $0xd8] sm:$0xff] %v169
  // Predicated region
  $region14: #{feat_encoder_forward.25} parent=0 // pred_check
    _
  $region15: #{feat_encoder_forward.25} parent=0 // pred_check_branch
    %199 = sbr.rel (0) target = $region17
  $region16: #{feat_encoder_forward.25} parent=0 // pred_region
    _
  $region17: #{feat_encoder_forward.25} parent=0 // pred_fallthru
    _
  // Predicated region
  $region18: #{feat_encoder_forward.25} parent=0 // pred_check
    _
  $region19: #{feat_encoder_forward.25} parent=0 // pred_check_branch
    %201 = sbr.rel (0) target = $region21
  $region20: #{feat_encoder_forward.25} parent=0 // pred_region
    _
  $region21: #{feat_encoder_forward.25} parent=0 // pred_fallthru
    _

// kernel: feat_encoder_forward.26
$region0: #{feat_encoder_forward.26}
  #allocation0 [shape = 'u32[]', space=smem, size = 0x4, offset = 0x4, fixed_abs, tag = 'smem constant byte address 0x4 - core index']
  #allocation1 [shape = 'u32[144,128]{1,0:T(1,128)}', space=vmem, size = 0x12000, scoped, tag = 'internal scratch']
  %s0 = inlined_call_operand.vmem [shape: bf16[2,2048], index: 0, kind: input, shape index: {}]
  %s1 = inlined_call_operand.vmem [shape: bf16[2048,512], index: 1, kind: input, shape index: {}]
  %s2 = inlined_call_operand.vmem [shape: f32[1,512], index: 2, kind: input, shape index: {}]
  %s3 = inlined_call_operand.vmem [shape: f32[2,512], index: 3, kind: output, shape index: {}]
  %s4 = sld [smem:[#allocation0]]
  $region22: #{feat_encoder_forward.26} parent=0
    _
  %s6 = ssub.s32 1, %s4
  %s7 = scalar_select 0, %s6, %s4
  // Predicated region
  $region2: #{feat_encoder_forward.26} parent=0 // pred_check
    _
  $region3: #{feat_encoder_forward.26} parent=0 // pred_check_branch
    %9 = sbr.rel (0) target = $region5
  $region4: #{feat_encoder_forward.26} parent=0 // pred_region
    _
  $region5: #{feat_encoder_forward.26} parent=0 // pred_fallthru
    _
  // Predicated region
  $region6: #{feat_encoder_forward.26} parent=0 // pred_check
    _
  $region7: #{feat_encoder_forward.26} parent=0 // pred_check_branch
    %11 = sbr.rel (0) target = $region9
  $region8: #{feat_encoder_forward.26} parent=0 // pred_region
    _
  $region9: #{feat_encoder_forward.26} parent=0 // pred_fallthru
    _
  // Predicated region
  $region10: #{feat_encoder_forward.26} parent=0 // pred_check
    _
  $region11: #{feat_encoder_forward.26} parent=0 // pred_check_branch
    %13 = sbr.rel (0) target = $region13
  $region12: #{feat_encoder_forward.26} parent=0 // pred_region
    _
  $region13: #{feat_encoder_forward.26} parent=0 // pred_fallthru
    _
  %v14 = vld [vmem:[%s0] sm:$0xff]
  %v15 = vld [vmem:[%s0 + $0x8] sm:$0xff]
  %v16 = vld [vmem:[%s1] sm:$0xff]
  %v17 = vld [vmem:[%s1 + $0x8] sm:$0xff]
  %v18 = vld [vmem:[%s1 + $0x10] sm:$0xff]
  %v19 = vld [vmem:[%s1 + $0x18] sm:$0xff]
  %v20 = vld [vmem:[%s1 + $0x20] sm:$0xff]
  %v21 = vld [vmem:[%s1 + $0x28] sm:$0xff]
  %v22 = vld [vmem:[%s1 + $0x30] sm:$0xff]
  %v23 = vld [vmem:[%s1 + $0x38] sm:$0xff]
  %v24 = vld [vmem:[%s1 + $0x40] sm:$0xff]
  %v25 = vld [vmem:[%s1 + $0x48] sm:$0xff]
  %v26 = vld [vmem:[%s1 + $0x50] sm:$0xff]
  %v27 = vld [vmem:[%s1 + $0x58] sm:$0xff]
  %v28 = vld [vmem:[%s1 + $0x60] sm:$0xff]
  %v29 = vld [vmem:[%s1 + $0x68] sm:$0xff]
  %v30 = vld [vmem:[%s1 + $0x70] sm:$0xff]
  %v31 = vld [vmem:[%s1 + $0x78] sm:$0xff]
  %v32 = vld [vmem:[%s1 + $0x80] sm:$0xff]
  %v33 = vld [vmem:[%s1 + $0x88] sm:$0xff]
  %v34 = vld [vmem:[%s1 + $0x90] sm:$0xff]
  %v35 = vld [vmem:[%s1 + $0x98] sm:$0xff]
  %v36 = vld [vmem:[%s1 + $0xa0] sm:$0xff]
  %v37 = vld [vmem:[%s1 + $0xa8] sm:$0xff]
  %v38 = vld [vmem:[%s1 + $0xb0] sm:$0xff]
  %v39 = vld [vmem:[%s1 + $0xb8] sm:$0xff]
  %v40 = vld [vmem:[%s1 + $0xc0] sm:$0xff]
  %v41 = vld [vmem:[%s1 + $0xc8] sm:$0xff]
  %v42 = vld [vmem:[%s1 + $0xd0] sm:$0xff]
  %v43 = vld [vmem:[%s1 + $0xd8] sm:$0xff]
  %v44 = vld [vmem:[%s1 + $0xe0] sm:$0xff]
  %v45 = vld [vmem:[%s1 + $0xe8] sm:$0xff]
  %v46 = vld [vmem:[%s1 + $0xf0] sm:$0xff]
  %v47 = vld [vmem:[%s1 + $0xf8] sm:$0xff]
  %v48 = vld [vmem:[%s1 + $0x100] sm:$0xff]
  %v49 = vld [vmem:[%s1 + $0x108] sm:$0xff]
  %v50 = vld [vmem:[%s1 + $0x110] sm:$0xff]
  %v51 = vld [vmem:[%s1 + $0x118] sm:$0xff]
  %v52 = vld [vmem:[%s1 + $0x120] sm:$0xff]
  %v53 = vld [vmem:[%s1 + $0x128] sm:$0xff]
  %v54 = vld [vmem:[%s1 + $0x130] sm:$0xff]
  %v55 = vld [vmem:[%s1 + $0x138] sm:$0xff]
  %v56 = vld [vmem:[%s1 + $0x140] sm:$0xff]
  %v57 = vld [vmem:[%s1 + $0x148] sm:$0xff]
  %v58 = vld [vmem:[%s1 + $0x150] sm:$0xff]
  %v59 = vld [vmem:[%s1 + $0x158] sm:$0xff]
  %v60 = vld [vmem:[%s1 + $0x160] sm:$0xff]
  %v61 = vld [vmem:[%s1 + $0x168] sm:$0xff]
  %v62 = vld [vmem:[%s1 + $0x170] sm:$0xff]
  %v63 = vld [vmem:[%s1 + $0x178] sm:$0xff]
  %v64 = vld [vmem:[%s1 + $0x180] sm:$0xff]
  %v65 = vld [vmem:[%s1 + $0x188] sm:$0xff]
  %v66 = vld [vmem:[%s1 + $0x190] sm:$0xff]
  %v67 = vld [vmem:[%s1 + $0x198] sm:$0xff]
  %v68 = vld [vmem:[%s1 + $0x1a0] sm:$0xff]
  %v69 = vld [vmem:[%s1 + $0x1a8] sm:$0xff]
  %v70 = vld [vmem:[%s1 + $0x1b0] sm:$0xff]
  %v71 = vld [vmem:[%s1 + $0x1b8] sm:$0xff]
  %v72 = vld [vmem:[%s1 + $0x1c0] sm:$0xff]
  %v73 = vld [vmem:[%s1 + $0x1c8] sm:$0xff]
  %v74 = vld [vmem:[%s1 + $0x1d0] sm:$0xff]
  %v75 = vld [vmem:[%s1 + $0x1d8] sm:$0xff]
  %v76 = vld [vmem:[%s1 + $0x1e0] sm:$0xff]
  %v77 = vld [vmem:[%s1 + $0x1e8] sm:$0xff]
  %v78 = vld [vmem:[%s1 + $0x1f0] sm:$0xff]
  %v79 = vld [vmem:[%s1 + $0x1f8] sm:$0xff]
  %v80 = vld [vmem:[%s1 + $0x200] sm:$0xff]
  %v81 = vld [vmem:[%s1 + $0x208] sm:$0xff]
  %v82 = vld [vmem:[%s1 + $0x210] sm:$0xff]
  %v83 = vld [vmem:[%s1 + $0x218] sm:$0xff]
  %v84 = vld [vmem:[%s1 + $0x220] sm:$0xff]
  %v85 = vld [vmem:[%s1 + $0x228] sm:$0xff]
  %v86 = vld [vmem:[%s1 + $0x230] sm:$0xff]
  %v87 = vld [vmem:[%s1 + $0x238] sm:$0xff]
  %v88 = vld [vmem:[%s1 + $0x240] sm:$0xff]
  %v89 = vld [vmem:[%s1 + $0x248] sm:$0xff]
  %v90 = vld [vmem:[%s1 + $0x250] sm:$0xff]
  %v91 = vld [vmem:[%s1 + $0x258] sm:$0xff]
  %v92 = vld [vmem:[%s1 + $0x260] sm:$0xff]
  %v93 = vld [vmem:[%s1 + $0x268] sm:$0xff]
  %v94 = vld [vmem:[%s1 + $0x270] sm:$0xff]
  %v95 = vld [vmem:[%s1 + $0x278] sm:$0xff]
  %v96 = vld [vmem:[%s1 + $0x280] sm:$0xff]
  %v97 = vld [vmem:[%s1 + $0x288] sm:$0xff]
  %v98 = vld [vmem:[%s1 + $0x290] sm:$0xff]
  %v99 = vld [vmem:[%s1 + $0x298] sm:$0xff]
  %v100 = vld [vmem:[%s1 + $0x2a0] sm:$0xff]
  %v101 = vld [vmem:[%s1 + $0x2a8] sm:$0xff]
  %v102 = vld [vmem:[%s1 + $0x2b0] sm:$0xff]
  %v103 = vld [vmem:[%s1 + $0x2b8] sm:$0xff]
  %v104 = vld [vmem:[%s1 + $0x2c0] sm:$0xff]
  %v105 = vld [vmem:[%s1 + $0x2c8] sm:$0xff]
  %v106 = vld [vmem:[%s1 + $0x2d0] sm:$0xff]
  %v107 = vld [vmem:[%s1 + $0x2d8] sm:$0xff]
  %v108 = vld [vmem:[%s1 + $0x2e0] sm:$0xff]
  %v109 = vld [vmem:[%s1 + $0x2e8] sm:$0xff]
  %v110 = vld [vmem:[%s1 + $0x2f0] sm:$0xff]
  %v111 = vld [vmem:[%s1 + $0x2f8] sm:$0xff]
  %v112 = vld [vmem:[%s1 + $0x300] sm:$0xff]
  %v113 = vld [vmem:[%s1 + $0x308] sm:$0xff]
  %v114 = vld [vmem:[%s1 + $0x310] sm:$0xff]
  %v115 = vld [vmem:[%s1 + $0x318] sm:$0xff]
  %v116 = vld [vmem:[%s1 + $0x320] sm:$0xff]
  %v117 = vld [vmem:[%s1 + $0x328] sm:$0xff]
  %v118 = vld [vmem:[%s1 + $0x330] sm:$0xff]
  %v119 = vld [vmem:[%s1 + $0x338] sm:$0xff]
  %v120 = vld [vmem:[%s1 + $0x340] sm:$0xff]
  %v121 = vld [vmem:[%s1 + $0x348] sm:$0xff]
  %v122 = vld [vmem:[%s1 + $0x350] sm:$0xff]
  %v123 = vld [vmem:[%s1 + $0x358] sm:$0xff]
  %v124 = vld [vmem:[%s1 + $0x360] sm:$0xff]
  %v125 = vld [vmem:[%s1 + $0x368] sm:$0xff]
  %v126 = vld [vmem:[%s1 + $0x370] sm:$0xff]
  %v127 = vld [vmem:[%s1 + $0x378] sm:$0xff]
  %v128 = vld [vmem:[%s1 + $0x380] sm:$0xff]
  %v129 = vld [vmem:[%s1 + $0x388] sm:$0xff]
  %v130 = vld [vmem:[%s1 + $0x390] sm:$0xff]
  %v131 = vld [vmem:[%s1 + $0x398] sm:$0xff]
  %v132 = vld [vmem:[%s1 + $0x3a0] sm:$0xff]
  %v133 = vld [vmem:[%s1 + $0x3a8] sm:$0xff]
  %v134 = vld [vmem:[%s1 + $0x3b0] sm:$0xff]
  %v135 = vld [vmem:[%s1 + $0x3b8] sm:$0xff]
  %v136 = vld [vmem:[%s1 + $0x3c0] sm:$0xff]
  %v137 = vld [vmem:[%s1 + $0x3c8] sm:$0xff]
  %v138 = vld [vmem:[%s1 + $0x3d0] sm:$0xff]
  %v139 = vld [vmem:[%s1 + $0x3d8] sm:$0xff]
  %v140 = vld [vmem:[%s1 + $0x3e0] sm:$0xff]
  %v141 = vld [vmem:[%s1 + $0x3e8] sm:$0xff]
  %v142 = vld [vmem:[%s1 + $0x3f0] sm:$0xff]
  %v143 = vld [vmem:[%s1 + $0x3f8] sm:$0xff]
  %v144 = vld [vmem:[%s1 + $0x400] sm:$0xff]
  %v145 = vld [vmem:[%s1 + $0x408] sm:$0xff]
  %v146 = vld [vmem:[%s1 + $0x410] sm:$0xff]
  %v147 = vld [vmem:[%s1 + $0x418] sm:$0xff]
  %v148 = vld [vmem:[%s1 + $0x420] sm:$0xff]
  %v149 = vld [vmem:[%s1 + $0x428] sm:$0xff]
  %v150 = vld [vmem:[%s1 + $0x430] sm:$0xff]
  %v151 = vld [vmem:[%s1 + $0x438] sm:$0xff]
  %v152 = vld [vmem:[%s1 + $0x440] sm:$0xff]
  %v153 = vld [vmem:[%s1 + $0x448] sm:$0xff]
  %v154 = vld [vmem:[%s1 + $0x450] sm:$0xff]
  %v155 = vld [vmem:[%s1 + $0x458] sm:$0xff]
  %v156 = vld [vmem:[%s1 + $0x460] sm:$0xff]
  %v157 = vld [vmem:[%s1 + $0x468] sm:$0xff]
  %v158 = vld [vmem:[%s1 + $0x470] sm:$0xff]
  %v159 = vld [vmem:[%s1 + $0x478] sm:$0xff]
  %v160 = vld [vmem:[%s1 + $0x480] sm:$0xff]
  %v161 = vld [vmem:[%s1 + $0x488] sm:$0xff]
  %v162 = vld [vmem:[%s1 + $0x490] sm:$0xff]
  %v163 = vld [vmem:[%s1 + $0x498] sm:$0xff]
  %v164 = vld [vmem:[%s1 + $0x4a0] sm:$0xff]
  %v165 = vld [vmem:[%s1 + $0x4a8] sm:$0xff]
  %v166 = vld [vmem:[%s1 + $0x4b0] sm:$0xff]
  %v167 = vld [vmem:[%s1 + $0x4b8] sm:$0xff]
  %v168 = vld [vmem:[%s1 + $0x4c0] sm:$0xff]
  %v169 = vld [vmem:[%s1 + $0x4c8] sm:$0xff]
  %v170 = vld [vmem:[%s1 + $0x4d0] sm:$0xff]
  %v171 = vld [vmem:[%s1 + $0x4d8] sm:$0xff]
  %v172 = vld [vmem:[%s1 + $0x4e0] sm:$0xff]
  %v173 = vld [vmem:[%s1 + $0x4e8] sm:$0xff]
  %v174 = vld [vmem:[%s1 + $0x4f0] sm:$0xff]
  %v175 = vld [vmem:[%s1 + $0x4f8] sm:$0xff]
  %v176 = vld [vmem:[%s1 + $0x500] sm:$0xff]
  %v177 = vld [vmem:[%s1 + $0x508] sm:$0xff]
  %v178 = vld [vmem:[%s1 + $0x510] sm:$0xff]
  %v179 = vld [vmem:[%s1 + $0x518] sm:$0xff]
  %v180 = vld [vmem:[%s1 + $0x520] sm:$0xff]
  %v181 = vld [vmem:[%s1 + $0x528] sm:$0xff]
  %v182 = vld [vmem:[%s1 + $0x530] sm:$0xff]
  %v183 = vld [vmem:[%s1 + $0x538] sm:$0xff]
  %v184 = vld [vmem:[%s1 + $0x540] sm:$0xff]
  %v185 = vld [vmem:[%s1 + $0x548] sm:$0xff]
  %v186 = vld [vmem:[%s1 + $0x550] sm:$0xff]
  %v187 = vld [vmem:[%s1 + $0x558] sm:$0xff]
  %v188 = vld [vmem:[%s1 + $0x560] sm:$0xff]
  %v189 = vld [vmem:[%s1 + $0x568] sm:$0xff]
  %v190 = vld [vmem:[%s1 + $0x570] sm:$0xff]
  %v191 = vld [vmem:[%s1 + $0x578] sm:$0xff]
  %v192 = vld [vmem:[%s1 + $0x580] sm:$0xff]
  %v193 = vld [vmem:[%s1 + $0x588] sm:$0xff]
  %v194 = vld [vmem:[%s1 + $0x590] sm:$0xff]
  %v195 = vld [vmem:[%s1 + $0x598] sm:$0xff]
  %v196 = vld [vmem:[%s1 + $0x5a0] sm:$0xff]
  %v197 = vld [vmem:[%s1 + $0x5a8] sm:$0xff]
  %v198 = vld [vmem:[%s1 + $0x5b0] sm:$0xff]
  %v199 = vld [vmem:[%s1 + $0x5b8] sm:$0xff]
  %v200 = vld [vmem:[%s1 + $0x5c0] sm:$0xff]
  %v201 = vld [vmem:[%s1 + $0x5c8] sm:$0xff]
  %v202 = vld [vmem:[%s1 + $0x5d0] sm:$0xff]
  %v203 = vld [vmem:[%s1 + $0x5d8] sm:$0xff]
  %v204 = vld [vmem:[%s1 + $0x5e0] sm:$0xff]
  %v205 = vld [vmem:[%s1 + $0x5e8] sm:$0xff]
  %v206 = vld [vmem:[%s1 + $0x5f0] sm:$0xff]
  %v207 = vld [vmem:[%s1 + $0x5f8] sm:$0xff]
  %v208 = vld [vmem:[%s1 + $0x600] sm:$0xff]
  %v209 = vld [vmem:[%s1 + $0x608] sm:$0xff]
  %v210 = vld [vmem:[%s1 + $0x610] sm:$0xff]
  %v211 = vld [vmem:[%s1 + $0x618] sm:$0xff]
  %v212 = vld [vmem:[%s1 + $0x620] sm:$0xff]
  %v213 = vld [vmem:[%s1 + $0x628] sm:$0xff]
  %v214 = vld [vmem:[%s1 + $0x630] sm:$0xff]
  %v215 = vld [vmem:[%s1 + $0x638] sm:$0xff]
  %v216 = vld [vmem:[%s1 + $0x640] sm:$0xff]
  %v217 = vld [vmem:[%s1 + $0x648] sm:$0xff]
  %v218 = vld [vmem:[%s1 + $0x650] sm:$0xff]
  %v219 = vld [vmem:[%s1 + $0x658] sm:$0xff]
  %v220 = vld [vmem:[%s1 + $0x660] sm:$0xff]
  %v221 = vld [vmem:[%s1 + $0x668] sm:$0xff]
  %v222 = vld [vmem:[%s1 + $0x670] sm:$0xff]
  %v223 = vld [vmem:[%s1 + $0x678] sm:$0xff]
  %v224 = vld [vmem:[%s1 + $0x680] sm:$0xff]
  %v225 = vld [vmem:[%s1 + $0x688] sm:$0xff]
  %v226 = vld [vmem:[%s1 + $0x690] sm:$0xff]
  %v227 = vld [vmem:[%s1 + $0x698] sm:$0xff]
  %v228 = vld [vmem:[%s1 + $0x6a0] sm:$0xff]
  %v229 = vld [vmem:[%s1 + $0x6a8] sm:$0xff]
  %v230 = vld [vmem:[%s1 + $0x6b0] sm:$0xff]
  %v231 = vld [vmem:[%s1 + $0x6b8] sm:$0xff]
  %v232 = vld [vmem:[%s1 + $0x6c0] sm:$0xff]
  %v233 = vld [vmem:[%s1 + $0x6c8] sm:$0xff]
  %v234 = vld [vmem:[%s1 + $0x6d0] sm:$0xff]
  %v235 = vld [vmem:[%s1 + $0x6d8] sm:$0xff]
  %v236 = vld [vmem:[%s1 + $0x6e0] sm:$0xff]
  %v237 = vld [vmem:[%s1 + $0x6e8] sm:$0xff]
  %v238 = vld [vmem:[%s1 + $0x6f0] sm:$0xff]
  %v239 = vld [vmem:[%s1 + $0x6f8] sm:$0xff]
  %v240 = vld [vmem:[%s1 + $0x700] sm:$0xff]
  %v241 = vld [vmem:[%s1 + $0x708] sm:$0xff]
  %v242 = vld [vmem:[%s1 + $0x710] sm:$0xff]
  %v243 = vld [vmem:[%s1 + $0x718] sm:$0xff]
  %v244 = vld [vmem:[%s1 + $0x720] sm:$0xff]
  %v245 = vld [vmem:[%s1 + $0x728] sm:$0xff]
  %v246 = vld [vmem:[%s1 + $0x730] sm:$0xff]
  %v247 = vld [vmem:[%s1 + $0x738] sm:$0xff]
  %v248 = vld [vmem:[%s1 + $0x740] sm:$0xff]
  %v249 = vld [vmem:[%s1 + $0x748] sm:$0xff]
  %v250 = vld [vmem:[%s1 + $0x750] sm:$0xff]
  %v251 = vld [vmem:[%s1 + $0x758] sm:$0xff]
  %v252 = vld [vmem:[%s1 + $0x760] sm:$0xff]
  %v253 = vld [vmem:[%s1 + $0x768] sm:$0xff]
  %v254 = vld [vmem:[%s1 + $0x770] sm:$0xff]
  %v255 = vld [vmem:[%s1 + $0x778] sm:$0xff]
  %v256 = vld [vmem:[%s1 + $0x780] sm:$0xff]
  %v257 = vld [vmem:[%s1 + $0x788] sm:$0xff]
  %v258 = vld [vmem:[%s1 + $0x790] sm:$0xff]
  %v259 = vld [vmem:[%s1 + $0x798] sm:$0xff]
  %v260 = vld [vmem:[%s1 + $0x7a0] sm:$0xff]
  %v261 = vld [vmem:[%s1 + $0x7a8] sm:$0xff]
  %v262 = vld [vmem:[%s1 + $0x7b0] sm:$0xff]
  %v263 = vld [vmem:[%s1 + $0x7b8] sm:$0xff]
  %v264 = vld [vmem:[%s1 + $0x7c0] sm:$0xff]
  %v265 = vld [vmem:[%s1 + $0x7c8] sm:$0xff]
  %v266 = vld [vmem:[%s1 + $0x7d0] sm:$0xff]
  %v267 = vld [vmem:[%s1 + $0x7d8] sm:$0xff]
  %v268 = vld [vmem:[%s1 + $0x7e0] sm:$0xff]
  %v269 = vld [vmem:[%s1 + $0x7e8] sm:$0xff]
  %v270 = vld [vmem:[%s1 + $0x7f0] sm:$0xff]
  %v271 = vld [vmem:[%s1 + $0x7f8] sm:$0xff]
  %v272 = vld [vmem:[%s1 + $0x800] sm:$0xff]
  %v273 = vld [vmem:[%s1 + $0x808] sm:$0xff]
  %v274 = vld [vmem:[%s1 + $0x810] sm:$0xff]
  %v275 = vld [vmem:[%s1 + $0x818] sm:$0xff]
  %v276 = vld [vmem:[%s1 + $0x820] sm:$0xff]
  %v277 = vld [vmem:[%s1 + $0x828] sm:$0xff]
  %v278 = vld [vmem:[%s1 + $0x830] sm:$0xff]
  %v279 = vld [vmem:[%s1 + $0x838] sm:$0xff]
  %v280 = vld [vmem:[%s1 + $0x840] sm:$0xff]
  %v281 = vld [vmem:[%s1 + $0x848] sm:$0xff]
  %v282 = vld [vmem:[%s1 + $0x850] sm:$0xff]
  %v283 = vld [vmem:[%s1 + $0x858] sm:$0xff]
  %v284 = vld [vmem:[%s1 + $0x860] sm:$0xff]
  %v285 = vld [vmem:[%s1 + $0x868] sm:$0xff]
  %v286 = vld [vmem:[%s1 + $0x870] sm:$0xff]
  %v287 = vld [vmem:[%s1 + $0x878] sm:$0xff]
  %v288 = vld [vmem:[%s1 + $0x880] sm:$0xff]
  %v289 = vld [vmem:[%s1 + $0x888] sm:$0xff]
  %v290 = vld [vmem:[%s1 + $0x890] sm:$0xff]
  %v291 = vld [vmem:[%s1 + $0x898] sm:$0xff]
  %v292 = vld [vmem:[%s1 + $0x8a0] sm:$0xff]
  %v293 = vld [vmem:[%s1 + $0x8a8] sm:$0xff]
  %v294 = vld [vmem:[%s1 + $0x8b0] sm:$0xff]
  %v295 = vld [vmem:[%s1 + $0x8b8] sm:$0xff]
  %v296 = vld [vmem:[%s1 + $0x8c0] sm:$0xff]
  %v297 = vld [vmem:[%s1 + $0x8c8] sm:$0xff]
  %v298 = vld [vmem:[%s1 + $0x8d0] sm:$0xff]
  %v299 = vld [vmem:[%s1 + $0x8d8] sm:$0xff]
  %v300 = vld [vmem:[%s1 + $0x8e0] sm:$0xff]
  %v301 = vld [vmem:[%s1 + $0x8e8] sm:$0xff]
  %v302 = vld [vmem:[%s1 + $0x8f0] sm:$0xff]
  %v303 = vld [vmem:[%s1 + $0x8f8] sm:$0xff]
  %v304 = vld [vmem:[%s1 + $0x900] sm:$0xff]
  %v305 = vld [vmem:[%s1 + $0x908] sm:$0xff]
  %v306 = vld [vmem:[%s1 + $0x910] sm:$0xff]
  %v307 = vld [vmem:[%s1 + $0x918] sm:$0xff]
  %v308 = vld [vmem:[%s1 + $0x920] sm:$0xff]
  %v309 = vld [vmem:[%s1 + $0x928] sm:$0xff]
  %v310 = vld [vmem:[%s1 + $0x930] sm:$0xff]
  %v311 = vld [vmem:[%s1 + $0x938] sm:$0xff]
  %v312 = vld [vmem:[%s1 + $0x940] sm:$0xff]
  %v313 = vld [vmem:[%s1 + $0x948] sm:$0xff]
  %v314 = vld [vmem:[%s1 + $0x950] sm:$0xff]
  %v315 = vld [vmem:[%s1 + $0x958] sm:$0xff]
  %v316 = vld [vmem:[%s1 + $0x960] sm:$0xff]
  %v317 = vld [vmem:[%s1 + $0x968] sm:$0xff]
  %v318 = vld [vmem:[%s1 + $0x970] sm:$0xff]
  %v319 = vld [vmem:[%s1 + $0x978] sm:$0xff]
  %v320 = vld [vmem:[%s1 + $0x980] sm:$0xff]
  %v321 = vld [vmem:[%s1 + $0x988] sm:$0xff]
  %v322 = vld [vmem:[%s1 + $0x990] sm:$0xff]
  %v323 = vld [vmem:[%s1 + $0x998] sm:$0xff]
  %v324 = vld [vmem:[%s1 + $0x9a0] sm:$0xff]
  %v325 = vld [vmem:[%s1 + $0x9a8] sm:$0xff]
  %v326 = vld [vmem:[%s1 + $0x9b0] sm:$0xff]
  %v327 = vld [vmem:[%s1 + $0x9b8] sm:$0xff]
  %v328 = vld [vmem:[%s1 + $0x9c0] sm:$0xff]
  %v329 = vld [vmem:[%s1 + $0x9c8] sm:$0xff]
  %v330 = vld [vmem:[%s1 + $0x9d0] sm:$0xff]
  %v331 = vld [vmem:[%s1 + $0x9d8] sm:$0xff]
  %v332 = vld [vmem:[%s1 + $0x9e0] sm:$0xff]
  %v333 = vld [vmem:[%s1 + $0x9e8] sm:$0xff]
  %v334 = vld [vmem:[%s1 + $0x9f0] sm:$0xff]
  %v335 = vld [vmem:[%s1 + $0x9f8] sm:$0xff]
  %v336 = vld [vmem:[%s1 + $0xa00] sm:$0xff]
  %v337 = vld [vmem:[%s1 + $0xa08] sm:$0xff]
  %v338 = vld [vmem:[%s1 + $0xa10] sm:$0xff]
  %v339 = vld [vmem:[%s1 + $0xa18] sm:$0xff]
  %v340 = vld [vmem:[%s1 + $0xa20] sm:$0xff]
  %v341 = vld [vmem:[%s1 + $0xa28] sm:$0xff]
  %v342 = vld [vmem:[%s1 + $0xa30] sm:$0xff]
  %v343 = vld [vmem:[%s1 + $0xa38] sm:$0xff]
  %v344 = vld [vmem:[%s1 + $0xa40] sm:$0xff]
  %v345 = vld [vmem:[%s1 + $0xa48] sm:$0xff]
  %v346 = vld [vmem:[%s1 + $0xa50] sm:$0xff]
  %v347 = vld [vmem:[%s1 + $0xa58] sm:$0xff]
  %v348 = vld [vmem:[%s1 + $0xa60] sm:$0xff]
  %v349 = vld [vmem:[%s1 + $0xa68] sm:$0xff]
  %v350 = vld [vmem:[%s1 + $0xa70] sm:$0xff]
  %v351 = vld [vmem:[%s1 + $0xa78] sm:$0xff]
  %v352 = vld [vmem:[%s1 + $0xa80] sm:$0xff]
  %v353 = vld [vmem:[%s1 + $0xa88] sm:$0xff]
  %v354 = vld [vmem:[%s1 + $0xa90] sm:$0xff]
  %v355 = vld [vmem:[%s1 + $0xa98] sm:$0xff]
  %v356 = vld [vmem:[%s1 + $0xaa0] sm:$0xff]
  %v357 = vld [vmem:[%s1 + $0xaa8] sm:$0xff]
  %v358 = vld [vmem:[%s1 + $0xab0] sm:$0xff]
  %v359 = vld [vmem:[%s1 + $0xab8] sm:$0xff]
  %v360 = vld [vmem:[%s1 + $0xac0] sm:$0xff]
  %v361 = vld [vmem:[%s1 + $0xac8] sm:$0xff]
  %v362 = vld [vmem:[%s1 + $0xad0] sm:$0xff]
  %v363 = vld [vmem:[%s1 + $0xad8] sm:$0xff]
  %v364 = vld [vmem:[%s1 + $0xae0] sm:$0xff]
  %v365 = vld [vmem:[%s1 + $0xae8] sm:$0xff]
  %v366 = vld [vmem:[%s1 + $0xaf0] sm:$0xff]
  %v367 = vld [vmem:[%s1 + $0xaf8] sm:$0xff]
  %v368 = vld [vmem:[%s1 + $0xb00] sm:$0xff]
  %v369 = vld [vmem:[%s1 + $0xb08] sm:$0xff]
  %v370 = vld [vmem:[%s1 + $0xb10] sm:$0xff]
  %v371 = vld [vmem:[%s1 + $0xb18] sm:$0xff]
  %v372 = vld [vmem:[%s1 + $0xb20] sm:$0xff]
  %v373 = vld [vmem:[%s1 + $0xb28] sm:$0xff]
  %v374 = vld [vmem:[%s1 + $0xb30] sm:$0xff]
  %v375 = vld [vmem:[%s1 + $0xb38] sm:$0xff]
  %v376 = vld [vmem:[%s1 + $0xb40] sm:$0xff]
  %v377 = vld [vmem:[%s1 + $0xb48] sm:$0xff]
  %v378 = vld [vmem:[%s1 + $0xb50] sm:$0xff]
  %v379 = vld [vmem:[%s1 + $0xb58] sm:$0xff]
  %v380 = vld [vmem:[%s1 + $0xb60] sm:$0xff]
  %v381 = vld [vmem:[%s1 + $0xb68] sm:$0xff]
  %v382 = vld [vmem:[%s1 + $0xb70] sm:$0xff]
  %v383 = vld [vmem:[%s1 + $0xb78] sm:$0xff]
  %v384 = vld [vmem:[%s1 + $0xb80] sm:$0xff]
  %v385 = vld [vmem:[%s1 + $0xb88] sm:$0xff]
  %v386 = vld [vmem:[%s1 + $0xb90] sm:$0xff]
  %v387 = vld [vmem:[%s1 + $0xb98] sm:$0xff]
  %v388 = vld [vmem:[%s1 + $0xba0] sm:$0xff]
  %v389 = vld [vmem:[%s1 + $0xba8] sm:$0xff]
  %v390 = vld [vmem:[%s1 + $0xbb0] sm:$0xff]
  %v391 = vld [vmem:[%s1 + $0xbb8] sm:$0xff]
  %v392 = vld [vmem:[%s1 + $0xbc0] sm:$0xff]
  %v393 = vld [vmem:[%s1 + $0xbc8] sm:$0xff]
  %v394 = vld [vmem:[%s1 + $0xbd0] sm:$0xff]
  %v395 = vld [vmem:[%s1 + $0xbd8] sm:$0xff]
  %v396 = vld [vmem:[%s1 + $0xbe0] sm:$0xff]
  %v397 = vld [vmem:[%s1 + $0xbe8] sm:$0xff]
  %v398 = vld [vmem:[%s1 + $0xbf0] sm:$0xff]
  %v399 = vld [vmem:[%s1 + $0xbf8] sm:$0xff]
  %v400 = vld [vmem:[%s1 + $0xc00] sm:$0xff]
  %v401 = vld [vmem:[%s1 + $0xc08] sm:$0xff]
  %v402 = vld [vmem:[%s1 + $0xc10] sm:$0xff]
  %v403 = vld [vmem:[%s1 + $0xc18] sm:$0xff]
  %v404 = vld [vmem:[%s1 + $0xc20] sm:$0xff]
  %v405 = vld [vmem:[%s1 + $0xc28] sm:$0xff]
  %v406 = vld [vmem:[%s1 + $0xc30] sm:$0xff]
  %v407 = vld [vmem:[%s1 + $0xc38] sm:$0xff]
  %v408 = vld [vmem:[%s1 + $0xc40] sm:$0xff]
  %v409 = vld [vmem:[%s1 + $0xc48] sm:$0xff]
  %v410 = vld [vmem:[%s1 + $0xc50] sm:$0xff]
  %v411 = vld [vmem:[%s1 + $0xc58] sm:$0xff]
  %v412 = vld [vmem:[%s1 + $0xc60] sm:$0xff]
  %v413 = vld [vmem:[%s1 + $0xc68] sm:$0xff]
  %v414 = vld [vmem:[%s1 + $0xc70] sm:$0xff]
  %v415 = vld [vmem:[%s1 + $0xc78] sm:$0xff]
  %v416 = vld [vmem:[%s1 + $0xc80] sm:$0xff]
  %v417 = vld [vmem:[%s1 + $0xc88] sm:$0xff]
  %v418 = vld [vmem:[%s1 + $0xc90] sm:$0xff]
  %v419 = vld [vmem:[%s1 + $0xc98] sm:$0xff]
  %v420 = vld [vmem:[%s1 + $0xca0] sm:$0xff]
  %v421 = vld [vmem:[%s1 + $0xca8] sm:$0xff]
  %v422 = vld [vmem:[%s1 + $0xcb0] sm:$0xff]
  %v423 = vld [vmem:[%s1 + $0xcb8] sm:$0xff]
  %v424 = vld [vmem:[%s1 + $0xcc0] sm:$0xff]
  %v425 = vld [vmem:[%s1 + $0xcc8] sm:$0xff]
  %v426 = vld [vmem:[%s1 + $0xcd0] sm:$0xff]
  %v427 = vld [vmem:[%s1 + $0xcd8] sm:$0xff]
  %v428 = vld [vmem:[%s1 + $0xce0] sm:$0xff]
  %v429 = vld [vmem:[%s1 + $0xce8] sm:$0xff]
  %v430 = vld [vmem:[%s1 + $0xcf0] sm:$0xff]
  %v431 = vld [vmem:[%s1 + $0xcf8] sm:$0xff]
  %v432 = vld [vmem:[%s1 + $0xd00] sm:$0xff]
  %v433 = vld [vmem:[%s1 + $0xd08] sm:$0xff]
  %v434 = vld [vmem:[%s1 + $0xd10] sm:$0xff]
  %v435 = vld [vmem:[%s1 + $0xd18] sm:$0xff]
  %v436 = vld [vmem:[%s1 + $0xd20] sm:$0xff]
  %v437 = vld [vmem:[%s1 + $0xd28] sm:$0xff]
  %v438 = vld [vmem:[%s1 + $0xd30] sm:$0xff]
  %v439 = vld [vmem:[%s1 + $0xd38] sm:$0xff]
  %v440 = vld [vmem:[%s1 + $0xd40] sm:$0xff]
  %v441 = vld [vmem:[%s1 + $0xd48] sm:$0xff]
  %v442 = vld [vmem:[%s1 + $0xd50] sm:$0xff]
  %v443 = vld [vmem:[%s1 + $0xd58] sm:$0xff]
  %v444 = vld [vmem:[%s1 + $0xd60] sm:$0xff]
  %v445 = vld [vmem:[%s1 + $0xd68] sm:$0xff]
  %v446 = vld [vmem:[%s1 + $0xd70] sm:$0xff]
  %v447 = vld [vmem:[%s1 + $0xd78] sm:$0xff]
  %v448 = vld [vmem:[%s1 + $0xd80] sm:$0xff]
  %v449 = vld [vmem:[%s1 + $0xd88] sm:$0xff]
  %v450 = vld [vmem:[%s1 + $0xd90] sm:$0xff]
  %v451 = vld [vmem:[%s1 + $0xd98] sm:$0xff]
  %v452 = vld [vmem:[%s1 + $0xda0] sm:$0xff]
  %v453 = vld [vmem:[%s1 + $0xda8] sm:$0xff]
  %v454 = vld [vmem:[%s1 + $0xdb0] sm:$0xff]
  %v455 = vld [vmem:[%s1 + $0xdb8] sm:$0xff]
  %v456 = vld [vmem:[%s1 + $0xdc0] sm:$0xff]
  %v457 = vld [vmem:[%s1 + $0xdc8] sm:$0xff]
  %v458 = vld [vmem:[%s1 + $0xdd0] sm:$0xff]
  %v459 = vld [vmem:[%s1 + $0xdd8] sm:$0xff]
  %v460 = vld [vmem:[%s1 + $0xde0] sm:$0xff]
  %v461 = vld [vmem:[%s1 + $0xde8] sm:$0xff]
  %v462 = vld [vmem:[%s1 + $0xdf0] sm:$0xff]
  %v463 = vld [vmem:[%s1 + $0xdf8] sm:$0xff]
  %v464 = vld [vmem:[%s1 + $0xe00] sm:$0xff]
  %v465 = vld [vmem:[%s1 + $0xe08] sm:$0xff]
  %v466 = vld [vmem:[%s1 + $0xe10] sm:$0xff]
  %v467 = vld [vmem:[%s1 + $0xe18] sm:$0xff]
  %v468 = vld [vmem:[%s1 + $0xe20] sm:$0xff]
  %v469 = vld [vmem:[%s1 + $0xe28] sm:$0xff]
  %v470 = vld [vmem:[%s1 + $0xe30] sm:$0xff]
  %v471 = vld [vmem:[%s1 + $0xe38] sm:$0xff]
  %v472 = vld [vmem:[%s1 + $0xe40] sm:$0xff]
  %v473 = vld [vmem:[%s1 + $0xe48] sm:$0xff]
  %v474 = vld [vmem:[%s1 + $0xe50] sm:$0xff]
  %v475 = vld [vmem:[%s1 + $0xe58] sm:$0xff]
  %v476 = vld [vmem:[%s1 + $0xe60] sm:$0xff]
  %v477 = vld [vmem:[%s1 + $0xe68] sm:$0xff]
  %v478 = vld [vmem:[%s1 + $0xe70] sm:$0xff]
  %v479 = vld [vmem:[%s1 + $0xe78] sm:$0xff]
  %v480 = vld [vmem:[%s1 + $0xe80] sm:$0xff]
  %v481 = vld [vmem:[%s1 + $0xe88] sm:$0xff]
  %v482 = vld [vmem:[%s1 + $0xe90] sm:$0xff]
  %v483 = vld [vmem:[%s1 + $0xe98] sm:$0xff]
  %v484 = vld [vmem:[%s1 + $0xea0] sm:$0xff]
  %v485 = vld [vmem:[%s1 + $0xea8] sm:$0xff]
  %v486 = vld [vmem:[%s1 + $0xeb0] sm:$0xff]
  %v487 = vld [vmem:[%s1 + $0xeb8] sm:$0xff]
  %v488 = vld [vmem:[%s1 + $0xec0] sm:$0xff]
  %v489 = vld [vmem:[%s1 + $0xec8] sm:$0xff]
  %v490 = vld [vmem:[%s1 + $0xed0] sm:$0xff]
  %v491 = vld [vmem:[%s1 + $0xed8] sm:$0xff]
  %v492 = vld [vmem:[%s1 + $0xee0] sm:$0xff]
  %v493 = vld [vmem:[%s1 + $0xee8] sm:$0xff]
  %v494 = vld [vmem:[%s1 + $0xef0] sm:$0xff]
  %v495 = vld [vmem:[%s1 + $0xef8] sm:$0xff]
  %v496 = vld [vmem:[%s1 + $0xf00] sm:$0xff]
  %v497 = vld [vmem:[%s1 + $0xf08] sm:$0xff]
  %v498 = vld [vmem:[%s1 + $0xf10] sm:$0xff]
  %v499 = vld [vmem:[%s1 + $0xf18] sm:$0xff]
  %v500 = vld [vmem:[%s1 + $0xf20] sm:$0xff]
  %v501 = vld [vmem:[%s1 + $0xf28] sm:$0xff]
  %v502 = vld [vmem:[%s1 + $0xf30] sm:$0xff]
  %v503 = vld [vmem:[%s1 + $0xf38] sm:$0xff]
  %v504 = vld [vmem:[%s1 + $0xf40] sm:$0xff]
  %v505 = vld [vmem:[%s1 + $0xf48] sm:$0xff]
  %v506 = vld [vmem:[%s1 + $0xf50] sm:$0xff]
  %v507 = vld [vmem:[%s1 + $0xf58] sm:$0xff]
  %v508 = vld [vmem:[%s1 + $0xf60] sm:$0xff]
  %v509 = vld [vmem:[%s1 + $0xf68] sm:$0xff]
  %v510 = vld [vmem:[%s1 + $0xf70] sm:$0xff]
  %v511 = vld [vmem:[%s1 + $0xf78] sm:$0xff]
  %v512 = vld [vmem:[%s1 + $0xf80] sm:$0xff]
  %v513 = vld [vmem:[%s1 + $0xf88] sm:$0xff]
  %v514 = vld [vmem:[%s1 + $0xf90] sm:$0xff]
  %v515 = vld [vmem:[%s1 + $0xf98] sm:$0xff]
  %v516 = vld [vmem:[%s1 + $0xfa0] sm:$0xff]
  %v517 = vld [vmem:[%s1 + $0xfa8] sm:$0xff]
  %v518 = vld [vmem:[%s1 + $0xfb0] sm:$0xff]
  %v519 = vld [vmem:[%s1 + $0xfb8] sm:$0xff]
  %v520 = vld [vmem:[%s1 + $0xfc0] sm:$0xff]
  %v521 = vld [vmem:[%s1 + $0xfc8] sm:$0xff]
  %v522 = vld [vmem:[%s1 + $0xfd0] sm:$0xff]
  %v523 = vld [vmem:[%s1 + $0xfd8] sm:$0xff]
  %v524 = vld [vmem:[%s1 + $0xfe0] sm:$0xff]
  %v525 = vld [vmem:[%s1 + $0xfe8] sm:$0xff]
  %v526 = vld [vmem:[%s1 + $0xff0] sm:$0xff]
  %v527 = vld [vmem:[%s1 + $0xff8] sm:$0xff]
  %v528 = vld [vmem:[%s2] sm:$0xf]
  %v530 = vlaneseq
  %v531 = vshrl.u32 %v530, 7
  %v532 = vsub.s32 0, %v531
  %v533 = vrot.slane %v528, %v532
  %v534 = vlaneseq
  %v535 = vshrl.u32 %v534, 7
  %v536 = vsub.s32 1, %v535
  %v537 = vrot.slane %v528, %v536
  %v538 = vlaneseq
  %v539 = vshrl.u32 %v538, 7
  %v540 = vsub.s32 2, %v539
  %v541 = vrot.slane %v528, %v540
  %v542 = vlaneseq
  %v543 = vshrl.u32 %v542, 7
  %v544 = vsub.s32 3, %v543
  %v545 = vrot.slane %v528, %v544
  %v552 = vcombine.high %v14, %v14
  %v554 = vunpack.c.l.s4 1966171168
  %v555 = vunpack.c.0.s8 %v554
  %v556 = vlaneseq
  %v557 = vshrl.u32 %v556, 7
  %v558 = vsub.s32 %v555, %v557
  %v559 = vrot.slane %v14, %v558
  %v561 = vunpack.c.l.s4 1966171168
  %v562 = vunpack.c.0.s8 %v561
  %v563 = vlaneseq
  %v564 = vshrl.u32 %v563, 7
  %v565 = vsub.s32 %v562, %v564
  %v566 = vrot.slane %v552, %v565
  %v567 = vcombine.high %v559, %v559
  %v568 = vcombine.high %v566, %v566
  %v570 = vunpack.c.l.s4 1966171168
  %v571 = vunpack.c.0.s8 %v570
  %v572 = vlaneseq
  %v573 = vshrl.u32 %v572, 7
  %v574 = vsub.s32 %v571, %v573
  %v575 = vrot.slane %v559, %v574
  %v577 = vunpack.c.l.s4 1966171168
  %v578 = vunpack.c.0.s8 %v577
  %v579 = vlaneseq
  %v580 = vshrl.u32 %v579, 7
  %v581 = vsub.s32 %v578, %v580
  %v582 = vrot.slane %v566, %v581
  %v584 = vunpack.c.l.s4 1966171168
  %v585 = vunpack.c.0.s8 %v584
  %v586 = vlaneseq
  %v587 = vshrl.u32 %v586, 7
  %v588 = vsub.s32 %v585, %v587
  %v589 = vrot.slane %v567, %v588
  %v591 = vunpack.c.l.s4 1966171168
  %v592 = vunpack.c.0.s8 %v591
  %v593 = vlaneseq
  %v594 = vshrl.u32 %v593, 7
  %v595 = vsub.s32 %v592, %v594
  %v596 = vrot.slane %v568, %v595
  %v597 = vcombine.high %v575, %v575
  %v598 = vcombine.high %v582, %v582
  %v599 = vcombine.high %v589, %v589
  %v600 = vcombine.high %v596, %v596
  %v601 = vcombine.high %v15, %v15
  %v603 = vunpack.c.l.s4 1966171168
  %v604 = vunpack.c.0.s8 %v603
  %v605 = vlaneseq
  %v606 = vshrl.u32 %v605, 7
  %v607 = vsub.s32 %v604, %v606
  %v608 = vrot.slane %v15, %v607
  %v610 = vunpack.c.l.s4 1966171168
  %v611 = vunpack.c.0.s8 %v610
  %v612 = vlaneseq
  %v613 = vshrl.u32 %v612, 7
  %v614 = vsub.s32 %v611, %v613
  %v615 = vrot.slane %v601, %v614
  %v616 = vcombine.high %v608, %v608
  %v617 = vcombine.high %v615, %v615
  %v619 = vunpack.c.l.s4 1966171168
  %v620 = vunpack.c.0.s8 %v619
  %v621 = vlaneseq
  %v622 = vshrl.u32 %v621, 7
  %v623 = vsub.s32 %v620, %v622
  %v624 = vrot.slane %v608, %v623
  %v626 = vunpack.c.l.s4 1966171168
  %v627 = vunpack.c.0.s8 %v626
  %v628 = vlaneseq
  %v629 = vshrl.u32 %v628, 7
  %v630 = vsub.s32 %v627, %v629
  %v631 = vrot.slane %v615, %v630
  %v633 = vunpack.c.l.s4 1966171168
  %v634 = vunpack.c.0.s8 %v633
  %v635 = vlaneseq
  %v636 = vshrl.u32 %v635, 7
  %v637 = vsub.s32 %v634, %v636
  %v638 = vrot.slane %v616, %v637
  %v640 = vunpack.c.l.s4 1966171168
  %v641 = vunpack.c.0.s8 %v640
  %v642 = vlaneseq
  %v643 = vshrl.u32 %v642, 7
  %v644 = vsub.s32 %v641, %v643
  %v645 = vrot.slane %v617, %v644
  %v646 = vcombine.high %v624, %v624
  %v647 = vcombine.high %v631, %v631
  %v648 = vcombine.high %v638, %v638
  %v649 = vcombine.high %v645, %v645
  %v1178 = vunpack.c.l.b16 %v16
  %v1179 = vunpack.c.h.b16 %v16
  %v1180 = vunpack.c.l.b16 %v17
  %v1181 = vunpack.c.h.b16 %v17
  %v1182 = vunpack.c.l.b16 %v18
  %v1183 = vunpack.c.h.b16 %v18
  %v1184 = vunpack.c.l.b16 %v19
  %v1185 = vunpack.c.h.b16 %v19
  %v1186 = vunpack.c.l.b16 %v20
  %v1187 = vunpack.c.h.b16 %v20
  %v1188 = vunpack.c.l.b16 %v21
  %v1189 = vunpack.c.h.b16 %v21
  %v1190 = vunpack.c.l.b16 %v22
  %v1191 = vunpack.c.h.b16 %v22
  %v1192 = vunpack.c.l.b16 %v23
  %v1193 = vunpack.c.h.b16 %v23
  %v1194 = vunpack.c.l.b16 %v24
  %v1195 = vunpack.c.h.b16 %v24
  %v1196 = vunpack.c.l.b16 %v25
  %v1197 = vunpack.c.h.b16 %v25
  %v1198 = vunpack.c.l.b16 %v26
  %v1199 = vunpack.c.h.b16 %v26
  %v1200 = vunpack.c.l.b16 %v27
  %v1201 = vunpack.c.h.b16 %v27
  %v1202 = vunpack.c.l.b16 %v28
  %v1203 = vunpack.c.h.b16 %v28
  %v1204 = vunpack.c.l.b16 %v29
  %v1205 = vunpack.c.h.b16 %v29
  %v1206 = vunpack.c.l.b16 %v30
  %v1207 = vunpack.c.h.b16 %v30
  %v1208 = vunpack.c.l.b16 %v31
  %v1209 = vunpack.c.h.b16 %v31
  %v1210 = vunpack.c.l.b16 %v32
  %v1211 = vunpack.c.h.b16 %v32
  %v1212 = vunpack.c.l.b16 %v33
  %v1213 = vunpack.c.h.b16 %v33
  %v1214 = vunpack.c.l.b16 %v34
  %v1215 = vunpack.c.h.b16 %v34
  %v1216 = vunpack.c.l.b16 %v35
  %v1217 = vunpack.c.h.b16 %v35
  %v1218 = vunpack.c.l.b16 %v36
  %v1219 = vunpack.c.h.b16 %v36
  %v1220 = vunpack.c.l.b16 %v37
  %v1221 = vunpack.c.h.b16 %v37
  %v1222 = vunpack.c.l.b16 %v38
  %v1223 = vunpack.c.h.b16 %v38
  %v1224 = vunpack.c.l.b16 %v39
  %v1225 = vunpack.c.h.b16 %v39
  %v1226 = vunpack.c.l.b16 %v40
  %v1227 = vunpack.c.h.b16 %v40
  %v1228 = vunpack.c.l.b16 %v41
  %v1229 = vunpack.c.h.b16 %v41
  %v1230 = vunpack.c.l.b16 %v42
  %v1231 = vunpack.c.h.b16 %v42
  %v1232 = vunpack.c.l.b16 %v43
  %v1233 = vunpack.c.h.b16 %v43
  %v1234 = vunpack.c.l.b16 %v44
  %v1235 = vunpack.c.h.b16 %v44
  %v1236 = vunpack.c.l.b16 %v45
  %v1237 = vunpack.c.h.b16 %v45
  %v1238 = vunpack.c.l.b16 %v46
  %v1239 = vunpack.c.h.b16 %v46
  %v1240 = vunpack.c.l.b16 %v47
  %v1241 = vunpack.c.h.b16 %v47
  %v1242 = vunpack.c.l.b16 %v48
  %v1243 = vunpack.c.h.b16 %v48
  %v1244 = vunpack.c.l.b16 %v49
  %v1245 = vunpack.c.h.b16 %v49
  %v1246 = vunpack.c.l.b16 %v50
  %v1247 = vunpack.c.h.b16 %v50
  %v1248 = vunpack.c.l.b16 %v51
  %v1249 = vunpack.c.h.b16 %v51
  %v1250 = vunpack.c.l.b16 %v52
  %v1251 = vunpack.c.h.b16 %v52
  %v1252 = vunpack.c.l.b16 %v53
  %v1253 = vunpack.c.h.b16 %v53
  %v1254 = vunpack.c.l.b16 %v54
  %v1255 = vunpack.c.h.b16 %v54
  %v1256 = vunpack.c.l.b16 %v55
  %v1257 = vunpack.c.h.b16 %v55
  %v1258 = vunpack.c.l.b16 %v56
  %v1259 = vunpack.c.h.b16 %v56
  %v1260 = vunpack.c.l.b16 %v57
  %v1261 = vunpack.c.h.b16 %v57
  %v1262 = vunpack.c.l.b16 %v58
  %v1263 = vunpack.c.h.b16 %v58
  %v1264 = vunpack.c.l.b16 %v59
  %v1265 = vunpack.c.h.b16 %v59
  %v1266 = vunpack.c.l.b16 %v60
  %v1267 = vunpack.c.h.b16 %v60
  %v1268 = vunpack.c.l.b16 %v61
  %v1269 = vunpack.c.h.b16 %v61
  %v1270 = vunpack.c.l.b16 %v62
  %v1271 = vunpack.c.h.b16 %v62
  %v1272 = vunpack.c.l.b16 %v63
  %v1273 = vunpack.c.h.b16 %v63
  %v1274 = vunpack.c.l.b16 %v64
  %v1275 = vunpack.c.h.b16 %v64
  %v1276 = vunpack.c.l.b16 %v65
  %v1277 = vunpack.c.h.b16 %v65
  %v1278 = vunpack.c.l.b16 %v66
  %v1279 = vunpack.c.h.b16 %v66
  %v1280 = vunpack.c.l.b16 %v67
  %v1281 = vunpack.c.h.b16 %v67
  %v1282 = vunpack.c.l.b16 %v68
  %v1283 = vunpack.c.h.b16 %v68
  %v1284 = vunpack.c.l.b16 %v69
  %v1285 = vunpack.c.h.b16 %v69
  %v1286 = vunpack.c.l.b16 %v70
  %v1287 = vunpack.c.h.b16 %v70
  %v1288 = vunpack.c.l.b16 %v71
  %v1289 = vunpack.c.h.b16 %v71
  %v1290 = vunpack.c.l.b16 %v72
  %v1291 = vunpack.c.h.b16 %v72
  %v1292 = vunpack.c.l.b16 %v73
  %v1293 = vunpack.c.h.b16 %v73
  %v1294 = vunpack.c.l.b16 %v74
  %v1295 = vunpack.c.h.b16 %v74
  %v1296 = vunpack.c.l.b16 %v75
  %v1297 = vunpack.c.h.b16 %v75
  %v1298 = vunpack.c.l.b16 %v76
  %v1299 = vunpack.c.h.b16 %v76
  %v1300 = vunpack.c.l.b16 %v77
  %v1301 = vunpack.c.h.b16 %v77
  %v1302 = vunpack.c.l.b16 %v78
  %v1303 = vunpack.c.h.b16 %v78
  %v1304 = vunpack.c.l.b16 %v79
  %v1305 = vunpack.c.h.b16 %v79
  %v1306 = vunpack.c.l.b16 %v80
  %v1307 = vunpack.c.h.b16 %v80
  %v1308 = vunpack.c.l.b16 %v81
  %v1309 = vunpack.c.h.b16 %v81
  %v1310 = vunpack.c.l.b16 %v82
  %v1311 = vunpack.c.h.b16 %v82
  %v1312 = vunpack.c.l.b16 %v83
  %v1313 = vunpack.c.h.b16 %v83
  %v1314 = vunpack.c.l.b16 %v84
  %v1315 = vunpack.c.h.b16 %v84
  %v1316 = vunpack.c.l.b16 %v85
  %v1317 = vunpack.c.h.b16 %v85
  %v1318 = vunpack.c.l.b16 %v86
  %v1319 = vunpack.c.h.b16 %v86
  %v1320 = vunpack.c.l.b16 %v87
  %v1321 = vunpack.c.h.b16 %v87
  %v1322 = vunpack.c.l.b16 %v88
  %v1323 = vunpack.c.h.b16 %v88
  %v1324 = vunpack.c.l.b16 %v89
  %v1325 = vunpack.c.h.b16 %v89
  %v1326 = vunpack.c.l.b16 %v90
  %v1327 = vunpack.c.h.b16 %v90
  %v1328 = vunpack.c.l.b16 %v91
  %v1329 = vunpack.c.h.b16 %v91
  %v1330 = vunpack.c.l.b16 %v92
  %v1331 = vunpack.c.h.b16 %v92
  %v1332 = vunpack.c.l.b16 %v93
  %v1333 = vunpack.c.h.b16 %v93
  %v1334 = vunpack.c.l.b16 %v94
  %v1335 = vunpack.c.h.b16 %v94
  %v1336 = vunpack.c.l.b16 %v95
  %v1337 = vunpack.c.h.b16 %v95
  %v1338 = vunpack.c.l.b16 %v96
  %v1339 = vunpack.c.h.b16 %v96
  %v1340 = vunpack.c.l.b16 %v97
  %v1341 = vunpack.c.h.b16 %v97
  %v1342 = vunpack.c.l.b16 %v98
  %v1343 = vunpack.c.h.b16 %v98
  %v1344 = vunpack.c.l.b16 %v99
  %v1345 = vunpack.c.h.b16 %v99
  %v1346 = vunpack.c.l.b16 %v100
  %v1347 = vunpack.c.h.b16 %v100
  %v1348 = vunpack.c.l.b16 %v101
  %v1349 = vunpack.c.h.b16 %v101
  %v1350 = vunpack.c.l.b16 %v102
  %v1351 = vunpack.c.h.b16 %v102
  %v1352 = vunpack.c.l.b16 %v103
  %v1353 = vunpack.c.h.b16 %v103
  %v1354 = vunpack.c.l.b16 %v104
  %v1355 = vunpack.c.h.b16 %v104
  %v1356 = vunpack.c.l.b16 %v105
  %v1357 = vunpack.c.h.b16 %v105
  %v1358 = vunpack.c.l.b16 %v106
  %v1359 = vunpack.c.h.b16 %v106
  %v1360 = vunpack.c.l.b16 %v107
  %v1361 = vunpack.c.h.b16 %v107
  %v1362 = vunpack.c.l.b16 %v108
  %v1363 = vunpack.c.h.b16 %v108
  %v1364 = vunpack.c.l.b16 %v109
  %v1365 = vunpack.c.h.b16 %v109
  %v1366 = vunpack.c.l.b16 %v110
  %v1367 = vunpack.c.h.b16 %v110
  %v1368 = vunpack.c.l.b16 %v111
  %v1369 = vunpack.c.h.b16 %v111
  %v1370 = vunpack.c.l.b16 %v112
  %v1371 = vunpack.c.h.b16 %v112
  %v1372 = vunpack.c.l.b16 %v113
  %v1373 = vunpack.c.h.b16 %v113
  %v1374 = vunpack.c.l.b16 %v114
  %v1375 = vunpack.c.h.b16 %v114
  %v1376 = vunpack.c.l.b16 %v115
  %v1377 = vunpack.c.h.b16 %v115
  %v1378 = vunpack.c.l.b16 %v116
  %v1379 = vunpack.c.h.b16 %v116
  %v1380 = vunpack.c.l.b16 %v117
  %v1381 = vunpack.c.h.b16 %v117
  %v1382 = vunpack.c.l.b16 %v118
  %v1383 = vunpack.c.h.b16 %v118
  %v1384 = vunpack.c.l.b16 %v119
  %v1385 = vunpack.c.h.b16 %v119
  %v1386 = vunpack.c.l.b16 %v120
  %v1387 = vunpack.c.h.b16 %v120
  %v1388 = vunpack.c.l.b16 %v121
  %v1389 = vunpack.c.h.b16 %v121
  %v1390 = vunpack.c.l.b16 %v122
  %v1391 = vunpack.c.h.b16 %v122
  %v1392 = vunpack.c.l.b16 %v123
  %v1393 = vunpack.c.h.b16 %v123
  %v1394 = vunpack.c.l.b16 %v124
  %v1395 = vunpack.c.h.b16 %v124
  %v1396 = vunpack.c.l.b16 %v125
  %v1397 = vunpack.c.h.b16 %v125
  %v1398 = vunpack.c.l.b16 %v126
  %v1399 = vunpack.c.h.b16 %v126
  %v1400 = vunpack.c.l.b16 %v127
  %v1401 = vunpack.c.h.b16 %v127
  %v1402 = vunpack.c.l.b16 %v128
  %v1403 = vunpack.c.h.b16 %v128
  %v1404 = vunpack.c.l.b16 %v129
  %v1405 = vunpack.c.h.b16 %v129
  %v1406 = vunpack.c.l.b16 %v130
  %v1407 = vunpack.c.h.b16 %v130
  %v1408 = vunpack.c.l.b16 %v131
  %v1409 = vunpack.c.h.b16 %v131
  %v1410 = vunpack.c.l.b16 %v132
  %v1411 = vunpack.c.h.b16 %v132
  %v1412 = vunpack.c.l.b16 %v133
  %v1413 = vunpack.c.h.b16 %v133
  %v1414 = vunpack.c.l.b16 %v134
  %v1415 = vunpack.c.h.b16 %v134
  %v1416 = vunpack.c.l.b16 %v135
  %v1417 = vunpack.c.h.b16 %v135
  %v1418 = vunpack.c.l.b16 %v136
  %v1419 = vunpack.c.h.b16 %v136
  %v1420 = vunpack.c.l.b16 %v137
  %v1421 = vunpack.c.h.b16 %v137
  %v1422 = vunpack.c.l.b16 %v138
  %v1423 = vunpack.c.h.b16 %v138
  %v1424 = vunpack.c.l.b16 %v139
  %v1425 = vunpack.c.h.b16 %v139
  %v1426 = vunpack.c.l.b16 %v140
  %v1427 = vunpack.c.h.b16 %v140
  %v1428 = vunpack.c.l.b16 %v141
  %v1429 = vunpack.c.h.b16 %v141
  %v1430 = vunpack.c.l.b16 %v142
  %v1431 = vunpack.c.h.b16 %v142
  %v1432 = vunpack.c.l.b16 %v143
  %v1433 = vunpack.c.h.b16 %v143
  %v1434 = vunpack.c.l.b16 %v144
  %v1435 = vunpack.c.h.b16 %v144
  %v1436 = vunpack.c.l.b16 %v145
  %v1437 = vunpack.c.h.b16 %v145
  %v1438 = vunpack.c.l.b16 %v146
  %v1439 = vunpack.c.h.b16 %v146
  %v1440 = vunpack.c.l.b16 %v147
  %v1441 = vunpack.c.h.b16 %v147
  %v1442 = vunpack.c.l.b16 %v148
  %v1443 = vunpack.c.h.b16 %v148
  %v1444 = vunpack.c.l.b16 %v149
  %v1445 = vunpack.c.h.b16 %v149
  %v1446 = vunpack.c.l.b16 %v150
  %v1447 = vunpack.c.h.b16 %v150
  %v1448 = vunpack.c.l.b16 %v151
  %v1449 = vunpack.c.h.b16 %v151
  %v1450 = vunpack.c.l.b16 %v152
  %v1451 = vunpack.c.h.b16 %v152
  %v1452 = vunpack.c.l.b16 %v153
  %v1453 = vunpack.c.h.b16 %v153
  %v1454 = vunpack.c.l.b16 %v154
  %v1455 = vunpack.c.h.b16 %v154
  %v1456 = vunpack.c.l.b16 %v155
  %v1457 = vunpack.c.h.b16 %v155
  %v1458 = vunpack.c.l.b16 %v156
  %v1459 = vunpack.c.h.b16 %v156
  %v1460 = vunpack.c.l.b16 %v157
  %v1461 = vunpack.c.h.b16 %v157
  %v1462 = vunpack.c.l.b16 %v158
  %v1463 = vunpack.c.h.b16 %v158
  %v1464 = vunpack.c.l.b16 %v159
  %v1465 = vunpack.c.h.b16 %v159
  %v1466 = vunpack.c.l.b16 %v160
  %v1467 = vunpack.c.h.b16 %v160
  %v1468 = vunpack.c.l.b16 %v161
  %v1469 = vunpack.c.h.b16 %v161
  %v1470 = vunpack.c.l.b16 %v162
  %v1471 = vunpack.c.h.b16 %v162
  %v1472 = vunpack.c.l.b16 %v163
  %v1473 = vunpack.c.h.b16 %v163
  %v1474 = vunpack.c.l.b16 %v164
  %v1475 = vunpack.c.h.b16 %v164
  %v1476 = vunpack.c.l.b16 %v165
  %v1477 = vunpack.c.h.b16 %v165
  %v1478 = vunpack.c.l.b16 %v166
  %v1479 = vunpack.c.h.b16 %v166
  %v1480 = vunpack.c.l.b16 %v167
  %v1481 = vunpack.c.h.b16 %v167
  %v1482 = vunpack.c.l.b16 %v168
  %v1483 = vunpack.c.h.b16 %v168
  %v1484 = vunpack.c.l.b16 %v169
  %v1485 = vunpack.c.h.b16 %v169
  %v1486 = vunpack.c.l.b16 %v170
  %v1487 = vunpack.c.h.b16 %v170
  %v1488 = vunpack.c.l.b16 %v171
  %v1489 = vunpack.c.h.b16 %v171
  %v1490 = vunpack.c.l.b16 %v172
  %v1491 = vunpack.c.h.b16 %v172
  %v1492 = vunpack.c.l.b16 %v173
  %v1493 = vunpack.c.h.b16 %v173
  %v1494 = vunpack.c.l.b16 %v174
  %v1495 = vunpack.c.h.b16 %v174
  %v1496 = vunpack.c.l.b16 %v175
  %v1497 = vunpack.c.h.b16 %v175
  %v1498 = vunpack.c.l.b16 %v176
  %v1499 = vunpack.c.h.b16 %v176
  %v1500 = vunpack.c.l.b16 %v177
  %v1501 = vunpack.c.h.b16 %v177
  %v1502 = vunpack.c.l.b16 %v178
  %v1503 = vunpack.c.h.b16 %v178
  %v1504 = vunpack.c.l.b16 %v179
  %v1505 = vunpack.c.h.b16 %v179
  %v1506 = vunpack.c.l.b16 %v180
  %v1507 = vunpack.c.h.b16 %v180
  %v1508 = vunpack.c.l.b16 %v181
  %v1509 = vunpack.c.h.b16 %v181
  %v1510 = vunpack.c.l.b16 %v182
  %v1511 = vunpack.c.h.b16 %v182
  %v1512 = vunpack.c.l.b16 %v183
  %v1513 = vunpack.c.h.b16 %v183
  %v1514 = vunpack.c.l.b16 %v184
  %v1515 = vunpack.c.h.b16 %v184
  %v1516 = vunpack.c.l.b16 %v185
  %v1517 = vunpack.c.h.b16 %v185
  %v1518 = vunpack.c.l.b16 %v186
  %v1519 = vunpack.c.h.b16 %v186
  %v1520 = vunpack.c.l.b16 %v187
  %v1521 = vunpack.c.h.b16 %v187
  %v1522 = vunpack.c.l.b16 %v188
  %v1523 = vunpack.c.h.b16 %v188
  %v1524 = vunpack.c.l.b16 %v189
  %v1525 = vunpack.c.h.b16 %v189
  %v1526 = vunpack.c.l.b16 %v190
  %v1527 = vunpack.c.h.b16 %v190
  %v1528 = vunpack.c.l.b16 %v191
  %v1529 = vunpack.c.h.b16 %v191
  %v1530 = vunpack.c.l.b16 %v192
  %v1531 = vunpack.c.h.b16 %v192
  %v1532 = vunpack.c.l.b16 %v193
  %v1533 = vunpack.c.h.b16 %v193
  %v1534 = vunpack.c.l.b16 %v194
  %v1535 = vunpack.c.h.b16 %v194
  %v1536 = vunpack.c.l.b16 %v195
  %v1537 = vunpack.c.h.b16 %v195
  %v1538 = vunpack.c.l.b16 %v196
  %v1539 = vunpack.c.h.b16 %v196
  %v1540 = vunpack.c.l.b16 %v197
  %v1541 = vunpack.c.h.b16 %v197
  %v1542 = vunpack.c.l.b16 %v198
  %v1543 = vunpack.c.h.b16 %v198
  %v1544 = vunpack.c.l.b16 %v199
  %v1545 = vunpack.c.h.b16 %v199
  %v1546 = vunpack.c.l.b16 %v200
  %v1547 = vunpack.c.h.b16 %v200
  %v1548 = vunpack.c.l.b16 %v201
  %v1549 = vunpack.c.h.b16 %v201
  %v1550 = vunpack.c.l.b16 %v202
  %v1551 = vunpack.c.h.b16 %v202
  %v1552 = vunpack.c.l.b16 %v203
  %v1553 = vunpack.c.h.b16 %v203
  %v1554 = vunpack.c.l.b16 %v204
  %v1555 = vunpack.c.h.b16 %v204
  %v1556 = vunpack.c.l.b16 %v205
  %v1557 = vunpack.c.h.b16 %v205
  %v1558 = vunpack.c.l.b16 %v206
  %v1559 = vunpack.c.h.b16 %v206
  %v1560 = vunpack.c.l.b16 %v207
  %v1561 = vunpack.c.h.b16 %v207
  %v1562 = vunpack.c.l.b16 %v208
  %v1563 = vunpack.c.h.b16 %v208
  %v1564 = vunpack.c.l.b16 %v209
  %v1565 = vunpack.c.h.b16 %v209
  %v1566 = vunpack.c.l.b16 %v210
  %v1567 = vunpack.c.h.b16 %v210
  %v1568 = vunpack.c.l.b16 %v211
  %v1569 = vunpack.c.h.b16 %v211
  %v1570 = vunpack.c.l.b16 %v212
  %v1571 = vunpack.c.h.b16 %v212
  %v1572 = vunpack.c.l.b16 %v213
  %v1573 = vunpack.c.h.b16 %v213
  %v1574 = vunpack.c.l.b16 %v214
  %v1575 = vunpack.c.h.b16 %v214
  %v1576 = vunpack.c.l.b16 %v215
  %v1577 = vunpack.c.h.b16 %v215
  %v1578 = vunpack.c.l.b16 %v216
  %v1579 = vunpack.c.h.b16 %v216
  %v1580 = vunpack.c.l.b16 %v217
  %v1581 = vunpack.c.h.b16 %v217
  %v1582 = vunpack.c.l.b16 %v218
  %v1583 = vunpack.c.h.b16 %v218
  %v1584 = vunpack.c.l.b16 %v219
  %v1585 = vunpack.c.h.b16 %v219
  %v1586 = vunpack.c.l.b16 %v220
  %v1587 = vunpack.c.h.b16 %v220
  %v1588 = vunpack.c.l.b16 %v221
  %v1589 = vunpack.c.h.b16 %v221
  %v1590 = vunpack.c.l.b16 %v222
  %v1591 = vunpack.c.h.b16 %v222
  %v1592 = vunpack.c.l.b16 %v223
  %v1593 = vunpack.c.h.b16 %v223
  %v1594 = vunpack.c.l.b16 %v224
  %v1595 = vunpack.c.h.b16 %v224
  %v1596 = vunpack.c.l.b16 %v225
  %v1597 = vunpack.c.h.b16 %v225
  %v1598 = vunpack.c.l.b16 %v226
  %v1599 = vunpack.c.h.b16 %v226
  %v1600 = vunpack.c.l.b16 %v227
  %v1601 = vunpack.c.h.b16 %v227
  %v1602 = vunpack.c.l.b16 %v228
  %v1603 = vunpack.c.h.b16 %v228
  %v1604 = vunpack.c.l.b16 %v229
  %v1605 = vunpack.c.h.b16 %v229
  %v1606 = vunpack.c.l.b16 %v230
  %v1607 = vunpack.c.h.b16 %v230
  %v1608 = vunpack.c.l.b16 %v231
  %v1609 = vunpack.c.h.b16 %v231
  %v1610 = vunpack.c.l.b16 %v232
  %v1611 = vunpack.c.h.b16 %v232
  %v1612 = vunpack.c.l.b16 %v233
  %v1613 = vunpack.c.h.b16 %v233
  %v1614 = vunpack.c.l.b16 %v234
  %v1615 = vunpack.c.h.b16 %v234
  %v1616 = vunpack.c.l.b16 %v235
  %v1617 = vunpack.c.h.b16 %v235
  %v1618 = vunpack.c.l.b16 %v236
  %v1619 = vunpack.c.h.b16 %v236
  %v1620 = vunpack.c.l.b16 %v237
  %v1621 = vunpack.c.h.b16 %v237
  %v1622 = vunpack.c.l.b16 %v238
  %v1623 = vunpack.c.h.b16 %v238
  %v1624 = vunpack.c.l.b16 %v239
  %v1625 = vunpack.c.h.b16 %v239
  %v1626 = vunpack.c.l.b16 %v240
  %v1627 = vunpack.c.h.b16 %v240
  %v1628 = vunpack.c.l.b16 %v241
  %v1629 = vunpack.c.h.b16 %v241
  %v1630 = vunpack.c.l.b16 %v242
  %v1631 = vunpack.c.h.b16 %v242
  %v1632 = vunpack.c.l.b16 %v243
  %v1633 = vunpack.c.h.b16 %v243
  %v1634 = vunpack.c.l.b16 %v244
  %v1635 = vunpack.c.h.b16 %v244
  %v1636 = vunpack.c.l.b16 %v245
  %v1637 = vunpack.c.h.b16 %v245
  %v1638 = vunpack.c.l.b16 %v246
  %v1639 = vunpack.c.h.b16 %v246
  %v1640 = vunpack.c.l.b16 %v247
  %v1641 = vunpack.c.h.b16 %v247
  %v1642 = vunpack.c.l.b16 %v248
  %v1643 = vunpack.c.h.b16 %v248
  %v1644 = vunpack.c.l.b16 %v249
  %v1645 = vunpack.c.h.b16 %v249
  %v1646 = vunpack.c.l.b16 %v250
  %v1647 = vunpack.c.h.b16 %v250
  %v1648 = vunpack.c.l.b16 %v251
  %v1649 = vunpack.c.h.b16 %v251
  %v1650 = vunpack.c.l.b16 %v252
  %v1651 = vunpack.c.h.b16 %v252
  %v1652 = vunpack.c.l.b16 %v253
  %v1653 = vunpack.c.h.b16 %v253
  %v1654 = vunpack.c.l.b16 %v254
  %v1655 = vunpack.c.h.b16 %v254
  %v1656 = vunpack.c.l.b16 %v255
  %v1657 = vunpack.c.h.b16 %v255
  %v1658 = vunpack.c.l.b16 %v256
  %v1659 = vunpack.c.h.b16 %v256
  %v1660 = vunpack.c.l.b16 %v257
  %v1661 = vunpack.c.h.b16 %v257
  %v1662 = vunpack.c.l.b16 %v258
  %v1663 = vunpack.c.h.b16 %v258
  %v1664 = vunpack.c.l.b16 %v259
  %v1665 = vunpack.c.h.b16 %v259
  %v1666 = vunpack.c.l.b16 %v260
  %v1667 = vunpack.c.h.b16 %v260
  %v1668 = vunpack.c.l.b16 %v261
  %v1669 = vunpack.c.h.b16 %v261
  %v1670 = vunpack.c.l.b16 %v262
  %v1671 = vunpack.c.h.b16 %v262
  %v1672 = vunpack.c.l.b16 %v263
  %v1673 = vunpack.c.h.b16 %v263
  %v1674 = vunpack.c.l.b16 %v264
  %v1675 = vunpack.c.h.b16 %v264
  %v1676 = vunpack.c.l.b16 %v265
  %v1677 = vunpack.c.h.b16 %v265
  %v1678 = vunpack.c.l.b16 %v266
  %v1679 = vunpack.c.h.b16 %v266
  %v1680 = vunpack.c.l.b16 %v267
  %v1681 = vunpack.c.h.b16 %v267
  %v1682 = vunpack.c.l.b16 %v268
  %v1683 = vunpack.c.h.b16 %v268
  %v1684 = vunpack.c.l.b16 %v269
  %v1685 = vunpack.c.h.b16 %v269
  %v1686 = vunpack.c.l.b16 %v270
  %v1687 = vunpack.c.h.b16 %v270
  %v1688 = vunpack.c.l.b16 %v271
  %v1689 = vunpack.c.h.b16 %v271
  %v1690 = vunpack.c.l.b16 %v272
  %v1691 = vunpack.c.h.b16 %v272
  %v1692 = vunpack.c.l.b16 %v273
  %v1693 = vunpack.c.h.b16 %v273
  %v1694 = vunpack.c.l.b16 %v274
  %v1695 = vunpack.c.h.b16 %v274
  %v1696 = vunpack.c.l.b16 %v275
  %v1697 = vunpack.c.h.b16 %v275
  %v1698 = vunpack.c.l.b16 %v276
  %v1699 = vunpack.c.h.b16 %v276
  %v1700 = vunpack.c.l.b16 %v277
  %v1701 = vunpack.c.h.b16 %v277
  %v1702 = vunpack.c.l.b16 %v278
  %v1703 = vunpack.c.h.b16 %v278
  %v1704 = vunpack.c.l.b16 %v279
  %v1705 = vunpack.c.h.b16 %v279
  %v1706 = vunpack.c.l.b16 %v280
  %v1707 = vunpack.c.h.b16 %v280
  %v1708 = vunpack.c.l.b16 %v281
  %v1709 = vunpack.c.h.b16 %v281
  %v1710 = vunpack.c.l.b16 %v282
  %v1711 = vunpack.c.h.b16 %v282
  %v1712 = vunpack.c.l.b16 %v283
  %v1713 = vunpack.c.h.b16 %v283
  %v1714 = vunpack.c.l.b16 %v284
  %v1715 = vunpack.c.h.b16 %v284
  %v1716 = vunpack.c.l.b16 %v285
  %v1717 = vunpack.c.h.b16 %v285
  %v1718 = vunpack.c.l.b16 %v286
  %v1719 = vunpack.c.h.b16 %v286
  %v1720 = vunpack.c.l.b16 %v287
  %v1721 = vunpack.c.h.b16 %v287
  %v1722 = vunpack.c.l.b16 %v288
  %v1723 = vunpack.c.h.b16 %v288
  %v1724 = vunpack.c.l.b16 %v289
  %v1725 = vunpack.c.h.b16 %v289
  %v1726 = vunpack.c.l.b16 %v290
  %v1727 = vunpack.c.h.b16 %v290
  %v1728 = vunpack.c.l.b16 %v291
  %v1729 = vunpack.c.h.b16 %v291
  %v1730 = vunpack.c.l.b16 %v292
  %v1731 = vunpack.c.h.b16 %v292
  %v1732 = vunpack.c.l.b16 %v293
  %v1733 = vunpack.c.h.b16 %v293
  %v1734 = vunpack.c.l.b16 %v294
  %v1735 = vunpack.c.h.b16 %v294
  %v1736 = vunpack.c.l.b16 %v295
  %v1737 = vunpack.c.h.b16 %v295
  %v1738 = vunpack.c.l.b16 %v296
  %v1739 = vunpack.c.h.b16 %v296
  %v1740 = vunpack.c.l.b16 %v297
  %v1741 = vunpack.c.h.b16 %v297
  %v1742 = vunpack.c.l.b16 %v298
  %v1743 = vunpack.c.h.b16 %v298
  %v1744 = vunpack.c.l.b16 %v299
  %v1745 = vunpack.c.h.b16 %v299
  %v1746 = vunpack.c.l.b16 %v300
  %v1747 = vunpack.c.h.b16 %v300
  %v1748 = vunpack.c.l.b16 %v301
  %v1749 = vunpack.c.h.b16 %v301
  %v1750 = vunpack.c.l.b16 %v302
  %v1751 = vunpack.c.h.b16 %v302
  %v1752 = vunpack.c.l.b16 %v303
  %v1753 = vunpack.c.h.b16 %v303
  %v1754 = vunpack.c.l.b16 %v304
  %v1755 = vunpack.c.h.b16 %v304
  %v1756 = vunpack.c.l.b16 %v305
  %v1757 = vunpack.c.h.b16 %v305
  %v1758 = vunpack.c.l.b16 %v306
  %v1759 = vunpack.c.h.b16 %v306
  %v1760 = vunpack.c.l.b16 %v307
  %v1761 = vunpack.c.h.b16 %v307
  %v1762 = vunpack.c.l.b16 %v308
  %v1763 = vunpack.c.h.b16 %v308
  %v1764 = vunpack.c.l.b16 %v309
  %v1765 = vunpack.c.h.b16 %v309
  %v1766 = vunpack.c.l.b16 %v310
  %v1767 = vunpack.c.h.b16 %v310
  %v1768 = vunpack.c.l.b16 %v311
  %v1769 = vunpack.c.h.b16 %v311
  %v1770 = vunpack.c.l.b16 %v312
  %v1771 = vunpack.c.h.b16 %v312
  %v1772 = vunpack.c.l.b16 %v313
  %v1773 = vunpack.c.h.b16 %v313
  %v1774 = vunpack.c.l.b16 %v314
  %v1775 = vunpack.c.h.b16 %v314
  %v1776 = vunpack.c.l.b16 %v315
  %v1777 = vunpack.c.h.b16 %v315
  %v1778 = vunpack.c.l.b16 %v316
  %v1779 = vunpack.c.h.b16 %v316
  %v1780 = vunpack.c.l.b16 %v317
  %v1781 = vunpack.c.h.b16 %v317
  %v1782 = vunpack.c.l.b16 %v318
  %v1783 = vunpack.c.h.b16 %v318
  %v1784 = vunpack.c.l.b16 %v319
  %v1785 = vunpack.c.h.b16 %v319
  %v1786 = vunpack.c.l.b16 %v320
  %v1787 = vunpack.c.h.b16 %v320
  %v1788 = vunpack.c.l.b16 %v321
  %v1789 = vunpack.c.h.b16 %v321
  %v1790 = vunpack.c.l.b16 %v322
  %v1791 = vunpack.c.h.b16 %v322
  %v1792 = vunpack.c.l.b16 %v323
  %v1793 = vunpack.c.h.b16 %v323
  %v1794 = vunpack.c.l.b16 %v324
  %v1795 = vunpack.c.h.b16 %v324
  %v1796 = vunpack.c.l.b16 %v325
  %v1797 = vunpack.c.h.b16 %v325
  %v1798 = vunpack.c.l.b16 %v326
  %v1799 = vunpack.c.h.b16 %v326
  %v1800 = vunpack.c.l.b16 %v327
  %v1801 = vunpack.c.h.b16 %v327
  %v1802 = vunpack.c.l.b16 %v328
  %v1803 = vunpack.c.h.b16 %v328
  %v1804 = vunpack.c.l.b16 %v329
  %v1805 = vunpack.c.h.b16 %v329
  %v1806 = vunpack.c.l.b16 %v330
  %v1807 = vunpack.c.h.b16 %v330
  %v1808 = vunpack.c.l.b16 %v331
  %v1809 = vunpack.c.h.b16 %v331
  %v1810 = vunpack.c.l.b16 %v332
  %v1811 = vunpack.c.h.b16 %v332
  %v1812 = vunpack.c.l.b16 %v333
  %v1813 = vunpack.c.h.b16 %v333
  %v1814 = vunpack.c.l.b16 %v334
  %v1815 = vunpack.c.h.b16 %v334
  %v1816 = vunpack.c.l.b16 %v335
  %v1817 = vunpack.c.h.b16 %v335
  %v1818 = vunpack.c.l.b16 %v336
  %v1819 = vunpack.c.h.b16 %v336
  %v1820 = vunpack.c.l.b16 %v337
  %v1821 = vunpack.c.h.b16 %v337
  %v1822 = vunpack.c.l.b16 %v338
  %v1823 = vunpack.c.h.b16 %v338
  %v1824 = vunpack.c.l.b16 %v339
  %v1825 = vunpack.c.h.b16 %v339
  %v1826 = vunpack.c.l.b16 %v340
  %v1827 = vunpack.c.h.b16 %v340
  %v1828 = vunpack.c.l.b16 %v341
  %v1829 = vunpack.c.h.b16 %v341
  %v1830 = vunpack.c.l.b16 %v342
  %v1831 = vunpack.c.h.b16 %v342
  %v1832 = vunpack.c.l.b16 %v343
  %v1833 = vunpack.c.h.b16 %v343
  %v1834 = vunpack.c.l.b16 %v344
  %v1835 = vunpack.c.h.b16 %v344
  %v1836 = vunpack.c.l.b16 %v345
  %v1837 = vunpack.c.h.b16 %v345
  %v1838 = vunpack.c.l.b16 %v346
  %v1839 = vunpack.c.h.b16 %v346
  %v1840 = vunpack.c.l.b16 %v347
  %v1841 = vunpack.c.h.b16 %v347
  %v1842 = vunpack.c.l.b16 %v348
  %v1843 = vunpack.c.h.b16 %v348
  %v1844 = vunpack.c.l.b16 %v349
  %v1845 = vunpack.c.h.b16 %v349
  %v1846 = vunpack.c.l.b16 %v350
  %v1847 = vunpack.c.h.b16 %v350
  %v1848 = vunpack.c.l.b16 %v351
  %v1849 = vunpack.c.h.b16 %v351
  %v1850 = vunpack.c.l.b16 %v352
  %v1851 = vunpack.c.h.b16 %v352
  %v1852 = vunpack.c.l.b16 %v353
  %v1853 = vunpack.c.h.b16 %v353
  %v1854 = vunpack.c.l.b16 %v354
  %v1855 = vunpack.c.h.b16 %v354
  %v1856 = vunpack.c.l.b16 %v355
  %v1857 = vunpack.c.h.b16 %v355
  %v1858 = vunpack.c.l.b16 %v356
  %v1859 = vunpack.c.h.b16 %v356
  %v1860 = vunpack.c.l.b16 %v357
  %v1861 = vunpack.c.h.b16 %v357
  %v1862 = vunpack.c.l.b16 %v358
  %v1863 = vunpack.c.h.b16 %v358
  %v1864 = vunpack.c.l.b16 %v359
  %v1865 = vunpack.c.h.b16 %v359
  %v1866 = vunpack.c.l.b16 %v360
  %v1867 = vunpack.c.h.b16 %v360
  %v1868 = vunpack.c.l.b16 %v361
  %v1869 = vunpack.c.h.b16 %v361
  %v1870 = vunpack.c.l.b16 %v362
  %v1871 = vunpack.c.h.b16 %v362
  %v1872 = vunpack.c.l.b16 %v363
  %v1873 = vunpack.c.h.b16 %v363
  %v1874 = vunpack.c.l.b16 %v364
  %v1875 = vunpack.c.h.b16 %v364
  %v1876 = vunpack.c.l.b16 %v365
  %v1877 = vunpack.c.h.b16 %v365
  %v1878 = vunpack.c.l.b16 %v366
  %v1879 = vunpack.c.h.b16 %v366
  %v1880 = vunpack.c.l.b16 %v367
  %v1881 = vunpack.c.h.b16 %v367
  %v1882 = vunpack.c.l.b16 %v368
  %v1883 = vunpack.c.h.b16 %v368
  %v1884 = vunpack.c.l.b16 %v369
  %v1885 = vunpack.c.h.b16 %v369
  %v1886 = vunpack.c.l.b16 %v370
  %v1887 = vunpack.c.h.b16 %v370
  %v1888 = vunpack.c.l.b16 %v371
  %v1889 = vunpack.c.h.b16 %v371
  %v1890 = vunpack.c.l.b16 %v372
  %v1891 = vunpack.c.h.b16 %v372
  %v1892 = vunpack.c.l.b16 %v373
  %v1893 = vunpack.c.h.b16 %v373
  %v1894 = vunpack.c.l.b16 %v374
  %v1895 = vunpack.c.h.b16 %v374
  %v1896 = vunpack.c.l.b16 %v375
  %v1897 = vunpack.c.h.b16 %v375
  %v1898 = vunpack.c.l.b16 %v376
  %v1899 = vunpack.c.h.b16 %v376
  %v1900 = vunpack.c.l.b16 %v377
  %v1901 = vunpack.c.h.b16 %v377
  %v1902 = vunpack.c.l.b16 %v378
  %v1903 = vunpack.c.h.b16 %v378
  %v1904 = vunpack.c.l.b16 %v379
  %v1905 = vunpack.c.h.b16 %v379
  %v1906 = vunpack.c.l.b16 %v380
  %v1907 = vunpack.c.h.b16 %v380
  %v1908 = vunpack.c.l.b16 %v381
  %v1909 = vunpack.c.h.b16 %v381
  %v1910 = vunpack.c.l.b16 %v382
  %v1911 = vunpack.c.h.b16 %v382
  %v1912 = vunpack.c.l.b16 %v383
  %v1913 = vunpack.c.h.b16 %v383
  %v1914 = vunpack.c.l.b16 %v384
  %v1915 = vunpack.c.h.b16 %v384
  %v1916 = vunpack.c.l.b16 %v385
  %v1917 = vunpack.c.h.b16 %v385
  %v1918 = vunpack.c.l.b16 %v386
  %v1919 = vunpack.c.h.b16 %v386
  %v1920 = vunpack.c.l.b16 %v387
  %v1921 = vunpack.c.h.b16 %v387
  %v1922 = vunpack.c.l.b16 %v388
  %v1923 = vunpack.c.h.b16 %v388
  %v1924 = vunpack.c.l.b16 %v389
  %v1925 = vunpack.c.h.b16 %v389
  %v1926 = vunpack.c.l.b16 %v390
  %v1927 = vunpack.c.h.b16 %v390
  %v1928 = vunpack.c.l.b16 %v391
  %v1929 = vunpack.c.h.b16 %v391
  %v1930 = vunpack.c.l.b16 %v392
  %v1931 = vunpack.c.h.b16 %v392
  %v1932 = vunpack.c.l.b16 %v393
  %v1933 = vunpack.c.h.b16 %v393
  %v1934 = vunpack.c.l.b16 %v394
  %v1935 = vunpack.c.h.b16 %v394
  %v1936 = vunpack.c.l.b16 %v395
  %v1937 = vunpack.c.h.b16 %v395
  %v1938 = vunpack.c.l.b16 %v396
  %v1939 = vunpack.c.h.b16 %v396
  %v1940 = vunpack.c.l.b16 %v397
  %v1941 = vunpack.c.h.b16 %v397
  %v1942 = vunpack.c.l.b16 %v398
  %v1943 = vunpack.c.h.b16 %v398
  %v1944 = vunpack.c.l.b16 %v399
  %v1945 = vunpack.c.h.b16 %v399
  %v1946 = vunpack.c.l.b16 %v400
  %v1947 = vunpack.c.h.b16 %v400
  %v1948 = vunpack.c.l.b16 %v401
  %v1949 = vunpack.c.h.b16 %v401
  %v1950 = vunpack.c.l.b16 %v402
  %v1951 = vunpack.c.h.b16 %v402
  %v1952 = vunpack.c.l.b16 %v403
  %v1953 = vunpack.c.h.b16 %v403
  %v1954 = vunpack.c.l.b16 %v404
  %v1955 = vunpack.c.h.b16 %v404
  %v1956 = vunpack.c.l.b16 %v405
  %v1957 = vunpack.c.h.b16 %v405
  %v1958 = vunpack.c.l.b16 %v406
  %v1959 = vunpack.c.h.b16 %v406
  %v1960 = vunpack.c.l.b16 %v407
  %v1961 = vunpack.c.h.b16 %v407
  %v1962 = vunpack.c.l.b16 %v408
  %v1963 = vunpack.c.h.b16 %v408
  %v1964 = vunpack.c.l.b16 %v409
  %v1965 = vunpack.c.h.b16 %v409
  %v1966 = vunpack.c.l.b16 %v410
  %v1967 = vunpack.c.h.b16 %v410
  %v1968 = vunpack.c.l.b16 %v411
  %v1969 = vunpack.c.h.b16 %v411
  %v1970 = vunpack.c.l.b16 %v412
  %v1971 = vunpack.c.h.b16 %v412
  %v1972 = vunpack.c.l.b16 %v413
  %v1973 = vunpack.c.h.b16 %v413
  %v1974 = vunpack.c.l.b16 %v414
  %v1975 = vunpack.c.h.b16 %v414
  %v1976 = vunpack.c.l.b16 %v415
  %v1977 = vunpack.c.h.b16 %v415
  %v1978 = vunpack.c.l.b16 %v416
  %v1979 = vunpack.c.h.b16 %v416
  %v1980 = vunpack.c.l.b16 %v417
  %v1981 = vunpack.c.h.b16 %v417
  %v1982 = vunpack.c.l.b16 %v418
  %v1983 = vunpack.c.h.b16 %v418
  %v1984 = vunpack.c.l.b16 %v419
  %v1985 = vunpack.c.h.b16 %v419
  %v1986 = vunpack.c.l.b16 %v420
  %v1987 = vunpack.c.h.b16 %v420
  %v1988 = vunpack.c.l.b16 %v421
  %v1989 = vunpack.c.h.b16 %v421
  %v1990 = vunpack.c.l.b16 %v422
  %v1991 = vunpack.c.h.b16 %v422
  %v1992 = vunpack.c.l.b16 %v423
  %v1993 = vunpack.c.h.b16 %v423
  %v1994 = vunpack.c.l.b16 %v424
  %v1995 = vunpack.c.h.b16 %v424
  %v1996 = vunpack.c.l.b16 %v425
  %v1997 = vunpack.c.h.b16 %v425
  %v1998 = vunpack.c.l.b16 %v426
  %v1999 = vunpack.c.h.b16 %v426
  %v2000 = vunpack.c.l.b16 %v427
  %v2001 = vunpack.c.h.b16 %v427
  %v2002 = vunpack.c.l.b16 %v428
  %v2003 = vunpack.c.h.b16 %v428
  %v2004 = vunpack.c.l.b16 %v429
  %v2005 = vunpack.c.h.b16 %v429
  %v2006 = vunpack.c.l.b16 %v430
  %v2007 = vunpack.c.h.b16 %v430
  %v2008 = vunpack.c.l.b16 %v431
  %v2009 = vunpack.c.h.b16 %v431
  %v2010 = vunpack.c.l.b16 %v432
  %v2011 = vunpack.c.h.b16 %v432
  %v2012 = vunpack.c.l.b16 %v433
  %v2013 = vunpack.c.h.b16 %v433
  %v2014 = vunpack.c.l.b16 %v434
  %v2015 = vunpack.c.h.b16 %v434
  %v2016 = vunpack.c.l.b16 %v435
  %v2017 = vunpack.c.h.b16 %v435
  %v2018 = vunpack.c.l.b16 %v436
  %v2019 = vunpack.c.h.b16 %v436
  %v2020 = vunpack.c.l.b16 %v437
  %v2021 = vunpack.c.h.b16 %v437
  %v2022 = vunpack.c.l.b16 %v438
  %v2023 = vunpack.c.h.b16 %v438
  %v2024 = vunpack.c.l.b16 %v439
  %v2025 = vunpack.c.h.b16 %v439
  %v2026 = vunpack.c.l.b16 %v440
  %v2027 = vunpack.c.h.b16 %v440
  %v2028 = vunpack.c.l.b16 %v441
  %v2029 = vunpack.c.h.b16 %v441
  %v2030 = vunpack.c.l.b16 %v442
  %v2031 = vunpack.c.h.b16 %v442
  %v2032 = vunpack.c.l.b16 %v443
  %v2033 = vunpack.c.h.b16 %v443
  %v2034 = vunpack.c.l.b16 %v444
  %v2035 = vunpack.c.h.b16 %v444
  %v2036 = vunpack.c.l.b16 %v445
  %v2037 = vunpack.c.h.b16 %v445
  %v2038 = vunpack.c.l.b16 %v446
  %v2039 = vunpack.c.h.b16 %v446
  %v2040 = vunpack.c.l.b16 %v447
  %v2041 = vunpack.c.h.b16 %v447
  %v2042 = vunpack.c.l.b16 %v448
  %v2043 = vunpack.c.h.b16 %v448
  %v2044 = vunpack.c.l.b16 %v449
  %v2045 = vunpack.c.h.b16 %v449
  %v2046 = vunpack.c.l.b16 %v450
  %v2047 = vunpack.c.h.b16 %v450
  %v2048 = vunpack.c.l.b16 %v451
  %v2049 = vunpack.c.h.b16 %v451
  %v2050 = vunpack.c.l.b16 %v452
  %v2051 = vunpack.c.h.b16 %v452
  %v2052 = vunpack.c.l.b16 %v453
  %v2053 = vunpack.c.h.b16 %v453
  %v2054 = vunpack.c.l.b16 %v454
  %v2055 = vunpack.c.h.b16 %v454
  %v2056 = vunpack.c.l.b16 %v455
  %v2057 = vunpack.c.h.b16 %v455
  %v2058 = vunpack.c.l.b16 %v456
  %v2059 = vunpack.c.h.b16 %v456
  %v2060 = vunpack.c.l.b16 %v457
  %v2061 = vunpack.c.h.b16 %v457
  %v2062 = vunpack.c.l.b16 %v458
  %v2063 = vunpack.c.h.b16 %v458
  %v2064 = vunpack.c.l.b16 %v459
  %v2065 = vunpack.c.h.b16 %v459
  %v2066 = vunpack.c.l.b16 %v460
  %v2067 = vunpack.c.h.b16 %v460
  %v2068 = vunpack.c.l.b16 %v461
  %v2069 = vunpack.c.h.b16 %v461
  %v2070 = vunpack.c.l.b16 %v462
  %v2071 = vunpack.c.h.b16 %v462
  %v2072 = vunpack.c.l.b16 %v463
  %v2073 = vunpack.c.h.b16 %v463
  %v2074 = vunpack.c.l.b16 %v464
  %v2075 = vunpack.c.h.b16 %v464
  %v2076 = vunpack.c.l.b16 %v465
  %v2077 = vunpack.c.h.b16 %v465
  %v2078 = vunpack.c.l.b16 %v466
  %v2079 = vunpack.c.h.b16 %v466
  %v2080 = vunpack.c.l.b16 %v467
  %v2081 = vunpack.c.h.b16 %v467
  %v2082 = vunpack.c.l.b16 %v468
  %v2083 = vunpack.c.h.b16 %v468
  %v2084 = vunpack.c.l.b16 %v469
  %v2085 = vunpack.c.h.b16 %v469
  %v2086 = vunpack.c.l.b16 %v470
  %v2087 = vunpack.c.h.b16 %v470
  %v2088 = vunpack.c.l.b16 %v471
  %v2089 = vunpack.c.h.b16 %v471
  %v2090 = vunpack.c.l.b16 %v472
  %v2091 = vunpack.c.h.b16 %v472
  %v2092 = vunpack.c.l.b16 %v473
  %v2093 = vunpack.c.h.b16 %v473
  %v2094 = vunpack.c.l.b16 %v474
  %v2095 = vunpack.c.h.b16 %v474
  %v2096 = vunpack.c.l.b16 %v475
  %v2097 = vunpack.c.h.b16 %v475
  %v2098 = vunpack.c.l.b16 %v476
  %v2099 = vunpack.c.h.b16 %v476
  %v2100 = vunpack.c.l.b16 %v477
  %v2101 = vunpack.c.h.b16 %v477
  %v2102 = vunpack.c.l.b16 %v478
  %v2103 = vunpack.c.h.b16 %v478
  %v2104 = vunpack.c.l.b16 %v479
  %v2105 = vunpack.c.h.b16 %v479
  %v2106 = vunpack.c.l.b16 %v480
  %v2107 = vunpack.c.h.b16 %v480
  %v2108 = vunpack.c.l.b16 %v481
  %v2109 = vunpack.c.h.b16 %v481
  %v2110 = vunpack.c.l.b16 %v482
  %v2111 = vunpack.c.h.b16 %v482
  %v2112 = vunpack.c.l.b16 %v483
  %v2113 = vunpack.c.h.b16 %v483
  %v2114 = vunpack.c.l.b16 %v484
  %v2115 = vunpack.c.h.b16 %v484
  %v2116 = vunpack.c.l.b16 %v485
  %v2117 = vunpack.c.h.b16 %v485
  %v2118 = vunpack.c.l.b16 %v486
  %v2119 = vunpack.c.h.b16 %v486
  %v2120 = vunpack.c.l.b16 %v487
  %v2121 = vunpack.c.h.b16 %v487
  %v2122 = vunpack.c.l.b16 %v488
  %v2123 = vunpack.c.h.b16 %v488
  %v2124 = vunpack.c.l.b16 %v489
  %v2125 = vunpack.c.h.b16 %v489
  %v2126 = vunpack.c.l.b16 %v490
  %v2127 = vunpack.c.h.b16 %v490
  %v2128 = vunpack.c.l.b16 %v491
  %v2129 = vunpack.c.h.b16 %v491
  %v2130 = vunpack.c.l.b16 %v492
  %v2131 = vunpack.c.h.b16 %v492
  %v2132 = vunpack.c.l.b16 %v493
  %v2133 = vunpack.c.h.b16 %v493
  %v2134 = vunpack.c.l.b16 %v494
  %v2135 = vunpack.c.h.b16 %v494
  %v2136 = vunpack.c.l.b16 %v495
  %v2137 = vunpack.c.h.b16 %v495
  %v2138 = vunpack.c.l.b16 %v496
  %v2139 = vunpack.c.h.b16 %v496
  %v2140 = vunpack.c.l.b16 %v497
  %v2141 = vunpack.c.h.b16 %v497
  %v2142 = vunpack.c.l.b16 %v498
  %v2143 = vunpack.c.h.b16 %v498
  %v2144 = vunpack.c.l.b16 %v499
  %v2145 = vunpack.c.h.b16 %v499
  %v2146 = vunpack.c.l.b16 %v500
  %v2147 = vunpack.c.h.b16 %v500
  %v2148 = vunpack.c.l.b16 %v501
  %v2149 = vunpack.c.h.b16 %v501
  %v2150 = vunpack.c.l.b16 %v502
  %v2151 = vunpack.c.h.b16 %v502
  %v2152 = vunpack.c.l.b16 %v503
  %v2153 = vunpack.c.h.b16 %v503
  %v2154 = vunpack.c.l.b16 %v504
  %v2155 = vunpack.c.h.b16 %v504
  %v2156 = vunpack.c.l.b16 %v505
  %v2157 = vunpack.c.h.b16 %v505
  %v2158 = vunpack.c.l.b16 %v506
  %v2159 = vunpack.c.h.b16 %v506
  %v2160 = vunpack.c.l.b16 %v507
  %v2161 = vunpack.c.h.b16 %v507
  %v2162 = vunpack.c.l.b16 %v508
  %v2163 = vunpack.c.h.b16 %v508
  %v2164 = vunpack.c.l.b16 %v509
  %v2165 = vunpack.c.h.b16 %v509
  %v2166 = vunpack.c.l.b16 %v510
  %v2167 = vunpack.c.h.b16 %v510
  %v2168 = vunpack.c.l.b16 %v511
  %v2169 = vunpack.c.h.b16 %v511
  %v2170 = vunpack.c.l.b16 %v512
  %v2171 = vunpack.c.h.b16 %v512
  %v2172 = vunpack.c.l.b16 %v513
  %v2173 = vunpack.c.h.b16 %v513
  %v2174 = vunpack.c.l.b16 %v514
  %v2175 = vunpack.c.h.b16 %v514
  %v2176 = vunpack.c.l.b16 %v515
  %v2177 = vunpack.c.h.b16 %v515
  %v2178 = vunpack.c.l.b16 %v516
  %v2179 = vunpack.c.h.b16 %v516
  %v2180 = vunpack.c.l.b16 %v517
  %v2181 = vunpack.c.h.b16 %v517
  %v2182 = vunpack.c.l.b16 %v518
  %v2183 = vunpack.c.h.b16 %v518
  %v2184 = vunpack.c.l.b16 %v519
  %v2185 = vunpack.c.h.b16 %v519
  %v2186 = vunpack.c.l.b16 %v520
  %v2187 = vunpack.c.h.b16 %v520
  %v2188 = vunpack.c.l.b16 %v521
  %v2189 = vunpack.c.h.b16 %v521
  %v2190 = vunpack.c.l.b16 %v522
  %v2191 = vunpack.c.h.b16 %v522
  %v2192 = vunpack.c.l.b16 %v523
  %v2193 = vunpack.c.h.b16 %v523
  %v2194 = vunpack.c.l.b16 %v524
  %v2195 = vunpack.c.h.b16 %v524
  %v2196 = vunpack.c.l.b16 %v525
  %v2197 = vunpack.c.h.b16 %v525
  %v2198 = vunpack.c.l.b16 %v526
  %v2199 = vunpack.c.h.b16 %v526
  %v2200 = vunpack.c.l.b16 %v527
  %v2201 = vunpack.c.h.b16 %v527
  %v2202 = vpack.c.b16 %v1182, %v1178
  %v2203 = vpack.c.b16 %v1183, %v1179
  %v2204 = vpack.c.b16 %v1184, %v1180
  %v2205 = vpack.c.b16 %v1185, %v1181
  %v2206 = vpack.c.b16 %v1190, %v1186
  %v2207 = vpack.c.b16 %v1191, %v1187
  %v2208 = vpack.c.b16 %v1192, %v1188
  %v2209 = vpack.c.b16 %v1193, %v1189
  %v2210 = vpack.c.b16 %v1198, %v1194
  %v2211 = vpack.c.b16 %v1199, %v1195
  %v2212 = vpack.c.b16 %v1200, %v1196
  %v2213 = vpack.c.b16 %v1201, %v1197
  %v2214 = vpack.c.b16 %v1206, %v1202
  %v2215 = vpack.c.b16 %v1207, %v1203
  %v2216 = vpack.c.b16 %v1208, %v1204
  %v2217 = vpack.c.b16 %v1209, %v1205
  %v2218 = vpack.c.b16 %v1214, %v1210
  %v2219 = vpack.c.b16 %v1215, %v1211
  %v2220 = vpack.c.b16 %v1216, %v1212
  %v2221 = vpack.c.b16 %v1217, %v1213
  %v2222 = vpack.c.b16 %v1222, %v1218
  %v2223 = vpack.c.b16 %v1223, %v1219
  %v2224 = vpack.c.b16 %v1224, %v1220
  %v2225 = vpack.c.b16 %v1225, %v1221
  %v2226 = vpack.c.b16 %v1230, %v1226
  %v2227 = vpack.c.b16 %v1231, %v1227
  %v2228 = vpack.c.b16 %v1232, %v1228
  %v2229 = vpack.c.b16 %v1233, %v1229
  %v2230 = vpack.c.b16 %v1238, %v1234
  %v2231 = vpack.c.b16 %v1239, %v1235
  %v2232 = vpack.c.b16 %v1240, %v1236
  %v2233 = vpack.c.b16 %v1241, %v1237
  %v2234 = vpack.c.b16 %v1246, %v1242
  %v2235 = vpack.c.b16 %v1247, %v1243
  %v2236 = vpack.c.b16 %v1248, %v1244
  %v2237 = vpack.c.b16 %v1249, %v1245
  %v2238 = vpack.c.b16 %v1254, %v1250
  %v2239 = vpack.c.b16 %v1255, %v1251
  %v2240 = vpack.c.b16 %v1256, %v1252
  %v2241 = vpack.c.b16 %v1257, %v1253
  %v2242 = vpack.c.b16 %v1262, %v1258
  %v2243 = vpack.c.b16 %v1263, %v1259
  %v2244 = vpack.c.b16 %v1264, %v1260
  %v2245 = vpack.c.b16 %v1265, %v1261
  %v2246 = vpack.c.b16 %v1270, %v1266
  %v2247 = vpack.c.b16 %v1271, %v1267
  %v2248 = vpack.c.b16 %v1272, %v1268
  %v2249 = vpack.c.b16 %v1273, %v1269
  %v2250 = vpack.c.b16 %v1278, %v1274
  %v2251 = vpack.c.b16 %v1279, %v1275
  %v2252 = vpack.c.b16 %v1280, %v1276
  %v2253 = vpack.c.b16 %v1281, %v1277
  %v2254 = vpack.c.b16 %v1286, %v1282
  %v2255 = vpack.c.b16 %v1287, %v1283
  %v2256 = vpack.c.b16 %v1288, %v1284
  %v2257 = vpack.c.b16 %v1289, %v1285
  %v2258 = vpack.c.b16 %v1294, %v1290
  %v2259 = vpack.c.b16 %v1295, %v1291
  %v2260 = vpack.c.b16 %v1296, %v1292
  %v2261 = vpack.c.b16 %v1297, %v1293
  %v2262 = vpack.c.b16 %v1302, %v1298
  %v2263 = vpack.c.b16 %v1303, %v1299
  %v2264 = vpack.c.b16 %v1304, %v1300
  %v2265 = vpack.c.b16 %v1305, %v1301
  %v2266 = vpack.c.b16 %v1310, %v1306
  %v2267 = vpack.c.b16 %v1311, %v1307
  %v2268 = vpack.c.b16 %v1312, %v1308
  %v2269 = vpack.c.b16 %v1313, %v1309
  %v2270 = vpack.c.b16 %v1318, %v1314
  %v2271 = vpack.c.b16 %v1319, %v1315
  %v2272 = vpack.c.b16 %v1320, %v1316
  %v2273 = vpack.c.b16 %v1321, %v1317
  %v2274 = vpack.c.b16 %v1326, %v1322
  %v2275 = vpack.c.b16 %v1327, %v1323
  %v2276 = vpack.c.b16 %v1328, %v1324
  %v2277 = vpack.c.b16 %v1329, %v1325
  %v2278 = vpack.c.b16 %v1334, %v1330
  %v2279 = vpack.c.b16 %v1335, %v1331
  %v2280 = vpack.c.b16 %v1336, %v1332
  %v2281 = vpack.c.b16 %v1337, %v1333
  %v2282 = vpack.c.b16 %v1342, %v1338
  %v2283 = vpack.c.b16 %v1343, %v1339
  %v2284 = vpack.c.b16 %v1344, %v1340
  %v2285 = vpack.c.b16 %v1345, %v1341
  %v2286 = vpack.c.b16 %v1350, %v1346
  %v2287 = vpack.c.b16 %v1351, %v1347
  %v2288 = vpack.c.b16 %v1352, %v1348
  %v2289 = vpack.c.b16 %v1353, %v1349
  %v2290 = vpack.c.b16 %v1358, %v1354
  %v2291 = vpack.c.b16 %v1359, %v1355
  %v2292 = vpack.c.b16 %v1360, %v1356
  %v2293 = vpack.c.b16 %v1361, %v1357
  %v2294 = vpack.c.b16 %v1366, %v1362
  %v2295 = vpack.c.b16 %v1367, %v1363
  %v2296 = vpack.c.b16 %v1368, %v1364
  %v2297 = vpack.c.b16 %v1369, %v1365
  %v2298 = vpack.c.b16 %v1374, %v1370
  %v2299 = vpack.c.b16 %v1375, %v1371
  %v2300 = vpack.c.b16 %v1376, %v1372
  %v2301 = vpack.c.b16 %v1377, %v1373
  %v2302 = vpack.c.b16 %v1382, %v1378
  %v2303 = vpack.c.b16 %v1383, %v1379
  %v2304 = vpack.c.b16 %v1384, %v1380
  %v2305 = vpack.c.b16 %v1385, %v1381
  %v2306 = vpack.c.b16 %v1390, %v1386
  %v2307 = vpack.c.b16 %v1391, %v1387
  %v2308 = vpack.c.b16 %v1392, %v1388
  %v2309 = vpack.c.b16 %v1393, %v1389
  %v2310 = vpack.c.b16 %v1398, %v1394
  %v2311 = vpack.c.b16 %v1399, %v1395
  %v2312 = vpack.c.b16 %v1400, %v1396
  %v2313 = vpack.c.b16 %v1401, %v1397
  %v2314 = vpack.c.b16 %v1406, %v1402
  %v2315 = vpack.c.b16 %v1407, %v1403
  %v2316 = vpack.c.b16 %v1408, %v1404
  %v2317 = vpack.c.b16 %v1409, %v1405
  %v2318 = vpack.c.b16 %v1414, %v1410
  %v2319 = vpack.c.b16 %v1415, %v1411
  %v2320 = vpack.c.b16 %v1416, %v1412
  %v2321 = vpack.c.b16 %v1417, %v1413
  %v2322 = vpack.c.b16 %v1422, %v1418
  %v2323 = vpack.c.b16 %v1423, %v1419
  %v2324 = vpack.c.b16 %v1424, %v1420
  %v2325 = vpack.c.b16 %v1425, %v1421
  %v2326 = vpack.c.b16 %v1430, %v1426
  %v2327 = vpack.c.b16 %v1431, %v1427
  %v2328 = vpack.c.b16 %v1432, %v1428
  %v2329 = vpack.c.b16 %v1433, %v1429
  %v2330 = vpack.c.b16 %v1438, %v1434
  %v2331 = vpack.c.b16 %v1439, %v1435
  %v2332 = vpack.c.b16 %v1440, %v1436
  %v2333 = vpack.c.b16 %v1441, %v1437
  %v2334 = vpack.c.b16 %v1446, %v1442
  %v2335 = vpack.c.b16 %v1447, %v1443
  %v2336 = vpack.c.b16 %v1448, %v1444
  %v2337 = vpack.c.b16 %v1449, %v1445
  %v2338 = vpack.c.b16 %v1454, %v1450
  %v2339 = vpack.c.b16 %v1455, %v1451
  %v2340 = vpack.c.b16 %v1456, %v1452
  %v2341 = vpack.c.b16 %v1457, %v1453
  %v2342 = vpack.c.b16 %v1462, %v1458
  %v2343 = vpack.c.b16 %v1463, %v1459
  %v2344 = vpack.c.b16 %v1464, %v1460
  %v2345 = vpack.c.b16 %v1465, %v1461
  %v2346 = vpack.c.b16 %v1470, %v1466
  %v2347 = vpack.c.b16 %v1471, %v1467
  %v2348 = vpack.c.b16 %v1472, %v1468
  %v2349 = vpack.c.b16 %v1473, %v1469
  %v2350 = vpack.c.b16 %v1478, %v1474
  %v2351 = vpack.c.b16 %v1479, %v1475
  %v2352 = vpack.c.b16 %v1480, %v1476
  %v2353 = vpack.c.b16 %v1481, %v1477
  %v2354 = vpack.c.b16 %v1486, %v1482
  %v2355 = vpack.c.b16 %v1487, %v1483
  %v2356 = vpack.c.b16 %v1488, %v1484
  %v2357 = vpack.c.b16 %v1489, %v1485
  %v2358 = vpack.c.b16 %v1494, %v1490
  %v2359 = vpack.c.b16 %v1495, %v1491
  %v2360 = vpack.c.b16 %v1496, %v1492
  %v2361 = vpack.c.b16 %v1497, %v1493
  %v2362 = vpack.c.b16 %v1502, %v1498
  %v2363 = vpack.c.b16 %v1503, %v1499
  %v2364 = vpack.c.b16 %v1504, %v1500
  %v2365 = vpack.c.b16 %v1505, %v1501
  %v2366 = vpack.c.b16 %v1510, %v1506
  %v2367 = vpack.c.b16 %v1511, %v1507
  %v2368 = vpack.c.b16 %v1512, %v1508
  %v2369 = vpack.c.b16 %v1513, %v1509
  %v2370 = vpack.c.b16 %v1518, %v1514
  %v2371 = vpack.c.b16 %v1519, %v1515
  %v2372 = vpack.c.b16 %v1520, %v1516
  %v2373 = vpack.c.b16 %v1521, %v1517
  %v2374 = vpack.c.b16 %v1526, %v1522
  %v2375 = vpack.c.b16 %v1527, %v1523
  %v2376 = vpack.c.b16 %v1528, %v1524
  %v2377 = vpack.c.b16 %v1529, %v1525
  %v2378 = vpack.c.b16 %v1534, %v1530
  %v2379 = vpack.c.b16 %v1535, %v1531
  %v2380 = vpack.c.b16 %v1536, %v1532
  %v2381 = vpack.c.b16 %v1537, %v1533
  %v2382 = vpack.c.b16 %v1542, %v1538
  %v2383 = vpack.c.b16 %v1543, %v1539
  %v2384 = vpack.c.b16 %v1544, %v1540
  %v2385 = vpack.c.b16 %v1545, %v1541
  %v2386 = vpack.c.b16 %v1550, %v1546
  %v2387 = vpack.c.b16 %v1551, %v1547
  %v2388 = vpack.c.b16 %v1552, %v1548
  %v2389 = vpack.c.b16 %v1553, %v1549
  %v2390 = vpack.c.b16 %v1558, %v1554
  %v2391 = vpack.c.b16 %v1559, %v1555
  %v2392 = vpack.c.b16 %v1560, %v1556
  %v2393 = vpack.c.b16 %v1561, %v1557
  %v2394 = vpack.c.b16 %v1566, %v1562
  %v2395 = vpack.c.b16 %v1567, %v1563
  %v2396 = vpack.c.b16 %v1568, %v1564
  %v2397 = vpack.c.b16 %v1569, %v1565
  %v2398 = vpack.c.b16 %v1574, %v1570
  %v2399 = vpack.c.b16 %v1575, %v1571
  %v2400 = vpack.c.b16 %v1576, %v1572
  %v2401 = vpack.c.b16 %v1577, %v1573
  %v2402 = vpack.c.b16 %v1582, %v1578
  %v2403 = vpack.c.b16 %v1583, %v1579
  %v2404 = vpack.c.b16 %v1584, %v1580
  %v2405 = vpack.c.b16 %v1585, %v1581
  %v2406 = vpack.c.b16 %v1590, %v1586
  %v2407 = vpack.c.b16 %v1591, %v1587
  %v2408 = vpack.c.b16 %v1592, %v1588
  %v2409 = vpack.c.b16 %v1593, %v1589
  %v2410 = vpack.c.b16 %v1598, %v1594
  %v2411 = vpack.c.b16 %v1599, %v1595
  %v2412 = vpack.c.b16 %v1600, %v1596
  %v2413 = vpack.c.b16 %v1601, %v1597
  %v2414 = vpack.c.b16 %v1606, %v1602
  %v2415 = vpack.c.b16 %v1607, %v1603
  %v2416 = vpack.c.b16 %v1608, %v1604
  %v2417 = vpack.c.b16 %v1609, %v1605
  %v2418 = vpack.c.b16 %v1614, %v1610
  %v2419 = vpack.c.b16 %v1615, %v1611
  %v2420 = vpack.c.b16 %v1616, %v1612
  %v2421 = vpack.c.b16 %v1617, %v1613
  %v2422 = vpack.c.b16 %v1622, %v1618
  %v2423 = vpack.c.b16 %v1623, %v1619
  %v2424 = vpack.c.b16 %v1624, %v1620
  %v2425 = vpack.c.b16 %v1625, %v1621
  %v2426 = vpack.c.b16 %v1630, %v1626
  %v2427 = vpack.c.b16 %v1631, %v1627
  %v2428 = vpack.c.b16 %v1632, %v1628
  %v2429 = vpack.c.b16 %v1633, %v1629
  %v2430 = vpack.c.b16 %v1638, %v1634
  %v2431 = vpack.c.b16 %v1639, %v1635
  %v2432 = vpack.c.b16 %v1640, %v1636
  %v2433 = vpack.c.b16 %v1641, %v1637
  %v2434 = vpack.c.b16 %v1646, %v1642
  %v2435 = vpack.c.b16 %v1647, %v1643
  %v2436 = vpack.c.b16 %v1648, %v1644
  %v2437 = vpack.c.b16 %v1649, %v1645
  %v2438 = vpack.c.b16 %v1654, %v1650
  %v2439 = vpack.c.b16 %v1655, %v1651
  %v2440 = vpack.c.b16 %v1656, %v1652
  %v2441 = vpack.c.b16 %v1657, %v1653
  %v2442 = vpack.c.b16 %v1662, %v1658
  %v2443 = vpack.c.b16 %v1663, %v1659
  %v2444 = vpack.c.b16 %v1664, %v1660
  %v2445 = vpack.c.b16 %v1665, %v1661
  %v2446 = vpack.c.b16 %v1670, %v1666
  %v2447 = vpack.c.b16 %v1671, %v1667
  %v2448 = vpack.c.b16 %v1672, %v1668
  %v2449 = vpack.c.b16 %v1673, %v1669
  %v2450 = vpack.c.b16 %v1678, %v1674
  %v2451 = vpack.c.b16 %v1679, %v1675
  %v2452 = vpack.c.b16 %v1680, %v1676
  %v2453 = vpack.c.b16 %v1681, %v1677
  %v2454 = vpack.c.b16 %v1686, %v1682
  %v2455 = vpack.c.b16 %v1687, %v1683
  %v2456 = vpack.c.b16 %v1688, %v1684
  %v2457 = vpack.c.b16 %v1689, %v1685
  %v2458 = vpack.c.b16 %v1694, %v1690
  %v2459 = vpack.c.b16 %v1695, %v1691
  %v2460 = vpack.c.b16 %v1696, %v1692
  %v2461 = vpack.c.b16 %v1697, %v1693
  %v2462 = vpack.c.b16 %v1702, %v1698
  %v2463 = vpack.c.b16 %v1703, %v1699
  %v2464 = vpack.c.b16 %v1704, %v1700
  %v2465 = vpack.c.b16 %v1705, %v1701
  %v2466 = vpack.c.b16 %v1710, %v1706
  %v2467 = vpack.c.b16 %v1711, %v1707
  %v2468 = vpack.c.b16 %v1712, %v1708
  %v2469 = vpack.c.b16 %v1713, %v1709
  %v2470 = vpack.c.b16 %v1718, %v1714
  %v2471 = vpack.c.b16 %v1719, %v1715
  %v2472 = vpack.c.b16 %v1720, %v1716
  %v2473 = vpack.c.b16 %v1721, %v1717
  %v2474 = vpack.c.b16 %v1726, %v1722
  %v2475 = vpack.c.b16 %v1727, %v1723
  %v2476 = vpack.c.b16 %v1728, %v1724
  %v2477 = vpack.c.b16 %v1729, %v1725
  %v2478 = vpack.c.b16 %v1734, %v1730
  %v2479 = vpack.c.b16 %v1735, %v1731
  %v2480 = vpack.c.b16 %v1736, %v1732
  %v2481 = vpack.c.b16 %v1737, %v1733
  %v2482 = vpack.c.b16 %v1742, %v1738
  %v2483 = vpack.c.b16 %v1743, %v1739
  %v2484 = vpack.c.b16 %v1744, %v1740
  %v2485 = vpack.c.b16 %v1745, %v1741
  %v2486 = vpack.c.b16 %v1750, %v1746
  %v2487 = vpack.c.b16 %v1751, %v1747
  %v2488 = vpack.c.b16 %v1752, %v1748
  %v2489 = vpack.c.b16 %v1753, %v1749
  %v2490 = vpack.c.b16 %v1758, %v1754
  %v2491 = vpack.c.b16 %v1759, %v1755
  %v2492 = vpack.c.b16 %v1760, %v1756
  %v2493 = vpack.c.b16 %v1761, %v1757
  %v2494 = vpack.c.b16 %v1766, %v1762
  %v2495 = vpack.c.b16 %v1767, %v1763
  %v2496 = vpack.c.b16 %v1768, %v1764
  %v2497 = vpack.c.b16 %v1769, %v1765
  %v2498 = vpack.c.b16 %v1774, %v1770
  %v2499 = vpack.c.b16 %v1775, %v1771
  %v2500 = vpack.c.b16 %v1776, %v1772
  %v2501 = vpack.c.b16 %v1777, %v1773
  %v2502 = vpack.c.b16 %v1782, %v1778
  %v2503 = vpack.c.b16 %v1783, %v1779
  %v2504 = vpack.c.b16 %v1784, %v1780
  %v2505 = vpack.c.b16 %v1785, %v1781
  %v2506 = vpack.c.b16 %v1790, %v1786
  %v2507 = vpack.c.b16 %v1791, %v1787
  %v2508 = vpack.c.b16 %v1792, %v1788
  %v2509 = vpack.c.b16 %v1793, %v1789
  %v2510 = vpack.c.b16 %v1798, %v1794
  %v2511 = vpack.c.b16 %v1799, %v1795
  %v2512 = vpack.c.b16 %v1800, %v1796
  %v2513 = vpack.c.b16 %v1801, %v1797
  %v2514 = vpack.c.b16 %v1806, %v1802
  %v2515 = vpack.c.b16 %v1807, %v1803
  %v2516 = vpack.c.b16 %v1808, %v1804
  %v2517 = vpack.c.b16 %v1809, %v1805
  %v2518 = vpack.c.b16 %v1814, %v1810
  %v2519 = vpack.c.b16 %v1815, %v1811
  %v2520 = vpack.c.b16 %v1816, %v1812
  %v2521 = vpack.c.b16 %v1817, %v1813
  %v2522 = vpack.c.b16 %v1822, %v1818
  %v2523 = vpack.c.b16 %v1823, %v1819
  %v2524 = vpack.c.b16 %v1824, %v1820
  %v2525 = vpack.c.b16 %v1825, %v1821
  %v2526 = vpack.c.b16 %v1830, %v1826
  %v2527 = vpack.c.b16 %v1831, %v1827
  %v2528 = vpack.c.b16 %v1832, %v1828
  %v2529 = vpack.c.b16 %v1833, %v1829
  %v2530 = vpack.c.b16 %v1838, %v1834
  %v2531 = vpack.c.b16 %v1839, %v1835
  %v2532 = vpack.c.b16 %v1840, %v1836
  %v2533 = vpack.c.b16 %v1841, %v1837
  %v2534 = vpack.c.b16 %v1846, %v1842
  %v2535 = vpack.c.b16 %v1847, %v1843
  %v2536 = vpack.c.b16 %v1848, %v1844
  %v2537 = vpack.c.b16 %v1849, %v1845
  %v2538 = vpack.c.b16 %v1854, %v1850
  %v2539 = vpack.c.b16 %v1855, %v1851
  %v2540 = vpack.c.b16 %v1856, %v1852
  %v2541 = vpack.c.b16 %v1857, %v1853
  %v2542 = vpack.c.b16 %v1862, %v1858
  %v2543 = vpack.c.b16 %v1863, %v1859
  %v2544 = vpack.c.b16 %v1864, %v1860
  %v2545 = vpack.c.b16 %v1865, %v1861
  %v2546 = vpack.c.b16 %v1870, %v1866
  %v2547 = vpack.c.b16 %v1871, %v1867
  %v2548 = vpack.c.b16 %v1872, %v1868
  %v2549 = vpack.c.b16 %v1873, %v1869
  %v2550 = vpack.c.b16 %v1878, %v1874
  %v2551 = vpack.c.b16 %v1879, %v1875
  %v2552 = vpack.c.b16 %v1880, %v1876
  %v2553 = vpack.c.b16 %v1881, %v1877
  %v2554 = vpack.c.b16 %v1886, %v1882
  %v2555 = vpack.c.b16 %v1887, %v1883
  %v2556 = vpack.c.b16 %v1888, %v1884
  %v2557 = vpack.c.b16 %v1889, %v1885
  %v2558 = vpack.c.b16 %v1894, %v1890
  %v2559 = vpack.c.b16 %v1895, %v1891
  %v2560 = vpack.c.b16 %v1896, %v1892
  %v2561 = vpack.c.b16 %v1897, %v1893
  %v2562 = vpack.c.b16 %v1902, %v1898
  %v2563 = vpack.c.b16 %v1903, %v1899
  %v2564 = vpack.c.b16 %v1904, %v1900
  %v2565 = vpack.c.b16 %v1905, %v1901
  %v2566 = vpack.c.b16 %v1910, %v1906
  %v2567 = vpack.c.b16 %v1911, %v1907
  %v2568 = vpack.c.b16 %v1912, %v1908
  %v2569 = vpack.c.b16 %v1913, %v1909
  %v2570 = vpack.c.b16 %v1918, %v1914
  %v2571 = vpack.c.b16 %v1919, %v1915
  %v2572 = vpack.c.b16 %v1920, %v1916
  %v2573 = vpack.c.b16 %v1921, %v1917
  %v2574 = vpack.c.b16 %v1926, %v1922
  %v2575 = vpack.c.b16 %v1927, %v1923
  %v2576 = vpack.c.b16 %v1928, %v1924
  %v2577 = vpack.c.b16 %v1929, %v1925
  %v2578 = vpack.c.b16 %v1934, %v1930
  %v2579 = vpack.c.b16 %v1935, %v1931
  %v2580 = vpack.c.b16 %v1936, %v1932
  %v2581 = vpack.c.b16 %v1937, %v1933
  %v2582 = vpack.c.b16 %v1942, %v1938
  %v2583 = vpack.c.b16 %v1943, %v1939
  %v2584 = vpack.c.b16 %v1944, %v1940
  %v2585 = vpack.c.b16 %v1945, %v1941
  %v2586 = vpack.c.b16 %v1950, %v1946
  %v2587 = vpack.c.b16 %v1951, %v1947
  %v2588 = vpack.c.b16 %v1952, %v1948
  %v2589 = vpack.c.b16 %v1953, %v1949
  %v2590 = vpack.c.b16 %v1958, %v1954
  %v2591 = vpack.c.b16 %v1959, %v1955
  %v2592 = vpack.c.b16 %v1960, %v1956
  %v2593 = vpack.c.b16 %v1961, %v1957
  %v2594 = vpack.c.b16 %v1966, %v1962
  %v2595 = vpack.c.b16 %v1967, %v1963
  %v2596 = vpack.c.b16 %v1968, %v1964
  %v2597 = vpack.c.b16 %v1969, %v1965
  %v2598 = vpack.c.b16 %v1974, %v1970
  %v2599 = vpack.c.b16 %v1975, %v1971
  %v2600 = vpack.c.b16 %v1976, %v1972
  %v2601 = vpack.c.b16 %v1977, %v1973
  %v2602 = vpack.c.b16 %v1982, %v1978
  %v2603 = vpack.c.b16 %v1983, %v1979
  %v2604 = vpack.c.b16 %v1984, %v1980
  %v2605 = vpack.c.b16 %v1985, %v1981
  %v2606 = vpack.c.b16 %v1990, %v1986
  %v2607 = vpack.c.b16 %v1991, %v1987
  %v2608 = vpack.c.b16 %v1992, %v1988
  %v2609 = vpack.c.b16 %v1993, %v1989
  %v2610 = vpack.c.b16 %v1998, %v1994
  %v2611 = vpack.c.b16 %v1999, %v1995
  %v2612 = vpack.c.b16 %v2000, %v1996
  %v2613 = vpack.c.b16 %v2001, %v1997
  %v2614 = vpack.c.b16 %v2006, %v2002
  %v2615 = vpack.c.b16 %v2007, %v2003
  %v2616 = vpack.c.b16 %v2008, %v2004
  %v2617 = vpack.c.b16 %v2009, %v2005
  %v2618 = vpack.c.b16 %v2014, %v2010
  %v2619 = vpack.c.b16 %v2015, %v2011
  %v2620 = vpack.c.b16 %v2016, %v2012
  %v2621 = vpack.c.b16 %v2017, %v2013
  %v2622 = vpack.c.b16 %v2022, %v2018
  %v2623 = vpack.c.b16 %v2023, %v2019
  %v2624 = vpack.c.b16 %v2024, %v2020
  %v2625 = vpack.c.b16 %v2025, %v2021
  %v2626 = vpack.c.b16 %v2030, %v2026
  %v2627 = vpack.c.b16 %v2031, %v2027
  %v2628 = vpack.c.b16 %v2032, %v2028
  %v2629 = vpack.c.b16 %v2033, %v2029
  %v2630 = vpack.c.b16 %v2038, %v2034
  %v2631 = vpack.c.b16 %v2039, %v2035
  %v2632 = vpack.c.b16 %v2040, %v2036
  %v2633 = vpack.c.b16 %v2041, %v2037
  %v2634 = vpack.c.b16 %v2046, %v2042
  %v2635 = vpack.c.b16 %v2047, %v2043
  %v2636 = vpack.c.b16 %v2048, %v2044
  %v2637 = vpack.c.b16 %v2049, %v2045
  %v2638 = vpack.c.b16 %v2054, %v2050
  %v2639 = vpack.c.b16 %v2055, %v2051
  %v2640 = vpack.c.b16 %v2056, %v2052
  %v2641 = vpack.c.b16 %v2057, %v2053
  %v2642 = vpack.c.b16 %v2062, %v2058
  %v2643 = vpack.c.b16 %v2063, %v2059
  %v2644 = vpack.c.b16 %v2064, %v2060
  %v2645 = vpack.c.b16 %v2065, %v2061
  %v2646 = vpack.c.b16 %v2070, %v2066
  %v2647 = vpack.c.b16 %v2071, %v2067
  %v2648 = vpack.c.b16 %v2072, %v2068
  %v2649 = vpack.c.b16 %v2073, %v2069
  %v2650 = vpack.c.b16 %v2078, %v2074
  %v2651 = vpack.c.b16 %v2079, %v2075
  %v2652 = vpack.c.b16 %v2080, %v2076
  %v2653 = vpack.c.b16 %v2081, %v2077
  %v2654 = vpack.c.b16 %v2086, %v2082
  %v2655 = vpack.c.b16 %v2087, %v2083
  %v2656 = vpack.c.b16 %v2088, %v2084
  %v2657 = vpack.c.b16 %v2089, %v2085
  %v2658 = vpack.c.b16 %v2094, %v2090
  %v2659 = vpack.c.b16 %v2095, %v2091
  %v2660 = vpack.c.b16 %v2096, %v2092
  %v2661 = vpack.c.b16 %v2097, %v2093
  %v2662 = vpack.c.b16 %v2102, %v2098
  %v2663 = vpack.c.b16 %v2103, %v2099
  %v2664 = vpack.c.b16 %v2104, %v2100
  %v2665 = vpack.c.b16 %v2105, %v2101
  %v2666 = vpack.c.b16 %v2110, %v2106
  %v2667 = vpack.c.b16 %v2111, %v2107
  %v2668 = vpack.c.b16 %v2112, %v2108
  %v2669 = vpack.c.b16 %v2113, %v2109
  %v2670 = vpack.c.b16 %v2118, %v2114
  %v2671 = vpack.c.b16 %v2119, %v2115
  %v2672 = vpack.c.b16 %v2120, %v2116
  %v2673 = vpack.c.b16 %v2121, %v2117
  %v2674 = vpack.c.b16 %v2126, %v2122
  %v2675 = vpack.c.b16 %v2127, %v2123
  %v2676 = vpack.c.b16 %v2128, %v2124
  %v2677 = vpack.c.b16 %v2129, %v2125
  %v2678 = vpack.c.b16 %v2134, %v2130
  %v2679 = vpack.c.b16 %v2135, %v2131
  %v2680 = vpack.c.b16 %v2136, %v2132
  %v2681 = vpack.c.b16 %v2137, %v2133
  %v2682 = vpack.c.b16 %v2142, %v2138
  %v2683 = vpack.c.b16 %v2143, %v2139
  %v2684 = vpack.c.b16 %v2144, %v2140
  %v2685 = vpack.c.b16 %v2145, %v2141
  %v2686 = vpack.c.b16 %v2150, %v2146
  %v2687 = vpack.c.b16 %v2151, %v2147
  %v2688 = vpack.c.b16 %v2152, %v2148
  %v2689 = vpack.c.b16 %v2153, %v2149
  %v2690 = vpack.c.b16 %v2158, %v2154
  %v2691 = vpack.c.b16 %v2159, %v2155
  %v2692 = vpack.c.b16 %v2160, %v2156
  %v2693 = vpack.c.b16 %v2161, %v2157
  %v2694 = vpack.c.b16 %v2166, %v2162
  %v2695 = vpack.c.b16 %v2167, %v2163
  %v2696 = vpack.c.b16 %v2168, %v2164
  %v2697 = vpack.c.b16 %v2169, %v2165
  %v2698 = vpack.c.b16 %v2174, %v2170
  %v2699 = vpack.c.b16 %v2175, %v2171
  %v2700 = vpack.c.b16 %v2176, %v2172
  %v2701 = vpack.c.b16 %v2177, %v2173
  %v2702 = vpack.c.b16 %v2182, %v2178
  %v2703 = vpack.c.b16 %v2183, %v2179
  %v2704 = vpack.c.b16 %v2184, %v2180
  %v2705 = vpack.c.b16 %v2185, %v2181
  %v2706 = vpack.c.b16 %v2190, %v2186
  %v2707 = vpack.c.b16 %v2191, %v2187
  %v2708 = vpack.c.b16 %v2192, %v2188
  %v2709 = vpack.c.b16 %v2193, %v2189
  %v2710 = vpack.c.b16 %v2198, %v2194
  %v2711 = vpack.c.b16 %v2199, %v2195
  %v2712 = vpack.c.b16 %v2200, %v2196
  %v2713 = vpack.c.b16 %v2201, %v2197
  %3226 = vmatprep.subr.bf16.mxu0 %v2203
  %3227 = vmatpush1.bf16.msra.mxu0 %v2202
  %3228 = vmatprep.subr.bf16.mxu0 %v2207
  %3229 = vmatpush1.bf16.msra.mxu0 %v2206
  %3230 = vmatprep.subr.bf16.mxu0 %v2211
  %3231 = vmatpush1.bf16.msra.mxu0 %v2210
  %3232 = vmatprep.subr.bf16.mxu0 %v2215
  %3233 = vmatpush1.bf16.msra.mxu0 %v2214
  %3234 = vmatprep.subr.bf16.mxu0 %v2219
  %3235 = vmatpush1.bf16.msra.mxu0 %v2218
  %3236 = vmatprep.subr.bf16.mxu0 %v2223
  %3237 = vmatpush1.bf16.msra.mxu0 %v2222
  %3238 = vmatprep.subr.bf16.mxu0 %v2227
  %3239 = vmatpush1.bf16.msra.mxu0 %v2226
  %3240 = vmatprep.subr.bf16.mxu0 %v2231
  %3241 = vmatpush1.bf16.msra.mxu0 %v2230
  %3242 = vmatprep.subr.bf16.mxu0 %v2235
  %3243 = vmatpush1.bf16.msra.mxu0 %v2234
  %3244 = vmatprep.subr.bf16.mxu0 %v2239
  %3245 = vmatpush1.bf16.msra.mxu0 %v2238
  %3246 = vmatprep.subr.bf16.mxu0 %v2243
  %3247 = vmatpush1.bf16.msra.mxu0 %v2242
  %3248 = vmatprep.subr.bf16.mxu0 %v2247
  %3249 = vmatpush1.bf16.msra.mxu0 %v2246
  %3250 = vmatprep.subr.bf16.mxu0 %v2251
  %3251 = vmatpush1.bf16.msra.mxu0 %v2250
  %3252 = vmatprep.subr.bf16.mxu0 %v2255
  %3253 = vmatpush1.bf16.msra.mxu0 %v2254
  %3254 = vmatprep.subr.bf16.mxu0 %v2259
  %3255 = vmatpush1.bf16.msra.mxu0 %v2258
  %3256 = vmatprep.subr.bf16.mxu0 %v2263
  %3257 = vmatpush1.bf16.msra.mxu0 %v2262
  %3258 = vmatprep.mubr.bf16.mxu0 %v589
  %3259 = vmatmul.mubr.bf16.gmra.mrb[0].mxu0 %v575
  %v3260 = vpop.f32.mrb[0].mxu0
  %v3261 = vadd.f32 %v533, %v3260
  %v3262 = vpop.f32.mrb[0].mxu0
  %v3263 = vadd.f32 %v537, %v3262
  %v3264 = vpop.f32.mrb[0].mxu0
  %v3265 = vpop.f32.mrb[0].mxu0
  %3266 = vdwg.mxu0
  %3267 = vmatprep.subr.bf16.mxu0 %v2267
  %3268 = vmatpush1.bf16.msra.mxu0 %v2266
  %3269 = vmatprep.subr.bf16.mxu0 %v2271
  %3270 = vmatpush1.bf16.msra.mxu0 %v2270
  %3271 = vmatprep.subr.bf16.mxu0 %v2275
  %3272 = vmatpush1.bf16.msra.mxu0 %v2274
  %3273 = vmatprep.subr.bf16.mxu0 %v2279
  %3274 = vmatpush1.bf16.msra.mxu0 %v2278
  %3275 = vmatprep.subr.bf16.mxu0 %v2283
  %3276 = vmatpush1.bf16.msra.mxu0 %v2282
  %3277 = vmatprep.subr.bf16.mxu0 %v2287
  %3278 = vmatpush1.bf16.msra.mxu0 %v2286
  %3279 = vmatprep.subr.bf16.mxu0 %v2291
  %3280 = vmatpush1.bf16.msra.mxu0 %v2290
  %3281 = vmatprep.subr.bf16.mxu0 %v2295
  %3282 = vmatpush1.bf16.msra.mxu0 %v2294
  %3283 = vmatprep.subr.bf16.mxu0 %v2299
  %3284 = vmatpush1.bf16.msra.mxu0 %v2298
  %3285 = vmatprep.subr.bf16.mxu0 %v2303
  %3286 = vmatpush1.bf16.msra.mxu0 %v2302
  %3287 = vmatprep.subr.bf16.mxu0 %v2307
  %3288 = vmatpush1.bf16.msra.mxu0 %v2306
  %3289 = vmatprep.subr.bf16.mxu0 %v2311
  %3290 = vmatpush1.bf16.msra.mxu0 %v2310
  %3291 = vmatprep.subr.bf16.mxu0 %v2315
  %3292 = vmatpush1.bf16.msra.mxu0 %v2314
  %3293 = vmatprep.subr.bf16.mxu0 %v2319
  %3294 = vmatpush1.bf16.msra.mxu0 %v2318
  %3295 = vmatprep.subr.bf16.mxu0 %v2323
  %3296 = vmatpush1.bf16.msra.mxu0 %v2322
  %3297 = vmatprep.subr.bf16.mxu0 %v2327
  %3298 = vmatpush1.bf16.msra.mxu0 %v2326
  %3299 = vmatprep.mubr.bf16.mxu0 %v599
  %3300 = vmatmul.mubr.bf16.gmra.mrb[0].mxu0 %v597
  %v3301 = vpop.f32.mrb[0].mxu0
  %v3302 = vadd.f32 %v3261, %v3301
  %v3303 = vpop.f32.mrb[0].mxu0
  %v3304 = vadd.f32 %v3263, %v3303
  %v3305 = vpop.f32.mrb[0].mxu0
  %v3306 = vpop.f32.mrb[0].mxu0
  %3307 = vdwg.mxu0
  %3308 = vmatprep.subr.bf16.mxu0 %v2331
  %3309 = vmatpush1.bf16.msra.mxu0 %v2330
  %3310 = vmatprep.subr.bf16.mxu0 %v2335
  %3311 = vmatpush1.bf16.msra.mxu0 %v2334
  %3312 = vmatprep.subr.bf16.mxu0 %v2339
  %3313 = vmatpush1.bf16.msra.mxu0 %v2338
  %3314 = vmatprep.subr.bf16.mxu0 %v2343
  %3315 = vmatpush1.bf16.msra.mxu0 %v2342
  %3316 = vmatprep.subr.bf16.mxu0 %v2347
  %3317 = vmatpush1.bf16.msra.mxu0 %v2346
  %3318 = vmatprep.subr.bf16.mxu0 %v2351
  %3319 = vmatpush1.bf16.msra.mxu0 %v2350
  %3320 = vmatprep.subr.bf16.mxu0 %v2355
  %3321 = vmatpush1.bf16.msra.mxu0 %v2354
  %3322 = vmatprep.subr.bf16.mxu0 %v2359
  %3323 = vmatpush1.bf16.msra.mxu0 %v2358
  %3324 = vmatprep.subr.bf16.mxu0 %v2363
  %3325 = vmatpush1.bf16.msra.mxu0 %v2362
  %3326 = vmatprep.subr.bf16.mxu0 %v2367
  %3327 = vmatpush1.bf16.msra.mxu0 %v2366
  %3328 = vmatprep.subr.bf16.mxu0 %v2371
  %3329 = vmatpush1.bf16.msra.mxu0 %v2370
  %3330 = vmatprep.subr.bf16.mxu0 %v2375
  %3331 = vmatpush1.bf16.msra.mxu0 %v2374
  %3332 = vmatprep.subr.bf16.mxu0 %v2379
  %3333 = vmatpush1.bf16.msra.mxu0 %v2378
  %3334 = vmatprep.subr.bf16.mxu0 %v2383
  %3335 = vmatpush1.bf16.msra.mxu0 %v2382
  %3336 = vmatprep.subr.bf16.mxu0 %v2387
  %3337 = vmatpush1.bf16.msra.mxu0 %v2386
  %3338 = vmatprep.subr.bf16.mxu0 %v2391
  %3339 = vmatpush1.bf16.msra.mxu0 %v2390
  %3340 = vmatprep.mubr.bf16.mxu0 %v596
  %3341 = vmatmul.mubr.bf16.gmra.mrb[0].mxu0 %v582
  %v3342 = vpop.f32.mrb[0].mxu0
  %v3343 = vadd.f32 %v3302, %v3342
  %v3344 = vpop.f32.mrb[0].mxu0
  %v3345 = vadd.f32 %v3304, %v3344
  %v3346 = vpop.f32.mrb[0].mxu0
  %v3347 = vpop.f32.mrb[0].mxu0
  %3348 = vdwg.mxu0
  %3349 = vmatprep.subr.bf16.mxu0 %v2395
  %3350 = vmatpush1.bf16.msra.mxu0 %v2394
  %3351 = vmatprep.subr.bf16.mxu0 %v2399
  %3352 = vmatpush1.bf16.msra.mxu0 %v2398
  %3353 = vmatprep.subr.bf16.mxu0 %v2403
  %3354 = vmatpush1.bf16.msra.mxu0 %v2402
  %3355 = vmatprep.subr.bf16.mxu0 %v2407
  %3356 = vmatpush1.bf16.msra.mxu0 %v2406
  %3357 = vmatprep.subr.bf16.mxu0 %v2411
  %3358 = vmatpush1.bf16.msra.mxu0 %v2410
  %3359 = vmatprep.subr.bf16.mxu0 %v2415
  %3360 = vmatpush1.bf16.msra.mxu0 %v2414
  %3361 = vmatprep.subr.bf16.mxu0 %v2419
  %3362 = vmatpush1.bf16.msra.mxu0 %v2418
  %3363 = vmatprep.subr.bf16.mxu0 %v2423
  %3364 = vmatpush1.bf16.msra.mxu0 %v2422
  %3365 = vmatprep.subr.bf16.mxu0 %v2427
  %3366 = vmatpush1.bf16.msra.mxu0 %v2426
  %3367 = vmatprep.subr.bf16.mxu0 %v2431
  %3368 = vmatpush1.bf16.msra.mxu0 %v2430
  %3369 = vmatprep.subr.bf16.mxu0 %v2435
  %3370 = vmatpush1.bf16.msra.mxu0 %v2434
  %3371 = vmatprep.subr.bf16.mxu0 %v2439
  %3372 = vmatpush1.bf16.msra.mxu0 %v2438
  %3373 = vmatprep.subr.bf16.mxu0 %v2443
  %3374 = vmatpush1.bf16.msra.mxu0 %v2442
  %3375 = vmatprep.subr.bf16.mxu0 %v2447
  %3376 = vmatpush1.bf16.msra.mxu0 %v2446
  %3377 = vmatprep.subr.bf16.mxu0 %v2451
  %3378 = vmatpush1.bf16.msra.mxu0 %v2450
  %3379 = vmatprep.subr.bf16.mxu0 %v2455
  %3380 = vmatpush1.bf16.msra.mxu0 %v2454
  %3381 = vmatprep.mubr.bf16.mxu0 %v600
  %3382 = vmatmul.mubr.bf16.gmra.mrb[0].mxu0 %v598
  %v3383 = vpop.f32.mrb[0].mxu0
  %v3384 = vadd.f32 %v3343, %v3383
  %v3385 = vpop.f32.mrb[0].mxu0
  %v3386 = vadd.f32 %v3345, %v3385
  %v3387 = vpop.f32.mrb[0].mxu0
  %v3388 = vpop.f32.mrb[0].mxu0
  %3389 = vdwg.mxu0
  %3390 = vmatprep.subr.bf16.mxu0 %v2459
  %3391 = vmatpush1.bf16.msra.mxu0 %v2458
  %3392 = vmatprep.subr.bf16.mxu0 %v2463
  %3393 = vmatpush1.bf16.msra.mxu0 %v2462
  %3394 = vmatprep.subr.bf16.mxu0 %v2467
  %3395 = vmatpush1.bf16.msra.mxu0 %v2466
  %3396 = vmatprep.subr.bf16.mxu0 %v2471
  %3397 = vmatpush1.bf16.msra.mxu0 %v2470
  %3398 = vmatprep.subr.bf16.mxu0 %v2475
  %3399 = vmatpush1.bf16.msra.mxu0 %v2474
  %3400 = vmatprep.subr.bf16.mxu0 %v2479
  %3401 = vmatpush1.bf16.msra.mxu0 %v2478
  %3402 = vmatprep.subr.bf16.mxu0 %v2483
  %3403 = vmatpush1.bf16.msra.mxu0 %v2482
  %3404 = vmatprep.subr.bf16.mxu0 %v2487
  %3405 = vmatpush1.bf16.msra.mxu0 %v2486
  %3406 = vmatprep.subr.bf16.mxu0 %v2491
  %3407 = vmatpush1.bf16.msra.mxu0 %v2490
  %3408 = vmatprep.subr.bf16.mxu0 %v2495
  %3409 = vmatpush1.bf16.msra.mxu0 %v2494
  %3410 = vmatprep.subr.bf16.mxu0 %v2499
  %3411 = vmatpush1.bf16.msra.mxu0 %v2498
  %3412 = vmatprep.subr.bf16.mxu0 %v2503
  %3413 = vmatpush1.bf16.msra.mxu0 %v2502
  %3414 = vmatprep.subr.bf16.mxu0 %v2507
  %3415 = vmatpush1.bf16.msra.mxu0 %v2506
  %3416 = vmatprep.subr.bf16.mxu0 %v2511
  %3417 = vmatpush1.bf16.msra.mxu0 %v2510
  %3418 = vmatprep.subr.bf16.mxu0 %v2515
  %3419 = vmatpush1.bf16.msra.mxu0 %v2514
  %3420 = vmatprep.subr.bf16.mxu0 %v2519
  %3421 = vmatpush1.bf16.msra.mxu0 %v2518
  %3422 = vmatprep.mubr.bf16.mxu0 %v638
  %3423 = vmatmul.mubr.bf16.gmra.mrb[0].mxu0 %v624
  %v3424 = vpop.f32.mrb[0].mxu0
  %v3425 = vadd.f32 %v3384, %v3424
  %v3426 = vpop.f32.mrb[0].mxu0
  %v3427 = vadd.f32 %v3386, %v3426
  %v3428 = vpop.f32.mrb[0].mxu0
  %v3429 = vpop.f32.mrb[0].mxu0
  %3430 = vdwg.mxu0
  %3431 = vmatprep.subr.bf16.mxu0 %v2523
  %3432 = vmatpush1.bf16.msra.mxu0 %v2522
  %3433 = vmatprep.subr.bf16.mxu0 %v2527
  %3434 = vmatpush1.bf16.msra.mxu0 %v2526
  %3435 = vmatprep.subr.bf16.mxu0 %v2531
  %3436 = vmatpush1.bf16.msra.mxu0 %v2530
  %3437 = vmatprep.subr.bf16.mxu0 %v2535
  %3438 = vmatpush1.bf16.msra.mxu0 %v2534
  %3439 = vmatprep.subr.bf16.mxu0 %v2539
  %3440 = vmatpush1.bf16.msra.mxu0 %v2538
  %3441 = vmatprep.subr.bf16.mxu0 %v2543
  %3442 = vmatpush1.bf16.msra.mxu0 %v2542
  %3443 = vmatprep.subr.bf16.mxu0 %v2547
  %3444 = vmatpush1.bf16.msra.mxu0 %v2546
  %3445 = vmatprep.subr.bf16.mxu0 %v2551
  %3446 = vmatpush1.bf16.msra.mxu0 %v2550
  %3447 = vmatprep.subr.bf16.mxu0 %v2555
  %3448 = vmatpush1.bf16.msra.mxu0 %v2554
  %3449 = vmatprep.subr.bf16.mxu0 %v2559
  %3450 = vmatpush1.bf16.msra.mxu0 %v2558
  %3451 = vmatprep.subr.bf16.mxu0 %v2563
  %3452 = vmatpush1.bf16.msra.mxu0 %v2562
  %3453 = vmatprep.subr.bf16.mxu0 %v2567
  %3454 = vmatpush1.bf16.msra.mxu0 %v2566
  %3455 = vmatprep.subr.bf16.mxu0 %v2571
  %3456 = vmatpush1.bf16.msra.mxu0 %v2570
  %3457 = vmatprep.subr.bf16.mxu0 %v2575
  %3458 = vmatpush1.bf16.msra.mxu0 %v2574
  %3459 = vmatprep.subr.bf16.mxu0 %v2579
  %3460 = vmatpush1.bf16.msra.mxu0 %v2578
  %3461 = vmatprep.subr.bf16.mxu0 %v2583
  %3462 = vmatpush1.bf16.msra.mxu0 %v2582
  %3463 = vmatprep.mubr.bf16.mxu0 %v648
  %3464 = vmatmul.mubr.bf16.gmra.mrb[0].mxu0 %v646
  %v3465 = vpop.f32.mrb[0].mxu0
  %v3466 = vadd.f32 %v3425, %v3465
  %v3467 = vpop.f32.mrb[0].mxu0
  %v3468 = vadd.f32 %v3427, %v3467
  %v3469 = vpop.f32.mrb[0].mxu0
  %v3470 = vpop.f32.mrb[0].mxu0
  %3471 = vdwg.mxu0
  %3472 = vmatprep.subr.bf16.mxu0 %v2587
  %3473 = vmatpush1.bf16.msra.mxu0 %v2586
  %3474 = vmatprep.subr.bf16.mxu0 %v2591
  %3475 = vmatpush1.bf16.msra.mxu0 %v2590
  %3476 = vmatprep.subr.bf16.mxu0 %v2595
  %3477 = vmatpush1.bf16.msra.mxu0 %v2594
  %3478 = vmatprep.subr.bf16.mxu0 %v2599
  %3479 = vmatpush1.bf16.msra.mxu0 %v2598
  %3480 = vmatprep.subr.bf16.mxu0 %v2603
  %3481 = vmatpush1.bf16.msra.mxu0 %v2602
  %3482 = vmatprep.subr.bf16.mxu0 %v2607
  %3483 = vmatpush1.bf16.msra.mxu0 %v2606
  %3484 = vmatprep.subr.bf16.mxu0 %v2611
  %3485 = vmatpush1.bf16.msra.mxu0 %v2610
  %3486 = vmatprep.subr.bf16.mxu0 %v2615
  %3487 = vmatpush1.bf16.msra.mxu0 %v2614
  %3488 = vmatprep.subr.bf16.mxu0 %v2619
  %3489 = vmatpush1.bf16.msra.mxu0 %v2618
  %3490 = vmatprep.subr.bf16.mxu0 %v2623
  %3491 = vmatpush1.bf16.msra.mxu0 %v2622
  %3492 = vmatprep.subr.bf16.mxu0 %v2627
  %3493 = vmatpush1.bf16.msra.mxu0 %v2626
  %3494 = vmatprep.subr.bf16.mxu0 %v2631
  %3495 = vmatpush1.bf16.msra.mxu0 %v2630
  %3496 = vmatprep.subr.bf16.mxu0 %v2635
  %3497 = vmatpush1.bf16.msra.mxu0 %v2634
  %3498 = vmatprep.subr.bf16.mxu0 %v2639
  %3499 = vmatpush1.bf16.msra.mxu0 %v2638
  %3500 = vmatprep.subr.bf16.mxu0 %v2643
  %3501 = vmatpush1.bf16.msra.mxu0 %v2642
  %3502 = vmatprep.subr.bf16.mxu0 %v2647
  %3503 = vmatpush1.bf16.msra.mxu0 %v2646
  %3504 = vmatprep.mubr.bf16.mxu0 %v645
  %3505 = vmatmul.mubr.bf16.gmra.mrb[0].mxu0 %v631
  %v3506 = vpop.f32.mrb[0].mxu0
  %v3507 = vadd.f32 %v3466, %v3506
  %v3508 = vpop.f32.mrb[0].mxu0
  %v3509 = vadd.f32 %v3468, %v3508
  %v3510 = vpop.f32.mrb[0].mxu0
  %v3511 = vpop.f32.mrb[0].mxu0
  %3512 = vdwg.mxu0
  %3513 = vmatprep.subr.bf16.mxu0 %v2651
  %3514 = vmatpush1.bf16.msra.mxu0 %v2650
  %3515 = vmatprep.subr.bf16.mxu0 %v2655
  %3516 = vmatpush1.bf16.msra.mxu0 %v2654
  %3517 = vmatprep.subr.bf16.mxu0 %v2659
  %3518 = vmatpush1.bf16.msra.mxu0 %v2658
  %3519 = vmatprep.subr.bf16.mxu0 %v2663
  %3520 = vmatpush1.bf16.msra.mxu0 %v2662
  %3521 = vmatprep.subr.bf16.mxu0 %v2667
  %3522 = vmatpush1.bf16.msra.mxu0 %v2666
  %3523 = vmatprep.subr.bf16.mxu0 %v2671
  %3524 = vmatpush1.bf16.msra.mxu0 %v2670
  %3525 = vmatprep.subr.bf16.mxu0 %v2675
  %3526 = vmatpush1.bf16.msra.mxu0 %v2674
  %3527 = vmatprep.subr.bf16.mxu0 %v2679
  %3528 = vmatpush1.bf16.msra.mxu0 %v2678
  %3529 = vmatprep.subr.bf16.mxu0 %v2683
  %3530 = vmatpush1.bf16.msra.mxu0 %v2682
  %3531 = vmatprep.subr.bf16.mxu0 %v2687
  %3532 = vmatpush1.bf16.msra.mxu0 %v2686
  %3533 = vmatprep.subr.bf16.mxu0 %v2691
  %3534 = vmatpush1.bf16.msra.mxu0 %v2690
  %3535 = vmatprep.subr.bf16.mxu0 %v2695
  %3536 = vmatpush1.bf16.msra.mxu0 %v2694
  %3537 = vmatprep.subr.bf16.mxu0 %v2699
  %3538 = vmatpush1.bf16.msra.mxu0 %v2698
  %3539 = vmatprep.subr.bf16.mxu0 %v2703
  %3540 = vmatpush1.bf16.msra.mxu0 %v2702
  %3541 = vmatprep.subr.bf16.mxu0 %v2707
  %3542 = vmatpush1.bf16.msra.mxu0 %v2706
  %3543 = vmatprep.subr.bf16.mxu0 %v2711
  %3544 = vmatpush1.bf16.msra.mxu0 %v2710
  %3545 = vmatprep.mubr.bf16.mxu0 %v649
  %3546 = vmatmul.mubr.bf16.gmra.mrb[0].mxu0 %v647
  %v3547 = vpop.f32.mrb[0].mxu0
  %v3548 = vadd.f32 %v3507, %v3547
  %v3549 = vpop.f32.mrb[0].mxu0
  %v3550 = vadd.f32 %v3509, %v3549
  %v3551 = vpop.f32.mrb[0].mxu0
  %v3552 = vpop.f32.mrb[0].mxu0
  %3553 = vdwg.mxu0
  %3554 = vmatprep.subr.bf16.mxu0 %v2205
  %3555 = vmatpush1.bf16.msra.mxu0 %v2204
  %3556 = vmatprep.subr.bf16.mxu0 %v2209
  %3557 = vmatpush1.bf16.msra.mxu0 %v2208
  %3558 = vmatprep.subr.bf16.mxu0 %v2213
  %3559 = vmatpush1.bf16.msra.mxu0 %v2212
  %3560 = vmatprep.subr.bf16.mxu0 %v2217
  %3561 = vmatpush1.bf16.msra.mxu0 %v2216
  %3562 = vmatprep.subr.bf16.mxu0 %v2221
  %3563 = vmatpush1.bf16.msra.mxu0 %v2220
  %3564 = vmatprep.subr.bf16.mxu0 %v2225
  %3565 = vmatpush1.bf16.msra.mxu0 %v2224
  %3566 = vmatprep.subr.bf16.mxu0 %v2229
  %3567 = vmatpush1.bf16.msra.mxu0 %v2228
  %3568 = vmatprep.subr.bf16.mxu0 %v2233
  %3569 = vmatpush1.bf16.msra.mxu0 %v2232
  %3570 = vmatprep.subr.bf16.mxu0 %v2237
  %3571 = vmatpush1.bf16.msra.mxu0 %v2236
  %3572 = vmatprep.subr.bf16.mxu0 %v2241
  %3573 = vmatpush1.bf16.msra.mxu0 %v2240
  %3574 = vmatprep.subr.bf16.mxu0 %v2245
  %3575 = vmatpush1.bf16.msra.mxu0 %v2244
  %3576 = vmatprep.subr.bf16.mxu0 %v2249
  %3577 = vmatpush1.bf16.msra.mxu0 %v2248
  %3578 = vmatprep.subr.bf16.mxu0 %v2253
  %3579 = vmatpush1.bf16.msra.mxu0 %v2252
  %3580 = vmatprep.subr.bf16.mxu0 %v2257
  %3581 = vmatpush1.bf16.msra.mxu0 %v2256
  %3582 = vmatprep.subr.bf16.mxu0 %v2261
  %3583 = vmatpush1.bf16.msra.mxu0 %v2260
  %3584 = vmatprep.subr.bf16.mxu0 %v2265
  %3585 = vmatpush1.bf16.msra.mxu0 %v2264
  %3586 = vmatprep.mubr.bf16.mxu0 %v589
  %3587 = vmatmul.mubr.bf16.gmra.mrb[0].mxu0 %v575
  %v3588 = vpop.f32.mrb[0].mxu0
  %v3589 = vadd.f32 %v541, %v3588
  %v3590 = vpop.f32.mrb[0].mxu0
  %v3591 = vadd.f32 %v545, %v3590
  %v3592 = vpop.f32.mrb[0].mxu0
  %v3593 = vpop.f32.mrb[0].mxu0
  %3594 = vdwg.mxu0
  %3595 = vmatprep.subr.bf16.mxu0 %v2269
  %3596 = vmatpush1.bf16.msra.mxu0 %v2268
  %3597 = vmatprep.subr.bf16.mxu0 %v2273
  %3598 = vmatpush1.bf16.msra.mxu0 %v2272
  %3599 = vmatprep.subr.bf16.mxu0 %v2277
  %3600 = vmatpush1.bf16.msra.mxu0 %v2276
  %3601 = vmatprep.subr.bf16.mxu0 %v2281
  %3602 = vmatpush1.bf16.msra.mxu0 %v2280
  %3603 = vmatprep.subr.bf16.mxu0 %v2285
  %3604 = vmatpush1.bf16.msra.mxu0 %v2284
  %3605 = vmatprep.subr.bf16.mxu0 %v2289
  %3606 = vmatpush1.bf16.msra.mxu0 %v2288
  %3607 = vmatprep.subr.bf16.mxu0 %v2293
  %3608 = vmatpush1.bf16.msra.mxu0 %v2292
  %3609 = vmatprep.subr.bf16.mxu0 %v2297
  %3610 = vmatpush1.bf16.msra.mxu0 %v2296
  %3611 = vmatprep.subr.bf16.mxu0 %v2301
  %3612 = vmatpush1.bf16.msra.mxu0 %v2300
  %3613 = vmatprep.subr.bf16.mxu0 %v2305
  %3614 = vmatpush1.bf16.msra.mxu0 %v2304
  %3615 = vmatprep.subr.bf16.mxu0 %v2309
  %3616 = vmatpush1.bf16.msra.mxu0 %v2308
  %3617 = vmatprep.subr.bf16.mxu0 %v2313
  %3618 = vmatpush1.bf16.msra.mxu0 %v2312
  %3619 = vmatprep.subr.bf16.mxu0 %v2317
  %3620 = vmatpush1.bf16.msra.mxu0 %v2316
  %3621 = vmatprep.subr.bf16.mxu0 %v2321
  %3622 = vmatpush1.bf16.msra.mxu0 %v2320
  %3623 = vmatprep.subr.bf16.mxu0 %v2325
  %3624 = vmatpush1.bf16.msra.mxu0 %v2324
  %3625 = vmatprep.subr.bf16.mxu0 %v2329
  %3626 = vmatpush1.bf16.msra.mxu0 %v2328
  %3627 = vmatprep.mubr.bf16.mxu0 %v599
  %3628 = vmatmul.mubr.bf16.gmra.mrb[0].mxu0 %v597
  %v3629 = vpop.f32.mrb[0].mxu0
  %v3630 = vadd.f32 %v3589, %v3629
  %v3631 = vpop.f32.mrb[0].mxu0
  %v3632 = vadd.f32 %v3591, %v3631
  %v3633 = vpop.f32.mrb[0].mxu0
  %v3634 = vpop.f32.mrb[0].mxu0
  %3635 = vdwg.mxu0
  %3636 = vmatprep.subr.bf16.mxu0 %v2333
  %3637 = vmatpush1.bf16.msra.mxu0 %v2332
  %3638 = vmatprep.subr.bf16.mxu0 %v2337
  %3639 = vmatpush1.bf16.msra.mxu0 %v2336
  %3640 = vmatprep.subr.bf16.mxu0 %v2341
  %3641 = vmatpush1.bf16.msra.mxu0 %v2340
  %3642 = vmatprep.subr.bf16.mxu0 %v2345
  %3643 = vmatpush1.bf16.msra.mxu0 %v2344
  %3644 = vmatprep.subr.bf16.mxu0 %v2349
  %3645 = vmatpush1.bf16.msra.mxu0 %v2348
  %3646 = vmatprep.subr.bf16.mxu0 %v2353
  %3647 = vmatpush1.bf16.msra.mxu0 %v2352
  %3648 = vmatprep.subr.bf16.mxu0 %v2357
  %3649 = vmatpush1.bf16.msra.mxu0 %v2356
  %3650 = vmatprep.subr.bf16.mxu0 %v2361
  %3651 = vmatpush1.bf16.msra.mxu0 %v2360
  %3652 = vmatprep.subr.bf16.mxu0 %v2365
  %3653 = vmatpush1.bf16.msra.mxu0 %v2364
  %3654 = vmatprep.subr.bf16.mxu0 %v2369
  %3655 = vmatpush1.bf16.msra.mxu0 %v2368
  %3656 = vmatprep.subr.bf16.mxu0 %v2373
  %3657 = vmatpush1.bf16.msra.mxu0 %v2372
  %3658 = vmatprep.subr.bf16.mxu0 %v2377
  %3659 = vmatpush1.bf16.msra.mxu0 %v2376
  %3660 = vmatprep.subr.bf16.mxu0 %v2381
  %3661 = vmatpush1.bf16.msra.mxu0 %v2380
  %3662 = vmatprep.subr.bf16.mxu0 %v2385
  %3663 = vmatpush1.bf16.msra.mxu0 %v2384
  %3664 = vmatprep.subr.bf16.mxu0 %v2389
  %3665 = vmatpush1.bf16.msra.mxu0 %v2388
  %3666 = vmatprep.subr.bf16.mxu0 %v2393
  %3667 = vmatpush1.bf16.msra.mxu0 %v2392
  %3668 = vmatprep.mubr.bf16.mxu0 %v596
  %3669 = vmatmul.mubr.bf16.gmra.mrb[0].mxu0 %v582
  %v3670 = vpop.f32.mrb[0].mxu0
  %v3671 = vadd.f32 %v3630, %v3670
  %v3672 = vpop.f32.mrb[0].mxu0
  %v3673 = vadd.f32 %v3632, %v3672
  %v3674 = vpop.f32.mrb[0].mxu0
  %v3675 = vpop.f32.mrb[0].mxu0
  %3676 = vdwg.mxu0
  %3677 = vmatprep.subr.bf16.mxu0 %v2397
  %3678 = vmatpush1.bf16.msra.mxu0 %v2396
  %3679 = vmatprep.subr.bf16.mxu0 %v2401
  %3680 = vmatpush1.bf16.msra.mxu0 %v2400
  %3681 = vmatprep.subr.bf16.mxu0 %v2405
  %3682 = vmatpush1.bf16.msra.mxu0 %v2404
  %3683 = vmatprep.subr.bf16.mxu0 %v2409
  %3684 = vmatpush1.bf16.msra.mxu0 %v2408
  %3685 = vmatprep.subr.bf16.mxu0 %v2413
  %3686 = vmatpush1.bf16.msra.mxu0 %v2412
  %3687 = vmatprep.subr.bf16.mxu0 %v2417
  %3688 = vmatpush1.bf16.msra.mxu0 %v2416
  %3689 = vmatprep.subr.bf16.mxu0 %v2421
  %3690 = vmatpush1.bf16.msra.mxu0 %v2420
  %3691 = vmatprep.subr.bf16.mxu0 %v2425
  %3692 = vmatpush1.bf16.msra.mxu0 %v2424
  %3693 = vmatprep.subr.bf16.mxu0 %v2429
  %3694 = vmatpush1.bf16.msra.mxu0 %v2428
  %3695 = vmatprep.subr.bf16.mxu0 %v2433
  %3696 = vmatpush1.bf16.msra.mxu0 %v2432
  %3697 = vmatprep.subr.bf16.mxu0 %v2437
  %3698 = vmatpush1.bf16.msra.mxu0 %v2436
  %3699 = vmatprep.subr.bf16.mxu0 %v2441
  %3700 = vmatpush1.bf16.msra.mxu0 %v2440
  %3701 = vmatprep.subr.bf16.mxu0 %v2445
  %3702 = vmatpush1.bf16.msra.mxu0 %v2444
  %3703 = vmatprep.subr.bf16.mxu0 %v2449
  %3704 = vmatpush1.bf16.msra.mxu0 %v2448
  %3705 = vmatprep.subr.bf16.mxu0 %v2453
  %3706 = vmatpush1.bf16.msra.mxu0 %v2452
  %3707 = vmatprep.subr.bf16.mxu0 %v2457
  %3708 = vmatpush1.bf16.msra.mxu0 %v2456
  %3709 = vmatprep.mubr.bf16.mxu0 %v600
  %3710 = vmatmul.mubr.bf16.gmra.mrb[0].mxu0 %v598
  %v3711 = vpop.f32.mrb[0].mxu0
  %v3712 = vadd.f32 %v3671, %v3711
  %v3713 = vpop.f32.mrb[0].mxu0
  %v3714 = vadd.f32 %v3673, %v3713
  %v3715 = vpop.f32.mrb[0].mxu0
  %v3716 = vpop.f32.mrb[0].mxu0
  %3717 = vdwg.mxu0
  %3718 = vmatprep.subr.bf16.mxu0 %v2461
  %3719 = vmatpush1.bf16.msra.mxu0 %v2460
  %3720 = vmatprep.subr.bf16.mxu0 %v2465
  %3721 = vmatpush1.bf16.msra.mxu0 %v2464
  %3722 = vmatprep.subr.bf16.mxu0 %v2469
  %3723 = vmatpush1.bf16.msra.mxu0 %v2468
  %3724 = vmatprep.subr.bf16.mxu0 %v2473
  %3725 = vmatpush1.bf16.msra.mxu0 %v2472
  %3726 = vmatprep.subr.bf16.mxu0 %v2477
  %3727 = vmatpush1.bf16.msra.mxu0 %v2476
  %3728 = vmatprep.subr.bf16.mxu0 %v2481
  %3729 = vmatpush1.bf16.msra.mxu0 %v2480
  %3730 = vmatprep.subr.bf16.mxu0 %v2485
  %3731 = vmatpush1.bf16.msra.mxu0 %v2484
  %3732 = vmatprep.subr.bf16.mxu0 %v2489
  %3733 = vmatpush1.bf16.msra.mxu0 %v2488
  %3734 = vmatprep.subr.bf16.mxu0 %v2493
  %3735 = vmatpush1.bf16.msra.mxu0 %v2492
  %3736 = vmatprep.subr.bf16.mxu0 %v2497
  %3737 = vmatpush1.bf16.msra.mxu0 %v2496
  %3738 = vmatprep.subr.bf16.mxu0 %v2501
  %3739 = vmatpush1.bf16.msra.mxu0 %v2500
  %3740 = vmatprep.subr.bf16.mxu0 %v2505
  %3741 = vmatpush1.bf16.msra.mxu0 %v2504
  %3742 = vmatprep.subr.bf16.mxu0 %v2509
  %3743 = vmatpush1.bf16.msra.mxu0 %v2508
  %3744 = vmatprep.subr.bf16.mxu0 %v2513
  %3745 = vmatpush1.bf16.msra.mxu0 %v2512
  %3746 = vmatprep.subr.bf16.mxu0 %v2517
  %3747 = vmatpush1.bf16.msra.mxu0 %v2516
  %3748 = vmatprep.subr.bf16.mxu0 %v2521
  %3749 = vmatpush1.bf16.msra.mxu0 %v2520
  %3750 = vmatprep.mubr.bf16.mxu0 %v638
  %3751 = vmatmul.mubr.bf16.gmra.mrb[0].mxu0 %v624
  %v3752 = vpop.f32.mrb[0].mxu0
  %v3753 = vadd.f32 %v3712, %v3752
  %v3754 = vpop.f32.mrb[0].mxu0
  %v3755 = vadd.f32 %v3714, %v3754
  %v3756 = vpop.f32.mrb[0].mxu0
  %v3757 = vpop.f32.mrb[0].mxu0
  %3758 = vdwg.mxu0
  %3759 = vmatprep.subr.bf16.mxu0 %v2525
  %3760 = vmatpush1.bf16.msra.mxu0 %v2524
  %3761 = vmatprep.subr.bf16.mxu0 %v2529
  %3762 = vmatpush1.bf16.msra.mxu0 %v2528
  %3763 = vmatprep.subr.bf16.mxu0 %v2533
  %3764 = vmatpush1.bf16.msra.mxu0 %v2532
  %3765 = vmatprep.subr.bf16.mxu0 %v2537
  %3766 = vmatpush1.bf16.msra.mxu0 %v2536
  %3767 = vmatprep.subr.bf16.mxu0 %v2541
  %3768 = vmatpush1.bf16.msra.mxu0 %v2540
  %3769 = vmatprep.subr.bf16.mxu0 %v2545
  %3770 = vmatpush1.bf16.msra.mxu0 %v2544
  %3771 = vmatprep.subr.bf16.mxu0 %v2549
  %3772 = vmatpush1.bf16.msra.mxu0 %v2548
  %3773 = vmatprep.subr.bf16.mxu0 %v2553
  %3774 = vmatpush1.bf16.msra.mxu0 %v2552
  %3775 = vmatprep.subr.bf16.mxu0 %v2557
  %3776 = vmatpush1.bf16.msra.mxu0 %v2556
  %3777 = vmatprep.subr.bf16.mxu0 %v2561
  %3778 = vmatpush1.bf16.msra.mxu0 %v2560
  %3779 = vmatprep.subr.bf16.mxu0 %v2565
  %3780 = vmatpush1.bf16.msra.mxu0 %v2564
  %3781 = vmatprep.subr.bf16.mxu0 %v2569
  %3782 = vmatpush1.bf16.msra.mxu0 %v2568
  %3783 = vmatprep.subr.bf16.mxu0 %v2573
  %3784 = vmatpush1.bf16.msra.mxu0 %v2572
  %3785 = vmatprep.subr.bf16.mxu0 %v2577
  %3786 = vmatpush1.bf16.msra.mxu0 %v2576
  %3787 = vmatprep.subr.bf16.mxu0 %v2581
  %3788 = vmatpush1.bf16.msra.mxu0 %v2580
  %3789 = vmatprep.subr.bf16.mxu0 %v2585
  %3790 = vmatpush1.bf16.msra.mxu0 %v2584
  %3791 = vmatprep.mubr.bf16.mxu0 %v648
  %3792 = vmatmul.mubr.bf16.gmra.mrb[0].mxu0 %v646
  %v3793 = vpop.f32.mrb[0].mxu0
  %v3794 = vadd.f32 %v3753, %v3793
  %v3795 = vpop.f32.mrb[0].mxu0
  %v3796 = vadd.f32 %v3755, %v3795
  %v3797 = vpop.f32.mrb[0].mxu0
  %v3798 = vpop.f32.mrb[0].mxu0
  %3799 = vdwg.mxu0
  %3800 = vmatprep.subr.bf16.mxu0 %v2589
  %3801 = vmatpush1.bf16.msra.mxu0 %v2588
  %3802 = vmatprep.subr.bf16.mxu0 %v2593
  %3803 = vmatpush1.bf16.msra.mxu0 %v2592
  %3804 = vmatprep.subr.bf16.mxu0 %v2597
  %3805 = vmatpush1.bf16.msra.mxu0 %v2596
  %3806 = vmatprep.subr.bf16.mxu0 %v2601
  %3807 = vmatpush1.bf16.msra.mxu0 %v2600
  %3808 = vmatprep.subr.bf16.mxu0 %v2605
  %3809 = vmatpush1.bf16.msra.mxu0 %v2604
  %3810 = vmatprep.subr.bf16.mxu0 %v2609
  %3811 = vmatpush1.bf16.msra.mxu0 %v2608
  %3812 = vmatprep.subr.bf16.mxu0 %v2613
  %3813 = vmatpush1.bf16.msra.mxu0 %v2612
  %3814 = vmatprep.subr.bf16.mxu0 %v2617
  %3815 = vmatpush1.bf16.msra.mxu0 %v2616
  %3816 = vmatprep.subr.bf16.mxu0 %v2621
  %3817 = vmatpush1.bf16.msra.mxu0 %v2620
  %3818 = vmatprep.subr.bf16.mxu0 %v2625
  %3819 = vmatpush1.bf16.msra.mxu0 %v2624
  %3820 = vmatprep.subr.bf16.mxu0 %v2629
  %3821 = vmatpush1.bf16.msra.mxu0 %v2628
  %3822 = vmatprep.subr.bf16.mxu0 %v2633
  %3823 = vmatpush1.bf16.msra.mxu0 %v2632
  %3824 = vmatprep.subr.bf16.mxu0 %v2637
  %3825 = vmatpush1.bf16.msra.mxu0 %v2636
  %3826 = vmatprep.subr.bf16.mxu0 %v2641
  %3827 = vmatpush1.bf16.msra.mxu0 %v2640
  %3828 = vmatprep.subr.bf16.mxu0 %v2645
  %3829 = vmatpush1.bf16.msra.mxu0 %v2644
  %3830 = vmatprep.subr.bf16.mxu0 %v2649
  %3831 = vmatpush1.bf16.msra.mxu0 %v2648
  %3832 = vmatprep.mubr.bf16.mxu0 %v645
  %3833 = vmatmul.mubr.bf16.gmra.mrb[0].mxu0 %v631
  %v3834 = vpop.f32.mrb[0].mxu0
  %v3835 = vadd.f32 %v3794, %v3834
  %v3836 = vpop.f32.mrb[0].mxu0
  %v3837 = vadd.f32 %v3796, %v3836
  %v3838 = vpop.f32.mrb[0].mxu0
  %v3839 = vpop.f32.mrb[0].mxu0
  %3840 = vdwg.mxu0
  %3841 = vmatprep.subr.bf16.mxu0 %v2653
  %3842 = vmatpush1.bf16.msra.mxu0 %v2652
  %3843 = vmatprep.subr.bf16.mxu0 %v2657
  %3844 = vmatpush1.bf16.msra.mxu0 %v2656
  %3845 = vmatprep.subr.bf16.mxu0 %v2661
  %3846 = vmatpush1.bf16.msra.mxu0 %v2660
  %3847 = vmatprep.subr.bf16.mxu0 %v2665
  %3848 = vmatpush1.bf16.msra.mxu0 %v2664
  %3849 = vmatprep.subr.bf16.mxu0 %v2669
  %3850 = vmatpush1.bf16.msra.mxu0 %v2668
  %3851 = vmatprep.subr.bf16.mxu0 %v2673
  %3852 = vmatpush1.bf16.msra.mxu0 %v2672
  %3853 = vmatprep.subr.bf16.mxu0 %v2677
  %3854 = vmatpush1.bf16.msra.mxu0 %v2676
  %3855 = vmatprep.subr.bf16.mxu0 %v2681
  %3856 = vmatpush1.bf16.msra.mxu0 %v2680
  %3857 = vmatprep.subr.bf16.mxu0 %v2685
  %3858 = vmatpush1.bf16.msra.mxu0 %v2684
  %3859 = vmatprep.subr.bf16.mxu0 %v2689
  %3860 = vmatpush1.bf16.msra.mxu0 %v2688
  %3861 = vmatprep.subr.bf16.mxu0 %v2693
  %3862 = vmatpush1.bf16.msra.mxu0 %v2692
  %3863 = vmatprep.subr.bf16.mxu0 %v2697
  %3864 = vmatpush1.bf16.msra.mxu0 %v2696
  %3865 = vmatprep.subr.bf16.mxu0 %v2701
  %3866 = vmatpush1.bf16.msra.mxu0 %v2700
  %3867 = vmatprep.subr.bf16.mxu0 %v2705
  %3868 = vmatpush1.bf16.msra.mxu0 %v2704
  %3869 = vmatprep.subr.bf16.mxu0 %v2709
  %3870 = vmatpush1.bf16.msra.mxu0 %v2708
  %3871 = vmatprep.subr.bf16.mxu0 %v2713
  %3872 = vmatpush1.bf16.msra.mxu0 %v2712
  %3873 = vmatprep.mubr.bf16.mxu0 %v649
  %3874 = vmatmul.mubr.bf16.gmra.mrb[0].mxu0 %v647
  %v3875 = vpop.f32.mrb[0].mxu0
  %v3876 = vadd.f32 %v3835, %v3875
  %v3877 = vpop.f32.mrb[0].mxu0
  %v3878 = vadd.f32 %v3837, %v3877
  %v3879 = vpop.f32.mrb[0].mxu0
  %v3880 = vpop.f32.mrb[0].mxu0
  %3881 = vdwg.mxu0
  %v3882 = vmax.f32 %v3548, 0.0
  %v3883 = vmax.f32 %v3550, 0.0
  %v3884 = vmax.f32 %v3876, 0.0
  %v3885 = vmax.f32 %v3878, 0.0
  %v3890 = vcombine.low %v3882, %v3883
  %v3891 = vcombine.low %v3884, %v3885
  %v3893 = vunpack.c.l.s4 1983009808
  %v3894 = vunpack.c.0.s8 %v3893
  %v3895 = vlaneseq
  %v3896 = vshrl.u32 %v3895, 7
  %v3897 = vsub.s32 %v3894, %v3896
  %v3898 = vrot.slane %v3890, %v3897
  %v3900 = vunpack.c.l.s4 1983009808
  %v3901 = vunpack.c.0.s8 %v3900
  %v3902 = vlaneseq
  %v3903 = vshrl.u32 %v3902, 7
  %v3904 = vsub.s32 %v3901, %v3903
  %v3905 = vrot.slane %v3891, %v3904
  %v3906 = vcombine.low %v3898, %v3905
  %3908 = vst [vmem:[%s3] sm:$0xff] %v3906
  // Predicated region
  $region14: #{feat_encoder_forward.26} parent=0 // pred_check
    _
  $region15: #{feat_encoder_forward.26} parent=0 // pred_check_branch
    %3910 = sbr.rel (0) target = $region17
  $region16: #{feat_encoder_forward.26} parent=0 // pred_region
    _
  $region17: #{feat_encoder_forward.26} parent=0 // pred_fallthru
    _
  // Predicated region
  $region18: #{feat_encoder_forward.26} parent=0 // pred_check
    _
  $region19: #{feat_encoder_forward.26} parent=0 // pred_check_branch
    %3912 = sbr.rel (0) target = $region21
  $region20: #{feat_encoder_forward.26} parent=0 // pred_region
    _
  $region21: #{feat_encoder_forward.26} parent=0 // pred_fallthru
    _

// kernel: feat_encoder_forward.27
$region0: #{feat_encoder_forward.27}
  #allocation0 [shape = 'u32[]', space=smem, size = 0x4, offset = 0x4, fixed_abs, tag = 'smem constant byte address 0x4 - core index']
  #allocation1 [shape = 'u32[144,128]{1,0:T(1,128)}', space=vmem, size = 0x12000, scoped, tag = 'internal scratch']
  %s0 = inlined_call_operand.vmem [shape: bf16[2,512], index: 0, kind: input, shape index: {}]
  %s1 = inlined_call_operand.vmem [shape: bf16[512,32], index: 1, kind: input, shape index: {}]
  %s2 = inlined_call_operand.vmem [shape: f32[1,32], index: 2, kind: input, shape index: {}]
  %s3 = inlined_call_operand.hbm [shape: f32[2,32], index: 3, kind: output, shape index: {}]
  %s4 = sld [smem:[#allocation0]]
  $region22: #{feat_encoder_forward.27} parent=0
    _
  %s6 = ssub.s32 1, %s4
  %s7 = scalar_select 0, %s6, %s4
  $region1: #{feat_encoder_forward.27} parent=0
    #allocation2 [shape = 'u8[1024]{0}', space=vmem, size = 0x400, scoped, tag = 'output window, operand 0, single buffered']
    #allocation3 [shape = 's32[1]{0}', space=sflag, size = 0x4, scoped, tag = 'scoped memory for feat_encoder_forward.27']
    %8 = vsyncpa [#allocation3], 0
    // Predicated region
    $region2: #{feat_encoder_forward.27} parent=1 // pred_check
      _
    $region3: #{feat_encoder_forward.27} parent=1 // pred_check_branch
      %10 = sbr.rel (0) target = $region5
    $region4: #{feat_encoder_forward.27} parent=1 // pred_region
      _
    $region5: #{feat_encoder_forward.27} parent=1 // pred_fallthru
      _
    // Predicated region
    $region6: #{feat_encoder_forward.27} parent=1 // pred_check
      _
    $region7: #{feat_encoder_forward.27} parent=1 // pred_check_branch
      %12 = sbr.rel (0) target = $region9
    $region8: #{feat_encoder_forward.27} parent=1 // pred_region
      _
    $region9: #{feat_encoder_forward.27} parent=1 // pred_fallthru
      _
    // Predicated region
    $region10: #{feat_encoder_forward.27} parent=1 // pred_check
      _
    $region11: #{feat_encoder_forward.27} parent=1 // pred_check_branch
      %14 = sbr.rel (0) target = $region13
    $region12: #{feat_encoder_forward.27} parent=1 // pred_region
      _
    $region13: #{feat_encoder_forward.27} parent=1 // pred_fallthru
      _
    %v16 = vld [vmem:[%s0] sm:$0xf]
    %v17 = vld [vmem:[%s1] sm:$0xf]
    %v18 = vld [vmem:[%s1 + $0x4] sm:$0xf]
    %v19 = vld [vmem:[%s1 + $0x8] sm:$0xf]
    %v20 = vld [vmem:[%s1 + $0xc] sm:$0xf]
    %v21 = vld [vmem:[%s1 + $0x10] sm:$0xf]
    %v22 = vld [vmem:[%s1 + $0x14] sm:$0xf]
    %v23 = vld [vmem:[%s1 + $0x18] sm:$0xf]
    %v24 = vld [vmem:[%s1 + $0x1c] sm:$0xf]
    %v25 = vld [vmem:[%s1 + $0x20] sm:$0xf]
    %v26 = vld [vmem:[%s1 + $0x24] sm:$0xf]
    %v27 = vld [vmem:[%s1 + $0x28] sm:$0xf]
    %v28 = vld [vmem:[%s1 + $0x2c] sm:$0xf]
    %v29 = vld [vmem:[%s1 + $0x30] sm:$0xf]
    %v30 = vld [vmem:[%s1 + $0x34] sm:$0xf]
    %v31 = vld [vmem:[%s1 + $0x38] sm:$0xf]
    %v32 = vld [vmem:[%s1 + $0x3c] sm:$0xf]
    %v33 = vld [vmem:[%s1 + $0x40] sm:$0xf]
    %v34 = vld [vmem:[%s1 + $0x44] sm:$0xf]
    %v35 = vld [vmem:[%s1 + $0x48] sm:$0xf]
    %v36 = vld [vmem:[%s1 + $0x4c] sm:$0xf]
    %v37 = vld [vmem:[%s1 + $0x50] sm:$0xf]
    %v38 = vld [vmem:[%s1 + $0x54] sm:$0xf]
    %v39 = vld [vmem:[%s1 + $0x58] sm:$0xf]
    %v40 = vld [vmem:[%s1 + $0x5c] sm:$0xf]
    %v41 = vld [vmem:[%s1 + $0x60] sm:$0xf]
    %v42 = vld [vmem:[%s1 + $0x64] sm:$0xf]
    %v43 = vld [vmem:[%s1 + $0x68] sm:$0xf]
    %v44 = vld [vmem:[%s1 + $0x6c] sm:$0xf]
    %v45 = vld [vmem:[%s1 + $0x70] sm:$0xf]
    %v46 = vld [vmem:[%s1 + $0x74] sm:$0xf]
    %v47 = vld [vmem:[%s1 + $0x78] sm:$0xf]
    %v48 = vld [vmem:[%s1 + $0x7c] sm:$0xf]
    %v49 = vld [vmem:[%s1 + $0x80] sm:$0xf]
    %v50 = vld [vmem:[%s1 + $0x84] sm:$0xf]
    %v51 = vld [vmem:[%s1 + $0x88] sm:$0xf]
    %v52 = vld [vmem:[%s1 + $0x8c] sm:$0xf]
    %v53 = vld [vmem:[%s1 + $0x90] sm:$0xf]
    %v54 = vld [vmem:[%s1 + $0x94] sm:$0xf]
    %v55 = vld [vmem:[%s1 + $0x98] sm:$0xf]
    %v56 = vld [vmem:[%s1 + $0x9c] sm:$0xf]
    %v57 = vld [vmem:[%s1 + $0xa0] sm:$0xf]
    %v58 = vld [vmem:[%s1 + $0xa4] sm:$0xf]
    %v59 = vld [vmem:[%s1 + $0xa8] sm:$0xf]
    %v60 = vld [vmem:[%s1 + $0xac] sm:$0xf]
    %v61 = vld [vmem:[%s1 + $0xb0] sm:$0xf]
    %v62 = vld [vmem:[%s1 + $0xb4] sm:$0xf]
    %v63 = vld [vmem:[%s1 + $0xb8] sm:$0xf]
    %v64 = vld [vmem:[%s1 + $0xbc] sm:$0xf]
    %v65 = vld [vmem:[%s1 + $0xc0] sm:$0xf]
    %v66 = vld [vmem:[%s1 + $0xc4] sm:$0xf]
    %v67 = vld [vmem:[%s1 + $0xc8] sm:$0xf]
    %v68 = vld [vmem:[%s1 + $0xcc] sm:$0xf]
    %v69 = vld [vmem:[%s1 + $0xd0] sm:$0xf]
    %v70 = vld [vmem:[%s1 + $0xd4] sm:$0xf]
    %v71 = vld [vmem:[%s1 + $0xd8] sm:$0xf]
    %v72 = vld [vmem:[%s1 + $0xdc] sm:$0xf]
    %v73 = vld [vmem:[%s1 + $0xe0] sm:$0xf]
    %v74 = vld [vmem:[%s1 + $0xe4] sm:$0xf]
    %v75 = vld [vmem:[%s1 + $0xe8] sm:$0xf]
    %v76 = vld [vmem:[%s1 + $0xec] sm:$0xf]
    %v77 = vld [vmem:[%s1 + $0xf0] sm:$0xf]
    %v78 = vld [vmem:[%s1 + $0xf4] sm:$0xf]
    %v79 = vld [vmem:[%s1 + $0xf8] sm:$0xf]
    %v80 = vld [vmem:[%s1 + $0xfc] sm:$0xf]
    %v81 = vld [vmem:[%s2] sm:$0x1]
    %v83 = vlaneseq
    %v84 = vshrl.u32 %v83, 7
    %v85 = vsub.s32 0, %v84
    %v86 = vrot.slane %v81, %v85
    %v90 = vunpack.c.l.s4 1966171168
    %v91 = vunpack.c.0.s8 %v90
    %v92 = vlaneseq
    %v93 = vshrl.u32 %v92, 7
    %v94 = vsub.s32 %v91, %v93
    %v95 = vrot.slane %v16, %v94
    %v96 = vcombine.high %v95, %v95
    %v98 = vunpack.c.l.s4 1966171168
    %v99 = vunpack.c.0.s8 %v98
    %v100 = vlaneseq
    %v101 = vshrl.u32 %v100, 7
    %v102 = vsub.s32 %v99, %v101
    %v103 = vrot.slane %v95, %v102
    %v105 = vunpack.c.l.s4 1966171168
    %v106 = vunpack.c.0.s8 %v105
    %v107 = vlaneseq
    %v108 = vshrl.u32 %v107, 7
    %v109 = vsub.s32 %v106, %v108
    %v110 = vrot.slane %v96, %v109
    %v111 = vcombine.high %v103, %v103
    %v112 = vcombine.high %v110, %v110
    %v181 = vunpack.c.l.b16 %v17
    %v182 = vunpack.c.l.b16 %v18
    %v183 = vunpack.c.l.b16 %v19
    %v184 = vunpack.c.l.b16 %v20
    %v185 = vunpack.c.l.b16 %v21
    %v186 = vunpack.c.l.b16 %v22
    %v187 = vunpack.c.l.b16 %v23
    %v188 = vunpack.c.l.b16 %v24
    %v189 = vunpack.c.l.b16 %v25
    %v190 = vunpack.c.l.b16 %v26
    %v191 = vunpack.c.l.b16 %v27
    %v192 = vunpack.c.l.b16 %v28
    %v193 = vunpack.c.l.b16 %v29
    %v194 = vunpack.c.l.b16 %v30
    %v195 = vunpack.c.l.b16 %v31
    %v196 = vunpack.c.l.b16 %v32
    %v197 = vunpack.c.l.b16 %v33
    %v198 = vunpack.c.l.b16 %v34
    %v199 = vunpack.c.l.b16 %v35
    %v200 = vunpack.c.l.b16 %v36
    %v201 = vunpack.c.l.b16 %v37
    %v202 = vunpack.c.l.b16 %v38
    %v203 = vunpack.c.l.b16 %v39
    %v204 = vunpack.c.l.b16 %v40
    %v205 = vunpack.c.l.b16 %v41
    %v206 = vunpack.c.l.b16 %v42
    %v207 = vunpack.c.l.b16 %v43
    %v208 = vunpack.c.l.b16 %v44
    %v209 = vunpack.c.l.b16 %v45
    %v210 = vunpack.c.l.b16 %v46
    %v211 = vunpack.c.l.b16 %v47
    %v212 = vunpack.c.l.b16 %v48
    %v213 = vunpack.c.l.b16 %v49
    %v214 = vunpack.c.l.b16 %v50
    %v215 = vunpack.c.l.b16 %v51
    %v216 = vunpack.c.l.b16 %v52
    %v217 = vunpack.c.l.b16 %v53
    %v218 = vunpack.c.l.b16 %v54
    %v219 = vunpack.c.l.b16 %v55
    %v220 = vunpack.c.l.b16 %v56
    %v221 = vunpack.c.l.b16 %v57
    %v222 = vunpack.c.l.b16 %v58
    %v223 = vunpack.c.l.b16 %v59
    %v224 = vunpack.c.l.b16 %v60
    %v225 = vunpack.c.l.b16 %v61
    %v226 = vunpack.c.l.b16 %v62
    %v227 = vunpack.c.l.b16 %v63
    %v228 = vunpack.c.l.b16 %v64
    %v229 = vunpack.c.l.b16 %v65
    %v230 = vunpack.c.l.b16 %v66
    %v231 = vunpack.c.l.b16 %v67
    %v232 = vunpack.c.l.b16 %v68
    %v233 = vunpack.c.l.b16 %v69
    %v234 = vunpack.c.l.b16 %v70
    %v235 = vunpack.c.l.b16 %v71
    %v236 = vunpack.c.l.b16 %v72
    %v237 = vunpack.c.l.b16 %v73
    %v238 = vunpack.c.l.b16 %v74
    %v239 = vunpack.c.l.b16 %v75
    %v240 = vunpack.c.l.b16 %v76
    %v241 = vunpack.c.l.b16 %v77
    %v242 = vunpack.c.l.b16 %v78
    %v243 = vunpack.c.l.b16 %v79
    %v244 = vunpack.c.l.b16 %v80
    %v245 = vpack.c.b16 %v182, %v181
    %v246 = vpack.c.b16 %v184, %v183
    %v247 = vpack.c.b16 %v186, %v185
    %v248 = vpack.c.b16 %v188, %v187
    %v249 = vpack.c.b16 %v190, %v189
    %v250 = vpack.c.b16 %v192, %v191
    %v251 = vpack.c.b16 %v194, %v193
    %v252 = vpack.c.b16 %v196, %v195
    %v253 = vpack.c.b16 %v198, %v197
    %v254 = vpack.c.b16 %v200, %v199
    %v255 = vpack.c.b16 %v202, %v201
    %v256 = vpack.c.b16 %v204, %v203
    %v257 = vpack.c.b16 %v206, %v205
    %v258 = vpack.c.b16 %v208, %v207
    %v259 = vpack.c.b16 %v210, %v209
    %v260 = vpack.c.b16 %v212, %v211
    %v261 = vpack.c.b16 %v214, %v213
    %v262 = vpack.c.b16 %v216, %v215
    %v263 = vpack.c.b16 %v218, %v217
    %v264 = vpack.c.b16 %v220, %v219
    %v265 = vpack.c.b16 %v222, %v221
    %v266 = vpack.c.b16 %v224, %v223
    %v267 = vpack.c.b16 %v226, %v225
    %v268 = vpack.c.b16 %v228, %v227
    %v269 = vpack.c.b16 %v230, %v229
    %v270 = vpack.c.b16 %v232, %v231
    %v271 = vpack.c.b16 %v234, %v233
    %v272 = vpack.c.b16 %v236, %v235
    %v273 = vpack.c.b16 %v238, %v237
    %v274 = vpack.c.b16 %v240, %v239
    %v275 = vpack.c.b16 %v242, %v241
    %v276 = vpack.c.b16 %v244, %v243
    %309 = vmatprep.subr.bf16.mxu0 0
    %310 = vmatpush1.bf16.msra.mxu0 %v245
    %311 = vmatprep.subr.bf16.mxu0 0
    %312 = vmatpush1.bf16.msra.mxu0 %v246
    %313 = vmatprep.subr.bf16.mxu0 0
    %314 = vmatpush1.bf16.msra.mxu0 %v247
    %315 = vmatprep.subr.bf16.mxu0 0
    %316 = vmatpush1.bf16.msra.mxu0 %v248
    %317 = vmatprep.subr.bf16.mxu0 0
    %318 = vmatpush1.bf16.msra.mxu0 %v249
    %319 = vmatprep.subr.bf16.mxu0 0
    %320 = vmatpush1.bf16.msra.mxu0 %v250
    %321 = vmatprep.subr.bf16.mxu0 0
    %322 = vmatpush1.bf16.msra.mxu0 %v251
    %323 = vmatprep.subr.bf16.mxu0 0
    %324 = vmatpush1.bf16.msra.mxu0 %v252
    %325 = vmatprep.subr.bf16.mxu0 0
    %326 = vmatpush1.bf16.msra.mxu0 %v253
    %327 = vmatprep.subr.bf16.mxu0 0
    %328 = vmatpush1.bf16.msra.mxu0 %v254
    %329 = vmatprep.subr.bf16.mxu0 0
    %330 = vmatpush1.bf16.msra.mxu0 %v255
    %331 = vmatprep.subr.bf16.mxu0 0
    %332 = vmatpush1.bf16.msra.mxu0 %v256
    %333 = vmatprep.subr.bf16.mxu0 0
    %334 = vmatpush1.bf16.msra.mxu0 %v257
    %335 = vmatprep.subr.bf16.mxu0 0
    %336 = vmatpush1.bf16.msra.mxu0 %v258
    %337 = vmatprep.subr.bf16.mxu0 0
    %338 = vmatpush1.bf16.msra.mxu0 %v259
    %339 = vmatprep.subr.bf16.mxu0 0
    %340 = vmatpush1.bf16.msra.mxu0 %v260
    %341 = vmatprep.mubr.bf16.mxu0 %v110
    %342 = vmatmul.mubr.bf16.gmra.mrb[0].mxu0 %v103
    %v343 = vpop.f32.mrb[0].mxu0
    %v344 = vadd.f32 %v86, %v343
    %v345 = vpop.f32.mrb[0].mxu0
    %v346 = vpop.f32.mrb[0].mxu0
    %v347 = vpop.f32.mrb[0].mxu0
    %348 = vdwg.mxu0
    %349 = vmatprep.subr.bf16.mxu0 0
    %350 = vmatpush1.bf16.msra.mxu0 %v261
    %351 = vmatprep.subr.bf16.mxu0 0
    %352 = vmatpush1.bf16.msra.mxu0 %v262
    %353 = vmatprep.subr.bf16.mxu0 0
    %354 = vmatpush1.bf16.msra.mxu0 %v263
    %355 = vmatprep.subr.bf16.mxu0 0
    %356 = vmatpush1.bf16.msra.mxu0 %v264
    %357 = vmatprep.subr.bf16.mxu0 0
    %358 = vmatpush1.bf16.msra.mxu0 %v265
    %359 = vmatprep.subr.bf16.mxu0 0
    %360 = vmatpush1.bf16.msra.mxu0 %v266
    %361 = vmatprep.subr.bf16.mxu0 0
    %362 = vmatpush1.bf16.msra.mxu0 %v267
    %363 = vmatprep.subr.bf16.mxu0 0
    %364 = vmatpush1.bf16.msra.mxu0 %v268
    %365 = vmatprep.subr.bf16.mxu0 0
    %366 = vmatpush1.bf16.msra.mxu0 %v269
    %367 = vmatprep.subr.bf16.mxu0 0
    %368 = vmatpush1.bf16.msra.mxu0 %v270
    %369 = vmatprep.subr.bf16.mxu0 0
    %370 = vmatpush1.bf16.msra.mxu0 %v271
    %371 = vmatprep.subr.bf16.mxu0 0
    %372 = vmatpush1.bf16.msra.mxu0 %v272
    %373 = vmatprep.subr.bf16.mxu0 0
    %374 = vmatpush1.bf16.msra.mxu0 %v273
    %375 = vmatprep.subr.bf16.mxu0 0
    %376 = vmatpush1.bf16.msra.mxu0 %v274
    %377 = vmatprep.subr.bf16.mxu0 0
    %378 = vmatpush1.bf16.msra.mxu0 %v275
    %379 = vmatprep.subr.bf16.mxu0 0
    %380 = vmatpush1.bf16.msra.mxu0 %v276
    %381 = vmatprep.mubr.bf16.mxu0 %v112
    %382 = vmatmul.mubr.bf16.gmra.mrb[0].mxu0 %v111
    %v383 = vpop.f32.mrb[0].mxu0
    %v384 = vadd.f32 %v344, %v383
    %v385 = vpop.f32.mrb[0].mxu0
    %v386 = vpop.f32.mrb[0].mxu0
    %v387 = vpop.f32.mrb[0].mxu0
    %388 = vdwg.mxu0
    %vm389 = vcmask 254976
    %390 = vst.msk [vmem:[#allocation2] sm:$0x3] %vm389, %v384
    // Predicated region
    $region14: #{feat_encoder_forward.27} parent=1 // pred_check
      _
    $region15: #{feat_encoder_forward.27} parent=1 // pred_check_branch
      %392 = sbr.rel (0) target = $region17
    $region16: #{feat_encoder_forward.27} parent=1 // pred_region
      %s394 = ssub.s32 32, 32
      %395 = vsyncadd [#allocation3], %s394
      %s397 = sshll.u32 [#allocation2], 4
      %s398 = int_to_ptr.vmem [resolvable:$true] %s397
      %400 = dma.vmem_to_hbm [thread:$0]  %s398, 32, %s3, [#allocation3]
    $region17: #{feat_encoder_forward.27} parent=1 // pred_fallthru
      _
    // Predicated region
    $region18: #{feat_encoder_forward.27} parent=1 // pred_check
      _
    $region19: #{feat_encoder_forward.27} parent=1 // pred_check_branch
      %402 = sbr.rel (0) target = $region21
    $region20: #{feat_encoder_forward.27} parent=1 // pred_region
      %403 = dma.done [#allocation3], 32
    $region21: #{feat_encoder_forward.27} parent=1 // pred_fallthru
      _
    %404 = vsyncpa [#allocation3], 1

</llo_original>
